<compile_context>
chip_gen: v7x
topology: tpu7x:2x2x1
jax: 0.10.0
libtpu: 0.0.40
codegen_flags: <defaults>
</compile_context>

<pallas_src>
import functools
import math

import jax
import jax.numpy as jnp
from jax import lax
from jax.experimental import pallas as pl
from jax.experimental.pallas import tpu as pltpu

EPS = 1e-5
KS = 3
DILATIONS = (1, 2, 3, 4)


def _round_up(x, m):
    return ((x + m - 1) // m) * m


# ---------------------------------------------------------------------------
# Kernel A: fused six-branch 1x1 conv (one matmul) + per-step BN1 sum/sumsq
# ---------------------------------------------------------------------------
def conv1x1_stats_kernel(x_ref, w_ref, y_ref, st_ref):
    # x_ref: (BT, T, V, Cin) bf16      w_ref: (Cin, C1p) bf16 (resident)
    # y_ref: (BT, T, V, C1p) bf16      st_ref: (1, 2, C1p) f32 per-step partial
    bt, t, v, cin = x_ref.shape
    c1p = y_ref.shape[-1]
    x = x_ref[...].reshape(bt * t * v, cin)
    y = jnp.dot(x, w_ref[...], preferred_element_type=jnp.float32)
    y_ref[...] = y.reshape(bt, t, v, c1p).astype(y_ref.dtype)
    s = jnp.sum(y, axis=0, keepdims=True)
    ss = jnp.sum(y * y, axis=0, keepdims=True)
    st_ref[...] = jnp.concatenate([s, ss], axis=0)[None]


# ---------------------------------------------------------------------------
# Shared branch computation (used by pass B for stats and pass C for output)
# ---------------------------------------------------------------------------
def _shift_t(a, off):
    """out[:, t] = a[:, t + off] along axis 1 (time), zero padded; static off."""
    if off == 0:
        return a
    t = a.shape[1]
    pad = jnp.zeros(a.shape[:1] + (abs(off),) + a.shape[2:], a.dtype)
    if off > 0:
        return jnp.concatenate([a[:, off:], pad], axis=1)
    return jnp.concatenate([pad, a[:, :t + off]], axis=1)


def _compute_branches(y_blk, scale1, shift1, wt, *, dilations, bc, ks):
    # y_blk: (BT, T, V, C1p) bf16; scale1/shift1: (1, C1p) f32
    # wt: (ks*nd*bc, nd*bc) bf16 block-diagonal temporal-conv weight
    # returns z: (BT, T, V, 6*bc) f32 (pre-BN2, branch channel order matches
    # torch.cat(branch_outs, dim=1))
    bt, t, v, _ = y_blk.shape
    nd = len(dilations)

    y = y_blk.astype(jnp.float32)
    yn = y * scale1 + shift1                     # BN1 (all branches)
    yr = jnp.maximum(yn, 0.0)                    # ReLU (branches 0..4)
    yr_b = yr.astype(jnp.bfloat16)

    # Dilated temporal convs: 4 branches x 3 taps fused into ONE matmul.
    cols = []
    for bi, d in enumerate(dilations):
        ybr = yr_b[..., bi * bc:(bi + 1) * bc]
        for k in range(ks):
            cols.append(_shift_t(ybr, (k - (ks - 1) // 2) * d))
    slab = jnp.concatenate(cols, axis=-1).reshape(bt * t * v, nd * ks * bc)
    dil = jnp.dot(slab, wt, preferred_element_type=jnp.float32)
    dil = dil.reshape(bt, t, v, nd * bc)

    # MaxPool (3,1) branch (implicit -inf padding, like nn.MaxPool2d).
    ymp = yr[..., nd * bc:(nd + 1) * bc]
    ninf = jnp.full((bt, 1, v, bc), -jnp.inf, jnp.float32)
    up = jnp.concatenate([ymp[:, 1:], ninf], axis=1)
    dn = jnp.concatenate([ninf, ymp[:, :-1]], axis=1)
    mp = jnp.maximum(jnp.maximum(ymp, up), dn)

    # Plain 1x1 branch: BN1 output only (no ReLU, no BN2).
    pln = yn[..., (nd + 1) * bc:(nd + 2) * bc]

    return jnp.concatenate([dil, mp, pln], axis=-1)


# ---------------------------------------------------------------------------
# Kernel B: BN1+ReLU -> branches -> per-step BN2 sum/sumsq (stats only)
# ---------------------------------------------------------------------------
def branch_stats_kernel(y_ref, s1_ref, h1_ref, wt_ref, st_ref, *,
                        dilations, bc, ks):
    z = _compute_branches(y_ref[...], s1_ref[...], h1_ref[...], wt_ref[...],
                          dilations=dilations, bc=bc, ks=ks)
    zz = z.reshape(-1, z.shape[-1])
    s = jnp.sum(zz, axis=0, keepdims=True)
    ss = jnp.sum(zz * zz, axis=0, keepdims=True)
    st_ref[...] = jnp.concatenate([s, ss], axis=0)[None]


# ---------------------------------------------------------------------------
# Kernel C: recompute branches, apply BN2 affine, emit channels-first output
# ---------------------------------------------------------------------------
def branch_apply_kernel(y_ref, s1_ref, h1_ref, wt_ref, s2_ref, h2_ref, o_ref, *,
                        dilations, bc, ks):
    z = _compute_branches(y_ref[...], s1_ref[...], h1_ref[...], wt_ref[...],
                          dilations=dilations, bc=bc, ks=ks)
    zo = z * s2_ref[...] + h2_ref[...]            # BN2 (identity for plain)
    bt, t, v, cz = zo.shape
    ll = t * v
    cz8 = _round_up(cz, 8)
    zo = zo.reshape(bt, ll, cz)
    if cz8 != cz:
        zo = jnp.concatenate(
            [zo, jnp.zeros((bt, ll, cz8 - cz), jnp.float32)], axis=-1)
    for b in range(bt):                           # static unrolled, BT small
        o_ref[b] = zo[b].T[:cz, :]                # (Cout, T*V), lane-dense


# ---------------------------------------------------------------------------
# Parameter init (deterministic, mirrors weights_init / nn defaults)
# ---------------------------------------------------------------------------
def init_params(key, in_channels, out_channels, kernel_size=KS,
                dilations=DILATIONS):
    n_dil = len(dilations)
    nb = n_dil + 2
    assert out_channels % nb == 0
    bc = out_channels // nb
    Cout = out_channels
    C1p = _round_up(Cout, 128)
    ks = kernel_size

    keys = iter(jax.random.split(key, 8 * nb))

    def kaiming(k, out_c, in_c, kh, kw):
        # kaiming_normal_(mode='fan_out'): std = sqrt(2 / (out_c*kh*kw))
        std = math.sqrt(2.0 / (out_c * kh * kw))
        return std * jax.random.normal(k, (out_c, in_c, kh, kw), jnp.float32)

    def bn_gamma(k, c):
        return 1.0 + 0.02 * jax.random.normal(k, (c,), jnp.float32)

    pw_ws, g1s, b1s, g2s, b2s, tc_blocks = [], [], [], [], [], []

    for _d in dilations:                                   # dilated branches
        pw = kaiming(next(keys), bc, in_channels, 1, 1)[:, :, 0, 0]  # (bc,Cin)
        pw_ws.append(pw.T)                                           # (Cin,bc)
        tc = kaiming(next(keys), bc, bc, ks, 1)[:, :, :, 0]          # (o,i,k)
        tc_blocks.append(jnp.transpose(tc, (2, 1, 0)).reshape(ks * bc, bc))
        g1s.append(bn_gamma(next(keys), bc)); b1s.append(jnp.zeros(bc))
        g2s.append(bn_gamma(next(keys), bc)); b2s.append(jnp.zeros(bc))

    pw = kaiming(next(keys), bc, in_channels, 1, 1)[:, :, 0, 0]      # maxpool
    pw_ws.append(pw.T)
    g1s.append(bn_gamma(next(keys), bc)); b1s.append(jnp.zeros(bc))
    g2s.append(bn_gamma(next(keys), bc)); b2s.append(jnp.zeros(bc))

    pw = kaiming(next(keys), bc, in_channels, 1, 1)[:, :, 0, 0]      # plain 1x1
    pw_ws.append(pw.T)
    g1s.append(bn_gamma(next(keys), bc)); b1s.append(jnp.zeros(bc))
    g2s.append(jnp.ones(bc)); b2s.append(jnp.zeros(bc))   # placeholder

    # Fused 1x1 weight, channels padded to C1p lanes (input dim stays Cin).
    w1 = jnp.concatenate(pw_ws, axis=1)                    # (Cin, Cout)
    w1_p = (jnp.zeros((in_channels, C1p), jnp.float32)
            .at[:, :Cout].set(w1).astype(jnp.bfloat16))

    # Block-diagonal fused temporal-conv weight: (ks*n_dil*bc, n_dil*bc).
    wt = jnp.zeros((ks * n_dil * bc, n_dil * bc), jnp.float32)
    for bi, blk in enumerate(tc_blocks):
        wt = wt.at[bi * ks * bc:(bi + 1) * ks * bc,
                   bi * bc:(bi + 1) * bc].set(blk)
    wt = wt.astype(jnp.bfloat16)

    def pad_c1p(vs):
        v = jnp.concatenate(vs)[None, :]
        return jnp.zeros((1, C1p), jnp.float32).at[:, :Cout].set(v)

    return dict(
        w1=w1_p,
        g1=pad_c1p(g1s), b1=pad_c1p(b1s),
        g2=jnp.concatenate(g2s)[None, :], b2=jnp.concatenate(b2s)[None, :],
        wt=wt,
        bc=bc, ks=ks, dilations=tuple(dilations),
        cin=in_channels, cout=Cout, c1p=C1p,
    )


# ---------------------------------------------------------------------------
# Forward
# ---------------------------------------------------------------------------
def multiscale_temporal_conv(params, x, bt=4):
    # bt: samples per grid step (amortizes per-step overhead; rows per step
    # = bt*T*V).  Chosen as a divisor of N so no padded samples pollute the
    # batch-norm statistics.  4 is a safe default for v7x's 64 MiB VMEM;
    # 8 is fine on v5e/v6e for typical T,V.
    N, Cin, T, V = x.shape
    assert Cin == params["cin"]
    bc = params["bc"]
    ks = params["ks"]
    dil = params["dilations"]
    n_dil = len(dil)
    Cout, C1p = params["cout"], params["c1p"]
    L = T * V
    M = N * L

    BT = 1
    for cand in (8, 4, 2, 1):
        if cand <= bt and N % cand == 0:
            BT = cand
            break
    G = N // BT

    # NCHW -> channels-last + bf16 (one small fused XLA transpose; Cin stays
    # unpadded so pass A reads only the real input bytes).
    xr = jnp.transpose(x, (0, 2, 3, 1)).astype(jnp.bfloat16)   # (N, T, V, Cin)

    cp = pltpu.CompilerParams(
        dimension_semantics=("parallel",),       # megacore-shardable on v7x
        vmem_limit_bytes=48 * 1024 * 1024)

    # ---- pass A: fused 1x1 conv + per-step BN1 statistics ------------------
    y1, st1p = pl.pallas_call(
        conv1x1_stats_kernel,
        grid=(G,),
        in_specs=[
            pl.BlockSpec((BT, T, V, Cin), lambda i: (i, 0, 0, 0)),
            pl.BlockSpec((Cin, C1p), lambda i: (0, 0)),        # resident weight
        ],
        out_specs=[
            pl.BlockSpec((BT, T, V, C1p), lambda i: (i, 0, 0, 0)),
            pl.BlockSpec((1, 2, C1p), lambda i: (i, 0, 0)),    # per-step partial
        ],
        out_shape=[
            jax.ShapeDtypeStruct((N, T, V, C1p), jnp.bfloat16),
            jax.ShapeDtypeStruct((G, 2, C1p), jnp.float32),
        ],
        compiler_params=cp,
    )(xr, params["w1"])

    # Finalize BN1 (tiny per-channel vectors; biased batch variance).
    st1 = jnp.sum(st1p, axis=0)
    mean1 = st1[0:1] / M
    var1 = jnp.maximum(st1[1:2] / M - mean1 * mean1, 0.0)
    scale1 = params["g1"] * lax.rsqrt(var1 + EPS)
    shift1 = params["b1"] - mean1 * scale1

    # ---- pass B: branches, BN2 statistics only (no z written to HBM) -------
    wt_shape = params["wt"].shape
    kernel_b = functools.partial(branch_stats_kernel,
                                 dilations=dil, bc=bc, ks=ks)
    st2p = pl.pallas_call(
        kernel_b,
        grid=(G,),
        in_specs=[
            pl.BlockSpec((BT, T, V, C1p), lambda i: (i, 0, 0, 0)),
            pl.BlockSpec((1, C1p), lambda i: (0, 0)),
            pl.BlockSpec((1, C1p), lambda i: (0, 0)),
            pl.BlockSpec(wt_shape, lambda i: (0, 0)),          # resident weight
        ],
        out_specs=pl.BlockSpec((1, 2, Cout), lambda i: (i, 0, 0)),
        out_shape=jax.ShapeDtypeStruct((G, 2, Cout), jnp.float32),
        compiler_params=cp,
    )(y1, scale1, shift1, params["wt"])

    # Finalize BN2; identity for the plain-1x1 branch (its only BN was BN1).
    st2 = jnp.sum(st2p, axis=0)
    mean2 = st2[0:1] / M
    var2 = jnp.maximum(st2[1:2] / M - mean2 * mean2, 0.0)
    scale2 = params["g2"] * lax.rsqrt(var2 + EPS)
    shift2 = params["b2"] - mean2 * scale2
    npc = (n_dil + 1) * bc
    scale2 = jnp.concatenate(
        [scale2[:, :npc], jnp.ones((1, bc), jnp.float32)], axis=1)
    shift2 = jnp.concatenate(
        [shift2[:, :npc], jnp.zeros((1, bc), jnp.float32)], axis=1)

    # ---- pass C: recompute branches, apply BN2, emit (N, Cout, T*V) --------
    kernel_c = functools.partial(branch_apply_kernel,
                                 dilations=dil, bc=bc, ks=ks)
    out_cf = pl.pallas_call(
        kernel_c,
        grid=(G,),
        in_specs=[
            pl.BlockSpec((BT, T, V, C1p), lambda i: (i, 0, 0, 0)),
            pl.BlockSpec((1, C1p), lambda i: (0, 0)),
            pl.BlockSpec((1, C1p), lambda i: (0, 0)),
            pl.BlockSpec(wt_shape, lambda i: (0, 0)),
            pl.BlockSpec((1, Cout), lambda i: (0, 0)),
            pl.BlockSpec((1, Cout), lambda i: (0, 0)),
        ],
        out_specs=pl.BlockSpec((BT, Cout, L), lambda i: (i, 0, 0)),
        out_shape=jax.ShapeDtypeStruct((N, Cout, L), jnp.float32),
        compiler_params=cp,
    )(y1, scale1, shift1, params["wt"], scale2, shift2)

    # Channel order matches torch.cat(dim=1); residual == 0.  The final
    # reshape only splits the trailing T*V axis -> no data movement.
    return out_cf.reshape(N, Cout, T, V)   # NCHW


# ---------------------------------------------------------------------------
if __name__ == "__main__":
    key = jax.random.PRNGKey(0)
    kp, kx = jax.random.split(key)

    N, Cin, T, V = 2, 4, 16, 16
    Cout = 12  # must be divisible by num_branches = 6

    params = init_params(kp, Cin, Cout)
    x = jax.random.normal(kx, (N, Cin, T, V), jnp.float32)

    fwd = jax.jit(functools.partial(multiscale_temporal_conv, params))
    y = jax.block_until_ready(fwd(x))

    assert y.shape == (N, Cout, T, V), y.shape
    assert bool(jnp.all(jnp.isfinite(y)))
    print("KERNEL_OK")
</pallas_src>

<mosaic_0001>
module attributes {stable_mosaic.version = 11 : i64} {
  func.func @conv1x1_stats_kernel(%arg0: i32, %arg1: memref<2x16x16x4xbf16, #tpu.memory_space<vmem>>, %arg2: memref<4x128xbf16, #tpu.memory_space<vmem>>, %arg3: memref<2x16x16x128xbf16, #tpu.memory_space<vmem>>, %arg4: memref<1x2x128xf32, #tpu.memory_space<vmem>>) attributes {dimension_semantics = [#tpu.dimension_semantics<parallel>], iteration_bounds = array<i64: 1>, scalar_prefetch = 0 : i64, scratch_operands = 0 : i64, tpu.core_type = #tpu.core_type<tc>, window_params = [{transform_indices = @transform_0, window_bounds = array<i64: 2, 16, 16, 4>}, {pipeline_mode = #tpu.pipeline_mode<synchronous>, transform_indices = @transform_1, window_bounds = array<i64: 4, 128>}, {transform_indices = @transform_2, window_bounds = array<i64: 2, 16, 16, 128>}, {transform_indices = @transform_3, window_bounds = array<i64: 1, 2, 128>}]} {
    %c0 = arith.constant 0 : index
    %c0_0 = arith.constant 0 : index
    %c0_1 = arith.constant 0 : index
    %c0_2 = arith.constant 0 : index
    %0 = vector.load %arg1[%c0, %c0_0, %c0_1, %c0_2] : memref<2x16x16x4xbf16, #tpu.memory_space<vmem>>, vector<2x16x16x4xbf16>
    %1 = vector.shape_cast %0 : vector<2x16x16x4xbf16> to vector<512x4xbf16>
    %c0_3 = arith.constant 0 : index
    %c0_4 = arith.constant 0 : index
    %2 = vector.load %arg2[%c0_3, %c0_4] : memref<4x128xbf16, #tpu.memory_space<vmem>>, vector<4x128xbf16>
    %cst = arith.constant dense<0.000000e+00> : vector<512x128xf32>
    %3 = tpu.matmul %1, %2, %cst {dimension_numbers = #tpu.dot_dimension_numbers<[1], [0], [0], [1], [0, 0, 1, 1], [], []>} : vector<512x4xbf16>, vector<4x128xbf16>, vector<512x128xf32> -> vector<512x128xf32>
    %4 = vector.shape_cast %3 : vector<512x128xf32> to vector<2x16x16x128xf32>
    %5 = arith.truncf %4 : vector<2x16x16x128xf32> to vector<2x16x16x128xbf16>
    %c0_5 = arith.constant 0 : index
    %c0_6 = arith.constant 0 : index
    %c0_7 = arith.constant 0 : index
    %c0_8 = arith.constant 0 : index
    %6 = vector.load %arg3[%c0_5, %c0_6, %c0_7, %c0_8] : memref<2x16x16x128xbf16, #tpu.memory_space<vmem>>, vector<2x16x16x128xbf16>
    tpu.vector_store %arg3[%c0_5, %c0_6, %c0_7, %c0_8], %5 {strides = array<i32>} : memref<2x16x16x128xbf16, #tpu.memory_space<vmem>>, vector<2x16x16x128xbf16>,
    %cst_9 = arith.constant dense<0.000000e+00> : vector<128xf32>
    %7 = vector.multi_reduction <add>, %3, %cst_9 [0] : vector<512x128xf32> to vector<128xf32>
    %8 = vector.shape_cast %7 : vector<128xf32> to vector<1x128xf32>
    %9 = arith.mulf %3, %3 : vector<512x128xf32>
    %cst_10 = arith.constant dense<0.000000e+00> : vector<128xf32>
    %10 = vector.multi_reduction <add>, %9, %cst_10 [0] : vector<512x128xf32> to vector<128xf32>
    %11 = vector.shape_cast %10 : vector<128xf32> to vector<1x128xf32>
    %12 = tpu.concatenate %8, %11 in 0 : vector<1x128xf32>, vector<1x128xf32> -> vector<2x128xf32>
    %13 = vector.shape_cast %12 : vector<2x128xf32> to vector<1x2x128xf32>
    %c0_11 = arith.constant 0 : index
    %c0_12 = arith.constant 0 : index
    %c0_13 = arith.constant 0 : index
    %14 = vector.load %arg4[%c0_11, %c0_12, %c0_13] : memref<1x2x128xf32, #tpu.memory_space<vmem>>, vector<1x2x128xf32>
    tpu.vector_store %arg4[%c0_11, %c0_12, %c0_13], %13 {strides = array<i32>} : memref<1x2x128xf32, #tpu.memory_space<vmem>>, vector<1x2x128xf32>,
    return
  }
  func.func @transform_0(%arg0: i32) -> (i32, i32, i32, i32) {
    %c0_i32 = arith.constant 0 : i32
    %c0_i32_0 = arith.constant 0 : i32
    %c0_i32_1 = arith.constant 0 : i32
    %c0_i32_2 = arith.constant 0 : i32
    return %arg0, %c0_i32, %c0_i32_0, %c0_i32_1 : i32, i32, i32, i32
  }
  func.func @transform_1(%arg0: i32) -> (i32, i32) {
    %c0_i32 = arith.constant 0 : i32
    %c0_i32_0 = arith.constant 0 : i32
    %c0_i32_1 = arith.constant 0 : i32
    return %c0_i32, %c0_i32_0 : i32, i32
  }
  func.func @transform_2(%arg0: i32) -> (i32, i32, i32, i32) {
    %c0_i32 = arith.constant 0 : i32
    %c0_i32_0 = arith.constant 0 : i32
    %c0_i32_1 = arith.constant 0 : i32
    %c0_i32_2 = arith.constant 0 : i32
    return %arg0, %c0_i32, %c0_i32_0, %c0_i32_1 : i32, i32, i32, i32
  }
  func.func @transform_3(%arg0: i32) -> (i32, i32, i32) {
    %c0_i32 = arith.constant 0 : i32
    %c0_i32_0 = arith.constant 0 : i32
    %c0_i32_1 = arith.constant 0 : i32
    return %arg0, %c0_i32, %c0_i32_0 : i32, i32, i32
  }
}

module attributes {stable_mosaic.version = 11 : i64} {
  func.func @branch_stats_kernel(%arg0: i32, %arg1: memref<2x16x16x128xbf16, #tpu.memory_space<vmem>>, %arg2: memref<1x128xf32, #tpu.memory_space<vmem>>, %arg3: memref<1x128xf32, #tpu.memory_space<vmem>>, %arg4: memref<24x8xbf16, #tpu.memory_space<vmem>>, %arg5: memref<1x2x12xf32, #tpu.memory_space<vmem>>) attributes {dimension_semantics = [#tpu.dimension_semantics<parallel>], iteration_bounds = array<i64: 1>, scalar_prefetch = 0 : i64, scratch_operands = 0 : i64, tpu.core_type = #tpu.core_type<tc>, window_params = [{transform_indices = @transform_0, window_bounds = array<i64: 2, 16, 16, 128>}, {pipeline_mode = #tpu.pipeline_mode<synchronous>, transform_indices = @transform_1, window_bounds = array<i64: 1, 128>}, {pipeline_mode = #tpu.pipeline_mode<synchronous>, transform_indices = @transform_2, window_bounds = array<i64: 1, 128>}, {pipeline_mode = #tpu.pipeline_mode<synchronous>, transform_indices = @transform_3, window_bounds = array<i64: 24, 8>}, {transform_indices = @transform_4, window_bounds = array<i64: 1, 2, 12>}]} {
    %c0 = arith.constant 0 : index
    %c0_0 = arith.constant 0 : index
    %c0_1 = arith.constant 0 : index
    %c0_2 = arith.constant 0 : index
    %0 = vector.load %arg1[%c0, %c0_0, %c0_1, %c0_2] : memref<2x16x16x128xbf16, #tpu.memory_space<vmem>>, vector<2x16x16x128xbf16>
    %c0_3 = arith.constant 0 : index
    %c0_4 = arith.constant 0 : index
    %1 = vector.load %arg2[%c0_3, %c0_4] : memref<1x128xf32, #tpu.memory_space<vmem>>, vector<1x128xf32>
    %c0_5 = arith.constant 0 : index
    %c0_6 = arith.constant 0 : index
    %2 = vector.load %arg3[%c0_5, %c0_6] : memref<1x128xf32, #tpu.memory_space<vmem>>, vector<1x128xf32>
    %c0_7 = arith.constant 0 : index
    %c0_8 = arith.constant 0 : index
    %3 = vector.load %arg4[%c0_7, %c0_8] : memref<24x8xbf16, #tpu.memory_space<vmem>>, vector<24x8xbf16>
    %4 = arith.extf %0 : vector<2x16x16x128xbf16> to vector<2x16x16x128xf32>
    %5 = vector.shape_cast %1 : vector<1x128xf32> to vector<1x1x1x128xf32>
    %6 = vector.broadcast %5 : vector<1x1x1x128xf32> to vector<2x16x16x128xf32>
    %7 = arith.mulf %4, %6 : vector<2x16x16x128xf32>
    %8 = vector.shape_cast %2 : vector<1x128xf32> to vector<1x1x1x128xf32>
    %9 = vector.broadcast %8 : vector<1x1x1x128xf32> to vector<2x16x16x128xf32>
    %10 = arith.addf %7, %9 : vector<2x16x16x128xf32>
    %cst = arith.constant 0.000000e+00 : f32
    %11 = vector.broadcast %cst : f32 to vector<2x16x16x128xf32>
    %12 = arith.maximumf %10, %11 : vector<2x16x16x128xf32>
    %13 = arith.truncf %12 : vector<2x16x16x128xf32> to vector<2x16x16x128xbf16>
    %14 = vector.extract_strided_slice %13 {offsets = [0, 0, 0, 0], sizes = [2, 16, 16, 2], strides = [1, 1, 1, 1]} : vector<2x16x16x128xbf16> to vector<2x16x16x2xbf16>
    %cst_9 = arith.constant 0.000000e+00 : bf16
    %15 = vector.broadcast %cst_9 : bf16 to vector<2x1x16x2xbf16>
    %16 = vector.extract_strided_slice %14 {offsets = [0, 0, 0, 0], sizes = [2, 15, 16, 2], strides = [1, 1, 1, 1]} : vector<2x16x16x2xbf16> to vector<2x15x16x2xbf16>
    %17 = tpu.concatenate %15, %16 in 1 : vector<2x1x16x2xbf16>, vector<2x15x16x2xbf16> -> vector<2x16x16x2xbf16>
    %cst_10 = arith.constant 0.000000e+00 : bf16
    %18 = vector.broadcast %cst_10 : bf16 to vector<2x1x16x2xbf16>
    %19 = vector.extract_strided_slice %14 {offsets = [0, 1, 0, 0], sizes = [2, 15, 16, 2], strides = [1, 1, 1, 1]} : vector<2x16x16x2xbf16> to vector<2x15x16x2xbf16>
    %20 = tpu.concatenate %19, %18 in 1 : vector<2x15x16x2xbf16>, vector<2x1x16x2xbf16> -> vector<2x16x16x2xbf16>
    %21 = vector.extract_strided_slice %13 {offsets = [0, 0, 0, 2], sizes = [2, 16, 16, 2], strides = [1, 1, 1, 1]} : vector<2x16x16x128xbf16> to vector<2x16x16x2xbf16>
    %cst_11 = arith.constant 0.000000e+00 : bf16
    %22 = vector.broadcast %cst_11 : bf16 to vector<2x2x16x2xbf16>
    %23 = vector.extract_strided_slice %21 {offsets = [0, 0, 0, 0], sizes = [2, 14, 16, 2], strides = [1, 1, 1, 1]} : vector<2x16x16x2xbf16> to vector<2x14x16x2xbf16>
    %24 = tpu.concatenate %22, %23 in 1 : vector<2x2x16x2xbf16>, vector<2x14x16x2xbf16> -> vector<2x16x16x2xbf16>
    %cst_12 = arith.constant 0.000000e+00 : bf16
    %25 = vector.broadcast %cst_12 : bf16 to vector<2x2x16x2xbf16>
    %26 = vector.extract_strided_slice %21 {offsets = [0, 2, 0, 0], sizes = [2, 14, 16, 2], strides = [1, 1, 1, 1]} : vector<2x16x16x2xbf16> to vector<2x14x16x2xbf16>
    %27 = tpu.concatenate %26, %25 in 1 : vector<2x14x16x2xbf16>, vector<2x2x16x2xbf16> -> vector<2x16x16x2xbf16>
    %28 = vector.extract_strided_slice %13 {offsets = [0, 0, 0, 4], sizes = [2, 16, 16, 2], strides = [1, 1, 1, 1]} : vector<2x16x16x128xbf16> to vector<2x16x16x2xbf16>
    %cst_13 = arith.constant 0.000000e+00 : bf16
    %29 = vector.broadcast %cst_13 : bf16 to vector<2x3x16x2xbf16>
    %30 = vector.extract_strided_slice %28 {offsets = [0, 0, 0, 0], sizes = [2, 13, 16, 2], strides = [1, 1, 1, 1]} : vector<2x16x16x2xbf16> to vector<2x13x16x2xbf16>
    %31 = tpu.concatenate %29, %30 in 1 : vector<2x3x16x2xbf16>, vector<2x13x16x2xbf16> -> vector<2x16x16x2xbf16>
    %cst_14 = arith.constant 0.000000e+00 : bf16
    %32 = vector.broadcast %cst_14 : bf16 to vector<2x3x16x2xbf16>
    %33 = vector.extract_strided_slice %28 {offsets = [0, 3, 0, 0], sizes = [2, 13, 16, 2], strides = [1, 1, 1, 1]} : vector<2x16x16x2xbf16> to vector<2x13x16x2xbf16>
    %34 = tpu.concatenate %33, %32 in 1 : vector<2x13x16x2xbf16>, vector<2x3x16x2xbf16> -> vector<2x16x16x2xbf16>
    %35 = vector.extract_strided_slice %13 {offsets = [0, 0, 0, 6], sizes = [2, 16, 16, 2], strides = [1, 1, 1, 1]} : vector<2x16x16x128xbf16> to vector<2x16x16x2xbf16>
    %cst_15 = arith.constant 0.000000e+00 : bf16
    %36 = vector.broadcast %cst_15 : bf16 to vector<2x4x16x2xbf16>
    %37 = vector.extract_strided_slice %35 {offsets = [0, 0, 0, 0], sizes = [2, 12, 16, 2], strides = [1, 1, 1, 1]} : vector<2x16x16x2xbf16> to vector<2x12x16x2xbf16>
    %38 = tpu.concatenate %36, %37 in 1 : vector<2x4x16x2xbf16>, vector<2x12x16x2xbf16> -> vector<2x16x16x2xbf16>
    %cst_16 = arith.constant 0.000000e+00 : bf16
    %39 = vector.broadcast %cst_16 : bf16 to vector<2x4x16x2xbf16>
    %40 = vector.extract_strided_slice %35 {offsets = [0, 4, 0, 0], sizes = [2, 12, 16, 2], strides = [1, 1, 1, 1]} : vector<2x16x16x2xbf16> to vector<2x12x16x2xbf16>
    %41 = tpu.concatenate %40, %39 in 1 : vector<2x12x16x2xbf16>, vector<2x4x16x2xbf16> -> vector<2x16x16x2xbf16>
    %42 = tpu.concatenate %17, %14, %20, %24, %21, %27, %31, %28, %34, %38, %35, %41 in 3 : vector<2x16x16x2xbf16>, vector<2x16x16x2xbf16>, vector<2x16x16x2xbf16>, vector<2x16x16x2xbf16>, vector<2x16x16x2xbf16>, vector<2x16x16x2xbf16>, vector<2x16x16x2xbf16>, vector<2x16x16x2xbf16>, vector<2x16x16x2xbf16>, vector<2x16x16x2xbf16>, vector<2x16x16x2xbf16>, vector<2x16x16x2xbf16> -> vector<2x16x16x24xbf16>
    %43 = vector.shape_cast %42 : vector<2x16x16x24xbf16> to vector<512x24xbf16>
    %cst_17 = arith.constant dense<0.000000e+00> : vector<512x8xf32>
    %44 = tpu.matmul %43, %3, %cst_17 {dimension_numbers = #tpu.dot_dimension_numbers<[1], [0], [0], [1], [0, 0, 1, 1], [], []>} : vector<512x24xbf16>, vector<24x8xbf16>, vector<512x8xf32> -> vector<512x8xf32>
    %45 = vector.shape_cast %44 : vector<512x8xf32> to vector<2x16x16x8xf32>
    %46 = vector.extract_strided_slice %12 {offsets = [0, 0, 0, 8], sizes = [2, 16, 16, 2], strides = [1, 1, 1, 1]} : vector<2x16x16x128xf32> to vector<2x16x16x2xf32>
    %cst_18 = arith.constant 0xFF800000 : f32
    %47 = vector.broadcast %cst_18 : f32 to vector<2x1x16x2xf32>
    %48 = vector.extract_strided_slice %46 {offsets = [0, 1, 0, 0], sizes = [2, 15, 16, 2], strides = [1, 1, 1, 1]} : vector<2x16x16x2xf32> to vector<2x15x16x2xf32>
    %49 = tpu.concatenate %48, %47 in 1 : vector<2x15x16x2xf32>, vector<2x1x16x2xf32> -> vector<2x16x16x2xf32>
    %50 = vector.extract_strided_slice %46 {offsets = [0, 0, 0, 0], sizes = [2, 15, 16, 2], strides = [1, 1, 1, 1]} : vector<2x16x16x2xf32> to vector<2x15x16x2xf32>
    %51 = tpu.concatenate %47, %50 in 1 : vector<2x1x16x2xf32>, vector<2x15x16x2xf32> -> vector<2x16x16x2xf32>
    %52 = arith.maximumf %46, %49 : vector<2x16x16x2xf32>
    %53 = arith.maximumf %52, %51 : vector<2x16x16x2xf32>
    %54 = vector.extract_strided_slice %10 {offsets = [0, 0, 0, 10], sizes = [2, 16, 16, 2], strides = [1, 1, 1, 1]} : vector<2x16x16x128xf32> to vector<2x16x16x2xf32>
    %55 = tpu.concatenate %45, %53, %54 in 3 : vector<2x16x16x8xf32>, vector<2x16x16x2xf32>, vector<2x16x16x2xf32> -> vector<2x16x16x12xf32>
    %56 = vector.shape_cast %55 : vector<2x16x16x12xf32> to vector<512x12xf32>
    %cst_19 = arith.constant dense<0.000000e+00> : vector<12xf32>
    %57 = vector.multi_reduction <add>, %56, %cst_19 [0] : vector<512x12xf32> to vector<12xf32>
    %58 = vector.shape_cast %57 : vector<12xf32> to vector<1x12xf32>
    %59 = arith.mulf %56, %56 : vector<512x12xf32>
    %cst_20 = arith.constant dense<0.000000e+00> : vector<12xf32>
    %60 = vector.multi_reduction <add>, %59, %cst_20 [0] : vector<512x12xf32> to vector<12xf32>
    %61 = vector.shape_cast %60 : vector<12xf32> to vector<1x12xf32>
    %62 = tpu.concatenate %58, %61 in 0 : vector<1x12xf32>, vector<1x12xf32> -> vector<2x12xf32>
    %63 = vector.shape_cast %62 : vector<2x12xf32> to vector<1x2x12xf32>
    %c0_21 = arith.constant 0 : index
    %c0_22 = arith.constant 0 : index
    %c0_23 = arith.constant 0 : index
    %64 = vector.load %arg5[%c0_21, %c0_22, %c0_23] : memref<1x2x12xf32, #tpu.memory_space<vmem>>, vector<1x2x12xf32>
    tpu.vector_store %arg5[%c0_21, %c0_22, %c0_23], %63 {strides = array<i32>} : memref<1x2x12xf32, #tpu.memory_space<vmem>>, vector<1x2x12xf32>,
    return
  }
  func.func @transform_0(%arg0: i32) -> (i32, i32, i32, i32) {
    %c0_i32 = arith.constant 0 : i32
    %c0_i32_0 = arith.constant 0 : i32
    %c0_i32_1 = arith.constant 0 : i32
    %c0_i32_2 = arith.constant 0 : i32
    return %arg0, %c0_i32, %c0_i32_0, %c0_i32_1 : i32, i32, i32, i32
  }
  func.func @transform_1(%arg0: i32) -> (i32, i32) {
    %c0_i32 = arith.constant 0 : i32
    %c0_i32_0 = arith.constant 0 : i32
    %c0_i32_1 = arith.constant 0 : i32
    return %c0_i32, %c0_i32_0 : i32, i32
  }
  func.func @transform_2(%arg0: i32) -> (i32, i32) {
    %c0_i32 = arith.constant 0 : i32
    %c0_i32_0 = arith.constant 0 : i32
    %c0_i32_1 = arith.constant 0 : i32
    return %c0_i32, %c0_i32_0 : i32, i32
  }
  func.func @transform_3(%arg0: i32) -> (i32, i32) {
    %c0_i32 = arith.constant 0 : i32
    %c0_i32_0 = arith.constant 0 : i32
    %c0_i32_1 = arith.constant 0 : i32
    return %c0_i32, %c0_i32_0 : i32, i32
  }
  func.func @transform_4(%arg0: i32) -> (i32, i32, i32) {
    %c0_i32 = arith.constant 0 : i32
    %c0_i32_0 = arith.constant 0 : i32
    %c0_i32_1 = arith.constant 0 : i32
    return %arg0, %c0_i32, %c0_i32_0 : i32, i32, i32
  }
}

module attributes {stable_mosaic.version = 11 : i64} {
  func.func @branch_apply_kernel(%arg0: i32, %arg1: memref<2x16x16x128xbf16, #tpu.memory_space<vmem>>, %arg2: memref<1x128xf32, #tpu.memory_space<vmem>>, %arg3: memref<1x128xf32, #tpu.memory_space<vmem>>, %arg4: memref<24x8xbf16, #tpu.memory_space<vmem>>, %arg5: memref<1x12xf32, #tpu.memory_space<vmem>>, %arg6: memref<1x12xf32, #tpu.memory_space<vmem>>, %arg7: memref<2x12x256xf32, #tpu.memory_space<vmem>>) attributes {dimension_semantics = [#tpu.dimension_semantics<parallel>], iteration_bounds = array<i64: 1>, scalar_prefetch = 0 : i64, scratch_operands = 0 : i64, tpu.core_type = #tpu.core_type<tc>, window_params = [{transform_indices = @transform_0, window_bounds = array<i64: 2, 16, 16, 128>}, {pipeline_mode = #tpu.pipeline_mode<synchronous>, transform_indices = @transform_1, window_bounds = array<i64: 1, 128>}, {pipeline_mode = #tpu.pipeline_mode<synchronous>, transform_indices = @transform_2, window_bounds = array<i64: 1, 128>}, {pipeline_mode = #tpu.pipeline_mode<synchronous>, transform_indices = @transform_3, window_bounds = array<i64: 24, 8>}, {pipeline_mode = #tpu.pipeline_mode<synchronous>, transform_indices = @transform_4, window_bounds = array<i64: 1, 12>}, {pipeline_mode = #tpu.pipeline_mode<synchronous>, transform_indices = @transform_5, window_bounds = array<i64: 1, 12>}, {transform_indices = @transform_6, window_bounds = array<i64: 2, 12, 256>}]} {
    %c0 = arith.constant 0 : index
    %c0_0 = arith.constant 0 : index
    %c0_1 = arith.constant 0 : index
    %c0_2 = arith.constant 0 : index
    %0 = vector.load %arg1[%c0, %c0_0, %c0_1, %c0_2] : memref<2x16x16x128xbf16, #tpu.memory_space<vmem>>, vector<2x16x16x128xbf16>
    %c0_3 = arith.constant 0 : index
    %c0_4 = arith.constant 0 : index
    %1 = vector.load %arg2[%c0_3, %c0_4] : memref<1x128xf32, #tpu.memory_space<vmem>>, vector<1x128xf32>
    %c0_5 = arith.constant 0 : index
    %c0_6 = arith.constant 0 : index
    %2 = vector.load %arg3[%c0_5, %c0_6] : memref<1x128xf32, #tpu.memory_space<vmem>>, vector<1x128xf32>
    %c0_7 = arith.constant 0 : index
    %c0_8 = arith.constant 0 : index
    %3 = vector.load %arg4[%c0_7, %c0_8] : memref<24x8xbf16, #tpu.memory_space<vmem>>, vector<24x8xbf16>
    %4 = arith.extf %0 : vector<2x16x16x128xbf16> to vector<2x16x16x128xf32>
    %5 = vector.shape_cast %1 : vector<1x128xf32> to vector<1x1x1x128xf32>
    %6 = vector.broadcast %5 : vector<1x1x1x128xf32> to vector<2x16x16x128xf32>
    %7 = arith.mulf %4, %6 : vector<2x16x16x128xf32>
    %8 = vector.shape_cast %2 : vector<1x128xf32> to vector<1x1x1x128xf32>
    %9 = vector.broadcast %8 : vector<1x1x1x128xf32> to vector<2x16x16x128xf32>
    %10 = arith.addf %7, %9 : vector<2x16x16x128xf32>
    %cst = arith.constant 0.000000e+00 : f32
    %11 = vector.broadcast %cst : f32 to vector<2x16x16x128xf32>
    %12 = arith.maximumf %10, %11 : vector<2x16x16x128xf32>
    %13 = arith.truncf %12 : vector<2x16x16x128xf32> to vector<2x16x16x128xbf16>
    %14 = vector.extract_strided_slice %13 {offsets = [0, 0, 0, 0], sizes = [2, 16, 16, 2], strides = [1, 1, 1, 1]} : vector<2x16x16x128xbf16> to vector<2x16x16x2xbf16>
    %cst_9 = arith.constant 0.000000e+00 : bf16
    %15 = vector.broadcast %cst_9 : bf16 to vector<2x1x16x2xbf16>
    %16 = vector.extract_strided_slice %14 {offsets = [0, 0, 0, 0], sizes = [2, 15, 16, 2], strides = [1, 1, 1, 1]} : vector<2x16x16x2xbf16> to vector<2x15x16x2xbf16>
    %17 = tpu.concatenate %15, %16 in 1 : vector<2x1x16x2xbf16>, vector<2x15x16x2xbf16> -> vector<2x16x16x2xbf16>
    %cst_10 = arith.constant 0.000000e+00 : bf16
    %18 = vector.broadcast %cst_10 : bf16 to vector<2x1x16x2xbf16>
    %19 = vector.extract_strided_slice %14 {offsets = [0, 1, 0, 0], sizes = [2, 15, 16, 2], strides = [1, 1, 1, 1]} : vector<2x16x16x2xbf16> to vector<2x15x16x2xbf16>
    %20 = tpu.concatenate %19, %18 in 1 : vector<2x15x16x2xbf16>, vector<2x1x16x2xbf16> -> vector<2x16x16x2xbf16>
    %21 = vector.extract_strided_slice %13 {offsets = [0, 0, 0, 2], sizes = [2, 16, 16, 2], strides = [1, 1, 1, 1]} : vector<2x16x16x128xbf16> to vector<2x16x16x2xbf16>
    %cst_11 = arith.constant 0.000000e+00 : bf16
    %22 = vector.broadcast %cst_11 : bf16 to vector<2x2x16x2xbf16>
    %23 = vector.extract_strided_slice %21 {offsets = [0, 0, 0, 0], sizes = [2, 14, 16, 2], strides = [1, 1, 1, 1]} : vector<2x16x16x2xbf16> to vector<2x14x16x2xbf16>
    %24 = tpu.concatenate %22, %23 in 1 : vector<2x2x16x2xbf16>, vector<2x14x16x2xbf16> -> vector<2x16x16x2xbf16>
    %cst_12 = arith.constant 0.000000e+00 : bf16
    %25 = vector.broadcast %cst_12 : bf16 to vector<2x2x16x2xbf16>
    %26 = vector.extract_strided_slice %21 {offsets = [0, 2, 0, 0], sizes = [2, 14, 16, 2], strides = [1, 1, 1, 1]} : vector<2x16x16x2xbf16> to vector<2x14x16x2xbf16>
    %27 = tpu.concatenate %26, %25 in 1 : vector<2x14x16x2xbf16>, vector<2x2x16x2xbf16> -> vector<2x16x16x2xbf16>
    %28 = vector.extract_strided_slice %13 {offsets = [0, 0, 0, 4], sizes = [2, 16, 16, 2], strides = [1, 1, 1, 1]} : vector<2x16x16x128xbf16> to vector<2x16x16x2xbf16>
    %cst_13 = arith.constant 0.000000e+00 : bf16
    %29 = vector.broadcast %cst_13 : bf16 to vector<2x3x16x2xbf16>
    %30 = vector.extract_strided_slice %28 {offsets = [0, 0, 0, 0], sizes = [2, 13, 16, 2], strides = [1, 1, 1, 1]} : vector<2x16x16x2xbf16> to vector<2x13x16x2xbf16>
    %31 = tpu.concatenate %29, %30 in 1 : vector<2x3x16x2xbf16>, vector<2x13x16x2xbf16> -> vector<2x16x16x2xbf16>
    %cst_14 = arith.constant 0.000000e+00 : bf16
    %32 = vector.broadcast %cst_14 : bf16 to vector<2x3x16x2xbf16>
    %33 = vector.extract_strided_slice %28 {offsets = [0, 3, 0, 0], sizes = [2, 13, 16, 2], strides = [1, 1, 1, 1]} : vector<2x16x16x2xbf16> to vector<2x13x16x2xbf16>
    %34 = tpu.concatenate %33, %32 in 1 : vector<2x13x16x2xbf16>, vector<2x3x16x2xbf16> -> vector<2x16x16x2xbf16>
    %35 = vector.extract_strided_slice %13 {offsets = [0, 0, 0, 6], sizes = [2, 16, 16, 2], strides = [1, 1, 1, 1]} : vector<2x16x16x128xbf16> to vector<2x16x16x2xbf16>
    %cst_15 = arith.constant 0.000000e+00 : bf16
    %36 = vector.broadcast %cst_15 : bf16 to vector<2x4x16x2xbf16>
    %37 = vector.extract_strided_slice %35 {offsets = [0, 0, 0, 0], sizes = [2, 12, 16, 2], strides = [1, 1, 1, 1]} : vector<2x16x16x2xbf16> to vector<2x12x16x2xbf16>
    %38 = tpu.concatenate %36, %37 in 1 : vector<2x4x16x2xbf16>, vector<2x12x16x2xbf16> -> vector<2x16x16x2xbf16>
    %cst_16 = arith.constant 0.000000e+00 : bf16
    %39 = vector.broadcast %cst_16 : bf16 to vector<2x4x16x2xbf16>
    %40 = vector.extract_strided_slice %35 {offsets = [0, 4, 0, 0], sizes = [2, 12, 16, 2], strides = [1, 1, 1, 1]} : vector<2x16x16x2xbf16> to vector<2x12x16x2xbf16>
    %41 = tpu.concatenate %40, %39 in 1 : vector<2x12x16x2xbf16>, vector<2x4x16x2xbf16> -> vector<2x16x16x2xbf16>
    %42 = tpu.concatenate %17, %14, %20, %24, %21, %27, %31, %28, %34, %38, %35, %41 in 3 : vector<2x16x16x2xbf16>, vector<2x16x16x2xbf16>, vector<2x16x16x2xbf16>, vector<2x16x16x2xbf16>, vector<2x16x16x2xbf16>, vector<2x16x16x2xbf16>, vector<2x16x16x2xbf16>, vector<2x16x16x2xbf16>, vector<2x16x16x2xbf16>, vector<2x16x16x2xbf16>, vector<2x16x16x2xbf16>, vector<2x16x16x2xbf16> -> vector<2x16x16x24xbf16>
    %43 = vector.shape_cast %42 : vector<2x16x16x24xbf16> to vector<512x24xbf16>
    %cst_17 = arith.constant dense<0.000000e+00> : vector<512x8xf32>
    %44 = tpu.matmul %43, %3, %cst_17 {dimension_numbers = #tpu.dot_dimension_numbers<[1], [0], [0], [1], [0, 0, 1, 1], [], []>} : vector<512x24xbf16>, vector<24x8xbf16>, vector<512x8xf32> -> vector<512x8xf32>
    %45 = vector.shape_cast %44 : vector<512x8xf32> to vector<2x16x16x8xf32>
    %46 = vector.extract_strided_slice %12 {offsets = [0, 0, 0, 8], sizes = [2, 16, 16, 2], strides = [1, 1, 1, 1]} : vector<2x16x16x128xf32> to vector<2x16x16x2xf32>
    %cst_18 = arith.constant 0xFF800000 : f32
    %47 = vector.broadcast %cst_18 : f32 to vector<2x1x16x2xf32>
    %48 = vector.extract_strided_slice %46 {offsets = [0, 1, 0, 0], sizes = [2, 15, 16, 2], strides = [1, 1, 1, 1]} : vector<2x16x16x2xf32> to vector<2x15x16x2xf32>
    %49 = tpu.concatenate %48, %47 in 1 : vector<2x15x16x2xf32>, vector<2x1x16x2xf32> -> vector<2x16x16x2xf32>
    %50 = vector.extract_strided_slice %46 {offsets = [0, 0, 0, 0], sizes = [2, 15, 16, 2], strides = [1, 1, 1, 1]} : vector<2x16x16x2xf32> to vector<2x15x16x2xf32>
    %51 = tpu.concatenate %47, %50 in 1 : vector<2x1x16x2xf32>, vector<2x15x16x2xf32> -> vector<2x16x16x2xf32>
    %52 = arith.maximumf %46, %49 : vector<2x16x16x2xf32>
    %53 = arith.maximumf %52, %51 : vector<2x16x16x2xf32>
    %54 = vector.extract_strided_slice %10 {offsets = [0, 0, 0, 10], sizes = [2, 16, 16, 2], strides = [1, 1, 1, 1]} : vector<2x16x16x128xf32> to vector<2x16x16x2xf32>
    %55 = tpu.concatenate %45, %53, %54 in 3 : vector<2x16x16x8xf32>, vector<2x16x16x2xf32>, vector<2x16x16x2xf32> -> vector<2x16x16x12xf32>
    %c0_19 = arith.constant 0 : index
    %c0_20 = arith.constant 0 : index
    %56 = vector.load %arg5[%c0_19, %c0_20] : memref<1x12xf32, #tpu.memory_space<vmem>>, vector<1x12xf32>
    %57 = vector.shape_cast %56 : vector<1x12xf32> to vector<1x1x1x12xf32>
    %58 = vector.broadcast %57 : vector<1x1x1x12xf32> to vector<2x16x16x12xf32>
    %59 = arith.mulf %55, %58 : vector<2x16x16x12xf32>
    %c0_21 = arith.constant 0 : index
    %c0_22 = arith.constant 0 : index
    %60 = vector.load %arg6[%c0_21, %c0_22] : memref<1x12xf32, #tpu.memory_space<vmem>>, vector<1x12xf32>
    %61 = vector.shape_cast %60 : vector<1x12xf32> to vector<1x1x1x12xf32>
    %62 = vector.broadcast %61 : vector<1x1x1x12xf32> to vector<2x16x16x12xf32>
    %63 = arith.addf %59, %62 : vector<2x16x16x12xf32>
    %64 = vector.shape_cast %63 : vector<2x16x16x12xf32> to vector<2x256x12xf32>
    %cst_23 = arith.constant 0.000000e+00 : f32
    %65 = vector.broadcast %cst_23 : f32 to vector<2x256x4xf32>
    %66 = tpu.concatenate %64, %65 in 2 : vector<2x256x12xf32>, vector<2x256x4xf32> -> vector<2x256x16xf32>
    %67 = vector.extract_strided_slice %66 {offsets = [0, 0, 0], sizes = [1, 256, 16], strides = [1, 1, 1]} : vector<2x256x16xf32> to vector<1x256x16xf32>
    %68 = vector.shape_cast %67 : vector<1x256x16xf32> to vector<256x16xf32>
    %69 = tpu.transpose %68, [1, 0] : vector<256x16xf32> -> vector<16x256xf32>
    %70 = vector.extract_strided_slice %69 {offsets = [0, 0], sizes = [12, 256], strides = [1, 1]} : vector<16x256xf32> to vector<12x256xf32>
    %c0_24 = arith.constant 0 : index
    %c0_25 = arith.constant 0 : index
    %c0_26 = arith.constant 0 : index
    %71 = vector.load %arg7[%c0_24, %c0_25, %c0_26] : memref<2x12x256xf32, #tpu.memory_space<vmem>>, vector<1x12x256xf32>
    %72 = vector.shape_cast %71 : vector<1x12x256xf32> to vector<12x256xf32>
    %73 = vector.shape_cast %70 : vector<12x256xf32> to vector<1x12x256xf32>
    tpu.vector_store %arg7[%c0_24, %c0_25, %c0_26], %73 {strides = array<i32>} : memref<2x12x256xf32, #tpu.memory_space<vmem>>, vector<1x12x256xf32>,
    %74 = vector.extract_strided_slice %66 {offsets = [1, 0, 0], sizes = [1, 256, 16], strides = [1, 1, 1]} : vector<2x256x16xf32> to vector<1x256x16xf32>
    %75 = vector.shape_cast %74 : vector<1x256x16xf32> to vector<256x16xf32>
    %76 = tpu.transpose %75, [1, 0] : vector<256x16xf32> -> vector<16x256xf32>
    %77 = vector.extract_strided_slice %76 {offsets = [0, 0], sizes = [12, 256], strides = [1, 1]} : vector<16x256xf32> to vector<12x256xf32>
    %c1 = arith.constant 1 : index
    %c0_27 = arith.constant 0 : index
    %c0_28 = arith.constant 0 : index
    %78 = vector.load %arg7[%c1, %c0_27, %c0_28] : memref<2x12x256xf32, #tpu.memory_space<vmem>>, vector<1x12x256xf32>
    %79 = vector.shape_cast %78 : vector<1x12x256xf32> to vector<12x256xf32>
    %80 = vector.shape_cast %77 : vector<12x256xf32> to vector<1x12x256xf32>
    tpu.vector_store %arg7[%c1, %c0_27, %c0_28], %80 {strides = array<i32>} : memref<2x12x256xf32, #tpu.memory_space<vmem>>, vector<1x12x256xf32>,
    return
  }
  func.func @transform_0(%arg0: i32) -> (i32, i32, i32, i32) {
    %c0_i32 = arith.constant 0 : i32
    %c0_i32_0 = arith.constant 0 : i32
    %c0_i32_1 = arith.constant 0 : i32
    %c0_i32_2 = arith.constant 0 : i32
    return %arg0, %c0_i32, %c0_i32_0, %c0_i32_1 : i32, i32, i32, i32
  }
  func.func @transform_1(%arg0: i32) -> (i32, i32) {
    %c0_i32 = arith.constant 0 : i32
    %c0_i32_0 = arith.constant 0 : i32
    %c0_i32_1 = arith.constant 0 : i32
    return %c0_i32, %c0_i32_0 : i32, i32
  }
  func.func @transform_2(%arg0: i32) -> (i32, i32) {
    %c0_i32 = arith.constant 0 : i32
    %c0_i32_0 = arith.constant 0 : i32
    %c0_i32_1 = arith.constant 0 : i32
    return %c0_i32, %c0_i32_0 : i32, i32
  }
  func.func @transform_3(%arg0: i32) -> (i32, i32) {
    %c0_i32 = arith.constant 0 : i32
    %c0_i32_0 = arith.constant 0 : i32
    %c0_i32_1 = arith.constant 0 : i32
    return %c0_i32, %c0_i32_0 : i32, i32
  }
  func.func @transform_4(%arg0: i32) -> (i32, i32) {
    %c0_i32 = arith.constant 0 : i32
    %c0_i32_0 = arith.constant 0 : i32
    %c0_i32_1 = arith.constant 0 : i32
    return %c0_i32, %c0_i32_0 : i32, i32
  }
  func.func @transform_5(%arg0: i32) -> (i32, i32) {
    %c0_i32 = arith.constant 0 : i32
    %c0_i32_0 = arith.constant 0 : i32
    %c0_i32_1 = arith.constant 0 : i32
    return %c0_i32, %c0_i32_0 : i32, i32
  }
  func.func @transform_6(%arg0: i32) -> (i32, i32, i32) {
    %c0_i32 = arith.constant 0 : i32
    %c0_i32_0 = arith.constant 0 : i32
    %c0_i32_1 = arith.constant 0 : i32
    return %arg0, %c0_i32, %c0_i32_0 : i32, i32, i32
  }
}

</mosaic_0001>

<llo_original>
// kernel: multiscale_temporal_conv.3
$region0: #{multiscale_temporal_conv.3}
  #allocation0 [shape = 'u32[]', space=smem, size = 0x4, offset = 0x4, fixed_abs, tag = 'smem constant byte address 0x4 - core index']
  #allocation1 [shape = 'u32[144,128]{1,0:T(1,128)}', space=vmem, size = 0x12000, scoped, tag = 'internal scratch']
  %s0 = inlined_call_operand.vmem [shape: bf16[2,16,16,4], index: 0, kind: input, shape index: {}]
  %s1 = inlined_call_operand.vmem [shape: bf16[4,128], index: 1, kind: input, shape index: {}]
  %s2 = inlined_call_operand.vmem [shape: bf16[2,16,16,128], index: 2, kind: output, shape index: {0}]
  %s3 = inlined_call_operand.vmem [shape: f32[1,2,128], index: 3, kind: output, shape index: {1}]
  %4 = xla_tuple %s2, %s3
  %s5 = sld [smem:[#allocation0]]
  $region26: #{multiscale_temporal_conv.3} parent=0
    _
  %s7 = ssub.s32 1, %s5
  %s8 = scalar_select 0, %s7, %s5
  // Predicated region
  $region2: #{multiscale_temporal_conv.3} parent=0 // pred_check
    _
  $region3: #{multiscale_temporal_conv.3} parent=0 // pred_check_branch
    %10 = sbr.rel (0) target = $region5
  $region4: #{multiscale_temporal_conv.3} parent=0 // pred_region
    _
  $region5: #{multiscale_temporal_conv.3} parent=0 // pred_fallthru
    _
  // Predicated region
  $region6: #{multiscale_temporal_conv.3} parent=0 // pred_check
    _
  $region7: #{multiscale_temporal_conv.3} parent=0 // pred_check_branch
    %12 = sbr.rel (0) target = $region9
  $region8: #{multiscale_temporal_conv.3} parent=0 // pred_region
    _
  $region9: #{multiscale_temporal_conv.3} parent=0 // pred_fallthru
    _
  %v14 = vld [vmem:[%s0] sm:$0xf]
  %v15 = vld [vmem:[%s0 + $0x4] sm:$0xf]
  %v16 = vld [vmem:[%s0 + $0x8] sm:$0xf]
  %v17 = vld [vmem:[%s0 + $0xc] sm:$0xf]
  %v18 = vld [vmem:[%s0 + $0x10] sm:$0xf]
  %v19 = vld [vmem:[%s0 + $0x14] sm:$0xf]
  %v20 = vld [vmem:[%s0 + $0x18] sm:$0xf]
  %v21 = vld [vmem:[%s0 + $0x1c] sm:$0xf]
  %v22 = vld [vmem:[%s0 + $0x20] sm:$0xf]
  %v23 = vld [vmem:[%s0 + $0x24] sm:$0xf]
  %v24 = vld [vmem:[%s0 + $0x28] sm:$0xf]
  %v25 = vld [vmem:[%s0 + $0x2c] sm:$0xf]
  %v26 = vld [vmem:[%s0 + $0x30] sm:$0xf]
  %v27 = vld [vmem:[%s0 + $0x34] sm:$0xf]
  %v28 = vld [vmem:[%s0 + $0x38] sm:$0xf]
  %v29 = vld [vmem:[%s0 + $0x3c] sm:$0xf]
  %v30 = vld [vmem:[%s0 + $0x40] sm:$0xf]
  %v31 = vld [vmem:[%s0 + $0x44] sm:$0xf]
  %v32 = vld [vmem:[%s0 + $0x48] sm:$0xf]
  %v33 = vld [vmem:[%s0 + $0x4c] sm:$0xf]
  %v34 = vld [vmem:[%s0 + $0x50] sm:$0xf]
  %v35 = vld [vmem:[%s0 + $0x54] sm:$0xf]
  %v36 = vld [vmem:[%s0 + $0x58] sm:$0xf]
  %v37 = vld [vmem:[%s0 + $0x5c] sm:$0xf]
  %v38 = vld [vmem:[%s0 + $0x60] sm:$0xf]
  %v39 = vld [vmem:[%s0 + $0x64] sm:$0xf]
  %v40 = vld [vmem:[%s0 + $0x68] sm:$0xf]
  %v41 = vld [vmem:[%s0 + $0x6c] sm:$0xf]
  %v42 = vld [vmem:[%s0 + $0x70] sm:$0xf]
  %v43 = vld [vmem:[%s0 + $0x74] sm:$0xf]
  %v44 = vld [vmem:[%s0 + $0x78] sm:$0xf]
  %v45 = vld [vmem:[%s0 + $0x7c] sm:$0xf]
  %v46 = vld [vmem:[%s0 + $0x80] sm:$0xf]
  %v47 = vld [vmem:[%s0 + $0x84] sm:$0xf]
  %v48 = vld [vmem:[%s0 + $0x88] sm:$0xf]
  %v49 = vld [vmem:[%s0 + $0x8c] sm:$0xf]
  %v50 = vld [vmem:[%s0 + $0x90] sm:$0xf]
  %v51 = vld [vmem:[%s0 + $0x94] sm:$0xf]
  %v52 = vld [vmem:[%s0 + $0x98] sm:$0xf]
  %v53 = vld [vmem:[%s0 + $0x9c] sm:$0xf]
  %v54 = vld [vmem:[%s0 + $0xa0] sm:$0xf]
  %v55 = vld [vmem:[%s0 + $0xa4] sm:$0xf]
  %v56 = vld [vmem:[%s0 + $0xa8] sm:$0xf]
  %v57 = vld [vmem:[%s0 + $0xac] sm:$0xf]
  %v58 = vld [vmem:[%s0 + $0xb0] sm:$0xf]
  %v59 = vld [vmem:[%s0 + $0xb4] sm:$0xf]
  %v60 = vld [vmem:[%s0 + $0xb8] sm:$0xf]
  %v61 = vld [vmem:[%s0 + $0xbc] sm:$0xf]
  %v62 = vld [vmem:[%s0 + $0xc0] sm:$0xf]
  %v63 = vld [vmem:[%s0 + $0xc4] sm:$0xf]
  %v64 = vld [vmem:[%s0 + $0xc8] sm:$0xf]
  %v65 = vld [vmem:[%s0 + $0xcc] sm:$0xf]
  %v66 = vld [vmem:[%s0 + $0xd0] sm:$0xf]
  %v67 = vld [vmem:[%s0 + $0xd4] sm:$0xf]
  %v68 = vld [vmem:[%s0 + $0xd8] sm:$0xf]
  %v69 = vld [vmem:[%s0 + $0xdc] sm:$0xf]
  %v70 = vld [vmem:[%s0 + $0xe0] sm:$0xf]
  %v71 = vld [vmem:[%s0 + $0xe4] sm:$0xf]
  %v72 = vld [vmem:[%s0 + $0xe8] sm:$0xf]
  %v73 = vld [vmem:[%s0 + $0xec] sm:$0xf]
  %v74 = vld [vmem:[%s0 + $0xf0] sm:$0xf]
  %v75 = vld [vmem:[%s0 + $0xf4] sm:$0xf]
  %v76 = vld [vmem:[%s0 + $0xf8] sm:$0xf]
  %v77 = vld [vmem:[%s0 + $0xfc] sm:$0xf]
  %v78 = vld [vmem:[%s1] sm:$0x3]
  %v143 = vunpack.c.l.b16 %v14
  %v144 = vunpack.c.l.b16 %v15
  %v145 = vunpack.c.l.b16 %v16
  %v146 = vunpack.c.l.b16 %v17
  %v147 = vunpack.c.l.b16 %v18
  %v148 = vunpack.c.l.b16 %v19
  %v149 = vunpack.c.l.b16 %v20
  %v150 = vunpack.c.l.b16 %v21
  %v151 = vunpack.c.l.b16 %v22
  %v152 = vunpack.c.l.b16 %v23
  %v153 = vunpack.c.l.b16 %v24
  %v154 = vunpack.c.l.b16 %v25
  %v155 = vunpack.c.l.b16 %v26
  %v156 = vunpack.c.l.b16 %v27
  %v157 = vunpack.c.l.b16 %v28
  %v158 = vunpack.c.l.b16 %v29
  %v159 = vunpack.c.l.b16 %v30
  %v160 = vunpack.c.l.b16 %v31
  %v161 = vunpack.c.l.b16 %v32
  %v162 = vunpack.c.l.b16 %v33
  %v163 = vunpack.c.l.b16 %v34
  %v164 = vunpack.c.l.b16 %v35
  %v165 = vunpack.c.l.b16 %v36
  %v166 = vunpack.c.l.b16 %v37
  %v167 = vunpack.c.l.b16 %v38
  %v168 = vunpack.c.l.b16 %v39
  %v169 = vunpack.c.l.b16 %v40
  %v170 = vunpack.c.l.b16 %v41
  %v171 = vunpack.c.l.b16 %v42
  %v172 = vunpack.c.l.b16 %v43
  %v173 = vunpack.c.l.b16 %v44
  %v174 = vunpack.c.l.b16 %v45
  %v175 = vunpack.c.l.b16 %v46
  %v176 = vunpack.c.l.b16 %v47
  %v177 = vunpack.c.l.b16 %v48
  %v178 = vunpack.c.l.b16 %v49
  %v179 = vunpack.c.l.b16 %v50
  %v180 = vunpack.c.l.b16 %v51
  %v181 = vunpack.c.l.b16 %v52
  %v182 = vunpack.c.l.b16 %v53
  %v183 = vunpack.c.l.b16 %v54
  %v184 = vunpack.c.l.b16 %v55
  %v185 = vunpack.c.l.b16 %v56
  %v186 = vunpack.c.l.b16 %v57
  %v187 = vunpack.c.l.b16 %v58
  %v188 = vunpack.c.l.b16 %v59
  %v189 = vunpack.c.l.b16 %v60
  %v190 = vunpack.c.l.b16 %v61
  %v191 = vunpack.c.l.b16 %v62
  %v192 = vunpack.c.l.b16 %v63
  %v193 = vunpack.c.l.b16 %v64
  %v194 = vunpack.c.l.b16 %v65
  %v195 = vunpack.c.l.b16 %v66
  %v196 = vunpack.c.l.b16 %v67
  %v197 = vunpack.c.l.b16 %v68
  %v198 = vunpack.c.l.b16 %v69
  %v199 = vunpack.c.l.b16 %v70
  %v200 = vunpack.c.l.b16 %v71
  %v201 = vunpack.c.l.b16 %v72
  %v202 = vunpack.c.l.b16 %v73
  %v203 = vunpack.c.l.b16 %v74
  %v204 = vunpack.c.l.b16 %v75
  %v205 = vunpack.c.l.b16 %v76
  %v206 = vunpack.c.l.b16 %v77
  %v207 = vpack.c.b16 %v144, %v143
  %v208 = vpack.c.b16 %v146, %v145
  %v209 = vpack.c.b16 %v148, %v147
  %v210 = vpack.c.b16 %v150, %v149
  %v211 = vpack.c.b16 %v152, %v151
  %v212 = vpack.c.b16 %v154, %v153
  %v213 = vpack.c.b16 %v156, %v155
  %v214 = vpack.c.b16 %v158, %v157
  %v215 = vpack.c.b16 %v160, %v159
  %v216 = vpack.c.b16 %v162, %v161
  %v217 = vpack.c.b16 %v164, %v163
  %v218 = vpack.c.b16 %v166, %v165
  %v219 = vpack.c.b16 %v168, %v167
  %v220 = vpack.c.b16 %v170, %v169
  %v221 = vpack.c.b16 %v172, %v171
  %v222 = vpack.c.b16 %v174, %v173
  %v223 = vpack.c.b16 %v176, %v175
  %v224 = vpack.c.b16 %v178, %v177
  %v225 = vpack.c.b16 %v180, %v179
  %v226 = vpack.c.b16 %v182, %v181
  %v227 = vpack.c.b16 %v184, %v183
  %v228 = vpack.c.b16 %v186, %v185
  %v229 = vpack.c.b16 %v188, %v187
  %v230 = vpack.c.b16 %v190, %v189
  %v231 = vpack.c.b16 %v192, %v191
  %v232 = vpack.c.b16 %v194, %v193
  %v233 = vpack.c.b16 %v196, %v195
  %v234 = vpack.c.b16 %v198, %v197
  %v235 = vpack.c.b16 %v200, %v199
  %v236 = vpack.c.b16 %v202, %v201
  %v237 = vpack.c.b16 %v204, %v203
  %v238 = vpack.c.b16 %v206, %v205
  %vm239 = vcmask 31744
  %v241 = vsel %vm239, %v207, 0
  %v244 = vsel %vm239, %v208, 0
  %v247 = vsel %vm239, %v209, 0
  %v250 = vsel %vm239, %v210, 0
  %v253 = vsel %vm239, %v211, 0
  %v256 = vsel %vm239, %v212, 0
  %v259 = vsel %vm239, %v213, 0
  %v262 = vsel %vm239, %v214, 0
  %v265 = vsel %vm239, %v215, 0
  %v268 = vsel %vm239, %v216, 0
  %v271 = vsel %vm239, %v217, 0
  %v274 = vsel %vm239, %v218, 0
  %v277 = vsel %vm239, %v219, 0
  %v280 = vsel %vm239, %v220, 0
  %v283 = vsel %vm239, %v221, 0
  %v286 = vsel %vm239, %v222, 0
  %v289 = vsel %vm239, %v223, 0
  %v292 = vsel %vm239, %v224, 0
  %v295 = vsel %vm239, %v225, 0
  %v298 = vsel %vm239, %v226, 0
  %v301 = vsel %vm239, %v227, 0
  %v304 = vsel %vm239, %v228, 0
  %v307 = vsel %vm239, %v229, 0
  %v310 = vsel %vm239, %v230, 0
  %v313 = vsel %vm239, %v231, 0
  %v316 = vsel %vm239, %v232, 0
  %v319 = vsel %vm239, %v233, 0
  %v322 = vsel %vm239, %v234, 0
  %v325 = vsel %vm239, %v235, 0
  %v328 = vsel %vm239, %v236, 0
  %v331 = vsel %vm239, %v237, 0
  %v334 = vsel %vm239, %v238, 0
  %vm336 = vcmask 1041408
  %v338 = vsel %vm336, %v78, 0
  %340 = vmatprep.subr.bf16.mxu0 0
  %341 = vmatpush1.bf16.msra.mxu0 %v338
  %342 = vmatprep.subr.bf16.mxu0 0
  %343 = vmatpush1.bf16.msra.mxu0 0
  %344 = vmatprep.subr.bf16.mxu0 0
  %345 = vmatpush1.bf16.msra.mxu0 0
  %346 = vmatprep.subr.bf16.mxu0 0
  %347 = vmatpush1.bf16.msra.mxu0 0
  %348 = vmatprep.subr.bf16.mxu0 0
  %349 = vmatpush1.bf16.msra.mxu0 0
  %350 = vmatprep.subr.bf16.mxu0 0
  %351 = vmatpush1.bf16.msra.mxu0 0
  %352 = vmatprep.subr.bf16.mxu0 0
  %353 = vmatpush1.bf16.msra.mxu0 0
  %354 = vmatprep.subr.bf16.mxu0 0
  %355 = vmatpush1.bf16.msra.mxu0 0
  %356 = vmatprep.subr.bf16.mxu0 0
  %357 = vmatpush1.bf16.msra.mxu0 0
  %358 = vmatprep.subr.bf16.mxu0 0
  %359 = vmatpush1.bf16.msra.mxu0 0
  %360 = vmatprep.subr.bf16.mxu0 0
  %361 = vmatpush1.bf16.msra.mxu0 0
  %362 = vmatprep.subr.bf16.mxu0 0
  %363 = vmatpush1.bf16.msra.mxu0 0
  %364 = vmatprep.subr.bf16.mxu0 0
  %365 = vmatpush1.bf16.msra.mxu0 0
  %366 = vmatprep.subr.bf16.mxu0 0
  %367 = vmatpush1.bf16.msra.mxu0 0
  %368 = vmatprep.subr.bf16.mxu0 0
  %369 = vmatpush1.bf16.msra.mxu0 0
  %370 = vmatprep.subr.bf16.mxu0 0
  %371 = vmatpush1.bf16.msra.mxu0 0
  %372 = vmatprep.mubr.bf16.mxu0 0
  %373 = vmatmul.mubr.bf16.gmra.mrb[0].mxu0 %v241
  %v374 = vpop.f32.mrb[0].mxu0
  %v375 = vadd.f32 0.0, %v374
  %v376 = vpop.f32.mrb[0].mxu0
  %v377 = vpop.f32.mrb[0].mxu0
  %v378 = vadd.f32 0.0, %v377
  %v379 = vpop.f32.mrb[0].mxu0
  %380 = vmatprep.mubr.bf16.mxu0 0
  %381 = vmatmul.mubr.bf16.gmra.mrb[0].mxu0 %v244
  %v382 = vpop.f32.mrb[0].mxu0
  %v383 = vadd.f32 0.0, %v382
  %v384 = vpop.f32.mrb[0].mxu0
  %v385 = vpop.f32.mrb[0].mxu0
  %v386 = vadd.f32 0.0, %v385
  %v387 = vpop.f32.mrb[0].mxu0
  %388 = vmatprep.mubr.bf16.mxu0 0
  %389 = vmatmul.mubr.bf16.gmra.mrb[0].mxu0 %v247
  %v390 = vpop.f32.mrb[0].mxu0
  %v391 = vadd.f32 0.0, %v390
  %v392 = vpop.f32.mrb[0].mxu0
  %v393 = vpop.f32.mrb[0].mxu0
  %v394 = vadd.f32 0.0, %v393
  %v395 = vpop.f32.mrb[0].mxu0
  %396 = vmatprep.mubr.bf16.mxu0 0
  %397 = vmatmul.mubr.bf16.gmra.mrb[0].mxu0 %v250
  %v398 = vpop.f32.mrb[0].mxu0
  %v399 = vadd.f32 0.0, %v398
  %v400 = vpop.f32.mrb[0].mxu0
  %v401 = vpop.f32.mrb[0].mxu0
  %v402 = vadd.f32 0.0, %v401
  %v403 = vpop.f32.mrb[0].mxu0
  %404 = vmatprep.mubr.bf16.mxu0 0
  %405 = vmatmul.mubr.bf16.gmra.mrb[0].mxu0 %v253
  %v406 = vpop.f32.mrb[0].mxu0
  %v407 = vadd.f32 0.0, %v406
  %v408 = vpop.f32.mrb[0].mxu0
  %v409 = vpop.f32.mrb[0].mxu0
  %v410 = vadd.f32 0.0, %v409
  %v411 = vpop.f32.mrb[0].mxu0
  %412 = vmatprep.mubr.bf16.mxu0 0
  %413 = vmatmul.mubr.bf16.gmra.mrb[0].mxu0 %v256
  %v414 = vpop.f32.mrb[0].mxu0
  %v415 = vadd.f32 0.0, %v414
  %v416 = vpop.f32.mrb[0].mxu0
  %v417 = vpop.f32.mrb[0].mxu0
  %v418 = vadd.f32 0.0, %v417
  %v419 = vpop.f32.mrb[0].mxu0
  %420 = vmatprep.mubr.bf16.mxu0 0
  %421 = vmatmul.mubr.bf16.gmra.mrb[0].mxu0 %v259
  %v422 = vpop.f32.mrb[0].mxu0
  %v423 = vadd.f32 0.0, %v422
  %v424 = vpop.f32.mrb[0].mxu0
  %v425 = vpop.f32.mrb[0].mxu0
  %v426 = vadd.f32 0.0, %v425
  %v427 = vpop.f32.mrb[0].mxu0
  %428 = vmatprep.mubr.bf16.mxu0 0
  %429 = vmatmul.mubr.bf16.gmra.mrb[0].mxu0 %v262
  %v430 = vpop.f32.mrb[0].mxu0
  %v431 = vadd.f32 0.0, %v430
  %v432 = vpop.f32.mrb[0].mxu0
  %v433 = vpop.f32.mrb[0].mxu0
  %v434 = vadd.f32 0.0, %v433
  %v435 = vpop.f32.mrb[0].mxu0
  %436 = vmatprep.mubr.bf16.mxu0 0
  %437 = vmatmul.mubr.bf16.gmra.mrb[0].mxu0 %v265
  %v438 = vpop.f32.mrb[0].mxu0
  %v439 = vadd.f32 0.0, %v438
  %v440 = vpop.f32.mrb[0].mxu0
  %v441 = vpop.f32.mrb[0].mxu0
  %v442 = vadd.f32 0.0, %v441
  %v443 = vpop.f32.mrb[0].mxu0
  %444 = vmatprep.mubr.bf16.mxu0 0
  %445 = vmatmul.mubr.bf16.gmra.mrb[0].mxu0 %v268
  %v446 = vpop.f32.mrb[0].mxu0
  %v447 = vadd.f32 0.0, %v446
  %v448 = vpop.f32.mrb[0].mxu0
  %v449 = vpop.f32.mrb[0].mxu0
  %v450 = vadd.f32 0.0, %v449
  %v451 = vpop.f32.mrb[0].mxu0
  %452 = vmatprep.mubr.bf16.mxu0 0
  %453 = vmatmul.mubr.bf16.gmra.mrb[0].mxu0 %v271
  %v454 = vpop.f32.mrb[0].mxu0
  %v455 = vadd.f32 0.0, %v454
  %v456 = vpop.f32.mrb[0].mxu0
  %v457 = vpop.f32.mrb[0].mxu0
  %v458 = vadd.f32 0.0, %v457
  %v459 = vpop.f32.mrb[0].mxu0
  %460 = vmatprep.mubr.bf16.mxu0 0
  %461 = vmatmul.mubr.bf16.gmra.mrb[0].mxu0 %v274
  %v462 = vpop.f32.mrb[0].mxu0
  %v463 = vadd.f32 0.0, %v462
  %v464 = vpop.f32.mrb[0].mxu0
  %v465 = vpop.f32.mrb[0].mxu0
  %v466 = vadd.f32 0.0, %v465
  %v467 = vpop.f32.mrb[0].mxu0
  %468 = vmatprep.mubr.bf16.mxu0 0
  %469 = vmatmul.mubr.bf16.gmra.mrb[0].mxu0 %v277
  %v470 = vpop.f32.mrb[0].mxu0
  %v471 = vadd.f32 0.0, %v470
  %v472 = vpop.f32.mrb[0].mxu0
  %v473 = vpop.f32.mrb[0].mxu0
  %v474 = vadd.f32 0.0, %v473
  %v475 = vpop.f32.mrb[0].mxu0
  %476 = vmatprep.mubr.bf16.mxu0 0
  %477 = vmatmul.mubr.bf16.gmra.mrb[0].mxu0 %v280
  %v478 = vpop.f32.mrb[0].mxu0
  %v479 = vadd.f32 0.0, %v478
  %v480 = vpop.f32.mrb[0].mxu0
  %v481 = vpop.f32.mrb[0].mxu0
  %v482 = vadd.f32 0.0, %v481
  %v483 = vpop.f32.mrb[0].mxu0
  %484 = vmatprep.mubr.bf16.mxu0 0
  %485 = vmatmul.mubr.bf16.gmra.mrb[0].mxu0 %v283
  %v486 = vpop.f32.mrb[0].mxu0
  %v487 = vadd.f32 0.0, %v486
  %v488 = vpop.f32.mrb[0].mxu0
  %v489 = vpop.f32.mrb[0].mxu0
  %v490 = vadd.f32 0.0, %v489
  %v491 = vpop.f32.mrb[0].mxu0
  %492 = vmatprep.mubr.bf16.mxu0 0
  %493 = vmatmul.mubr.bf16.gmra.mrb[0].mxu0 %v286
  %v494 = vpop.f32.mrb[0].mxu0
  %v495 = vadd.f32 0.0, %v494
  %v496 = vpop.f32.mrb[0].mxu0
  %v497 = vpop.f32.mrb[0].mxu0
  %v498 = vadd.f32 0.0, %v497
  %v499 = vpop.f32.mrb[0].mxu0
  %500 = vmatprep.mubr.bf16.mxu0 0
  %501 = vmatmul.mubr.bf16.gmra.mrb[0].mxu0 %v289
  %v502 = vpop.f32.mrb[0].mxu0
  %v503 = vadd.f32 0.0, %v502
  %v504 = vpop.f32.mrb[0].mxu0
  %v505 = vpop.f32.mrb[0].mxu0
  %v506 = vadd.f32 0.0, %v505
  %v507 = vpop.f32.mrb[0].mxu0
  %508 = vmatprep.mubr.bf16.mxu0 0
  %509 = vmatmul.mubr.bf16.gmra.mrb[0].mxu0 %v292
  %v510 = vpop.f32.mrb[0].mxu0
  %v511 = vadd.f32 0.0, %v510
  %v512 = vpop.f32.mrb[0].mxu0
  %v513 = vpop.f32.mrb[0].mxu0
  %v514 = vadd.f32 0.0, %v513
  %v515 = vpop.f32.mrb[0].mxu0
  %516 = vmatprep.mubr.bf16.mxu0 0
  %517 = vmatmul.mubr.bf16.gmra.mrb[0].mxu0 %v295
  %v518 = vpop.f32.mrb[0].mxu0
  %v519 = vadd.f32 0.0, %v518
  %v520 = vpop.f32.mrb[0].mxu0
  %v521 = vpop.f32.mrb[0].mxu0
  %v522 = vadd.f32 0.0, %v521
  %v523 = vpop.f32.mrb[0].mxu0
  %524 = vmatprep.mubr.bf16.mxu0 0
  %525 = vmatmul.mubr.bf16.gmra.mrb[0].mxu0 %v298
  %v526 = vpop.f32.mrb[0].mxu0
  %v527 = vadd.f32 0.0, %v526
  %v528 = vpop.f32.mrb[0].mxu0
  %v529 = vpop.f32.mrb[0].mxu0
  %v530 = vadd.f32 0.0, %v529
  %v531 = vpop.f32.mrb[0].mxu0
  %532 = vmatprep.mubr.bf16.mxu0 0
  %533 = vmatmul.mubr.bf16.gmra.mrb[0].mxu0 %v301
  %v534 = vpop.f32.mrb[0].mxu0
  %v535 = vadd.f32 0.0, %v534
  %v536 = vpop.f32.mrb[0].mxu0
  %v537 = vpop.f32.mrb[0].mxu0
  %v538 = vadd.f32 0.0, %v537
  %v539 = vpop.f32.mrb[0].mxu0
  %540 = vmatprep.mubr.bf16.mxu0 0
  %541 = vmatmul.mubr.bf16.gmra.mrb[0].mxu0 %v304
  %v542 = vpop.f32.mrb[0].mxu0
  %v543 = vadd.f32 0.0, %v542
  %v544 = vpop.f32.mrb[0].mxu0
  %v545 = vpop.f32.mrb[0].mxu0
  %v546 = vadd.f32 0.0, %v545
  %v547 = vpop.f32.mrb[0].mxu0
  %548 = vmatprep.mubr.bf16.mxu0 0
  %549 = vmatmul.mubr.bf16.gmra.mrb[0].mxu0 %v307
  %v550 = vpop.f32.mrb[0].mxu0
  %v551 = vadd.f32 0.0, %v550
  %v552 = vpop.f32.mrb[0].mxu0
  %v553 = vpop.f32.mrb[0].mxu0
  %v554 = vadd.f32 0.0, %v553
  %v555 = vpop.f32.mrb[0].mxu0
  %556 = vmatprep.mubr.bf16.mxu0 0
  %557 = vmatmul.mubr.bf16.gmra.mrb[0].mxu0 %v310
  %v558 = vpop.f32.mrb[0].mxu0
  %v559 = vadd.f32 0.0, %v558
  %v560 = vpop.f32.mrb[0].mxu0
  %v561 = vpop.f32.mrb[0].mxu0
  %v562 = vadd.f32 0.0, %v561
  %v563 = vpop.f32.mrb[0].mxu0
  %564 = vmatprep.mubr.bf16.mxu0 0
  %565 = vmatmul.mubr.bf16.gmra.mrb[0].mxu0 %v313
  %v566 = vpop.f32.mrb[0].mxu0
  %v567 = vadd.f32 0.0, %v566
  %v568 = vpop.f32.mrb[0].mxu0
  %v569 = vpop.f32.mrb[0].mxu0
  %v570 = vadd.f32 0.0, %v569
  %v571 = vpop.f32.mrb[0].mxu0
  %572 = vmatprep.mubr.bf16.mxu0 0
  %573 = vmatmul.mubr.bf16.gmra.mrb[0].mxu0 %v316
  %v574 = vpop.f32.mrb[0].mxu0
  %v575 = vadd.f32 0.0, %v574
  %v576 = vpop.f32.mrb[0].mxu0
  %v577 = vpop.f32.mrb[0].mxu0
  %v578 = vadd.f32 0.0, %v577
  %v579 = vpop.f32.mrb[0].mxu0
  %580 = vmatprep.mubr.bf16.mxu0 0
  %581 = vmatmul.mubr.bf16.gmra.mrb[0].mxu0 %v319
  %v582 = vpop.f32.mrb[0].mxu0
  %v583 = vadd.f32 0.0, %v582
  %v584 = vpop.f32.mrb[0].mxu0
  %v585 = vpop.f32.mrb[0].mxu0
  %v586 = vadd.f32 0.0, %v585
  %v587 = vpop.f32.mrb[0].mxu0
  %588 = vmatprep.mubr.bf16.mxu0 0
  %589 = vmatmul.mubr.bf16.gmra.mrb[0].mxu0 %v322
  %v590 = vpop.f32.mrb[0].mxu0
  %v591 = vadd.f32 0.0, %v590
  %v592 = vpop.f32.mrb[0].mxu0
  %v593 = vpop.f32.mrb[0].mxu0
  %v594 = vadd.f32 0.0, %v593
  %v595 = vpop.f32.mrb[0].mxu0
  %596 = vmatprep.mubr.bf16.mxu0 0
  %597 = vmatmul.mubr.bf16.gmra.mrb[0].mxu0 %v325
  %v598 = vpop.f32.mrb[0].mxu0
  %v599 = vadd.f32 0.0, %v598
  %v600 = vpop.f32.mrb[0].mxu0
  %v601 = vpop.f32.mrb[0].mxu0
  %v602 = vadd.f32 0.0, %v601
  %v603 = vpop.f32.mrb[0].mxu0
  %604 = vmatprep.mubr.bf16.mxu0 0
  %605 = vmatmul.mubr.bf16.gmra.mrb[0].mxu0 %v328
  %v606 = vpop.f32.mrb[0].mxu0
  %v607 = vadd.f32 0.0, %v606
  %v608 = vpop.f32.mrb[0].mxu0
  %v609 = vpop.f32.mrb[0].mxu0
  %v610 = vadd.f32 0.0, %v609
  %v611 = vpop.f32.mrb[0].mxu0
  %612 = vmatprep.mubr.bf16.mxu0 0
  %613 = vmatmul.mubr.bf16.gmra.mrb[0].mxu0 %v331
  %v614 = vpop.f32.mrb[0].mxu0
  %v615 = vadd.f32 0.0, %v614
  %v616 = vpop.f32.mrb[0].mxu0
  %v617 = vpop.f32.mrb[0].mxu0
  %v618 = vadd.f32 0.0, %v617
  %v619 = vpop.f32.mrb[0].mxu0
  %620 = vmatprep.mubr.bf16.mxu0 0
  %621 = vmatmul.mubr.bf16.gmra.mrb[0].mxu0 %v334
  %v622 = vpop.f32.mrb[0].mxu0
  %v623 = vadd.f32 0.0, %v622
  %v624 = vpop.f32.mrb[0].mxu0
  %v625 = vpop.f32.mrb[0].mxu0
  %v626 = vadd.f32 0.0, %v625
  %v627 = vpop.f32.mrb[0].mxu0
  %628 = vdwg.mxu0
  %v629 = vpack.c.bf16 %v378, %v375
  %v630 = vpack.c.bf16 %v386, %v383
  %v631 = vpack.c.bf16 %v394, %v391
  %v632 = vpack.c.bf16 %v402, %v399
  %v633 = vpack.c.bf16 %v410, %v407
  %v634 = vpack.c.bf16 %v418, %v415
  %v635 = vpack.c.bf16 %v426, %v423
  %v636 = vpack.c.bf16 %v434, %v431
  %v637 = vpack.c.bf16 %v442, %v439
  %v638 = vpack.c.bf16 %v450, %v447
  %v639 = vpack.c.bf16 %v458, %v455
  %v640 = vpack.c.bf16 %v466, %v463
  %v641 = vpack.c.bf16 %v474, %v471
  %v642 = vpack.c.bf16 %v482, %v479
  %v643 = vpack.c.bf16 %v490, %v487
  %v644 = vpack.c.bf16 %v498, %v495
  %v645 = vpack.c.bf16 %v506, %v503
  %v646 = vpack.c.bf16 %v514, %v511
  %v647 = vpack.c.bf16 %v522, %v519
  %v648 = vpack.c.bf16 %v530, %v527
  %v649 = vpack.c.bf16 %v538, %v535
  %v650 = vpack.c.bf16 %v546, %v543
  %v651 = vpack.c.bf16 %v554, %v551
  %v652 = vpack.c.bf16 %v562, %v559
  %v653 = vpack.c.bf16 %v570, %v567
  %v654 = vpack.c.bf16 %v578, %v575
  %v655 = vpack.c.bf16 %v586, %v583
  %v656 = vpack.c.bf16 %v594, %v591
  %v657 = vpack.c.bf16 %v602, %v599
  %v658 = vpack.c.bf16 %v610, %v607
  %v659 = vpack.c.bf16 %v618, %v615
  %v660 = vpack.c.bf16 %v626, %v623
  %v693 = vunpack.c.l.b16 %v629
  %v694 = vunpack.c.h.b16 %v629
  %v695 = vunpack.c.l.b16 %v630
  %v696 = vunpack.c.h.b16 %v630
  %v697 = vunpack.c.l.b16 %v631
  %v698 = vunpack.c.h.b16 %v631
  %v699 = vunpack.c.l.b16 %v632
  %v700 = vunpack.c.h.b16 %v632
  %v701 = vunpack.c.l.b16 %v633
  %v702 = vunpack.c.h.b16 %v633
  %v703 = vunpack.c.l.b16 %v634
  %v704 = vunpack.c.h.b16 %v634
  %v705 = vunpack.c.l.b16 %v635
  %v706 = vunpack.c.h.b16 %v635
  %v707 = vunpack.c.l.b16 %v636
  %v708 = vunpack.c.h.b16 %v636
  %v709 = vunpack.c.l.b16 %v637
  %v710 = vunpack.c.h.b16 %v637
  %v711 = vunpack.c.l.b16 %v638
  %v712 = vunpack.c.h.b16 %v638
  %v713 = vunpack.c.l.b16 %v639
  %v714 = vunpack.c.h.b16 %v639
  %v715 = vunpack.c.l.b16 %v640
  %v716 = vunpack.c.h.b16 %v640
  %v717 = vunpack.c.l.b16 %v641
  %v718 = vunpack.c.h.b16 %v641
  %v719 = vunpack.c.l.b16 %v642
  %v720 = vunpack.c.h.b16 %v642
  %v721 = vunpack.c.l.b16 %v643
  %v722 = vunpack.c.h.b16 %v643
  %v723 = vunpack.c.l.b16 %v644
  %v724 = vunpack.c.h.b16 %v644
  %v725 = vunpack.c.l.b16 %v645
  %v726 = vunpack.c.h.b16 %v645
  %v727 = vunpack.c.l.b16 %v646
  %v728 = vunpack.c.h.b16 %v646
  %v729 = vunpack.c.l.b16 %v647
  %v730 = vunpack.c.h.b16 %v647
  %v731 = vunpack.c.l.b16 %v648
  %v732 = vunpack.c.h.b16 %v648
  %v733 = vunpack.c.l.b16 %v649
  %v734 = vunpack.c.h.b16 %v649
  %v735 = vunpack.c.l.b16 %v650
  %v736 = vunpack.c.h.b16 %v650
  %v737 = vunpack.c.l.b16 %v651
  %v738 = vunpack.c.h.b16 %v651
  %v739 = vunpack.c.l.b16 %v652
  %v740 = vunpack.c.h.b16 %v652
  %v741 = vunpack.c.l.b16 %v653
  %v742 = vunpack.c.h.b16 %v653
  %v743 = vunpack.c.l.b16 %v654
  %v744 = vunpack.c.h.b16 %v654
  %v745 = vunpack.c.l.b16 %v655
  %v746 = vunpack.c.h.b16 %v655
  %v747 = vunpack.c.l.b16 %v656
  %v748 = vunpack.c.h.b16 %v656
  %v749 = vunpack.c.l.b16 %v657
  %v750 = vunpack.c.h.b16 %v657
  %v751 = vunpack.c.l.b16 %v658
  %v752 = vunpack.c.h.b16 %v658
  %v753 = vunpack.c.l.b16 %v659
  %v754 = vunpack.c.h.b16 %v659
  %v755 = vunpack.c.l.b16 %v660
  %v756 = vunpack.c.h.b16 %v660
  %v757 = vpack.c.b16 %v693, %v693
  %v758 = vpack.c.b16 %v694, %v694
  %v759 = vpack.c.b16 %v695, %v695
  %v760 = vpack.c.b16 %v696, %v696
  %v761 = vpack.c.b16 %v697, %v697
  %v762 = vpack.c.b16 %v698, %v698
  %v763 = vpack.c.b16 %v699, %v699
  %v764 = vpack.c.b16 %v700, %v700
  %v765 = vpack.c.b16 %v701, %v701
  %v766 = vpack.c.b16 %v702, %v702
  %v767 = vpack.c.b16 %v703, %v703
  %v768 = vpack.c.b16 %v704, %v704
  %v769 = vpack.c.b16 %v705, %v705
  %v770 = vpack.c.b16 %v706, %v706
  %v771 = vpack.c.b16 %v707, %v707
  %v772 = vpack.c.b16 %v708, %v708
  %v773 = vpack.c.b16 %v709, %v709
  %v774 = vpack.c.b16 %v710, %v710
  %v775 = vpack.c.b16 %v711, %v711
  %v776 = vpack.c.b16 %v712, %v712
  %v777 = vpack.c.b16 %v713, %v713
  %v778 = vpack.c.b16 %v714, %v714
  %v779 = vpack.c.b16 %v715, %v715
  %v780 = vpack.c.b16 %v716, %v716
  %v781 = vpack.c.b16 %v717, %v717
  %v782 = vpack.c.b16 %v718, %v718
  %v783 = vpack.c.b16 %v719, %v719
  %v784 = vpack.c.b16 %v720, %v720
  %v785 = vpack.c.b16 %v721, %v721
  %v786 = vpack.c.b16 %v722, %v722
  %v787 = vpack.c.b16 %v723, %v723
  %v788 = vpack.c.b16 %v724, %v724
  %v789 = vpack.c.b16 %v725, %v725
  %v790 = vpack.c.b16 %v726, %v726
  %v791 = vpack.c.b16 %v727, %v727
  %v792 = vpack.c.b16 %v728, %v728
  %v793 = vpack.c.b16 %v729, %v729
  %v794 = vpack.c.b16 %v730, %v730
  %v795 = vpack.c.b16 %v731, %v731
  %v796 = vpack.c.b16 %v732, %v732
  %v797 = vpack.c.b16 %v733, %v733
  %v798 = vpack.c.b16 %v734, %v734
  %v799 = vpack.c.b16 %v735, %v735
  %v800 = vpack.c.b16 %v736, %v736
  %v801 = vpack.c.b16 %v737, %v737
  %v802 = vpack.c.b16 %v738, %v738
  %v803 = vpack.c.b16 %v739, %v739
  %v804 = vpack.c.b16 %v740, %v740
  %v805 = vpack.c.b16 %v741, %v741
  %v806 = vpack.c.b16 %v742, %v742
  %v807 = vpack.c.b16 %v743, %v743
  %v808 = vpack.c.b16 %v744, %v744
  %v809 = vpack.c.b16 %v745, %v745
  %v810 = vpack.c.b16 %v746, %v746
  %v811 = vpack.c.b16 %v747, %v747
  %v812 = vpack.c.b16 %v748, %v748
  %v813 = vpack.c.b16 %v749, %v749
  %v814 = vpack.c.b16 %v750, %v750
  %v815 = vpack.c.b16 %v751, %v751
  %v816 = vpack.c.b16 %v752, %v752
  %v817 = vpack.c.b16 %v753, %v753
  %v818 = vpack.c.b16 %v754, %v754
  %v819 = vpack.c.b16 %v755, %v755
  %v820 = vpack.c.b16 %v756, %v756
  %885 = vst [vmem:[%s2] sm:$0xf] %v757
  %886 = vst [vmem:[%s2 + $0x4] sm:$0xf] %v758
  %887 = vst [vmem:[%s2 + $0x8] sm:$0xf] %v759
  %888 = vst [vmem:[%s2 + $0xc] sm:$0xf] %v760
  %889 = vst [vmem:[%s2 + $0x10] sm:$0xf] %v761
  %890 = vst [vmem:[%s2 + $0x14] sm:$0xf] %v762
  %891 = vst [vmem:[%s2 + $0x18] sm:$0xf] %v763
  %892 = vst [vmem:[%s2 + $0x1c] sm:$0xf] %v764
  %893 = vst [vmem:[%s2 + $0x20] sm:$0xf] %v765
  %894 = vst [vmem:[%s2 + $0x24] sm:$0xf] %v766
  %895 = vst [vmem:[%s2 + $0x28] sm:$0xf] %v767
  %896 = vst [vmem:[%s2 + $0x2c] sm:$0xf] %v768
  %897 = vst [vmem:[%s2 + $0x30] sm:$0xf] %v769
  %898 = vst [vmem:[%s2 + $0x34] sm:$0xf] %v770
  %899 = vst [vmem:[%s2 + $0x38] sm:$0xf] %v771
  %900 = vst [vmem:[%s2 + $0x3c] sm:$0xf] %v772
  %901 = vst [vmem:[%s2 + $0x40] sm:$0xf] %v773
  %902 = vst [vmem:[%s2 + $0x44] sm:$0xf] %v774
  %903 = vst [vmem:[%s2 + $0x48] sm:$0xf] %v775
  %904 = vst [vmem:[%s2 + $0x4c] sm:$0xf] %v776
  %905 = vst [vmem:[%s2 + $0x50] sm:$0xf] %v777
  %906 = vst [vmem:[%s2 + $0x54] sm:$0xf] %v778
  %907 = vst [vmem:[%s2 + $0x58] sm:$0xf] %v779
  %908 = vst [vmem:[%s2 + $0x5c] sm:$0xf] %v780
  %909 = vst [vmem:[%s2 + $0x60] sm:$0xf] %v781
  %910 = vst [vmem:[%s2 + $0x64] sm:$0xf] %v782
  %911 = vst [vmem:[%s2 + $0x68] sm:$0xf] %v783
  %912 = vst [vmem:[%s2 + $0x6c] sm:$0xf] %v784
  %913 = vst [vmem:[%s2 + $0x70] sm:$0xf] %v785
  %914 = vst [vmem:[%s2 + $0x74] sm:$0xf] %v786
  %915 = vst [vmem:[%s2 + $0x78] sm:$0xf] %v787
  %916 = vst [vmem:[%s2 + $0x7c] sm:$0xf] %v788
  %917 = vst [vmem:[%s2 + $0x80] sm:$0xf] %v789
  %918 = vst [vmem:[%s2 + $0x84] sm:$0xf] %v790
  %919 = vst [vmem:[%s2 + $0x88] sm:$0xf] %v791
  %920 = vst [vmem:[%s2 + $0x8c] sm:$0xf] %v792
  %921 = vst [vmem:[%s2 + $0x90] sm:$0xf] %v793
  %922 = vst [vmem:[%s2 + $0x94] sm:$0xf] %v794
  %923 = vst [vmem:[%s2 + $0x98] sm:$0xf] %v795
  %924 = vst [vmem:[%s2 + $0x9c] sm:$0xf] %v796
  %925 = vst [vmem:[%s2 + $0xa0] sm:$0xf] %v797
  %926 = vst [vmem:[%s2 + $0xa4] sm:$0xf] %v798
  %927 = vst [vmem:[%s2 + $0xa8] sm:$0xf] %v799
  %928 = vst [vmem:[%s2 + $0xac] sm:$0xf] %v800
  %929 = vst [vmem:[%s2 + $0xb0] sm:$0xf] %v801
  %930 = vst [vmem:[%s2 + $0xb4] sm:$0xf] %v802
  %931 = vst [vmem:[%s2 + $0xb8] sm:$0xf] %v803
  %932 = vst [vmem:[%s2 + $0xbc] sm:$0xf] %v804
  %933 = vst [vmem:[%s2 + $0xc0] sm:$0xf] %v805
  %934 = vst [vmem:[%s2 + $0xc4] sm:$0xf] %v806
  %935 = vst [vmem:[%s2 + $0xc8] sm:$0xf] %v807
  %936 = vst [vmem:[%s2 + $0xcc] sm:$0xf] %v808
  %937 = vst [vmem:[%s2 + $0xd0] sm:$0xf] %v809
  %938 = vst [vmem:[%s2 + $0xd4] sm:$0xf] %v810
  %939 = vst [vmem:[%s2 + $0xd8] sm:$0xf] %v811
  %940 = vst [vmem:[%s2 + $0xdc] sm:$0xf] %v812
  %941 = vst [vmem:[%s2 + $0xe0] sm:$0xf] %v813
  %942 = vst [vmem:[%s2 + $0xe4] sm:$0xf] %v814
  %943 = vst [vmem:[%s2 + $0xe8] sm:$0xf] %v815
  %944 = vst [vmem:[%s2 + $0xec] sm:$0xf] %v816
  %945 = vst [vmem:[%s2 + $0xf0] sm:$0xf] %v817
  %946 = vst [vmem:[%s2 + $0xf4] sm:$0xf] %v818
  %947 = vst [vmem:[%s2 + $0xf8] sm:$0xf] %v819
  %948 = vst [vmem:[%s2 + $0xfc] sm:$0xf] %v820
  %v949 = vadd.f32 %v375, %v378
  %v950 = vadd.f32 %v949, %v383
  %v951 = vadd.f32 %v950, %v386
  %v952 = vadd.f32 %v951, %v391
  %v953 = vadd.f32 %v952, %v394
  %v954 = vadd.f32 %v953, %v399
  %v955 = vadd.f32 %v954, %v402
  %v956 = vadd.f32 %v955, %v407
  %v957 = vadd.f32 %v956, %v410
  %v958 = vadd.f32 %v957, %v415
  %v959 = vadd.f32 %v958, %v418
  %v960 = vadd.f32 %v959, %v423
  %v961 = vadd.f32 %v960, %v426
  %v962 = vadd.f32 %v961, %v431
  %v963 = vadd.f32 %v962, %v434
  %v964 = vadd.f32 %v963, %v439
  %v965 = vadd.f32 %v964, %v442
  %v966 = vadd.f32 %v965, %v447
  %v967 = vadd.f32 %v966, %v450
  %v968 = vadd.f32 %v967, %v455
  %v969 = vadd.f32 %v968, %v458
  %v970 = vadd.f32 %v969, %v463
  %v971 = vadd.f32 %v970, %v466
  %v972 = vadd.f32 %v971, %v471
  %v973 = vadd.f32 %v972, %v474
  %v974 = vadd.f32 %v973, %v479
  %v975 = vadd.f32 %v974, %v482
  %v976 = vadd.f32 %v975, %v487
  %v977 = vadd.f32 %v976, %v490
  %v978 = vadd.f32 %v977, %v495
  %v979 = vadd.f32 %v978, %v498
  %v980 = vadd.f32 %v979, %v503
  %v981 = vadd.f32 %v980, %v506
  %v982 = vadd.f32 %v981, %v511
  %v983 = vadd.f32 %v982, %v514
  %v984 = vadd.f32 %v983, %v519
  %v985 = vadd.f32 %v984, %v522
  %v986 = vadd.f32 %v985, %v527
  %v987 = vadd.f32 %v986, %v530
  %v988 = vadd.f32 %v987, %v535
  %v989 = vadd.f32 %v988, %v538
  %v990 = vadd.f32 %v989, %v543
  %v991 = vadd.f32 %v990, %v546
  %v992 = vadd.f32 %v991, %v551
  %v993 = vadd.f32 %v992, %v554
  %v994 = vadd.f32 %v993, %v559
  %v995 = vadd.f32 %v994, %v562
  %v996 = vadd.f32 %v995, %v567
  %v997 = vadd.f32 %v996, %v570
  %v998 = vadd.f32 %v997, %v575
  %v999 = vadd.f32 %v998, %v578
  %v1000 = vadd.f32 %v999, %v583
  %v1001 = vadd.f32 %v1000, %v586
  %v1002 = vadd.f32 %v1001, %v591
  %v1003 = vadd.f32 %v1002, %v594
  %v1004 = vadd.f32 %v1003, %v599
  %v1005 = vadd.f32 %v1004, %v602
  %v1006 = vadd.f32 %v1005, %v607
  %v1007 = vadd.f32 %v1006, %v610
  %v1008 = vadd.f32 %v1007, %v615
  %v1009 = vadd.f32 %v1008, %v618
  %v1010 = vadd.f32 %v1009, %v623
  %v1011 = vadd.f32 %v1010, %v626
  %v1012 = vrot.slane %v1011, 4
  %v1013 = vadd.f32 %v1011, %v1012
  %v1014 = vrot.slane %v1013, 2
  %v1015 = vadd.f32 %v1013, %v1014
  %v1016 = vrot.slane %v1015, 1
  %v1017 = vadd.f32 %v1015, %v1016
  %v1018 = vmul.f32 %v375, %v375
  %v1019 = vmul.f32 %v378, %v378
  %v1020 = vmul.f32 %v383, %v383
  %v1021 = vmul.f32 %v386, %v386
  %v1022 = vmul.f32 %v391, %v391
  %v1023 = vmul.f32 %v394, %v394
  %v1024 = vmul.f32 %v399, %v399
  %v1025 = vmul.f32 %v402, %v402
  %v1026 = vmul.f32 %v407, %v407
  %v1027 = vmul.f32 %v410, %v410
  %v1028 = vmul.f32 %v415, %v415
  %v1029 = vmul.f32 %v418, %v418
  %v1030 = vmul.f32 %v423, %v423
  %v1031 = vmul.f32 %v426, %v426
  %v1032 = vmul.f32 %v431, %v431
  %v1033 = vmul.f32 %v434, %v434
  %v1034 = vmul.f32 %v439, %v439
  %v1035 = vmul.f32 %v442, %v442
  %v1036 = vmul.f32 %v447, %v447
  %v1037 = vmul.f32 %v450, %v450
  %v1038 = vmul.f32 %v455, %v455
  %v1039 = vmul.f32 %v458, %v458
  %v1040 = vmul.f32 %v463, %v463
  %v1041 = vmul.f32 %v466, %v466
  %v1042 = vmul.f32 %v471, %v471
  %v1043 = vmul.f32 %v474, %v474
  %v1044 = vmul.f32 %v479, %v479
  %v1045 = vmul.f32 %v482, %v482
  %v1046 = vmul.f32 %v487, %v487
  %v1047 = vmul.f32 %v490, %v490
  %v1048 = vmul.f32 %v495, %v495
  %v1049 = vmul.f32 %v498, %v498
  %v1050 = vmul.f32 %v503, %v503
  %v1051 = vmul.f32 %v506, %v506
  %v1052 = vmul.f32 %v511, %v511
  %v1053 = vmul.f32 %v514, %v514
  %v1054 = vmul.f32 %v519, %v519
  %v1055 = vmul.f32 %v522, %v522
  %v1056 = vmul.f32 %v527, %v527
  %v1057 = vmul.f32 %v530, %v530
  %v1058 = vmul.f32 %v535, %v535
  %v1059 = vmul.f32 %v538, %v538
  %v1060 = vmul.f32 %v543, %v543
  %v1061 = vmul.f32 %v546, %v546
  %v1062 = vmul.f32 %v551, %v551
  %v1063 = vmul.f32 %v554, %v554
  %v1064 = vmul.f32 %v559, %v559
  %v1065 = vmul.f32 %v562, %v562
  %v1066 = vmul.f32 %v567, %v567
  %v1067 = vmul.f32 %v570, %v570
  %v1068 = vmul.f32 %v575, %v575
  %v1069 = vmul.f32 %v578, %v578
  %v1070 = vmul.f32 %v583, %v583
  %v1071 = vmul.f32 %v586, %v586
  %v1072 = vmul.f32 %v591, %v591
  %v1073 = vmul.f32 %v594, %v594
  %v1074 = vmul.f32 %v599, %v599
  %v1075 = vmul.f32 %v602, %v602
  %v1076 = vmul.f32 %v607, %v607
  %v1077 = vmul.f32 %v610, %v610
  %v1078 = vmul.f32 %v615, %v615
  %v1079 = vmul.f32 %v618, %v618
  %v1080 = vmul.f32 %v623, %v623
  %v1081 = vmul.f32 %v626, %v626
  %v1082 = vadd.f32 %v1018, %v1019
  %v1083 = vadd.f32 %v1082, %v1020
  %v1084 = vadd.f32 %v1083, %v1021
  %v1085 = vadd.f32 %v1084, %v1022
  %v1086 = vadd.f32 %v1085, %v1023
  %v1087 = vadd.f32 %v1086, %v1024
  %v1088 = vadd.f32 %v1087, %v1025
  %v1089 = vadd.f32 %v1088, %v1026
  %v1090 = vadd.f32 %v1089, %v1027
  %v1091 = vadd.f32 %v1090, %v1028
  %v1092 = vadd.f32 %v1091, %v1029
  %v1093 = vadd.f32 %v1092, %v1030
  %v1094 = vadd.f32 %v1093, %v1031
  %v1095 = vadd.f32 %v1094, %v1032
  %v1096 = vadd.f32 %v1095, %v1033
  %v1097 = vadd.f32 %v1096, %v1034
  %v1098 = vadd.f32 %v1097, %v1035
  %v1099 = vadd.f32 %v1098, %v1036
  %v1100 = vadd.f32 %v1099, %v1037
  %v1101 = vadd.f32 %v1100, %v1038
  %v1102 = vadd.f32 %v1101, %v1039
  %v1103 = vadd.f32 %v1102, %v1040
  %v1104 = vadd.f32 %v1103, %v1041
  %v1105 = vadd.f32 %v1104, %v1042
  %v1106 = vadd.f32 %v1105, %v1043
  %v1107 = vadd.f32 %v1106, %v1044
  %v1108 = vadd.f32 %v1107, %v1045
  %v1109 = vadd.f32 %v1108, %v1046
  %v1110 = vadd.f32 %v1109, %v1047
  %v1111 = vadd.f32 %v1110, %v1048
  %v1112 = vadd.f32 %v1111, %v1049
  %v1113 = vadd.f32 %v1112, %v1050
  %v1114 = vadd.f32 %v1113, %v1051
  %v1115 = vadd.f32 %v1114, %v1052
  %v1116 = vadd.f32 %v1115, %v1053
  %v1117 = vadd.f32 %v1116, %v1054
  %v1118 = vadd.f32 %v1117, %v1055
  %v1119 = vadd.f32 %v1118, %v1056
  %v1120 = vadd.f32 %v1119, %v1057
  %v1121 = vadd.f32 %v1120, %v1058
  %v1122 = vadd.f32 %v1121, %v1059
  %v1123 = vadd.f32 %v1122, %v1060
  %v1124 = vadd.f32 %v1123, %v1061
  %v1125 = vadd.f32 %v1124, %v1062
  %v1126 = vadd.f32 %v1125, %v1063
  %v1127 = vadd.f32 %v1126, %v1064
  %v1128 = vadd.f32 %v1127, %v1065
  %v1129 = vadd.f32 %v1128, %v1066
  %v1130 = vadd.f32 %v1129, %v1067
  %v1131 = vadd.f32 %v1130, %v1068
  %v1132 = vadd.f32 %v1131, %v1069
  %v1133 = vadd.f32 %v1132, %v1070
  %v1134 = vadd.f32 %v1133, %v1071
  %v1135 = vadd.f32 %v1134, %v1072
  %v1136 = vadd.f32 %v1135, %v1073
  %v1137 = vadd.f32 %v1136, %v1074
  %v1138 = vadd.f32 %v1137, %v1075
  %v1139 = vadd.f32 %v1138, %v1076
  %v1140 = vadd.f32 %v1139, %v1077
  %v1141 = vadd.f32 %v1140, %v1078
  %v1142 = vadd.f32 %v1141, %v1079
  %v1143 = vadd.f32 %v1142, %v1080
  %v1144 = vadd.f32 %v1143, %v1081
  %v1145 = vrot.slane %v1144, 4
  %v1146 = vadd.f32 %v1144, %v1145
  %v1147 = vrot.slane %v1146, 2
  %v1148 = vadd.f32 %v1146, %v1147
  %v1149 = vrot.slane %v1148, 1
  %v1150 = vadd.f32 %v1148, %v1149
  %vm1151 = vcmask 1040384
  %v1152 = vsel %vm1151, %v1017, %v1150
  %1153 = vst [vmem:[%s3] sm:$0x3] %v1152
  // Predicated region
  $region10: #{multiscale_temporal_conv.3} parent=0 // pred_check
    _
  $region11: #{multiscale_temporal_conv.3} parent=0 // pred_check_branch
    %1155 = sbr.rel (0) target = $region13
  $region12: #{multiscale_temporal_conv.3} parent=0 // pred_region
    _
  $region13: #{multiscale_temporal_conv.3} parent=0 // pred_fallthru
    _
  // Predicated region
  $region14: #{multiscale_temporal_conv.3} parent=0 // pred_check
    _
  $region15: #{multiscale_temporal_conv.3} parent=0 // pred_check_branch
    %1157 = sbr.rel (0) target = $region17
  $region16: #{multiscale_temporal_conv.3} parent=0 // pred_region
    _
  $region17: #{multiscale_temporal_conv.3} parent=0 // pred_fallthru
    _
  // Predicated region
  $region18: #{multiscale_temporal_conv.3} parent=0 // pred_check
    _
  $region19: #{multiscale_temporal_conv.3} parent=0 // pred_check_branch
    %1159 = sbr.rel (0) target = $region21
  $region20: #{multiscale_temporal_conv.3} parent=0 // pred_region
    _
  $region21: #{multiscale_temporal_conv.3} parent=0 // pred_fallthru
    _
  // Predicated region
  $region22: #{multiscale_temporal_conv.3} parent=0 // pred_check
    _
  $region23: #{multiscale_temporal_conv.3} parent=0 // pred_check_branch
    %1161 = sbr.rel (0) target = $region25
  $region24: #{multiscale_temporal_conv.3} parent=0 // pred_region
    _
  $region25: #{multiscale_temporal_conv.3} parent=0 // pred_fallthru
    _

// kernel: multiscale_temporal_conv.4
$region0: #{multiscale_temporal_conv.4}
  #allocation0 [shape = 'u32[]', space=smem, size = 0x4, offset = 0x4, fixed_abs, tag = 'smem constant byte address 0x4 - core index']
  #allocation1 [shape = 'u32[144,128]{1,0:T(1,128)}', space=vmem, size = 0x12000, scoped, tag = 'internal scratch']
  %s0 = inlined_call_operand.vmem [shape: bf16[2,16,16,128], index: 0, kind: input, shape index: {}]
  %s1 = inlined_call_operand.vmem [shape: f32[1,128], index: 1, kind: input, shape index: {}]
  %s2 = inlined_call_operand.vmem [shape: f32[1,128], index: 2, kind: input, shape index: {}]
  %s3 = inlined_call_operand.vmem [shape: bf16[24,8], index: 3, kind: input, shape index: {}]
  %s4 = inlined_call_operand.vmem [shape: f32[1,2,12], index: 4, kind: output, shape index: {}]
  %s5 = sld [smem:[#allocation0]]
  $region26: #{multiscale_temporal_conv.4} parent=0
    _
  %s7 = ssub.s32 1, %s5
  %s8 = scalar_select 0, %s7, %s5
  // Predicated region
  $region2: #{multiscale_temporal_conv.4} parent=0 // pred_check
    _
  $region3: #{multiscale_temporal_conv.4} parent=0 // pred_check_branch
    %10 = sbr.rel (0) target = $region5
  $region4: #{multiscale_temporal_conv.4} parent=0 // pred_region
    _
  $region5: #{multiscale_temporal_conv.4} parent=0 // pred_fallthru
    _
  // Predicated region
  $region6: #{multiscale_temporal_conv.4} parent=0 // pred_check
    _
  $region7: #{multiscale_temporal_conv.4} parent=0 // pred_check_branch
    %12 = sbr.rel (0) target = $region9
  $region8: #{multiscale_temporal_conv.4} parent=0 // pred_region
    _
  $region9: #{multiscale_temporal_conv.4} parent=0 // pred_fallthru
    _
  // Predicated region
  $region10: #{multiscale_temporal_conv.4} parent=0 // pred_check
    _
  $region11: #{multiscale_temporal_conv.4} parent=0 // pred_check_branch
    %14 = sbr.rel (0) target = $region13
  $region12: #{multiscale_temporal_conv.4} parent=0 // pred_region
    _
  $region13: #{multiscale_temporal_conv.4} parent=0 // pred_fallthru
    _
  // Predicated region
  $region14: #{multiscale_temporal_conv.4} parent=0 // pred_check
    _
  $region15: #{multiscale_temporal_conv.4} parent=0 // pred_check_branch
    %16 = sbr.rel (0) target = $region17
  $region16: #{multiscale_temporal_conv.4} parent=0 // pred_region
    _
  $region17: #{multiscale_temporal_conv.4} parent=0 // pred_fallthru
    _
  %v18 = vld [vmem:[%s0] sm:$0xf]
  %v19 = vld [vmem:[%s0 + $0x4] sm:$0xf]
  %v20 = vld [vmem:[%s0 + $0x8] sm:$0xf]
  %v21 = vld [vmem:[%s0 + $0xc] sm:$0xf]
  %v22 = vld [vmem:[%s0 + $0x10] sm:$0xf]
  %v23 = vld [vmem:[%s0 + $0x14] sm:$0xf]
  %v24 = vld [vmem:[%s0 + $0x18] sm:$0xf]
  %v25 = vld [vmem:[%s0 + $0x1c] sm:$0xf]
  %v26 = vld [vmem:[%s0 + $0x20] sm:$0xf]
  %v27 = vld [vmem:[%s0 + $0x24] sm:$0xf]
  %v28 = vld [vmem:[%s0 + $0x28] sm:$0xf]
  %v29 = vld [vmem:[%s0 + $0x2c] sm:$0xf]
  %v30 = vld [vmem:[%s0 + $0x30] sm:$0xf]
  %v31 = vld [vmem:[%s0 + $0x34] sm:$0xf]
  %v32 = vld [vmem:[%s0 + $0x38] sm:$0xf]
  %v33 = vld [vmem:[%s0 + $0x3c] sm:$0xf]
  %v34 = vld [vmem:[%s0 + $0x40] sm:$0xf]
  %v35 = vld [vmem:[%s0 + $0x44] sm:$0xf]
  %v36 = vld [vmem:[%s0 + $0x48] sm:$0xf]
  %v37 = vld [vmem:[%s0 + $0x4c] sm:$0xf]
  %v38 = vld [vmem:[%s0 + $0x50] sm:$0xf]
  %v39 = vld [vmem:[%s0 + $0x54] sm:$0xf]
  %v40 = vld [vmem:[%s0 + $0x58] sm:$0xf]
  %v41 = vld [vmem:[%s0 + $0x5c] sm:$0xf]
  %v42 = vld [vmem:[%s0 + $0x60] sm:$0xf]
  %v43 = vld [vmem:[%s0 + $0x64] sm:$0xf]
  %v44 = vld [vmem:[%s0 + $0x68] sm:$0xf]
  %v45 = vld [vmem:[%s0 + $0x6c] sm:$0xf]
  %v46 = vld [vmem:[%s0 + $0x70] sm:$0xf]
  %v47 = vld [vmem:[%s0 + $0x74] sm:$0xf]
  %v48 = vld [vmem:[%s0 + $0x78] sm:$0xf]
  %v49 = vld [vmem:[%s0 + $0x7c] sm:$0xf]
  %v50 = vld [vmem:[%s0 + $0x80] sm:$0xf]
  %v51 = vld [vmem:[%s0 + $0x84] sm:$0xf]
  %v52 = vld [vmem:[%s0 + $0x88] sm:$0xf]
  %v53 = vld [vmem:[%s0 + $0x8c] sm:$0xf]
  %v54 = vld [vmem:[%s0 + $0x90] sm:$0xf]
  %v55 = vld [vmem:[%s0 + $0x94] sm:$0xf]
  %v56 = vld [vmem:[%s0 + $0x98] sm:$0xf]
  %v57 = vld [vmem:[%s0 + $0x9c] sm:$0xf]
  %v58 = vld [vmem:[%s0 + $0xa0] sm:$0xf]
  %v59 = vld [vmem:[%s0 + $0xa4] sm:$0xf]
  %v60 = vld [vmem:[%s0 + $0xa8] sm:$0xf]
  %v61 = vld [vmem:[%s0 + $0xac] sm:$0xf]
  %v62 = vld [vmem:[%s0 + $0xb0] sm:$0xf]
  %v63 = vld [vmem:[%s0 + $0xb4] sm:$0xf]
  %v64 = vld [vmem:[%s0 + $0xb8] sm:$0xf]
  %v65 = vld [vmem:[%s0 + $0xbc] sm:$0xf]
  %v66 = vld [vmem:[%s0 + $0xc0] sm:$0xf]
  %v67 = vld [vmem:[%s0 + $0xc4] sm:$0xf]
  %v68 = vld [vmem:[%s0 + $0xc8] sm:$0xf]
  %v69 = vld [vmem:[%s0 + $0xcc] sm:$0xf]
  %v70 = vld [vmem:[%s0 + $0xd0] sm:$0xf]
  %v71 = vld [vmem:[%s0 + $0xd4] sm:$0xf]
  %v72 = vld [vmem:[%s0 + $0xd8] sm:$0xf]
  %v73 = vld [vmem:[%s0 + $0xdc] sm:$0xf]
  %v74 = vld [vmem:[%s0 + $0xe0] sm:$0xf]
  %v75 = vld [vmem:[%s0 + $0xe4] sm:$0xf]
  %v76 = vld [vmem:[%s0 + $0xe8] sm:$0xf]
  %v77 = vld [vmem:[%s0 + $0xec] sm:$0xf]
  %v78 = vld [vmem:[%s0 + $0xf0] sm:$0xf]
  %v79 = vld [vmem:[%s0 + $0xf4] sm:$0xf]
  %v80 = vld [vmem:[%s0 + $0xf8] sm:$0xf]
  %v81 = vld [vmem:[%s0 + $0xfc] sm:$0xf]
  %v82 = vld [vmem:[%s1] sm:$0x1]
  %v83 = vld [vmem:[%s2] sm:$0x1]
  %v84 = vld [vmem:[%s3] sm:$0xf]
  %v85 = vld [vmem:[%s3 + $0x4] sm:$0xf]
  %v86 = vld [vmem:[%s3 + $0x8] sm:$0xf]
  %v87 = vunpack.c.l.bf16 %v18
  %v88 = vunpack.c.l.bf16 %v19
  %v89 = vunpack.c.l.bf16 %v20
  %v90 = vunpack.c.l.bf16 %v21
  %v91 = vunpack.c.l.bf16 %v22
  %v92 = vunpack.c.l.bf16 %v23
  %v93 = vunpack.c.l.bf16 %v24
  %v94 = vunpack.c.l.bf16 %v25
  %v95 = vunpack.c.l.bf16 %v26
  %v96 = vunpack.c.l.bf16 %v27
  %v97 = vunpack.c.l.bf16 %v28
  %v98 = vunpack.c.l.bf16 %v29
  %v99 = vunpack.c.l.bf16 %v30
  %v100 = vunpack.c.l.bf16 %v31
  %v101 = vunpack.c.l.bf16 %v32
  %v102 = vunpack.c.l.bf16 %v33
  %v103 = vunpack.c.l.bf16 %v34
  %v104 = vunpack.c.l.bf16 %v35
  %v105 = vunpack.c.l.bf16 %v36
  %v106 = vunpack.c.l.bf16 %v37
  %v107 = vunpack.c.l.bf16 %v38
  %v108 = vunpack.c.l.bf16 %v39
  %v109 = vunpack.c.l.bf16 %v40
  %v110 = vunpack.c.l.bf16 %v41
  %v111 = vunpack.c.l.bf16 %v42
  %v112 = vunpack.c.l.bf16 %v43
  %v113 = vunpack.c.l.bf16 %v44
  %v114 = vunpack.c.l.bf16 %v45
  %v115 = vunpack.c.l.bf16 %v46
  %v116 = vunpack.c.l.bf16 %v47
  %v117 = vunpack.c.l.bf16 %v48
  %v118 = vunpack.c.l.bf16 %v49
  %v119 = vunpack.c.l.bf16 %v50
  %v120 = vunpack.c.l.bf16 %v51
  %v121 = vunpack.c.l.bf16 %v52
  %v122 = vunpack.c.l.bf16 %v53
  %v123 = vunpack.c.l.bf16 %v54
  %v124 = vunpack.c.l.bf16 %v55
  %v125 = vunpack.c.l.bf16 %v56
  %v126 = vunpack.c.l.bf16 %v57
  %v127 = vunpack.c.l.bf16 %v58
  %v128 = vunpack.c.l.bf16 %v59
  %v129 = vunpack.c.l.bf16 %v60
  %v130 = vunpack.c.l.bf16 %v61
  %v131 = vunpack.c.l.bf16 %v62
  %v132 = vunpack.c.l.bf16 %v63
  %v133 = vunpack.c.l.bf16 %v64
  %v134 = vunpack.c.l.bf16 %v65
  %v135 = vunpack.c.l.bf16 %v66
  %v136 = vunpack.c.l.bf16 %v67
  %v137 = vunpack.c.l.bf16 %v68
  %v138 = vunpack.c.l.bf16 %v69
  %v139 = vunpack.c.l.bf16 %v70
  %v140 = vunpack.c.l.bf16 %v71
  %v141 = vunpack.c.l.bf16 %v72
  %v142 = vunpack.c.l.bf16 %v73
  %v143 = vunpack.c.l.bf16 %v74
  %v144 = vunpack.c.l.bf16 %v75
  %v145 = vunpack.c.l.bf16 %v76
  %v146 = vunpack.c.l.bf16 %v77
  %v147 = vunpack.c.l.bf16 %v78
  %v148 = vunpack.c.l.bf16 %v79
  %v149 = vunpack.c.l.bf16 %v80
  %v150 = vunpack.c.l.bf16 %v81
  %v152 = vlaneseq
  %v153 = vshrl.u32 %v152, 7
  %v154 = vsub.s32 0, %v153
  %v155 = vrot.slane %v82, %v154
  %v157 = vmul.f32 %v87, %v155
  %v158 = vmul.f32 %v88, %v155
  %v159 = vmul.f32 %v89, %v155
  %v160 = vmul.f32 %v90, %v155
  %v161 = vmul.f32 %v91, %v155
  %v162 = vmul.f32 %v92, %v155
  %v163 = vmul.f32 %v93, %v155
  %v164 = vmul.f32 %v94, %v155
  %v165 = vmul.f32 %v95, %v155
  %v166 = vmul.f32 %v96, %v155
  %v167 = vmul.f32 %v97, %v155
  %v168 = vmul.f32 %v98, %v155
  %v169 = vmul.f32 %v99, %v155
  %v170 = vmul.f32 %v100, %v155
  %v171 = vmul.f32 %v101, %v155
  %v172 = vmul.f32 %v102, %v155
  %v173 = vmul.f32 %v103, %v155
  %v174 = vmul.f32 %v104, %v155
  %v175 = vmul.f32 %v105, %v155
  %v176 = vmul.f32 %v106, %v155
  %v177 = vmul.f32 %v107, %v155
  %v178 = vmul.f32 %v108, %v155
  %v179 = vmul.f32 %v109, %v155
  %v180 = vmul.f32 %v110, %v155
  %v181 = vmul.f32 %v111, %v155
  %v182 = vmul.f32 %v112, %v155
  %v183 = vmul.f32 %v113, %v155
  %v184 = vmul.f32 %v114, %v155
  %v185 = vmul.f32 %v115, %v155
  %v186 = vmul.f32 %v116, %v155
  %v187 = vmul.f32 %v117, %v155
  %v188 = vmul.f32 %v118, %v155
  %v189 = vmul.f32 %v119, %v155
  %v190 = vmul.f32 %v120, %v155
  %v191 = vmul.f32 %v121, %v155
  %v192 = vmul.f32 %v122, %v155
  %v193 = vmul.f32 %v123, %v155
  %v194 = vmul.f32 %v124, %v155
  %v195 = vmul.f32 %v125, %v155
  %v196 = vmul.f32 %v126, %v155
  %v197 = vmul.f32 %v127, %v155
  %v198 = vmul.f32 %v128, %v155
  %v199 = vmul.f32 %v129, %v155
  %v200 = vmul.f32 %v130, %v155
  %v201 = vmul.f32 %v131, %v155
  %v202 = vmul.f32 %v132, %v155
  %v203 = vmul.f32 %v133, %v155
  %v204 = vmul.f32 %v134, %v155
  %v205 = vmul.f32 %v135, %v155
  %v206 = vmul.f32 %v136, %v155
  %v207 = vmul.f32 %v137, %v155
  %v208 = vmul.f32 %v138, %v155
  %v209 = vmul.f32 %v139, %v155
  %v210 = vmul.f32 %v140, %v155
  %v211 = vmul.f32 %v141, %v155
  %v212 = vmul.f32 %v142, %v155
  %v213 = vmul.f32 %v143, %v155
  %v214 = vmul.f32 %v144, %v155
  %v215 = vmul.f32 %v145, %v155
  %v216 = vmul.f32 %v146, %v155
  %v217 = vmul.f32 %v147, %v155
  %v218 = vmul.f32 %v148, %v155
  %v219 = vmul.f32 %v149, %v155
  %v220 = vmul.f32 %v150, %v155
  %v222 = vlaneseq
  %v223 = vshrl.u32 %v222, 7
  %v224 = vsub.s32 0, %v223
  %v225 = vrot.slane %v83, %v224
  %v227 = vadd.f32 %v157, %v225
  %v228 = vadd.f32 %v158, %v225
  %v229 = vadd.f32 %v159, %v225
  %v230 = vadd.f32 %v160, %v225
  %v231 = vadd.f32 %v161, %v225
  %v232 = vadd.f32 %v162, %v225
  %v233 = vadd.f32 %v163, %v225
  %v234 = vadd.f32 %v164, %v225
  %v235 = vadd.f32 %v165, %v225
  %v236 = vadd.f32 %v166, %v225
  %v237 = vadd.f32 %v167, %v225
  %v238 = vadd.f32 %v168, %v225
  %v239 = vadd.f32 %v169, %v225
  %v240 = vadd.f32 %v170, %v225
  %v241 = vadd.f32 %v171, %v225
  %v242 = vadd.f32 %v172, %v225
  %v243 = vadd.f32 %v173, %v225
  %v244 = vadd.f32 %v174, %v225
  %v245 = vadd.f32 %v175, %v225
  %v246 = vadd.f32 %v176, %v225
  %v247 = vadd.f32 %v177, %v225
  %v248 = vadd.f32 %v178, %v225
  %v249 = vadd.f32 %v179, %v225
  %v250 = vadd.f32 %v180, %v225
  %v251 = vadd.f32 %v181, %v225
  %v252 = vadd.f32 %v182, %v225
  %v253 = vadd.f32 %v183, %v225
  %v254 = vadd.f32 %v184, %v225
  %v255 = vadd.f32 %v185, %v225
  %v256 = vadd.f32 %v186, %v225
  %v257 = vadd.f32 %v187, %v225
  %v258 = vadd.f32 %v188, %v225
  %v259 = vadd.f32 %v189, %v225
  %v260 = vadd.f32 %v190, %v225
  %v261 = vadd.f32 %v191, %v225
  %v262 = vadd.f32 %v192, %v225
  %v263 = vadd.f32 %v193, %v225
  %v264 = vadd.f32 %v194, %v225
  %v265 = vadd.f32 %v195, %v225
  %v266 = vadd.f32 %v196, %v225
  %v267 = vadd.f32 %v197, %v225
  %v268 = vadd.f32 %v198, %v225
  %v269 = vadd.f32 %v199, %v225
  %v270 = vadd.f32 %v200, %v225
  %v271 = vadd.f32 %v201, %v225
  %v272 = vadd.f32 %v202, %v225
  %v273 = vadd.f32 %v203, %v225
  %v274 = vadd.f32 %v204, %v225
  %v275 = vadd.f32 %v205, %v225
  %v276 = vadd.f32 %v206, %v225
  %v277 = vadd.f32 %v207, %v225
  %v278 = vadd.f32 %v208, %v225
  %v279 = vadd.f32 %v209, %v225
  %v280 = vadd.f32 %v210, %v225
  %v281 = vadd.f32 %v211, %v225
  %v282 = vadd.f32 %v212, %v225
  %v283 = vadd.f32 %v213, %v225
  %v284 = vadd.f32 %v214, %v225
  %v285 = vadd.f32 %v215, %v225
  %v286 = vadd.f32 %v216, %v225
  %v287 = vadd.f32 %v217, %v225
  %v288 = vadd.f32 %v218, %v225
  %v289 = vadd.f32 %v219, %v225
  %v290 = vadd.f32 %v220, %v225
  %v291 = vmax.f32 %v227, 0.0
  %v292 = vmax.f32 %v228, 0.0
  %v293 = vmax.f32 %v229, 0.0
  %v294 = vmax.f32 %v230, 0.0
  %v295 = vmax.f32 %v231, 0.0
  %v296 = vmax.f32 %v232, 0.0
  %v297 = vmax.f32 %v233, 0.0
  %v298 = vmax.f32 %v234, 0.0
  %v299 = vmax.f32 %v235, 0.0
  %v300 = vmax.f32 %v236, 0.0
  %v301 = vmax.f32 %v237, 0.0
  %v302 = vmax.f32 %v238, 0.0
  %v303 = vmax.f32 %v239, 0.0
  %v304 = vmax.f32 %v240, 0.0
  %v305 = vmax.f32 %v241, 0.0
  %v306 = vmax.f32 %v242, 0.0
  %v307 = vmax.f32 %v243, 0.0
  %v308 = vmax.f32 %v244, 0.0
  %v309 = vmax.f32 %v245, 0.0
  %v310 = vmax.f32 %v246, 0.0
  %v311 = vmax.f32 %v247, 0.0
  %v312 = vmax.f32 %v248, 0.0
  %v313 = vmax.f32 %v249, 0.0
  %v314 = vmax.f32 %v250, 0.0
  %v315 = vmax.f32 %v251, 0.0
  %v316 = vmax.f32 %v252, 0.0
  %v317 = vmax.f32 %v253, 0.0
  %v318 = vmax.f32 %v254, 0.0
  %v319 = vmax.f32 %v255, 0.0
  %v320 = vmax.f32 %v256, 0.0
  %v321 = vmax.f32 %v257, 0.0
  %v322 = vmax.f32 %v258, 0.0
  %v323 = vmax.f32 %v259, 0.0
  %v324 = vmax.f32 %v260, 0.0
  %v325 = vmax.f32 %v261, 0.0
  %v326 = vmax.f32 %v262, 0.0
  %v327 = vmax.f32 %v263, 0.0
  %v328 = vmax.f32 %v264, 0.0
  %v329 = vmax.f32 %v265, 0.0
  %v330 = vmax.f32 %v266, 0.0
  %v331 = vmax.f32 %v267, 0.0
  %v332 = vmax.f32 %v268, 0.0
  %v333 = vmax.f32 %v269, 0.0
  %v334 = vmax.f32 %v270, 0.0
  %v335 = vmax.f32 %v271, 0.0
  %v336 = vmax.f32 %v272, 0.0
  %v337 = vmax.f32 %v273, 0.0
  %v338 = vmax.f32 %v274, 0.0
  %v339 = vmax.f32 %v275, 0.0
  %v340 = vmax.f32 %v276, 0.0
  %v341 = vmax.f32 %v277, 0.0
  %v342 = vmax.f32 %v278, 0.0
  %v343 = vmax.f32 %v279, 0.0
  %v344 = vmax.f32 %v280, 0.0
  %v345 = vmax.f32 %v281, 0.0
  %v346 = vmax.f32 %v282, 0.0
  %v347 = vmax.f32 %v283, 0.0
  %v348 = vmax.f32 %v284, 0.0
  %v349 = vmax.f32 %v285, 0.0
  %v350 = vmax.f32 %v286, 0.0
  %v351 = vmax.f32 %v287, 0.0
  %v352 = vmax.f32 %v288, 0.0
  %v353 = vmax.f32 %v289, 0.0
  %v354 = vmax.f32 %v290, 0.0
  %v355 = vpack.c.bf16 %v292, %v291
  %v356 = vpack.c.bf16 %v294, %v293
  %v357 = vpack.c.bf16 %v296, %v295
  %v358 = vpack.c.bf16 %v298, %v297
  %v359 = vpack.c.bf16 %v300, %v299
  %v360 = vpack.c.bf16 %v302, %v301
  %v361 = vpack.c.bf16 %v304, %v303
  %v362 = vpack.c.bf16 %v306, %v305
  %v363 = vpack.c.bf16 %v308, %v307
  %v364 = vpack.c.bf16 %v310, %v309
  %v365 = vpack.c.bf16 %v312, %v311
  %v366 = vpack.c.bf16 %v314, %v313
  %v367 = vpack.c.bf16 %v316, %v315
  %v368 = vpack.c.bf16 %v318, %v317
  %v369 = vpack.c.bf16 %v320, %v319
  %v370 = vpack.c.bf16 %v322, %v321
  %v371 = vpack.c.bf16 %v324, %v323
  %v372 = vpack.c.bf16 %v326, %v325
  %v373 = vpack.c.bf16 %v328, %v327
  %v374 = vpack.c.bf16 %v330, %v329
  %v375 = vpack.c.bf16 %v332, %v331
  %v376 = vpack.c.bf16 %v334, %v333
  %v377 = vpack.c.bf16 %v336, %v335
  %v378 = vpack.c.bf16 %v338, %v337
  %v379 = vpack.c.bf16 %v340, %v339
  %v380 = vpack.c.bf16 %v342, %v341
  %v381 = vpack.c.bf16 %v344, %v343
  %v382 = vpack.c.bf16 %v346, %v345
  %v383 = vpack.c.bf16 %v348, %v347
  %v384 = vpack.c.bf16 %v350, %v349
  %v385 = vpack.c.bf16 %v352, %v351
  %v386 = vpack.c.bf16 %v354, %v353
  %415 = vrot.lane.b32.xlu0 %v355, 126
  %v416 = vpop.permute.xlu0 %415
  %417 = vrot.lane.b32.xlu0 %v356, 126
  %v418 = vpop.permute.xlu0 %417
  %419 = vrot.lane.b32.xlu0 %v357, 126
  %v420 = vpop.permute.xlu0 %419
  %421 = vrot.lane.b32.xlu0 %v358, 126
  %v422 = vpop.permute.xlu0 %421
  %423 = vrot.lane.b32.xlu0 %v359, 126
  %v424 = vpop.permute.xlu0 %423
  %425 = vrot.lane.b32.xlu0 %v360, 126
  %v426 = vpop.permute.xlu0 %425
  %427 = vrot.lane.b32.xlu0 %v361, 126
  %v428 = vpop.permute.xlu0 %427
  %429 = vrot.lane.b32.xlu0 %v362, 126
  %v430 = vpop.permute.xlu0 %429
  %431 = vrot.lane.b32.xlu0 %v363, 126
  %v432 = vpop.permute.xlu0 %431
  %433 = vrot.lane.b32.xlu0 %v364, 126
  %v434 = vpop.permute.xlu0 %433
  %435 = vrot.lane.b32.xlu0 %v365, 126
  %v436 = vpop.permute.xlu0 %435
  %437 = vrot.lane.b32.xlu0 %v366, 126
  %v438 = vpop.permute.xlu0 %437
  %439 = vrot.lane.b32.xlu0 %v367, 126
  %v440 = vpop.permute.xlu0 %439
  %441 = vrot.lane.b32.xlu0 %v368, 126
  %v442 = vpop.permute.xlu0 %441
  %443 = vrot.lane.b32.xlu0 %v371, 126
  %v444 = vpop.permute.xlu0 %443
  %445 = vrot.lane.b32.xlu0 %v372, 126
  %v446 = vpop.permute.xlu0 %445
  %447 = vrot.lane.b32.xlu0 %v373, 126
  %v448 = vpop.permute.xlu0 %447
  %449 = vrot.lane.b32.xlu0 %v374, 126
  %v450 = vpop.permute.xlu0 %449
  %451 = vrot.lane.b32.xlu0 %v375, 126
  %v452 = vpop.permute.xlu0 %451
  %453 = vrot.lane.b32.xlu0 %v376, 126
  %v454 = vpop.permute.xlu0 %453
  %455 = vrot.lane.b32.xlu0 %v377, 126
  %v456 = vpop.permute.xlu0 %455
  %457 = vrot.lane.b32.xlu0 %v378, 126
  %v458 = vpop.permute.xlu0 %457
  %459 = vrot.lane.b32.xlu0 %v379, 126
  %v460 = vpop.permute.xlu0 %459
  %461 = vrot.lane.b32.xlu0 %v380, 126
  %v462 = vpop.permute.xlu0 %461
  %463 = vrot.lane.b32.xlu0 %v381, 126
  %v464 = vpop.permute.xlu0 %463
  %465 = vrot.lane.b32.xlu0 %v382, 126
  %v466 = vpop.permute.xlu0 %465
  %467 = vrot.lane.b32.xlu0 %v383, 126
  %v468 = vpop.permute.xlu0 %467
  %469 = vrot.lane.b32.xlu0 %v384, 126
  %v470 = vpop.permute.xlu0 %469
  %471 = vrot.lane.b32.xlu0 %v355, 124
  %v472 = vpop.permute.xlu0 %471
  %473 = vrot.lane.b32.xlu0 %v356, 124
  %v474 = vpop.permute.xlu0 %473
  %475 = vrot.lane.b32.xlu0 %v357, 124
  %v476 = vpop.permute.xlu0 %475
  %477 = vrot.lane.b32.xlu0 %v358, 124
  %v478 = vpop.permute.xlu0 %477
  %479 = vrot.lane.b32.xlu0 %v359, 124
  %v480 = vpop.permute.xlu0 %479
  %481 = vrot.lane.b32.xlu0 %v360, 124
  %v482 = vpop.permute.xlu0 %481
  %483 = vrot.lane.b32.xlu0 %v361, 124
  %v484 = vpop.permute.xlu0 %483
  %485 = vrot.lane.b32.xlu0 %v362, 124
  %v486 = vpop.permute.xlu0 %485
  %487 = vrot.lane.b32.xlu0 %v363, 124
  %v488 = vpop.permute.xlu0 %487
  %489 = vrot.lane.b32.xlu0 %v364, 124
  %v490 = vpop.permute.xlu0 %489
  %491 = vrot.lane.b32.xlu0 %v365, 124
  %v492 = vpop.permute.xlu0 %491
  %493 = vrot.lane.b32.xlu0 %v366, 124
  %v494 = vpop.permute.xlu0 %493
  %495 = vrot.lane.b32.xlu0 %v367, 124
  %v496 = vpop.permute.xlu0 %495
  %497 = vrot.lane.b32.xlu0 %v371, 124
  %v498 = vpop.permute.xlu0 %497
  %499 = vrot.lane.b32.xlu0 %v372, 124
  %v500 = vpop.permute.xlu0 %499
  %501 = vrot.lane.b32.xlu0 %v373, 124
  %v502 = vpop.permute.xlu0 %501
  %503 = vrot.lane.b32.xlu0 %v374, 124
  %v504 = vpop.permute.xlu0 %503
  %505 = vrot.lane.b32.xlu0 %v375, 124
  %v506 = vpop.permute.xlu0 %505
  %507 = vrot.lane.b32.xlu0 %v376, 124
  %v508 = vpop.permute.xlu0 %507
  %509 = vrot.lane.b32.xlu0 %v377, 124
  %v510 = vpop.permute.xlu0 %509
  %511 = vrot.lane.b32.xlu0 %v378, 124
  %v512 = vpop.permute.xlu0 %511
  %513 = vrot.lane.b32.xlu0 %v379, 124
  %v514 = vpop.permute.xlu0 %513
  %515 = vrot.lane.b32.xlu0 %v380, 124
  %v516 = vpop.permute.xlu0 %515
  %517 = vrot.lane.b32.xlu0 %v381, 124
  %v518 = vpop.permute.xlu0 %517
  %519 = vrot.lane.b32.xlu0 %v382, 124
  %v520 = vpop.permute.xlu0 %519
  %521 = vrot.lane.b32.xlu0 %v383, 124
  %v522 = vpop.permute.xlu0 %521
  %523 = vrot.lane.b32.xlu0 %v355, 122
  %v524 = vpop.permute.xlu0 %523
  %525 = vrot.lane.b32.xlu0 %v356, 122
  %v526 = vpop.permute.xlu0 %525
  %527 = vrot.lane.b32.xlu0 %v357, 122
  %v528 = vpop.permute.xlu0 %527
  %529 = vrot.lane.b32.xlu0 %v358, 122
  %v530 = vpop.permute.xlu0 %529
  %531 = vrot.lane.b32.xlu0 %v359, 122
  %v532 = vpop.permute.xlu0 %531
  %533 = vrot.lane.b32.xlu0 %v360, 122
  %v534 = vpop.permute.xlu0 %533
  %535 = vrot.lane.b32.xlu0 %v361, 122
  %v536 = vpop.permute.xlu0 %535
  %537 = vrot.lane.b32.xlu0 %v362, 122
  %v538 = vpop.permute.xlu0 %537
  %539 = vrot.lane.b32.xlu0 %v363, 122
  %v540 = vpop.permute.xlu0 %539
  %541 = vrot.lane.b32.xlu0 %v364, 122
  %v542 = vpop.permute.xlu0 %541
  %543 = vrot.lane.b32.xlu0 %v365, 122
  %v544 = vpop.permute.xlu0 %543
  %545 = vrot.lane.b32.xlu0 %v366, 122
  %v546 = vpop.permute.xlu0 %545
  %547 = vrot.lane.b32.xlu0 %v371, 122
  %v548 = vpop.permute.xlu0 %547
  %549 = vrot.lane.b32.xlu0 %v372, 122
  %v550 = vpop.permute.xlu0 %549
  %551 = vrot.lane.b32.xlu0 %v373, 122
  %v552 = vpop.permute.xlu0 %551
  %553 = vrot.lane.b32.xlu0 %v374, 122
  %v554 = vpop.permute.xlu0 %553
  %555 = vrot.lane.b32.xlu0 %v375, 122
  %v556 = vpop.permute.xlu0 %555
  %557 = vrot.lane.b32.xlu0 %v376, 122
  %v558 = vpop.permute.xlu0 %557
  %559 = vrot.lane.b32.xlu0 %v377, 122
  %v560 = vpop.permute.xlu0 %559
  %561 = vrot.lane.b32.xlu0 %v378, 122
  %v562 = vpop.permute.xlu0 %561
  %563 = vrot.lane.b32.xlu0 %v379, 122
  %v564 = vpop.permute.xlu0 %563
  %565 = vrot.lane.b32.xlu0 %v380, 122
  %v566 = vpop.permute.xlu0 %565
  %567 = vrot.lane.b32.xlu0 %v381, 122
  %v568 = vpop.permute.xlu0 %567
  %569 = vrot.lane.b32.xlu0 %v382, 122
  %v570 = vpop.permute.xlu0 %569
  %575 = vrot.lane.b32.xlu0 %v355, 2
  %v576 = vpop.permute.xlu0 %575
  %577 = vrot.lane.b32.xlu0 %v356, 2
  %v578 = vpop.permute.xlu0 %577
  %579 = vrot.lane.b32.xlu0 %v357, 2
  %v580 = vpop.permute.xlu0 %579
  %581 = vrot.lane.b32.xlu0 %v358, 2
  %v582 = vpop.permute.xlu0 %581
  %583 = vrot.lane.b32.xlu0 %v359, 2
  %v584 = vpop.permute.xlu0 %583
  %585 = vrot.lane.b32.xlu0 %v360, 2
  %v586 = vpop.permute.xlu0 %585
  %587 = vrot.lane.b32.xlu0 %v361, 2
  %v588 = vpop.permute.xlu0 %587
  %589 = vrot.lane.b32.xlu0 %v362, 2
  %v590 = vpop.permute.xlu0 %589
  %591 = vrot.lane.b32.xlu0 %v363, 2
  %v592 = vpop.permute.xlu0 %591
  %593 = vrot.lane.b32.xlu0 %v364, 2
  %v594 = vpop.permute.xlu0 %593
  %595 = vrot.lane.b32.xlu0 %v365, 2
  %v596 = vpop.permute.xlu0 %595
  %597 = vrot.lane.b32.xlu0 %v366, 2
  %v598 = vpop.permute.xlu0 %597
  %599 = vrot.lane.b32.xlu0 %v367, 2
  %v600 = vpop.permute.xlu0 %599
  %601 = vrot.lane.b32.xlu0 %v368, 2
  %v602 = vpop.permute.xlu0 %601
  %603 = vrot.lane.b32.xlu0 %v369, 2
  %v604 = vpop.permute.xlu0 %603
  %605 = vrot.lane.b32.xlu0 %v370, 2
  %v606 = vpop.permute.xlu0 %605
  %607 = vrot.lane.b32.xlu0 %v371, 2
  %v608 = vpop.permute.xlu0 %607
  %609 = vrot.lane.b32.xlu0 %v372, 2
  %v610 = vpop.permute.xlu0 %609
  %611 = vrot.lane.b32.xlu0 %v373, 2
  %v612 = vpop.permute.xlu0 %611
  %613 = vrot.lane.b32.xlu0 %v374, 2
  %v614 = vpop.permute.xlu0 %613
  %615 = vrot.lane.b32.xlu0 %v375, 2
  %v616 = vpop.permute.xlu0 %615
  %617 = vrot.lane.b32.xlu0 %v376, 2
  %v618 = vpop.permute.xlu0 %617
  %619 = vrot.lane.b32.xlu0 %v377, 2
  %v620 = vpop.permute.xlu0 %619
  %621 = vrot.lane.b32.xlu0 %v378, 2
  %v622 = vpop.permute.xlu0 %621
  %623 = vrot.lane.b32.xlu0 %v379, 2
  %v624 = vpop.permute.xlu0 %623
  %625 = vrot.lane.b32.xlu0 %v380, 2
  %v626 = vpop.permute.xlu0 %625
  %627 = vrot.lane.b32.xlu0 %v381, 2
  %v628 = vpop.permute.xlu0 %627
  %629 = vrot.lane.b32.xlu0 %v382, 2
  %v630 = vpop.permute.xlu0 %629
  %631 = vrot.lane.b32.xlu0 %v383, 2
  %v632 = vpop.permute.xlu0 %631
  %633 = vrot.lane.b32.xlu0 %v384, 2
  %v634 = vpop.permute.xlu0 %633
  %635 = vrot.lane.b32.xlu0 %v385, 2
  %v636 = vpop.permute.xlu0 %635
  %637 = vrot.lane.b32.xlu0 %v386, 2
  %v638 = vpop.permute.xlu0 %637
  %640 = vrot.lane.b32.xlu0 %v356, 4
  %v641 = vpop.permute.xlu0 %640
  %642 = vrot.lane.b32.xlu0 %v357, 4
  %v643 = vpop.permute.xlu0 %642
  %644 = vrot.lane.b32.xlu0 %v358, 4
  %v645 = vpop.permute.xlu0 %644
  %646 = vrot.lane.b32.xlu0 %v359, 4
  %v647 = vpop.permute.xlu0 %646
  %648 = vrot.lane.b32.xlu0 %v360, 4
  %v649 = vpop.permute.xlu0 %648
  %650 = vrot.lane.b32.xlu0 %v361, 4
  %v651 = vpop.permute.xlu0 %650
  %652 = vrot.lane.b32.xlu0 %v362, 4
  %v653 = vpop.permute.xlu0 %652
  %654 = vrot.lane.b32.xlu0 %v363, 4
  %v655 = vpop.permute.xlu0 %654
  %656 = vrot.lane.b32.xlu0 %v364, 4
  %v657 = vpop.permute.xlu0 %656
  %658 = vrot.lane.b32.xlu0 %v365, 4
  %v659 = vpop.permute.xlu0 %658
  %660 = vrot.lane.b32.xlu0 %v366, 4
  %v661 = vpop.permute.xlu0 %660
  %662 = vrot.lane.b32.xlu0 %v367, 4
  %v663 = vpop.permute.xlu0 %662
  %664 = vrot.lane.b32.xlu0 %v368, 4
  %v665 = vpop.permute.xlu0 %664
  %666 = vrot.lane.b32.xlu0 %v369, 4
  %v667 = vpop.permute.xlu0 %666
  %668 = vrot.lane.b32.xlu0 %v370, 4
  %v669 = vpop.permute.xlu0 %668
  %670 = vrot.lane.b32.xlu0 0, 4
  %v671 = vpop.permute.xlu0 %670
  %672 = vrot.lane.b32.xlu0 %v372, 4
  %v673 = vpop.permute.xlu0 %672
  %674 = vrot.lane.b32.xlu0 %v373, 4
  %v675 = vpop.permute.xlu0 %674
  %676 = vrot.lane.b32.xlu0 %v374, 4
  %v677 = vpop.permute.xlu0 %676
  %678 = vrot.lane.b32.xlu0 %v375, 4
  %v679 = vpop.permute.xlu0 %678
  %680 = vrot.lane.b32.xlu0 %v376, 4
  %v681 = vpop.permute.xlu0 %680
  %682 = vrot.lane.b32.xlu0 %v377, 4
  %v683 = vpop.permute.xlu0 %682
  %684 = vrot.lane.b32.xlu0 %v378, 4
  %v685 = vpop.permute.xlu0 %684
  %686 = vrot.lane.b32.xlu0 %v379, 4
  %v687 = vpop.permute.xlu0 %686
  %688 = vrot.lane.b32.xlu0 %v380, 4
  %v689 = vpop.permute.xlu0 %688
  %690 = vrot.lane.b32.xlu0 %v381, 4
  %v691 = vpop.permute.xlu0 %690
  %692 = vrot.lane.b32.xlu0 %v382, 4
  %v693 = vpop.permute.xlu0 %692
  %694 = vrot.lane.b32.xlu0 %v383, 4
  %v695 = vpop.permute.xlu0 %694
  %696 = vrot.lane.b32.xlu0 %v384, 4
  %v697 = vpop.permute.xlu0 %696
  %698 = vrot.lane.b32.xlu0 %v385, 4
  %v699 = vpop.permute.xlu0 %698
  %700 = vrot.lane.b32.xlu0 %v386, 4
  %v701 = vpop.permute.xlu0 %700
  %702 = vrot.lane.b32.xlu0 0, 6
  %v703 = vpop.permute.xlu0 %702
  %704 = vrot.lane.b32.xlu0 %v416, 6
  %v705 = vpop.permute.xlu0 %704
  %706 = vrot.lane.b32.xlu0 %v418, 6
  %v707 = vpop.permute.xlu0 %706
  %708 = vrot.lane.b32.xlu0 %v420, 6
  %v709 = vpop.permute.xlu0 %708
  %710 = vrot.lane.b32.xlu0 %v422, 6
  %v711 = vpop.permute.xlu0 %710
  %712 = vrot.lane.b32.xlu0 %v424, 6
  %v713 = vpop.permute.xlu0 %712
  %714 = vrot.lane.b32.xlu0 %v426, 6
  %v715 = vpop.permute.xlu0 %714
  %716 = vrot.lane.b32.xlu0 %v428, 6
  %v717 = vpop.permute.xlu0 %716
  %718 = vrot.lane.b32.xlu0 %v430, 6
  %v719 = vpop.permute.xlu0 %718
  %720 = vrot.lane.b32.xlu0 %v432, 6
  %v721 = vpop.permute.xlu0 %720
  %722 = vrot.lane.b32.xlu0 %v434, 6
  %v723 = vpop.permute.xlu0 %722
  %724 = vrot.lane.b32.xlu0 %v436, 6
  %v725 = vpop.permute.xlu0 %724
  %726 = vrot.lane.b32.xlu0 %v438, 6
  %v727 = vpop.permute.xlu0 %726
  %728 = vrot.lane.b32.xlu0 %v440, 6
  %v729 = vpop.permute.xlu0 %728
  %730 = vrot.lane.b32.xlu0 %v442, 6
  %v731 = vpop.permute.xlu0 %730
  %732 = vrot.lane.b32.xlu0 %v444, 6
  %v733 = vpop.permute.xlu0 %732
  %734 = vrot.lane.b32.xlu0 %v446, 6
  %v735 = vpop.permute.xlu0 %734
  %736 = vrot.lane.b32.xlu0 %v448, 6
  %v737 = vpop.permute.xlu0 %736
  %738 = vrot.lane.b32.xlu0 %v450, 6
  %v739 = vpop.permute.xlu0 %738
  %740 = vrot.lane.b32.xlu0 %v452, 6
  %v741 = vpop.permute.xlu0 %740
  %742 = vrot.lane.b32.xlu0 %v454, 6
  %v743 = vpop.permute.xlu0 %742
  %744 = vrot.lane.b32.xlu0 %v456, 6
  %v745 = vpop.permute.xlu0 %744
  %746 = vrot.lane.b32.xlu0 %v458, 6
  %v747 = vpop.permute.xlu0 %746
  %748 = vrot.lane.b32.xlu0 %v460, 6
  %v749 = vpop.permute.xlu0 %748
  %750 = vrot.lane.b32.xlu0 %v462, 6
  %v751 = vpop.permute.xlu0 %750
  %752 = vrot.lane.b32.xlu0 %v464, 6
  %v753 = vpop.permute.xlu0 %752
  %754 = vrot.lane.b32.xlu0 %v466, 6
  %v755 = vpop.permute.xlu0 %754
  %756 = vrot.lane.b32.xlu0 %v468, 6
  %v757 = vpop.permute.xlu0 %756
  %758 = vrot.lane.b32.xlu0 %v470, 6
  %v759 = vpop.permute.xlu0 %758
  %760 = vrot.lane.b32.xlu0 %v355, 6
  %v761 = vpop.permute.xlu0 %760
  %762 = vrot.lane.b32.xlu0 %v356, 6
  %v763 = vpop.permute.xlu0 %762
  %764 = vrot.lane.b32.xlu0 %v357, 6
  %v765 = vpop.permute.xlu0 %764
  %766 = vrot.lane.b32.xlu0 %v358, 6
  %v767 = vpop.permute.xlu0 %766
  %768 = vrot.lane.b32.xlu0 %v359, 6
  %v769 = vpop.permute.xlu0 %768
  %770 = vrot.lane.b32.xlu0 %v360, 6
  %v771 = vpop.permute.xlu0 %770
  %772 = vrot.lane.b32.xlu0 %v361, 6
  %v773 = vpop.permute.xlu0 %772
  %774 = vrot.lane.b32.xlu0 %v362, 6
  %v775 = vpop.permute.xlu0 %774
  %776 = vrot.lane.b32.xlu0 %v363, 6
  %v777 = vpop.permute.xlu0 %776
  %778 = vrot.lane.b32.xlu0 %v364, 6
  %v779 = vpop.permute.xlu0 %778
  %780 = vrot.lane.b32.xlu0 %v365, 6
  %v781 = vpop.permute.xlu0 %780
  %782 = vrot.lane.b32.xlu0 %v366, 6
  %v783 = vpop.permute.xlu0 %782
  %784 = vrot.lane.b32.xlu0 %v367, 6
  %v785 = vpop.permute.xlu0 %784
  %786 = vrot.lane.b32.xlu0 %v368, 6
  %v787 = vpop.permute.xlu0 %786
  %788 = vrot.lane.b32.xlu0 %v369, 6
  %v789 = vpop.permute.xlu0 %788
  %790 = vrot.lane.b32.xlu0 %v370, 6
  %v791 = vpop.permute.xlu0 %790
  %792 = vrot.lane.b32.xlu0 %v371, 6
  %v793 = vpop.permute.xlu0 %792
  %794 = vrot.lane.b32.xlu0 %v372, 6
  %v795 = vpop.permute.xlu0 %794
  %796 = vrot.lane.b32.xlu0 %v373, 6
  %v797 = vpop.permute.xlu0 %796
  %798 = vrot.lane.b32.xlu0 %v374, 6
  %v799 = vpop.permute.xlu0 %798
  %800 = vrot.lane.b32.xlu0 %v375, 6
  %v801 = vpop.permute.xlu0 %800
  %802 = vrot.lane.b32.xlu0 %v376, 6
  %v803 = vpop.permute.xlu0 %802
  %804 = vrot.lane.b32.xlu0 %v377, 6
  %v805 = vpop.permute.xlu0 %804
  %806 = vrot.lane.b32.xlu0 %v378, 6
  %v807 = vpop.permute.xlu0 %806
  %808 = vrot.lane.b32.xlu0 %v379, 6
  %v809 = vpop.permute.xlu0 %808
  %810 = vrot.lane.b32.xlu0 %v380, 6
  %v811 = vpop.permute.xlu0 %810
  %812 = vrot.lane.b32.xlu0 %v381, 6
  %v813 = vpop.permute.xlu0 %812
  %814 = vrot.lane.b32.xlu0 %v382, 6
  %v815 = vpop.permute.xlu0 %814
  %816 = vrot.lane.b32.xlu0 %v383, 6
  %v817 = vpop.permute.xlu0 %816
  %818 = vrot.lane.b32.xlu0 %v384, 6
  %v819 = vpop.permute.xlu0 %818
  %820 = vrot.lane.b32.xlu0 %v385, 6
  %v821 = vpop.permute.xlu0 %820
  %822 = vrot.lane.b32.xlu0 %v386, 6
  %v823 = vpop.permute.xlu0 %822
  %824 = vrot.lane.b32.xlu0 %v357, 8
  %v825 = vpop.permute.xlu0 %824
  %826 = vrot.lane.b32.xlu0 %v358, 8
  %v827 = vpop.permute.xlu0 %826
  %828 = vrot.lane.b32.xlu0 %v359, 8
  %v829 = vpop.permute.xlu0 %828
  %830 = vrot.lane.b32.xlu0 %v360, 8
  %v831 = vpop.permute.xlu0 %830
  %832 = vrot.lane.b32.xlu0 %v361, 8
  %v833 = vpop.permute.xlu0 %832
  %834 = vrot.lane.b32.xlu0 %v362, 8
  %v835 = vpop.permute.xlu0 %834
  %836 = vrot.lane.b32.xlu0 %v363, 8
  %v837 = vpop.permute.xlu0 %836
  %838 = vrot.lane.b32.xlu0 %v364, 8
  %v839 = vpop.permute.xlu0 %838
  %840 = vrot.lane.b32.xlu0 %v365, 8
  %v841 = vpop.permute.xlu0 %840
  %842 = vrot.lane.b32.xlu0 %v366, 8
  %v843 = vpop.permute.xlu0 %842
  %844 = vrot.lane.b32.xlu0 %v367, 8
  %v845 = vpop.permute.xlu0 %844
  %846 = vrot.lane.b32.xlu0 %v368, 8
  %v847 = vpop.permute.xlu0 %846
  %848 = vrot.lane.b32.xlu0 %v369, 8
  %v849 = vpop.permute.xlu0 %848
  %850 = vrot.lane.b32.xlu0 %v370, 8
  %v851 = vpop.permute.xlu0 %850
  %852 = vrot.lane.b32.xlu0 0, 8
  %v853 = vpop.permute.xlu0 %852
  %854 = vrot.lane.b32.xlu0 %v373, 8
  %v855 = vpop.permute.xlu0 %854
  %856 = vrot.lane.b32.xlu0 %v374, 8
  %v857 = vpop.permute.xlu0 %856
  %858 = vrot.lane.b32.xlu0 %v375, 8
  %v859 = vpop.permute.xlu0 %858
  %860 = vrot.lane.b32.xlu0 %v376, 8
  %v861 = vpop.permute.xlu0 %860
  %862 = vrot.lane.b32.xlu0 %v377, 8
  %v863 = vpop.permute.xlu0 %862
  %864 = vrot.lane.b32.xlu0 %v378, 8
  %v865 = vpop.permute.xlu0 %864
  %866 = vrot.lane.b32.xlu0 %v379, 8
  %v867 = vpop.permute.xlu0 %866
  %868 = vrot.lane.b32.xlu0 %v380, 8
  %v869 = vpop.permute.xlu0 %868
  %870 = vrot.lane.b32.xlu0 %v381, 8
  %v871 = vpop.permute.xlu0 %870
  %872 = vrot.lane.b32.xlu0 %v382, 8
  %v873 = vpop.permute.xlu0 %872
  %874 = vrot.lane.b32.xlu0 %v383, 8
  %v875 = vpop.permute.xlu0 %874
  %876 = vrot.lane.b32.xlu0 %v384, 8
  %v877 = vpop.permute.xlu0 %876
  %878 = vrot.lane.b32.xlu0 %v385, 8
  %v879 = vpop.permute.xlu0 %878
  %880 = vrot.lane.b32.xlu0 %v386, 8
  %v881 = vpop.permute.xlu0 %880
  %882 = vrot.lane.b32.xlu0 0, 12
  %v883 = vpop.permute.xlu0 %882
  %884 = vrot.lane.b32.xlu0 %v472, 12
  %v885 = vpop.permute.xlu0 %884
  %886 = vrot.lane.b32.xlu0 %v474, 12
  %v887 = vpop.permute.xlu0 %886
  %888 = vrot.lane.b32.xlu0 %v476, 12
  %v889 = vpop.permute.xlu0 %888
  %890 = vrot.lane.b32.xlu0 %v478, 12
  %v891 = vpop.permute.xlu0 %890
  %892 = vrot.lane.b32.xlu0 %v480, 12
  %v893 = vpop.permute.xlu0 %892
  %894 = vrot.lane.b32.xlu0 %v482, 12
  %v895 = vpop.permute.xlu0 %894
  %896 = vrot.lane.b32.xlu0 %v484, 12
  %v897 = vpop.permute.xlu0 %896
  %898 = vrot.lane.b32.xlu0 %v486, 12
  %v899 = vpop.permute.xlu0 %898
  %900 = vrot.lane.b32.xlu0 %v488, 12
  %v901 = vpop.permute.xlu0 %900
  %902 = vrot.lane.b32.xlu0 %v490, 12
  %v903 = vpop.permute.xlu0 %902
  %904 = vrot.lane.b32.xlu0 %v492, 12
  %v905 = vpop.permute.xlu0 %904
  %906 = vrot.lane.b32.xlu0 %v494, 12
  %v907 = vpop.permute.xlu0 %906
  %908 = vrot.lane.b32.xlu0 %v496, 12
  %v909 = vpop.permute.xlu0 %908
  %910 = vrot.lane.b32.xlu0 %v498, 12
  %v911 = vpop.permute.xlu0 %910
  %912 = vrot.lane.b32.xlu0 %v500, 12
  %v913 = vpop.permute.xlu0 %912
  %914 = vrot.lane.b32.xlu0 %v502, 12
  %v915 = vpop.permute.xlu0 %914
  %916 = vrot.lane.b32.xlu0 %v504, 12
  %v917 = vpop.permute.xlu0 %916
  %918 = vrot.lane.b32.xlu0 %v506, 12
  %v919 = vpop.permute.xlu0 %918
  %920 = vrot.lane.b32.xlu0 %v508, 12
  %v921 = vpop.permute.xlu0 %920
  %922 = vrot.lane.b32.xlu0 %v510, 12
  %v923 = vpop.permute.xlu0 %922
  %924 = vrot.lane.b32.xlu0 %v512, 12
  %v925 = vpop.permute.xlu0 %924
  %926 = vrot.lane.b32.xlu0 %v514, 12
  %v927 = vpop.permute.xlu0 %926
  %928 = vrot.lane.b32.xlu0 %v516, 12
  %v929 = vpop.permute.xlu0 %928
  %930 = vrot.lane.b32.xlu0 %v518, 12
  %v931 = vpop.permute.xlu0 %930
  %932 = vrot.lane.b32.xlu0 %v520, 12
  %v933 = vpop.permute.xlu0 %932
  %934 = vrot.lane.b32.xlu0 %v522, 12
  %v935 = vpop.permute.xlu0 %934
  %936 = vrot.lane.b32.xlu0 %v355, 10
  %v937 = vpop.permute.xlu0 %936
  %938 = vrot.lane.b32.xlu0 %v356, 10
  %v939 = vpop.permute.xlu0 %938
  %940 = vrot.lane.b32.xlu0 %v357, 10
  %v941 = vpop.permute.xlu0 %940
  %942 = vrot.lane.b32.xlu0 %v358, 10
  %v943 = vpop.permute.xlu0 %942
  %944 = vrot.lane.b32.xlu0 %v359, 10
  %v945 = vpop.permute.xlu0 %944
  %946 = vrot.lane.b32.xlu0 %v360, 10
  %v947 = vpop.permute.xlu0 %946
  %948 = vrot.lane.b32.xlu0 %v361, 10
  %v949 = vpop.permute.xlu0 %948
  %950 = vrot.lane.b32.xlu0 %v362, 10
  %v951 = vpop.permute.xlu0 %950
  %952 = vrot.lane.b32.xlu0 %v363, 10
  %v953 = vpop.permute.xlu0 %952
  %954 = vrot.lane.b32.xlu0 %v364, 10
  %v955 = vpop.permute.xlu0 %954
  %956 = vrot.lane.b32.xlu0 %v365, 10
  %v957 = vpop.permute.xlu0 %956
  %958 = vrot.lane.b32.xlu0 %v366, 10
  %v959 = vpop.permute.xlu0 %958
  %960 = vrot.lane.b32.xlu0 %v367, 10
  %v961 = vpop.permute.xlu0 %960
  %962 = vrot.lane.b32.xlu0 %v368, 10
  %v963 = vpop.permute.xlu0 %962
  %964 = vrot.lane.b32.xlu0 %v369, 10
  %v965 = vpop.permute.xlu0 %964
  %966 = vrot.lane.b32.xlu0 %v370, 10
  %v967 = vpop.permute.xlu0 %966
  %968 = vrot.lane.b32.xlu0 %v371, 10
  %v969 = vpop.permute.xlu0 %968
  %970 = vrot.lane.b32.xlu0 %v372, 10
  %v971 = vpop.permute.xlu0 %970
  %972 = vrot.lane.b32.xlu0 %v373, 10
  %v973 = vpop.permute.xlu0 %972
  %974 = vrot.lane.b32.xlu0 %v374, 10
  %v975 = vpop.permute.xlu0 %974
  %976 = vrot.lane.b32.xlu0 %v375, 10
  %v977 = vpop.permute.xlu0 %976
  %978 = vrot.lane.b32.xlu0 %v376, 10
  %v979 = vpop.permute.xlu0 %978
  %980 = vrot.lane.b32.xlu0 %v377, 10
  %v981 = vpop.permute.xlu0 %980
  %982 = vrot.lane.b32.xlu0 %v378, 10
  %v983 = vpop.permute.xlu0 %982
  %984 = vrot.lane.b32.xlu0 %v379, 10
  %v985 = vpop.permute.xlu0 %984
  %986 = vrot.lane.b32.xlu0 %v380, 10
  %v987 = vpop.permute.xlu0 %986
  %988 = vrot.lane.b32.xlu0 %v381, 10
  %v989 = vpop.permute.xlu0 %988
  %990 = vrot.lane.b32.xlu0 %v382, 10
  %v991 = vpop.permute.xlu0 %990
  %992 = vrot.lane.b32.xlu0 %v383, 10
  %v993 = vpop.permute.xlu0 %992
  %994 = vrot.lane.b32.xlu0 %v384, 10
  %v995 = vpop.permute.xlu0 %994
  %996 = vrot.lane.b32.xlu0 %v385, 10
  %v997 = vpop.permute.xlu0 %996
  %998 = vrot.lane.b32.xlu0 %v386, 10
  %v999 = vpop.permute.xlu0 %998
  %1000 = vrot.lane.b32.xlu0 %v358, 12
  %v1001 = vpop.permute.xlu0 %1000
  %1002 = vrot.lane.b32.xlu0 %v359, 12
  %v1003 = vpop.permute.xlu0 %1002
  %1004 = vrot.lane.b32.xlu0 %v360, 12
  %v1005 = vpop.permute.xlu0 %1004
  %1006 = vrot.lane.b32.xlu0 %v361, 12
  %v1007 = vpop.permute.xlu0 %1006
  %1008 = vrot.lane.b32.xlu0 %v362, 12
  %v1009 = vpop.permute.xlu0 %1008
  %1010 = vrot.lane.b32.xlu0 %v363, 12
  %v1011 = vpop.permute.xlu0 %1010
  %1012 = vrot.lane.b32.xlu0 %v364, 12
  %v1013 = vpop.permute.xlu0 %1012
  %1014 = vrot.lane.b32.xlu0 %v365, 12
  %v1015 = vpop.permute.xlu0 %1014
  %1016 = vrot.lane.b32.xlu0 %v366, 12
  %v1017 = vpop.permute.xlu0 %1016
  %1018 = vrot.lane.b32.xlu0 %v367, 12
  %v1019 = vpop.permute.xlu0 %1018
  %1020 = vrot.lane.b32.xlu0 %v368, 12
  %v1021 = vpop.permute.xlu0 %1020
  %1022 = vrot.lane.b32.xlu0 %v369, 12
  %v1023 = vpop.permute.xlu0 %1022
  %1024 = vrot.lane.b32.xlu0 %v370, 12
  %v1025 = vpop.permute.xlu0 %1024
  %1026 = vrot.lane.b32.xlu0 %v374, 12
  %v1027 = vpop.permute.xlu0 %1026
  %1028 = vrot.lane.b32.xlu0 %v375, 12
  %v1029 = vpop.permute.xlu0 %1028
  %1030 = vrot.lane.b32.xlu0 %v376, 12
  %v1031 = vpop.permute.xlu0 %1030
  %1032 = vrot.lane.b32.xlu0 %v377, 12
  %v1033 = vpop.permute.xlu0 %1032
  %1034 = vrot.lane.b32.xlu0 %v378, 12
  %v1035 = vpop.permute.xlu0 %1034
  %1036 = vrot.lane.b32.xlu0 %v379, 12
  %v1037 = vpop.permute.xlu0 %1036
  %1038 = vrot.lane.b32.xlu0 %v380, 12
  %v1039 = vpop.permute.xlu0 %1038
  %1040 = vrot.lane.b32.xlu0 %v381, 12
  %v1041 = vpop.permute.xlu0 %1040
  %1042 = vrot.lane.b32.xlu0 %v382, 12
  %v1043 = vpop.permute.xlu0 %1042
  %1044 = vrot.lane.b32.xlu0 %v383, 12
  %v1045 = vpop.permute.xlu0 %1044
  %1046 = vrot.lane.b32.xlu0 %v384, 12
  %v1047 = vpop.permute.xlu0 %1046
  %1048 = vrot.lane.b32.xlu0 %v385, 12
  %v1049 = vpop.permute.xlu0 %1048
  %1050 = vrot.lane.b32.xlu0 %v386, 12
  %v1051 = vpop.permute.xlu0 %1050
  %1052 = vrot.lane.b32.xlu0 0, 18
  %v1053 = vpop.permute.xlu0 %1052
  %1054 = vrot.lane.b32.xlu0 %v524, 18
  %v1055 = vpop.permute.xlu0 %1054
  %1056 = vrot.lane.b32.xlu0 %v526, 18
  %v1057 = vpop.permute.xlu0 %1056
  %1058 = vrot.lane.b32.xlu0 %v528, 18
  %v1059 = vpop.permute.xlu0 %1058
  %1060 = vrot.lane.b32.xlu0 %v530, 18
  %v1061 = vpop.permute.xlu0 %1060
  %1062 = vrot.lane.b32.xlu0 %v532, 18
  %v1063 = vpop.permute.xlu0 %1062
  %1064 = vrot.lane.b32.xlu0 %v534, 18
  %v1065 = vpop.permute.xlu0 %1064
  %1066 = vrot.lane.b32.xlu0 %v536, 18
  %v1067 = vpop.permute.xlu0 %1066
  %1068 = vrot.lane.b32.xlu0 %v538, 18
  %v1069 = vpop.permute.xlu0 %1068
  %1070 = vrot.lane.b32.xlu0 %v540, 18
  %v1071 = vpop.permute.xlu0 %1070
  %1072 = vrot.lane.b32.xlu0 %v542, 18
  %v1073 = vpop.permute.xlu0 %1072
  %1074 = vrot.lane.b32.xlu0 %v544, 18
  %v1075 = vpop.permute.xlu0 %1074
  %1076 = vrot.lane.b32.xlu0 %v546, 18
  %v1077 = vpop.permute.xlu0 %1076
  %1078 = vrot.lane.b32.xlu0 %v548, 18
  %v1079 = vpop.permute.xlu0 %1078
  %1080 = vrot.lane.b32.xlu0 %v550, 18
  %v1081 = vpop.permute.xlu0 %1080
  %1082 = vrot.lane.b32.xlu0 %v552, 18
  %v1083 = vpop.permute.xlu0 %1082
  %1084 = vrot.lane.b32.xlu0 %v554, 18
  %v1085 = vpop.permute.xlu0 %1084
  %1086 = vrot.lane.b32.xlu0 %v556, 18
  %v1087 = vpop.permute.xlu0 %1086
  %1088 = vrot.lane.b32.xlu0 %v558, 18
  %v1089 = vpop.permute.xlu0 %1088
  %1090 = vrot.lane.b32.xlu0 %v560, 18
  %v1091 = vpop.permute.xlu0 %1090
  %1092 = vrot.lane.b32.xlu0 %v562, 18
  %v1093 = vpop.permute.xlu0 %1092
  %1094 = vrot.lane.b32.xlu0 %v564, 18
  %v1095 = vpop.permute.xlu0 %1094
  %1096 = vrot.lane.b32.xlu0 %v566, 18
  %v1097 = vpop.permute.xlu0 %1096
  %1098 = vrot.lane.b32.xlu0 %v568, 18
  %v1099 = vpop.permute.xlu0 %1098
  %1100 = vrot.lane.b32.xlu0 %v570, 18
  %v1101 = vpop.permute.xlu0 %1100
  %1102 = vrot.lane.b32.xlu0 %v355, 14
  %v1103 = vpop.permute.xlu0 %1102
  %1104 = vrot.lane.b32.xlu0 %v356, 14
  %v1105 = vpop.permute.xlu0 %1104
  %1106 = vrot.lane.b32.xlu0 %v357, 14
  %v1107 = vpop.permute.xlu0 %1106
  %1108 = vrot.lane.b32.xlu0 %v358, 14
  %v1109 = vpop.permute.xlu0 %1108
  %1110 = vrot.lane.b32.xlu0 %v359, 14
  %v1111 = vpop.permute.xlu0 %1110
  %1112 = vrot.lane.b32.xlu0 %v360, 14
  %v1113 = vpop.permute.xlu0 %1112
  %1114 = vrot.lane.b32.xlu0 %v361, 14
  %v1115 = vpop.permute.xlu0 %1114
  %1116 = vrot.lane.b32.xlu0 %v362, 14
  %v1117 = vpop.permute.xlu0 %1116
  %1118 = vrot.lane.b32.xlu0 %v363, 14
  %v1119 = vpop.permute.xlu0 %1118
  %1120 = vrot.lane.b32.xlu0 %v364, 14
  %v1121 = vpop.permute.xlu0 %1120
  %1122 = vrot.lane.b32.xlu0 %v365, 14
  %v1123 = vpop.permute.xlu0 %1122
  %1124 = vrot.lane.b32.xlu0 %v366, 14
  %v1125 = vpop.permute.xlu0 %1124
  %1126 = vrot.lane.b32.xlu0 %v367, 14
  %v1127 = vpop.permute.xlu0 %1126
  %1128 = vrot.lane.b32.xlu0 %v368, 14
  %v1129 = vpop.permute.xlu0 %1128
  %1130 = vrot.lane.b32.xlu0 %v369, 14
  %v1131 = vpop.permute.xlu0 %1130
  %1132 = vrot.lane.b32.xlu0 %v370, 14
  %v1133 = vpop.permute.xlu0 %1132
  %1134 = vrot.lane.b32.xlu0 %v371, 14
  %v1135 = vpop.permute.xlu0 %1134
  %1136 = vrot.lane.b32.xlu0 %v372, 14
  %v1137 = vpop.permute.xlu0 %1136
  %1138 = vrot.lane.b32.xlu0 %v373, 14
  %v1139 = vpop.permute.xlu0 %1138
  %1140 = vrot.lane.b32.xlu0 %v374, 14
  %v1141 = vpop.permute.xlu0 %1140
  %1142 = vrot.lane.b32.xlu0 %v375, 14
  %v1143 = vpop.permute.xlu0 %1142
  %1144 = vrot.lane.b32.xlu0 %v376, 14
  %v1145 = vpop.permute.xlu0 %1144
  %1146 = vrot.lane.b32.xlu0 %v377, 14
  %v1147 = vpop.permute.xlu0 %1146
  %1148 = vrot.lane.b32.xlu0 %v378, 14
  %v1149 = vpop.permute.xlu0 %1148
  %1150 = vrot.lane.b32.xlu0 %v379, 14
  %v1151 = vpop.permute.xlu0 %1150
  %1152 = vrot.lane.b32.xlu0 %v380, 14
  %v1153 = vpop.permute.xlu0 %1152
  %1154 = vrot.lane.b32.xlu0 %v381, 14
  %v1155 = vpop.permute.xlu0 %1154
  %1156 = vrot.lane.b32.xlu0 %v382, 14
  %v1157 = vpop.permute.xlu0 %1156
  %1158 = vrot.lane.b32.xlu0 %v383, 14
  %v1159 = vpop.permute.xlu0 %1158
  %1160 = vrot.lane.b32.xlu0 %v384, 14
  %v1161 = vpop.permute.xlu0 %1160
  %1162 = vrot.lane.b32.xlu0 %v385, 14
  %v1163 = vpop.permute.xlu0 %1162
  %1164 = vrot.lane.b32.xlu0 %v386, 14
  %v1165 = vpop.permute.xlu0 %1164
  %1166 = vrot.lane.b32.xlu0 %v359, 16
  %v1167 = vpop.permute.xlu0 %1166
  %1168 = vrot.lane.b32.xlu0 %v360, 16
  %v1169 = vpop.permute.xlu0 %1168
  %1170 = vrot.lane.b32.xlu0 %v361, 16
  %v1171 = vpop.permute.xlu0 %1170
  %1172 = vrot.lane.b32.xlu0 %v362, 16
  %v1173 = vpop.permute.xlu0 %1172
  %1174 = vrot.lane.b32.xlu0 %v363, 16
  %v1175 = vpop.permute.xlu0 %1174
  %1176 = vrot.lane.b32.xlu0 %v364, 16
  %v1177 = vpop.permute.xlu0 %1176
  %1178 = vrot.lane.b32.xlu0 %v365, 16
  %v1179 = vpop.permute.xlu0 %1178
  %1180 = vrot.lane.b32.xlu0 %v366, 16
  %v1181 = vpop.permute.xlu0 %1180
  %1182 = vrot.lane.b32.xlu0 %v367, 16
  %v1183 = vpop.permute.xlu0 %1182
  %1184 = vrot.lane.b32.xlu0 %v368, 16
  %v1185 = vpop.permute.xlu0 %1184
  %1186 = vrot.lane.b32.xlu0 %v369, 16
  %v1187 = vpop.permute.xlu0 %1186
  %1188 = vrot.lane.b32.xlu0 %v370, 16
  %v1189 = vpop.permute.xlu0 %1188
  %1190 = vrot.lane.b32.xlu0 0, 16
  %v1191 = vpop.permute.xlu0 %1190
  %1192 = vrot.lane.b32.xlu0 %v375, 16
  %v1193 = vpop.permute.xlu0 %1192
  %1194 = vrot.lane.b32.xlu0 %v376, 16
  %v1195 = vpop.permute.xlu0 %1194
  %1196 = vrot.lane.b32.xlu0 %v377, 16
  %v1197 = vpop.permute.xlu0 %1196
  %1198 = vrot.lane.b32.xlu0 %v378, 16
  %v1199 = vpop.permute.xlu0 %1198
  %1200 = vrot.lane.b32.xlu0 %v379, 16
  %v1201 = vpop.permute.xlu0 %1200
  %1202 = vrot.lane.b32.xlu0 %v380, 16
  %v1203 = vpop.permute.xlu0 %1202
  %1204 = vrot.lane.b32.xlu0 %v381, 16
  %v1205 = vpop.permute.xlu0 %1204
  %1206 = vrot.lane.b32.xlu0 %v382, 16
  %v1207 = vpop.permute.xlu0 %1206
  %1208 = vrot.lane.b32.xlu0 %v383, 16
  %v1209 = vpop.permute.xlu0 %1208
  %1210 = vrot.lane.b32.xlu0 %v384, 16
  %v1211 = vpop.permute.xlu0 %1210
  %1212 = vrot.lane.b32.xlu0 %v385, 16
  %v1213 = vpop.permute.xlu0 %1212
  %1214 = vrot.lane.b32.xlu0 %v386, 16
  %v1215 = vpop.permute.xlu0 %1214
  %vm1216 = vcmask 15360
  %v1219 = vsel %vm1216, 0, %v576
  %v1222 = vsel %vm1216, %v355, %v578
  %v1225 = vsel %vm1216, %v356, %v580
  %v1228 = vsel %vm1216, %v357, %v582
  %v1231 = vsel %vm1216, %v358, %v584
  %v1234 = vsel %vm1216, %v359, %v586
  %v1237 = vsel %vm1216, %v360, %v588
  %v1240 = vsel %vm1216, %v361, %v590
  %v1243 = vsel %vm1216, %v362, %v592
  %v1246 = vsel %vm1216, %v363, %v594
  %v1249 = vsel %vm1216, %v364, %v596
  %v1252 = vsel %vm1216, %v365, %v598
  %v1255 = vsel %vm1216, %v366, %v600
  %v1258 = vsel %vm1216, %v367, %v602
  %v1261 = vsel %vm1216, %v368, %v604
  %v1264 = vsel %vm1216, %v369, %v606
  %v1266 = vsel %vm1216, 0, %v608
  %v1269 = vsel %vm1216, %v371, %v610
  %v1272 = vsel %vm1216, %v372, %v612
  %v1275 = vsel %vm1216, %v373, %v614
  %v1278 = vsel %vm1216, %v374, %v616
  %v1281 = vsel %vm1216, %v375, %v618
  %v1284 = vsel %vm1216, %v376, %v620
  %v1287 = vsel %vm1216, %v377, %v622
  %v1290 = vsel %vm1216, %v378, %v624
  %v1293 = vsel %vm1216, %v379, %v626
  %v1296 = vsel %vm1216, %v380, %v628
  %v1299 = vsel %vm1216, %v381, %v630
  %v1302 = vsel %vm1216, %v382, %v632
  %v1305 = vsel %vm1216, %v383, %v634
  %v1308 = vsel %vm1216, %v384, %v636
  %v1311 = vsel %vm1216, %v385, %v638
  %vm1312 = vcmask 31744
  %v1314 = vsel %vm1312, %v1219, %v641
  %v1316 = vsel %vm1312, %v1222, %v643
  %v1318 = vsel %vm1312, %v1225, %v645
  %v1320 = vsel %vm1312, %v1228, %v647
  %v1322 = vsel %vm1312, %v1231, %v649
  %v1324 = vsel %vm1312, %v1234, %v651
  %v1326 = vsel %vm1312, %v1237, %v653
  %v1328 = vsel %vm1312, %v1240, %v655
  %v1330 = vsel %vm1312, %v1243, %v657
  %v1332 = vsel %vm1312, %v1246, %v659
  %v1334 = vsel %vm1312, %v1249, %v661
  %v1336 = vsel %vm1312, %v1252, %v663
  %v1338 = vsel %vm1312, %v1255, %v665
  %v1340 = vsel %vm1312, %v1258, %v667
  %v1342 = vsel %vm1312, %v1261, %v669
  %v1344 = vsel %vm1312, %v1264, %v671
  %v1346 = vsel %vm1312, %v1266, %v673
  %v1348 = vsel %vm1312, %v1269, %v675
  %v1350 = vsel %vm1312, %v1272, %v677
  %v1352 = vsel %vm1312, %v1275, %v679
  %v1354 = vsel %vm1312, %v1278, %v681
  %v1356 = vsel %vm1312, %v1281, %v683
  %v1358 = vsel %vm1312, %v1284, %v685
  %v1360 = vsel %vm1312, %v1287, %v687
  %v1362 = vsel %vm1312, %v1290, %v689
  %v1364 = vsel %vm1312, %v1293, %v691
  %v1366 = vsel %vm1312, %v1296, %v693
  %v1368 = vsel %vm1312, %v1299, %v695
  %v1370 = vsel %vm1312, %v1302, %v697
  %v1372 = vsel %vm1312, %v1305, %v699
  %v1374 = vsel %vm1312, %v1308, %v701
  %v1375 = vsel %vm1312, %v1311, %v671
  %vm1376 = vcmask 48128
  %v1378 = vsel %vm1376, %v1314, %v703
  %v1379 = vsel %vm1376, %v1316, %v703
  %v1381 = vsel %vm1376, %v1318, %v705
  %v1383 = vsel %vm1376, %v1320, %v707
  %v1385 = vsel %vm1376, %v1322, %v709
  %v1387 = vsel %vm1376, %v1324, %v711
  %v1389 = vsel %vm1376, %v1326, %v713
  %v1391 = vsel %vm1376, %v1328, %v715
  %v1393 = vsel %vm1376, %v1330, %v717
  %v1395 = vsel %vm1376, %v1332, %v719
  %v1397 = vsel %vm1376, %v1334, %v721
  %v1399 = vsel %vm1376, %v1336, %v723
  %v1401 = vsel %vm1376, %v1338, %v725
  %v1403 = vsel %vm1376, %v1340, %v727
  %v1405 = vsel %vm1376, %v1342, %v729
  %v1407 = vsel %vm1376, %v1344, %v731
  %v1408 = vsel %vm1376, %v1346, %v703
  %v1409 = vsel %vm1376, %v1348, %v703
  %v1411 = vsel %vm1376, %v1350, %v733
  %v1413 = vsel %vm1376, %v1352, %v735
  %v1415 = vsel %vm1376, %v1354, %v737
  %v1417 = vsel %vm1376, %v1356, %v739
  %v1419 = vsel %vm1376, %v1358, %v741
  %v1421 = vsel %vm1376, %v1360, %v743
  %v1423 = vsel %vm1376, %v1362, %v745
  %v1425 = vsel %vm1376, %v1364, %v747
  %v1427 = vsel %vm1376, %v1366, %v749
  %v1429 = vsel %vm1376, %v1368, %v751
  %v1431 = vsel %vm1376, %v1370, %v753
  %v1433 = vsel %vm1376, %v1372, %v755
  %v1435 = vsel %vm1376, %v1374, %v757
  %v1437 = vsel %vm1376, %v1375, %v759
  %vm1438 = vcmask 64512
  %v1440 = vsel %vm1438, %v1378, %v761
  %v1442 = vsel %vm1438, %v1379, %v763
  %v1444 = vsel %vm1438, %v1381, %v765
  %v1446 = vsel %vm1438, %v1383, %v767
  %v1448 = vsel %vm1438, %v1385, %v769
  %v1450 = vsel %vm1438, %v1387, %v771
  %v1452 = vsel %vm1438, %v1389, %v773
  %v1454 = vsel %vm1438, %v1391, %v775
  %v1456 = vsel %vm1438, %v1393, %v777
  %v1458 = vsel %vm1438, %v1395, %v779
  %v1460 = vsel %vm1438, %v1397, %v781
  %v1462 = vsel %vm1438, %v1399, %v783
  %v1464 = vsel %vm1438, %v1401, %v785
  %v1466 = vsel %vm1438, %v1403, %v787
  %v1468 = vsel %vm1438, %v1405, %v789
  %v1470 = vsel %vm1438, %v1407, %v791
  %v1472 = vsel %vm1438, %v1408, %v793
  %v1474 = vsel %vm1438, %v1409, %v795
  %v1476 = vsel %vm1438, %v1411, %v797
  %v1478 = vsel %vm1438, %v1413, %v799
  %v1480 = vsel %vm1438, %v1415, %v801
  %v1482 = vsel %vm1438, %v1417, %v803
  %v1484 = vsel %vm1438, %v1419, %v805
  %v1486 = vsel %vm1438, %v1421, %v807
  %v1488 = vsel %vm1438, %v1423, %v809
  %v1490 = vsel %vm1438, %v1425, %v811
  %v1492 = vsel %vm1438, %v1427, %v813
  %v1494 = vsel %vm1438, %v1429, %v815
  %v1496 = vsel %vm1438, %v1431, %v817
  %v1498 = vsel %vm1438, %v1433, %v819
  %v1500 = vsel %vm1438, %v1435, %v821
  %v1502 = vsel %vm1438, %v1437, %v823
  %vm1503 = vcmask 80896
  %v1505 = vsel %vm1503, %v1440, %v825
  %v1507 = vsel %vm1503, %v1442, %v827
  %v1509 = vsel %vm1503, %v1444, %v829
  %v1511 = vsel %vm1503, %v1446, %v831
  %v1513 = vsel %vm1503, %v1448, %v833
  %v1515 = vsel %vm1503, %v1450, %v835
  %v1517 = vsel %vm1503, %v1452, %v837
  %v1519 = vsel %vm1503, %v1454, %v839
  %v1521 = vsel %vm1503, %v1456, %v841
  %v1523 = vsel %vm1503, %v1458, %v843
  %v1525 = vsel %vm1503, %v1460, %v845
  %v1527 = vsel %vm1503, %v1462, %v847
  %v1529 = vsel %vm1503, %v1464, %v849
  %v1531 = vsel %vm1503, %v1466, %v851
  %v1533 = vsel %vm1503, %v1468, %v853
  %v1534 = vsel %vm1503, %v1470, %v853
  %v1536 = vsel %vm1503, %v1472, %v855
  %v1538 = vsel %vm1503, %v1474, %v857
  %v1540 = vsel %vm1503, %v1476, %v859
  %v1542 = vsel %vm1503, %v1478, %v861
  %v1544 = vsel %vm1503, %v1480, %v863
  %v1546 = vsel %vm1503, %v1482, %v865
  %v1548 = vsel %vm1503, %v1484, %v867
  %v1550 = vsel %vm1503, %v1486, %v869
  %v1552 = vsel %vm1503, %v1488, %v871
  %v1554 = vsel %vm1503, %v1490, %v873
  %v1556 = vsel %vm1503, %v1492, %v875
  %v1558 = vsel %vm1503, %v1494, %v877
  %v1560 = vsel %vm1503, %v1496, %v879
  %v1562 = vsel %vm1503, %v1498, %v881
  %v1563 = vsel %vm1503, %v1500, %v853
  %v1564 = vsel %vm1503, %v1502, %v853
  %vm1565 = vcmask 97280
  %v1567 = vsel %vm1565, %v1505, %v883
  %v1568 = vsel %vm1565, %v1507, %v883
  %v1569 = vsel %vm1565, %v1509, %v883
  %v1571 = vsel %vm1565, %v1511, %v885
  %v1573 = vsel %vm1565, %v1513, %v887
  %v1575 = vsel %vm1565, %v1515, %v889
  %v1577 = vsel %vm1565, %v1517, %v891
  %v1579 = vsel %vm1565, %v1519, %v893
  %v1581 = vsel %vm1565, %v1521, %v895
  %v1583 = vsel %vm1565, %v1523, %v897
  %v1585 = vsel %vm1565, %v1525, %v899
  %v1587 = vsel %vm1565, %v1527, %v901
  %v1589 = vsel %vm1565, %v1529, %v903
  %v1591 = vsel %vm1565, %v1531, %v905
  %v1593 = vsel %vm1565, %v1533, %v907
  %v1595 = vsel %vm1565, %v1534, %v909
  %v1596 = vsel %vm1565, %v1536, %v883
  %v1597 = vsel %vm1565, %v1538, %v883
  %v1598 = vsel %vm1565, %v1540, %v883
  %v1600 = vsel %vm1565, %v1542, %v911
  %v1602 = vsel %vm1565, %v1544, %v913
  %v1604 = vsel %vm1565, %v1546, %v915
  %v1606 = vsel %vm1565, %v1548, %v917
  %v1608 = vsel %vm1565, %v1550, %v919
  %v1610 = vsel %vm1565, %v1552, %v921
  %v1612 = vsel %vm1565, %v1554, %v923
  %v1614 = vsel %vm1565, %v1556, %v925
  %v1616 = vsel %vm1565, %v1558, %v927
  %v1618 = vsel %vm1565, %v1560, %v929
  %v1620 = vsel %vm1565, %v1562, %v931
  %v1622 = vsel %vm1565, %v1563, %v933
  %v1624 = vsel %vm1565, %v1564, %v935
  %vm1625 = vcmask 113664
  %v1627 = vsel %vm1625, %v1567, %v937
  %v1629 = vsel %vm1625, %v1568, %v939
  %v1631 = vsel %vm1625, %v1569, %v941
  %v1633 = vsel %vm1625, %v1571, %v943
  %v1635 = vsel %vm1625, %v1573, %v945
  %v1637 = vsel %vm1625, %v1575, %v947
  %v1639 = vsel %vm1625, %v1577, %v949
  %v1641 = vsel %vm1625, %v1579, %v951
  %v1643 = vsel %vm1625, %v1581, %v953
  %v1645 = vsel %vm1625, %v1583, %v955
  %v1647 = vsel %vm1625, %v1585, %v957
  %v1649 = vsel %vm1625, %v1587, %v959
  %v1651 = vsel %vm1625, %v1589, %v961
  %v1653 = vsel %vm1625, %v1591, %v963
  %v1655 = vsel %vm1625, %v1593, %v965
  %v1657 = vsel %vm1625, %v1595, %v967
  %v1659 = vsel %vm1625, %v1596, %v969
  %v1661 = vsel %vm1625, %v1597, %v971
  %v1663 = vsel %vm1625, %v1598, %v973
  %v1665 = vsel %vm1625, %v1600, %v975
  %v1667 = vsel %vm1625, %v1602, %v977
  %v1669 = vsel %vm1625, %v1604, %v979
  %v1671 = vsel %vm1625, %v1606, %v981
  %v1673 = vsel %vm1625, %v1608, %v983
  %v1675 = vsel %vm1625, %v1610, %v985
  %v1677 = vsel %vm1625, %v1612, %v987
  %v1679 = vsel %vm1625, %v1614, %v989
  %v1681 = vsel %vm1625, %v1616, %v991
  %v1683 = vsel %vm1625, %v1618, %v993
  %v1685 = vsel %vm1625, %v1620, %v995
  %v1687 = vsel %vm1625, %v1622, %v997
  %v1689 = vsel %vm1625, %v1624, %v999
  %vm1690 = vcmask 130048
  %v1692 = vsel %vm1690, %v1627, %v1001
  %v1694 = vsel %vm1690, %v1629, %v1003
  %v1696 = vsel %vm1690, %v1631, %v1005
  %v1698 = vsel %vm1690, %v1633, %v1007
  %v1700 = vsel %vm1690, %v1635, %v1009
  %v1702 = vsel %vm1690, %v1637, %v1011
  %v1704 = vsel %vm1690, %v1639, %v1013
  %v1706 = vsel %vm1690, %v1641, %v1015
  %v1708 = vsel %vm1690, %v1643, %v1017
  %v1710 = vsel %vm1690, %v1645, %v1019
  %v1712 = vsel %vm1690, %v1647, %v1021
  %v1714 = vsel %vm1690, %v1649, %v1023
  %v1716 = vsel %vm1690, %v1651, %v1025
  %v1717 = vsel %vm1690, %v1653, %v883
  %v1718 = vsel %vm1690, %v1655, %v883
  %v1719 = vsel %vm1690, %v1657, %v883
  %v1721 = vsel %vm1690, %v1659, %v1027
  %v1723 = vsel %vm1690, %v1661, %v1029
  %v1725 = vsel %vm1690, %v1663, %v1031
  %v1727 = vsel %vm1690, %v1665, %v1033
  %v1729 = vsel %vm1690, %v1667, %v1035
  %v1731 = vsel %vm1690, %v1669, %v1037
  %v1733 = vsel %vm1690, %v1671, %v1039
  %v1735 = vsel %vm1690, %v1673, %v1041
  %v1737 = vsel %vm1690, %v1675, %v1043
  %v1739 = vsel %vm1690, %v1677, %v1045
  %v1741 = vsel %vm1690, %v1679, %v1047
  %v1743 = vsel %vm1690, %v1681, %v1049
  %v1745 = vsel %vm1690, %v1683, %v1051
  %v1746 = vsel %vm1690, %v1685, %v883
  %v1747 = vsel %vm1690, %v1687, %v883
  %v1748 = vsel %vm1690, %v1689, %v883
  %vm1749 = vcmask 146432
  %v1751 = vsel %vm1749, %v1692, %v1053
  %v1752 = vsel %vm1749, %v1694, %v1053
  %v1753 = vsel %vm1749, %v1696, %v1053
  %v1754 = vsel %vm1749, %v1698, %v1053
  %v1756 = vsel %vm1749, %v1700, %v1055
  %v1758 = vsel %vm1749, %v1702, %v1057
  %v1760 = vsel %vm1749, %v1704, %v1059
  %v1762 = vsel %vm1749, %v1706, %v1061
  %v1764 = vsel %vm1749, %v1708, %v1063
  %v1766 = vsel %vm1749, %v1710, %v1065
  %v1768 = vsel %vm1749, %v1712, %v1067
  %v1770 = vsel %vm1749, %v1714, %v1069
  %v1772 = vsel %vm1749, %v1716, %v1071
  %v1774 = vsel %vm1749, %v1717, %v1073
  %v1776 = vsel %vm1749, %v1718, %v1075
  %v1778 = vsel %vm1749, %v1719, %v1077
  %v1779 = vsel %vm1749, %v1721, %v1053
  %v1780 = vsel %vm1749, %v1723, %v1053
  %v1781 = vsel %vm1749, %v1725, %v1053
  %v1782 = vsel %vm1749, %v1727, %v1053
  %v1784 = vsel %vm1749, %v1729, %v1079
  %v1786 = vsel %vm1749, %v1731, %v1081
  %v1788 = vsel %vm1749, %v1733, %v1083
  %v1790 = vsel %vm1749, %v1735, %v1085
  %v1792 = vsel %vm1749, %v1737, %v1087
  %v1794 = vsel %vm1749, %v1739, %v1089
  %v1796 = vsel %vm1749, %v1741, %v1091
  %v1798 = vsel %vm1749, %v1743, %v1093
  %v1800 = vsel %vm1749, %v1745, %v1095
  %v1802 = vsel %vm1749, %v1746, %v1097
  %v1804 = vsel %vm1749, %v1747, %v1099
  %v1806 = vsel %vm1749, %v1748, %v1101
  %vm1807 = vcmask 162816
  %v1809 = vsel %vm1807, %v1751, %v1103
  %v1811 = vsel %vm1807, %v1752, %v1105
  %v1813 = vsel %vm1807, %v1753, %v1107
  %v1815 = vsel %vm1807, %v1754, %v1109
  %v1817 = vsel %vm1807, %v1756, %v1111
  %v1819 = vsel %vm1807, %v1758, %v1113
  %v1821 = vsel %vm1807, %v1760, %v1115
  %v1823 = vsel %vm1807, %v1762, %v1117
  %v1825 = vsel %vm1807, %v1764, %v1119
  %v1827 = vsel %vm1807, %v1766, %v1121
  %v1829 = vsel %vm1807, %v1768, %v1123
  %v1831 = vsel %vm1807, %v1770, %v1125
  %v1833 = vsel %vm1807, %v1772, %v1127
  %v1835 = vsel %vm1807, %v1774, %v1129
  %v1837 = vsel %vm1807, %v1776, %v1131
  %v1839 = vsel %vm1807, %v1778, %v1133
  %v1841 = vsel %vm1807, %v1779, %v1135
  %v1843 = vsel %vm1807, %v1780, %v1137
  %v1845 = vsel %vm1807, %v1781, %v1139
  %v1847 = vsel %vm1807, %v1782, %v1141
  %v1849 = vsel %vm1807, %v1784, %v1143
  %v1851 = vsel %vm1807, %v1786, %v1145
  %v1853 = vsel %vm1807, %v1788, %v1147
  %v1855 = vsel %vm1807, %v1790, %v1149
  %v1857 = vsel %vm1807, %v1792, %v1151
  %v1859 = vsel %vm1807, %v1794, %v1153
  %v1861 = vsel %vm1807, %v1796, %v1155
  %v1863 = vsel %vm1807, %v1798, %v1157
  %v1865 = vsel %vm1807, %v1800, %v1159
  %v1867 = vsel %vm1807, %v1802, %v1161
  %v1869 = vsel %vm1807, %v1804, %v1163
  %v1871 = vsel %vm1807, %v1806, %v1165
  %vm1872 = vcmask 179200
  %v1874 = vsel %vm1872, %v1809, %v1167
  %v1876 = vsel %vm1872, %v1811, %v1169
  %v1878 = vsel %vm1872, %v1813, %v1171
  %v1880 = vsel %vm1872, %v1815, %v1173
  %v1882 = vsel %vm1872, %v1817, %v1175
  %v1884 = vsel %vm1872, %v1819, %v1177
  %v1886 = vsel %vm1872, %v1821, %v1179
  %v1888 = vsel %vm1872, %v1823, %v1181
  %v1890 = vsel %vm1872, %v1825, %v1183
  %v1892 = vsel %vm1872, %v1827, %v1185
  %v1894 = vsel %vm1872, %v1829, %v1187
  %v1896 = vsel %vm1872, %v1831, %v1189
  %v1898 = vsel %vm1872, %v1833, %v1191
  %v1899 = vsel %vm1872, %v1835, %v1191
  %v1900 = vsel %vm1872, %v1837, %v1191
  %v1901 = vsel %vm1872, %v1839, %v1191
  %v1903 = vsel %vm1872, %v1841, %v1193
  %v1905 = vsel %vm1872, %v1843, %v1195
  %v1907 = vsel %vm1872, %v1845, %v1197
  %v1909 = vsel %vm1872, %v1847, %v1199
  %v1911 = vsel %vm1872, %v1849, %v1201
  %v1913 = vsel %vm1872, %v1851, %v1203
  %v1915 = vsel %vm1872, %v1853, %v1205
  %v1917 = vsel %vm1872, %v1855, %v1207
  %v1919 = vsel %vm1872, %v1857, %v1209
  %v1921 = vsel %vm1872, %v1859, %v1211
  %v1923 = vsel %vm1872, %v1861, %v1213
  %v1925 = vsel %vm1872, %v1863, %v1215
  %v1926 = vsel %vm1872, %v1865, %v1191
  %v1927 = vsel %vm1872, %v1867, %v1191
  %v1928 = vsel %vm1872, %v1869, %v1191
  %v1929 = vsel %vm1872, %v1871, %v1191
  %v1933 = vunpack.c.l.b16 %v84
  %v1934 = vunpack.c.l.b16 %v85
  %v1935 = vunpack.c.l.b16 %v86
  %v1936 = vpack.c.b16 %v1934, %v1933
  %v1937 = vpack.c.b16 %v1935, %v1935
  %vm1939 = vcmask 195584
  %v1940 = vsel %vm1939, %v1874, 0
  %v1942 = vsel %vm1939, %v1876, 0
  %v1944 = vsel %vm1939, %v1878, 0
  %v1946 = vsel %vm1939, %v1880, 0
  %v1948 = vsel %vm1939, %v1882, 0
  %v1950 = vsel %vm1939, %v1884, 0
  %v1952 = vsel %vm1939, %v1886, 0
  %v1954 = vsel %vm1939, %v1888, 0
  %v1956 = vsel %vm1939, %v1890, 0
  %v1958 = vsel %vm1939, %v1892, 0
  %v1960 = vsel %vm1939, %v1894, 0
  %v1962 = vsel %vm1939, %v1896, 0
  %v1964 = vsel %vm1939, %v1898, 0
  %v1966 = vsel %vm1939, %v1899, 0
  %v1968 = vsel %vm1939, %v1900, 0
  %v1970 = vsel %vm1939, %v1901, 0
  %v1972 = vsel %vm1939, %v1903, 0
  %v1974 = vsel %vm1939, %v1905, 0
  %v1976 = vsel %vm1939, %v1907, 0
  %v1978 = vsel %vm1939, %v1909, 0
  %v1980 = vsel %vm1939, %v1911, 0
  %v1982 = vsel %vm1939, %v1913, 0
  %v1984 = vsel %vm1939, %v1915, 0
  %v1986 = vsel %vm1939, %v1917, 0
  %v1988 = vsel %vm1939, %v1919, 0
  %v1990 = vsel %vm1939, %v1921, 0
  %v1992 = vsel %vm1939, %v1923, 0
  %v1994 = vsel %vm1939, %v1925, 0
  %v1996 = vsel %vm1939, %v1926, 0
  %v1998 = vsel %vm1939, %v1927, 0
  %v2000 = vsel %vm1939, %v1928, 0
  %v2002 = vsel %vm1939, %v1929, 0
  %vm2004 = vcmask 1043456
  %v2006 = vsel %vm2004, %v1937, 0
  %2008 = vmatprep.subr.bf16.mxu0 0
  %2009 = vmatpush1.bf16.msra.mxu0 %v1936
  %2010 = vmatprep.subr.bf16.mxu0 0
  %2011 = vmatpush1.bf16.msra.mxu0 %v2006
  %2012 = vmatprep.subr.bf16.mxu0 0
  %2013 = vmatpush1.bf16.msra.mxu0 0
  %2014 = vmatprep.subr.bf16.mxu0 0
  %2015 = vmatpush1.bf16.msra.mxu0 0
  %2016 = vmatprep.subr.bf16.mxu0 0
  %2017 = vmatpush1.bf16.msra.mxu0 0
  %2018 = vmatprep.subr.bf16.mxu0 0
  %2019 = vmatpush1.bf16.msra.mxu0 0
  %2020 = vmatprep.subr.bf16.mxu0 0
  %2021 = vmatpush1.bf16.msra.mxu0 0
  %2022 = vmatprep.subr.bf16.mxu0 0
  %2023 = vmatpush1.bf16.msra.mxu0 0
  %2024 = vmatprep.subr.bf16.mxu0 0
  %2025 = vmatpush1.bf16.msra.mxu0 0
  %2026 = vmatprep.subr.bf16.mxu0 0
  %2027 = vmatpush1.bf16.msra.mxu0 0
  %2028 = vmatprep.subr.bf16.mxu0 0
  %2029 = vmatpush1.bf16.msra.mxu0 0
  %2030 = vmatprep.subr.bf16.mxu0 0
  %2031 = vmatpush1.bf16.msra.mxu0 0
  %2032 = vmatprep.subr.bf16.mxu0 0
  %2033 = vmatpush1.bf16.msra.mxu0 0
  %2034 = vmatprep.subr.bf16.mxu0 0
  %2035 = vmatpush1.bf16.msra.mxu0 0
  %2036 = vmatprep.subr.bf16.mxu0 0
  %2037 = vmatpush1.bf16.msra.mxu0 0
  %2038 = vmatprep.subr.bf16.mxu0 0
  %2039 = vmatpush1.bf16.msra.mxu0 0
  %2040 = vmatprep.mubr.bf16.mxu0 0
  %2041 = vmatmul.mubr.bf16.gmra.mrb[0].mxu0 %v1940
  %v2042 = vpop.f32.mrb[0].mxu0
  %v2043 = vadd.f32 0.0, %v2042
  %v2044 = vpop.f32.mrb[0].mxu0
  %v2045 = vpop.f32.mrb[0].mxu0
  %v2046 = vadd.f32 0.0, %v2045
  %v2047 = vpop.f32.mrb[0].mxu0
  %2048 = vmatprep.mubr.bf16.mxu0 0
  %2049 = vmatmul.mubr.bf16.gmra.mrb[0].mxu0 %v1942
  %v2050 = vpop.f32.mrb[0].mxu0
  %v2051 = vadd.f32 0.0, %v2050
  %v2052 = vpop.f32.mrb[0].mxu0
  %v2053 = vpop.f32.mrb[0].mxu0
  %v2054 = vadd.f32 0.0, %v2053
  %v2055 = vpop.f32.mrb[0].mxu0
  %2056 = vmatprep.mubr.bf16.mxu0 0
  %2057 = vmatmul.mubr.bf16.gmra.mrb[0].mxu0 %v1944
  %v2058 = vpop.f32.mrb[0].mxu0
  %v2059 = vadd.f32 0.0, %v2058
  %v2060 = vpop.f32.mrb[0].mxu0
  %v2061 = vpop.f32.mrb[0].mxu0
  %v2062 = vadd.f32 0.0, %v2061
  %v2063 = vpop.f32.mrb[0].mxu0
  %2064 = vmatprep.mubr.bf16.mxu0 0
  %2065 = vmatmul.mubr.bf16.gmra.mrb[0].mxu0 %v1946
  %v2066 = vpop.f32.mrb[0].mxu0
  %v2067 = vadd.f32 0.0, %v2066
  %v2068 = vpop.f32.mrb[0].mxu0
  %v2069 = vpop.f32.mrb[0].mxu0
  %v2070 = vadd.f32 0.0, %v2069
  %v2071 = vpop.f32.mrb[0].mxu0
  %2072 = vmatprep.mubr.bf16.mxu0 0
  %2073 = vmatmul.mubr.bf16.gmra.mrb[0].mxu0 %v1948
  %v2074 = vpop.f32.mrb[0].mxu0
  %v2075 = vadd.f32 0.0, %v2074
  %v2076 = vpop.f32.mrb[0].mxu0
  %v2077 = vpop.f32.mrb[0].mxu0
  %v2078 = vadd.f32 0.0, %v2077
  %v2079 = vpop.f32.mrb[0].mxu0
  %2080 = vmatprep.mubr.bf16.mxu0 0
  %2081 = vmatmul.mubr.bf16.gmra.mrb[0].mxu0 %v1950
  %v2082 = vpop.f32.mrb[0].mxu0
  %v2083 = vadd.f32 0.0, %v2082
  %v2084 = vpop.f32.mrb[0].mxu0
  %v2085 = vpop.f32.mrb[0].mxu0
  %v2086 = vadd.f32 0.0, %v2085
  %v2087 = vpop.f32.mrb[0].mxu0
  %2088 = vmatprep.mubr.bf16.mxu0 0
  %2089 = vmatmul.mubr.bf16.gmra.mrb[0].mxu0 %v1952
  %v2090 = vpop.f32.mrb[0].mxu0
  %v2091 = vadd.f32 0.0, %v2090
  %v2092 = vpop.f32.mrb[0].mxu0
  %v2093 = vpop.f32.mrb[0].mxu0
  %v2094 = vadd.f32 0.0, %v2093
  %v2095 = vpop.f32.mrb[0].mxu0
  %2096 = vmatprep.mubr.bf16.mxu0 0
  %2097 = vmatmul.mubr.bf16.gmra.mrb[0].mxu0 %v1954
  %v2098 = vpop.f32.mrb[0].mxu0
  %v2099 = vadd.f32 0.0, %v2098
  %v2100 = vpop.f32.mrb[0].mxu0
  %v2101 = vpop.f32.mrb[0].mxu0
  %v2102 = vadd.f32 0.0, %v2101
  %v2103 = vpop.f32.mrb[0].mxu0
  %2104 = vmatprep.mubr.bf16.mxu0 0
  %2105 = vmatmul.mubr.bf16.gmra.mrb[0].mxu0 %v1956
  %v2106 = vpop.f32.mrb[0].mxu0
  %v2107 = vadd.f32 0.0, %v2106
  %v2108 = vpop.f32.mrb[0].mxu0
  %v2109 = vpop.f32.mrb[0].mxu0
  %v2110 = vadd.f32 0.0, %v2109
  %v2111 = vpop.f32.mrb[0].mxu0
  %2112 = vmatprep.mubr.bf16.mxu0 0
  %2113 = vmatmul.mubr.bf16.gmra.mrb[0].mxu0 %v1958
  %v2114 = vpop.f32.mrb[0].mxu0
  %v2115 = vadd.f32 0.0, %v2114
  %v2116 = vpop.f32.mrb[0].mxu0
  %v2117 = vpop.f32.mrb[0].mxu0
  %v2118 = vadd.f32 0.0, %v2117
  %v2119 = vpop.f32.mrb[0].mxu0
  %2120 = vmatprep.mubr.bf16.mxu0 0
  %2121 = vmatmul.mubr.bf16.gmra.mrb[0].mxu0 %v1960
  %v2122 = vpop.f32.mrb[0].mxu0
  %v2123 = vadd.f32 0.0, %v2122
  %v2124 = vpop.f32.mrb[0].mxu0
  %v2125 = vpop.f32.mrb[0].mxu0
  %v2126 = vadd.f32 0.0, %v2125
  %v2127 = vpop.f32.mrb[0].mxu0
  %2128 = vmatprep.mubr.bf16.mxu0 0
  %2129 = vmatmul.mubr.bf16.gmra.mrb[0].mxu0 %v1962
  %v2130 = vpop.f32.mrb[0].mxu0
  %v2131 = vadd.f32 0.0, %v2130
  %v2132 = vpop.f32.mrb[0].mxu0
  %v2133 = vpop.f32.mrb[0].mxu0
  %v2134 = vadd.f32 0.0, %v2133
  %v2135 = vpop.f32.mrb[0].mxu0
  %2136 = vmatprep.mubr.bf16.mxu0 0
  %2137 = vmatmul.mubr.bf16.gmra.mrb[0].mxu0 %v1964
  %v2138 = vpop.f32.mrb[0].mxu0
  %v2139 = vadd.f32 0.0, %v2138
  %v2140 = vpop.f32.mrb[0].mxu0
  %v2141 = vpop.f32.mrb[0].mxu0
  %v2142 = vadd.f32 0.0, %v2141
  %v2143 = vpop.f32.mrb[0].mxu0
  %2144 = vmatprep.mubr.bf16.mxu0 0
  %2145 = vmatmul.mubr.bf16.gmra.mrb[0].mxu0 %v1966
  %v2146 = vpop.f32.mrb[0].mxu0
  %v2147 = vadd.f32 0.0, %v2146
  %v2148 = vpop.f32.mrb[0].mxu0
  %v2149 = vpop.f32.mrb[0].mxu0
  %v2150 = vadd.f32 0.0, %v2149
  %v2151 = vpop.f32.mrb[0].mxu0
  %2152 = vmatprep.mubr.bf16.mxu0 0
  %2153 = vmatmul.mubr.bf16.gmra.mrb[0].mxu0 %v1968
  %v2154 = vpop.f32.mrb[0].mxu0
  %v2155 = vadd.f32 0.0, %v2154
  %v2156 = vpop.f32.mrb[0].mxu0
  %v2157 = vpop.f32.mrb[0].mxu0
  %v2158 = vadd.f32 0.0, %v2157
  %v2159 = vpop.f32.mrb[0].mxu0
  %2160 = vmatprep.mubr.bf16.mxu0 0
  %2161 = vmatmul.mubr.bf16.gmra.mrb[0].mxu0 %v1970
  %v2162 = vpop.f32.mrb[0].mxu0
  %v2163 = vadd.f32 0.0, %v2162
  %v2164 = vpop.f32.mrb[0].mxu0
  %v2165 = vpop.f32.mrb[0].mxu0
  %v2166 = vadd.f32 0.0, %v2165
  %v2167 = vpop.f32.mrb[0].mxu0
  %2168 = vmatprep.mubr.bf16.mxu0 0
  %2169 = vmatmul.mubr.bf16.gmra.mrb[0].mxu0 %v1972
  %v2170 = vpop.f32.mrb[0].mxu0
  %v2171 = vadd.f32 0.0, %v2170
  %v2172 = vpop.f32.mrb[0].mxu0
  %v2173 = vpop.f32.mrb[0].mxu0
  %v2174 = vadd.f32 0.0, %v2173
  %v2175 = vpop.f32.mrb[0].mxu0
  %2176 = vmatprep.mubr.bf16.mxu0 0
  %2177 = vmatmul.mubr.bf16.gmra.mrb[0].mxu0 %v1974
  %v2178 = vpop.f32.mrb[0].mxu0
  %v2179 = vadd.f32 0.0, %v2178
  %v2180 = vpop.f32.mrb[0].mxu0
  %v2181 = vpop.f32.mrb[0].mxu0
  %v2182 = vadd.f32 0.0, %v2181
  %v2183 = vpop.f32.mrb[0].mxu0
  %2184 = vmatprep.mubr.bf16.mxu0 0
  %2185 = vmatmul.mubr.bf16.gmra.mrb[0].mxu0 %v1976
  %v2186 = vpop.f32.mrb[0].mxu0
  %v2187 = vadd.f32 0.0, %v2186
  %v2188 = vpop.f32.mrb[0].mxu0
  %v2189 = vpop.f32.mrb[0].mxu0
  %v2190 = vadd.f32 0.0, %v2189
  %v2191 = vpop.f32.mrb[0].mxu0
  %2192 = vmatprep.mubr.bf16.mxu0 0
  %2193 = vmatmul.mubr.bf16.gmra.mrb[0].mxu0 %v1978
  %v2194 = vpop.f32.mrb[0].mxu0
  %v2195 = vadd.f32 0.0, %v2194
  %v2196 = vpop.f32.mrb[0].mxu0
  %v2197 = vpop.f32.mrb[0].mxu0
  %v2198 = vadd.f32 0.0, %v2197
  %v2199 = vpop.f32.mrb[0].mxu0
  %2200 = vmatprep.mubr.bf16.mxu0 0
  %2201 = vmatmul.mubr.bf16.gmra.mrb[0].mxu0 %v1980
  %v2202 = vpop.f32.mrb[0].mxu0
  %v2203 = vadd.f32 0.0, %v2202
  %v2204 = vpop.f32.mrb[0].mxu0
  %v2205 = vpop.f32.mrb[0].mxu0
  %v2206 = vadd.f32 0.0, %v2205
  %v2207 = vpop.f32.mrb[0].mxu0
  %2208 = vmatprep.mubr.bf16.mxu0 0
  %2209 = vmatmul.mubr.bf16.gmra.mrb[0].mxu0 %v1982
  %v2210 = vpop.f32.mrb[0].mxu0
  %v2211 = vadd.f32 0.0, %v2210
  %v2212 = vpop.f32.mrb[0].mxu0
  %v2213 = vpop.f32.mrb[0].mxu0
  %v2214 = vadd.f32 0.0, %v2213
  %v2215 = vpop.f32.mrb[0].mxu0
  %2216 = vmatprep.mubr.bf16.mxu0 0
  %2217 = vmatmul.mubr.bf16.gmra.mrb[0].mxu0 %v1984
  %v2218 = vpop.f32.mrb[0].mxu0
  %v2219 = vadd.f32 0.0, %v2218
  %v2220 = vpop.f32.mrb[0].mxu0
  %v2221 = vpop.f32.mrb[0].mxu0
  %v2222 = vadd.f32 0.0, %v2221
  %v2223 = vpop.f32.mrb[0].mxu0
  %2224 = vmatprep.mubr.bf16.mxu0 0
  %2225 = vmatmul.mubr.bf16.gmra.mrb[0].mxu0 %v1986
  %v2226 = vpop.f32.mrb[0].mxu0
  %v2227 = vadd.f32 0.0, %v2226
  %v2228 = vpop.f32.mrb[0].mxu0
  %v2229 = vpop.f32.mrb[0].mxu0
  %v2230 = vadd.f32 0.0, %v2229
  %v2231 = vpop.f32.mrb[0].mxu0
  %2232 = vmatprep.mubr.bf16.mxu0 0
  %2233 = vmatmul.mubr.bf16.gmra.mrb[0].mxu0 %v1988
  %v2234 = vpop.f32.mrb[0].mxu0
  %v2235 = vadd.f32 0.0, %v2234
  %v2236 = vpop.f32.mrb[0].mxu0
  %v2237 = vpop.f32.mrb[0].mxu0
  %v2238 = vadd.f32 0.0, %v2237
  %v2239 = vpop.f32.mrb[0].mxu0
  %2240 = vmatprep.mubr.bf16.mxu0 0
  %2241 = vmatmul.mubr.bf16.gmra.mrb[0].mxu0 %v1990
  %v2242 = vpop.f32.mrb[0].mxu0
  %v2243 = vadd.f32 0.0, %v2242
  %v2244 = vpop.f32.mrb[0].mxu0
  %v2245 = vpop.f32.mrb[0].mxu0
  %v2246 = vadd.f32 0.0, %v2245
  %v2247 = vpop.f32.mrb[0].mxu0
  %2248 = vmatprep.mubr.bf16.mxu0 0
  %2249 = vmatmul.mubr.bf16.gmra.mrb[0].mxu0 %v1992
  %v2250 = vpop.f32.mrb[0].mxu0
  %v2251 = vadd.f32 0.0, %v2250
  %v2252 = vpop.f32.mrb[0].mxu0
  %v2253 = vpop.f32.mrb[0].mxu0
  %v2254 = vadd.f32 0.0, %v2253
  %v2255 = vpop.f32.mrb[0].mxu0
  %2256 = vmatprep.mubr.bf16.mxu0 0
  %2257 = vmatmul.mubr.bf16.gmra.mrb[0].mxu0 %v1994
  %v2258 = vpop.f32.mrb[0].mxu0
  %v2259 = vadd.f32 0.0, %v2258
  %v2260 = vpop.f32.mrb[0].mxu0
  %v2261 = vpop.f32.mrb[0].mxu0
  %v2262 = vadd.f32 0.0, %v2261
  %v2263 = vpop.f32.mrb[0].mxu0
  %2264 = vmatprep.mubr.bf16.mxu0 0
  %2265 = vmatmul.mubr.bf16.gmra.mrb[0].mxu0 %v1996
  %v2266 = vpop.f32.mrb[0].mxu0
  %v2267 = vadd.f32 0.0, %v2266
  %v2268 = vpop.f32.mrb[0].mxu0
  %v2269 = vpop.f32.mrb[0].mxu0
  %v2270 = vadd.f32 0.0, %v2269
  %v2271 = vpop.f32.mrb[0].mxu0
  %2272 = vmatprep.mubr.bf16.mxu0 0
  %2273 = vmatmul.mubr.bf16.gmra.mrb[0].mxu0 %v1998
  %v2274 = vpop.f32.mrb[0].mxu0
  %v2275 = vadd.f32 0.0, %v2274
  %v2276 = vpop.f32.mrb[0].mxu0
  %v2277 = vpop.f32.mrb[0].mxu0
  %v2278 = vadd.f32 0.0, %v2277
  %v2279 = vpop.f32.mrb[0].mxu0
  %2280 = vmatprep.mubr.bf16.mxu0 0
  %2281 = vmatmul.mubr.bf16.gmra.mrb[0].mxu0 %v2000
  %v2282 = vpop.f32.mrb[0].mxu0
  %v2283 = vadd.f32 0.0, %v2282
  %v2284 = vpop.f32.mrb[0].mxu0
  %v2285 = vpop.f32.mrb[0].mxu0
  %v2286 = vadd.f32 0.0, %v2285
  %v2287 = vpop.f32.mrb[0].mxu0
  %2288 = vmatprep.mubr.bf16.mxu0 0
  %2289 = vmatmul.mubr.bf16.gmra.mrb[0].mxu0 %v2002
  %v2290 = vpop.f32.mrb[0].mxu0
  %v2291 = vadd.f32 0.0, %v2290
  %v2292 = vpop.f32.mrb[0].mxu0
  %v2293 = vpop.f32.mrb[0].mxu0
  %v2294 = vadd.f32 0.0, %v2293
  %v2295 = vpop.f32.mrb[0].mxu0
  %2296 = vdwg.mxu0
  %2357 = vrot.lane.b32.xlu0 %v291, 120
  %v2358 = vpop.permute.xlu0 %2357
  %2359 = vrot.lane.b32.xlu0 %v292, 120
  %v2360 = vpop.permute.xlu0 %2359
  %2361 = vrot.lane.b32.xlu0 %v293, 120
  %v2362 = vpop.permute.xlu0 %2361
  %2363 = vrot.lane.b32.xlu0 %v294, 120
  %v2364 = vpop.permute.xlu0 %2363
  %2365 = vrot.lane.b32.xlu0 %v295, 120
  %v2366 = vpop.permute.xlu0 %2365
  %2367 = vrot.lane.b32.xlu0 %v296, 120
  %v2368 = vpop.permute.xlu0 %2367
  %2369 = vrot.lane.b32.xlu0 %v297, 120
  %v2370 = vpop.permute.xlu0 %2369
  %2371 = vrot.lane.b32.xlu0 %v298, 120
  %v2372 = vpop.permute.xlu0 %2371
  %2373 = vrot.lane.b32.xlu0 %v299, 120
  %v2374 = vpop.permute.xlu0 %2373
  %2375 = vrot.lane.b32.xlu0 %v300, 120
  %v2376 = vpop.permute.xlu0 %2375
  %2377 = vrot.lane.b32.xlu0 %v301, 120
  %v2378 = vpop.permute.xlu0 %2377
  %2379 = vrot.lane.b32.xlu0 %v302, 120
  %v2380 = vpop.permute.xlu0 %2379
  %2381 = vrot.lane.b32.xlu0 %v303, 120
  %v2382 = vpop.permute.xlu0 %2381
  %2383 = vrot.lane.b32.xlu0 %v304, 120
  %v2384 = vpop.permute.xlu0 %2383
  %2385 = vrot.lane.b32.xlu0 %v305, 120
  %v2386 = vpop.permute.xlu0 %2385
  %2387 = vrot.lane.b32.xlu0 %v306, 120
  %v2388 = vpop.permute.xlu0 %2387
  %2389 = vrot.lane.b32.xlu0 %v307, 120
  %v2390 = vpop.permute.xlu0 %2389
  %2391 = vrot.lane.b32.xlu0 %v308, 120
  %v2392 = vpop.permute.xlu0 %2391
  %2393 = vrot.lane.b32.xlu0 %v309, 120
  %v2394 = vpop.permute.xlu0 %2393
  %2395 = vrot.lane.b32.xlu0 %v310, 120
  %v2396 = vpop.permute.xlu0 %2395
  %2397 = vrot.lane.b32.xlu0 %v311, 120
  %v2398 = vpop.permute.xlu0 %2397
  %2399 = vrot.lane.b32.xlu0 %v312, 120
  %v2400 = vpop.permute.xlu0 %2399
  %2401 = vrot.lane.b32.xlu0 %v313, 120
  %v2402 = vpop.permute.xlu0 %2401
  %2403 = vrot.lane.b32.xlu0 %v314, 120
  %v2404 = vpop.permute.xlu0 %2403
  %2405 = vrot.lane.b32.xlu0 %v315, 120
  %v2406 = vpop.permute.xlu0 %2405
  %2407 = vrot.lane.b32.xlu0 %v316, 120
  %v2408 = vpop.permute.xlu0 %2407
  %2409 = vrot.lane.b32.xlu0 %v317, 120
  %v2410 = vpop.permute.xlu0 %2409
  %2411 = vrot.lane.b32.xlu0 %v318, 120
  %v2412 = vpop.permute.xlu0 %2411
  %2413 = vrot.lane.b32.xlu0 %v319, 120
  %v2414 = vpop.permute.xlu0 %2413
  %2415 = vrot.lane.b32.xlu0 %v320, 120
  %v2416 = vpop.permute.xlu0 %2415
  %2417 = vrot.lane.b32.xlu0 %v323, 120
  %v2418 = vpop.permute.xlu0 %2417
  %2419 = vrot.lane.b32.xlu0 %v324, 120
  %v2420 = vpop.permute.xlu0 %2419
  %2421 = vrot.lane.b32.xlu0 %v325, 120
  %v2422 = vpop.permute.xlu0 %2421
  %2423 = vrot.lane.b32.xlu0 %v326, 120
  %v2424 = vpop.permute.xlu0 %2423
  %2425 = vrot.lane.b32.xlu0 %v327, 120
  %v2426 = vpop.permute.xlu0 %2425
  %2427 = vrot.lane.b32.xlu0 %v328, 120
  %v2428 = vpop.permute.xlu0 %2427
  %2429 = vrot.lane.b32.xlu0 %v329, 120
  %v2430 = vpop.permute.xlu0 %2429
  %2431 = vrot.lane.b32.xlu0 %v330, 120
  %v2432 = vpop.permute.xlu0 %2431
  %2433 = vrot.lane.b32.xlu0 %v331, 120
  %v2434 = vpop.permute.xlu0 %2433
  %2435 = vrot.lane.b32.xlu0 %v332, 120
  %v2436 = vpop.permute.xlu0 %2435
  %2437 = vrot.lane.b32.xlu0 %v333, 120
  %v2438 = vpop.permute.xlu0 %2437
  %2439 = vrot.lane.b32.xlu0 %v334, 120
  %v2440 = vpop.permute.xlu0 %2439
  %2441 = vrot.lane.b32.xlu0 %v335, 120
  %v2442 = vpop.permute.xlu0 %2441
  %2443 = vrot.lane.b32.xlu0 %v336, 120
  %v2444 = vpop.permute.xlu0 %2443
  %2445 = vrot.lane.b32.xlu0 %v337, 120
  %v2446 = vpop.permute.xlu0 %2445
  %2447 = vrot.lane.b32.xlu0 %v338, 120
  %v2448 = vpop.permute.xlu0 %2447
  %2449 = vrot.lane.b32.xlu0 %v339, 120
  %v2450 = vpop.permute.xlu0 %2449
  %2451 = vrot.lane.b32.xlu0 %v340, 120
  %v2452 = vpop.permute.xlu0 %2451
  %2453 = vrot.lane.b32.xlu0 %v341, 120
  %v2454 = vpop.permute.xlu0 %2453
  %2455 = vrot.lane.b32.xlu0 %v342, 120
  %v2456 = vpop.permute.xlu0 %2455
  %2457 = vrot.lane.b32.xlu0 %v343, 120
  %v2458 = vpop.permute.xlu0 %2457
  %2459 = vrot.lane.b32.xlu0 %v344, 120
  %v2460 = vpop.permute.xlu0 %2459
  %2461 = vrot.lane.b32.xlu0 %v345, 120
  %v2462 = vpop.permute.xlu0 %2461
  %2463 = vrot.lane.b32.xlu0 %v346, 120
  %v2464 = vpop.permute.xlu0 %2463
  %2465 = vrot.lane.b32.xlu0 %v347, 120
  %v2466 = vpop.permute.xlu0 %2465
  %2467 = vrot.lane.b32.xlu0 %v348, 120
  %v2468 = vpop.permute.xlu0 %2467
  %2469 = vrot.lane.b32.xlu0 %v349, 120
  %v2470 = vpop.permute.xlu0 %2469
  %2471 = vrot.lane.b32.xlu0 %v350, 120
  %v2472 = vpop.permute.xlu0 %2471
  %2473 = vrot.lane.b32.xlu0 %v351, 120
  %v2474 = vpop.permute.xlu0 %2473
  %2475 = vrot.lane.b32.xlu0 %v352, 120
  %v2476 = vpop.permute.xlu0 %2475
  %v2477 = vmax.f32 %v291, %v293
  %v2478 = vmax.f32 %v292, %v294
  %v2479 = vmax.f32 %v293, %v295
  %v2480 = vmax.f32 %v294, %v296
  %v2481 = vmax.f32 %v295, %v297
  %v2482 = vmax.f32 %v296, %v298
  %v2483 = vmax.f32 %v297, %v299
  %v2484 = vmax.f32 %v298, %v300
  %v2485 = vmax.f32 %v299, %v301
  %v2486 = vmax.f32 %v300, %v302
  %v2487 = vmax.f32 %v301, %v303
  %v2488 = vmax.f32 %v302, %v304
  %v2489 = vmax.f32 %v303, %v305
  %v2490 = vmax.f32 %v304, %v306
  %v2491 = vmax.f32 %v305, %v307
  %v2492 = vmax.f32 %v306, %v308
  %v2493 = vmax.f32 %v307, %v309
  %v2494 = vmax.f32 %v308, %v310
  %v2495 = vmax.f32 %v309, %v311
  %v2496 = vmax.f32 %v310, %v312
  %v2497 = vmax.f32 %v311, %v313
  %v2498 = vmax.f32 %v312, %v314
  %v2499 = vmax.f32 %v313, %v315
  %v2500 = vmax.f32 %v314, %v316
  %v2501 = vmax.f32 %v315, %v317
  %v2502 = vmax.f32 %v316, %v318
  %v2503 = vmax.f32 %v317, %v319
  %v2504 = vmax.f32 %v318, %v320
  %v2505 = vmax.f32 %v319, %v321
  %v2506 = vmax.f32 %v320, %v322
  %v2507 = vmax.f32 %v323, %v325
  %v2508 = vmax.f32 %v324, %v326
  %v2509 = vmax.f32 %v325, %v327
  %v2510 = vmax.f32 %v326, %v328
  %v2511 = vmax.f32 %v327, %v329
  %v2512 = vmax.f32 %v328, %v330
  %v2513 = vmax.f32 %v329, %v331
  %v2514 = vmax.f32 %v330, %v332
  %v2515 = vmax.f32 %v331, %v333
  %v2516 = vmax.f32 %v332, %v334
  %v2517 = vmax.f32 %v333, %v335
  %v2518 = vmax.f32 %v334, %v336
  %v2519 = vmax.f32 %v335, %v337
  %v2520 = vmax.f32 %v336, %v338
  %v2521 = vmax.f32 %v337, %v339
  %v2522 = vmax.f32 %v338, %v340
  %v2523 = vmax.f32 %v339, %v341
  %v2524 = vmax.f32 %v340, %v342
  %v2525 = vmax.f32 %v341, %v343
  %v2526 = vmax.f32 %v342, %v344
  %v2527 = vmax.f32 %v343, %v345
  %v2528 = vmax.f32 %v344, %v346
  %v2529 = vmax.f32 %v345, %v347
  %v2530 = vmax.f32 %v346, %v348
  %v2531 = vmax.f32 %v347, %v349
  %v2532 = vmax.f32 %v348, %v350
  %v2533 = vmax.f32 %v349, %v351
  %v2534 = vmax.f32 %v350, %v352
  %v2535 = vmax.f32 %v351, %v353
  %v2536 = vmax.f32 %v352, %v354
  %2538 = vrot.lane.b32.xlu0 -inf, 8
  %v2539 = vpop.permute.xlu0 %2538
  %2540 = vrot.lane.b32.xlu0 %v2358, 8
  %v2541 = vpop.permute.xlu0 %2540
  %2542 = vrot.lane.b32.xlu0 %v2360, 8
  %v2543 = vpop.permute.xlu0 %2542
  %2544 = vrot.lane.b32.xlu0 %v2362, 8
  %v2545 = vpop.permute.xlu0 %2544
  %2546 = vrot.lane.b32.xlu0 %v2364, 8
  %v2547 = vpop.permute.xlu0 %2546
  %2548 = vrot.lane.b32.xlu0 %v2366, 8
  %v2549 = vpop.permute.xlu0 %2548
  %2550 = vrot.lane.b32.xlu0 %v2368, 8
  %v2551 = vpop.permute.xlu0 %2550
  %2552 = vrot.lane.b32.xlu0 %v2370, 8
  %v2553 = vpop.permute.xlu0 %2552
  %2554 = vrot.lane.b32.xlu0 %v2372, 8
  %v2555 = vpop.permute.xlu0 %2554
  %2556 = vrot.lane.b32.xlu0 %v2374, 8
  %v2557 = vpop.permute.xlu0 %2556
  %2558 = vrot.lane.b32.xlu0 %v2376, 8
  %v2559 = vpop.permute.xlu0 %2558
  %2560 = vrot.lane.b32.xlu0 %v2378, 8
  %v2561 = vpop.permute.xlu0 %2560
  %2562 = vrot.lane.b32.xlu0 %v2380, 8
  %v2563 = vpop.permute.xlu0 %2562
  %2564 = vrot.lane.b32.xlu0 %v2382, 8
  %v2565 = vpop.permute.xlu0 %2564
  %2566 = vrot.lane.b32.xlu0 %v2384, 8
  %v2567 = vpop.permute.xlu0 %2566
  %2568 = vrot.lane.b32.xlu0 %v2386, 8
  %v2569 = vpop.permute.xlu0 %2568
  %2570 = vrot.lane.b32.xlu0 %v2388, 8
  %v2571 = vpop.permute.xlu0 %2570
  %2572 = vrot.lane.b32.xlu0 %v2390, 8
  %v2573 = vpop.permute.xlu0 %2572
  %2574 = vrot.lane.b32.xlu0 %v2392, 8
  %v2575 = vpop.permute.xlu0 %2574
  %2576 = vrot.lane.b32.xlu0 %v2394, 8
  %v2577 = vpop.permute.xlu0 %2576
  %2578 = vrot.lane.b32.xlu0 %v2396, 8
  %v2579 = vpop.permute.xlu0 %2578
  %2580 = vrot.lane.b32.xlu0 %v2398, 8
  %v2581 = vpop.permute.xlu0 %2580
  %2582 = vrot.lane.b32.xlu0 %v2400, 8
  %v2583 = vpop.permute.xlu0 %2582
  %2584 = vrot.lane.b32.xlu0 %v2402, 8
  %v2585 = vpop.permute.xlu0 %2584
  %2586 = vrot.lane.b32.xlu0 %v2404, 8
  %v2587 = vpop.permute.xlu0 %2586
  %2588 = vrot.lane.b32.xlu0 %v2406, 8
  %v2589 = vpop.permute.xlu0 %2588
  %2590 = vrot.lane.b32.xlu0 %v2408, 8
  %v2591 = vpop.permute.xlu0 %2590
  %2592 = vrot.lane.b32.xlu0 %v2410, 8
  %v2593 = vpop.permute.xlu0 %2592
  %2594 = vrot.lane.b32.xlu0 %v2412, 8
  %v2595 = vpop.permute.xlu0 %2594
  %2596 = vrot.lane.b32.xlu0 %v2414, 8
  %v2597 = vpop.permute.xlu0 %2596
  %2598 = vrot.lane.b32.xlu0 %v2416, 8
  %v2599 = vpop.permute.xlu0 %2598
  %2600 = vrot.lane.b32.xlu0 %v2418, 8
  %v2601 = vpop.permute.xlu0 %2600
  %2602 = vrot.lane.b32.xlu0 %v2420, 8
  %v2603 = vpop.permute.xlu0 %2602
  %2604 = vrot.lane.b32.xlu0 %v2422, 8
  %v2605 = vpop.permute.xlu0 %2604
  %2606 = vrot.lane.b32.xlu0 %v2424, 8
  %v2607 = vpop.permute.xlu0 %2606
  %2608 = vrot.lane.b32.xlu0 %v2426, 8
  %v2609 = vpop.permute.xlu0 %2608
  %2610 = vrot.lane.b32.xlu0 %v2428, 8
  %v2611 = vpop.permute.xlu0 %2610
  %2612 = vrot.lane.b32.xlu0 %v2430, 8
  %v2613 = vpop.permute.xlu0 %2612
  %2614 = vrot.lane.b32.xlu0 %v2432, 8
  %v2615 = vpop.permute.xlu0 %2614
  %2616 = vrot.lane.b32.xlu0 %v2434, 8
  %v2617 = vpop.permute.xlu0 %2616
  %2618 = vrot.lane.b32.xlu0 %v2436, 8
  %v2619 = vpop.permute.xlu0 %2618
  %2620 = vrot.lane.b32.xlu0 %v2438, 8
  %v2621 = vpop.permute.xlu0 %2620
  %2622 = vrot.lane.b32.xlu0 %v2440, 8
  %v2623 = vpop.permute.xlu0 %2622
  %2624 = vrot.lane.b32.xlu0 %v2442, 8
  %v2625 = vpop.permute.xlu0 %2624
  %2626 = vrot.lane.b32.xlu0 %v2444, 8
  %v2627 = vpop.permute.xlu0 %2626
  %2628 = vrot.lane.b32.xlu0 %v2446, 8
  %v2629 = vpop.permute.xlu0 %2628
  %2630 = vrot.lane.b32.xlu0 %v2448, 8
  %v2631 = vpop.permute.xlu0 %2630
  %2632 = vrot.lane.b32.xlu0 %v2450, 8
  %v2633 = vpop.permute.xlu0 %2632
  %2634 = vrot.lane.b32.xlu0 %v2452, 8
  %v2635 = vpop.permute.xlu0 %2634
  %2636 = vrot.lane.b32.xlu0 %v2454, 8
  %v2637 = vpop.permute.xlu0 %2636
  %2638 = vrot.lane.b32.xlu0 %v2456, 8
  %v2639 = vpop.permute.xlu0 %2638
  %2640 = vrot.lane.b32.xlu0 %v2458, 8
  %v2641 = vpop.permute.xlu0 %2640
  %2642 = vrot.lane.b32.xlu0 %v2460, 8
  %v2643 = vpop.permute.xlu0 %2642
  %2644 = vrot.lane.b32.xlu0 %v2462, 8
  %v2645 = vpop.permute.xlu0 %2644
  %2646 = vrot.lane.b32.xlu0 %v2464, 8
  %v2647 = vpop.permute.xlu0 %2646
  %2648 = vrot.lane.b32.xlu0 %v2466, 8
  %v2649 = vpop.permute.xlu0 %2648
  %2650 = vrot.lane.b32.xlu0 %v2468, 8
  %v2651 = vpop.permute.xlu0 %2650
  %2652 = vrot.lane.b32.xlu0 %v2470, 8
  %v2653 = vpop.permute.xlu0 %2652
  %2654 = vrot.lane.b32.xlu0 %v2472, 8
  %v2655 = vpop.permute.xlu0 %2654
  %2656 = vrot.lane.b32.xlu0 %v2474, 8
  %v2657 = vpop.permute.xlu0 %2656
  %2658 = vrot.lane.b32.xlu0 %v2476, 8
  %v2659 = vpop.permute.xlu0 %2658
  %v2721 = vmax.f32 %v2477, %v2539
  %v2722 = vmax.f32 %v2478, %v2539
  %v2723 = vmax.f32 %v2479, %v2541
  %v2724 = vmax.f32 %v2480, %v2543
  %v2725 = vmax.f32 %v2481, %v2545
  %v2726 = vmax.f32 %v2482, %v2547
  %v2727 = vmax.f32 %v2483, %v2549
  %v2728 = vmax.f32 %v2484, %v2551
  %v2729 = vmax.f32 %v2485, %v2553
  %v2730 = vmax.f32 %v2486, %v2555
  %v2731 = vmax.f32 %v2487, %v2557
  %v2732 = vmax.f32 %v2488, %v2559
  %v2733 = vmax.f32 %v2489, %v2561
  %v2734 = vmax.f32 %v2490, %v2563
  %v2735 = vmax.f32 %v2491, %v2565
  %v2736 = vmax.f32 %v2492, %v2567
  %v2737 = vmax.f32 %v2493, %v2569
  %v2738 = vmax.f32 %v2494, %v2571
  %v2739 = vmax.f32 %v2495, %v2573
  %v2740 = vmax.f32 %v2496, %v2575
  %v2741 = vmax.f32 %v2497, %v2577
  %v2742 = vmax.f32 %v2498, %v2579
  %v2743 = vmax.f32 %v2499, %v2581
  %v2744 = vmax.f32 %v2500, %v2583
  %v2745 = vmax.f32 %v2501, %v2585
  %v2746 = vmax.f32 %v2502, %v2587
  %v2747 = vmax.f32 %v2503, %v2589
  %v2748 = vmax.f32 %v2504, %v2591
  %v2749 = vmax.f32 %v2505, %v2593
  %v2750 = vmax.f32 %v2506, %v2595
  %v2751 = vmax.f32 %v321, %v2597
  %v2752 = vmax.f32 %v322, %v2599
  %v2753 = vmax.f32 %v2507, %v2539
  %v2754 = vmax.f32 %v2508, %v2539
  %v2755 = vmax.f32 %v2509, %v2601
  %v2756 = vmax.f32 %v2510, %v2603
  %v2757 = vmax.f32 %v2511, %v2605
  %v2758 = vmax.f32 %v2512, %v2607
  %v2759 = vmax.f32 %v2513, %v2609
  %v2760 = vmax.f32 %v2514, %v2611
  %v2761 = vmax.f32 %v2515, %v2613
  %v2762 = vmax.f32 %v2516, %v2615
  %v2763 = vmax.f32 %v2517, %v2617
  %v2764 = vmax.f32 %v2518, %v2619
  %v2765 = vmax.f32 %v2519, %v2621
  %v2766 = vmax.f32 %v2520, %v2623
  %v2767 = vmax.f32 %v2521, %v2625
  %v2768 = vmax.f32 %v2522, %v2627
  %v2769 = vmax.f32 %v2523, %v2629
  %v2770 = vmax.f32 %v2524, %v2631
  %v2771 = vmax.f32 %v2525, %v2633
  %v2772 = vmax.f32 %v2526, %v2635
  %v2773 = vmax.f32 %v2527, %v2637
  %v2774 = vmax.f32 %v2528, %v2639
  %v2775 = vmax.f32 %v2529, %v2641
  %v2776 = vmax.f32 %v2530, %v2643
  %v2777 = vmax.f32 %v2531, %v2645
  %v2778 = vmax.f32 %v2532, %v2647
  %v2779 = vmax.f32 %v2533, %v2649
  %v2780 = vmax.f32 %v2534, %v2651
  %v2781 = vmax.f32 %v2535, %v2653
  %v2782 = vmax.f32 %v2536, %v2655
  %v2783 = vmax.f32 %v353, %v2657
  %v2784 = vmax.f32 %v354, %v2659
  %v2785 = vsel %vm1438, %v2043, %v2721
  %v2786 = vsel %vm1438, %v2046, %v2722
  %v2787 = vsel %vm1438, %v2051, %v2723
  %v2788 = vsel %vm1438, %v2054, %v2724
  %v2789 = vsel %vm1438, %v2059, %v2725
  %v2790 = vsel %vm1438, %v2062, %v2726
  %v2791 = vsel %vm1438, %v2067, %v2727
  %v2792 = vsel %vm1438, %v2070, %v2728
  %v2793 = vsel %vm1438, %v2075, %v2729
  %v2794 = vsel %vm1438, %v2078, %v2730
  %v2795 = vsel %vm1438, %v2083, %v2731
  %v2796 = vsel %vm1438, %v2086, %v2732
  %v2797 = vsel %vm1438, %v2091, %v2733
  %v2798 = vsel %vm1438, %v2094, %v2734
  %v2799 = vsel %vm1438, %v2099, %v2735
  %v2800 = vsel %vm1438, %v2102, %v2736
  %v2801 = vsel %vm1438, %v2107, %v2737
  %v2802 = vsel %vm1438, %v2110, %v2738
  %v2803 = vsel %vm1438, %v2115, %v2739
  %v2804 = vsel %vm1438, %v2118, %v2740
  %v2805 = vsel %vm1438, %v2123, %v2741
  %v2806 = vsel %vm1438, %v2126, %v2742
  %v2807 = vsel %vm1438, %v2131, %v2743
  %v2808 = vsel %vm1438, %v2134, %v2744
  %v2809 = vsel %vm1438, %v2139, %v2745
  %v2810 = vsel %vm1438, %v2142, %v2746
  %v2811 = vsel %vm1438, %v2147, %v2747
  %v2812 = vsel %vm1438, %v2150, %v2748
  %v2813 = vsel %vm1438, %v2155, %v2749
  %v2814 = vsel %vm1438, %v2158, %v2750
  %v2815 = vsel %vm1438, %v2163, %v2751
  %v2816 = vsel %vm1438, %v2166, %v2752
  %v2817 = vsel %vm1438, %v2171, %v2753
  %v2818 = vsel %vm1438, %v2174, %v2754
  %v2819 = vsel %vm1438, %v2179, %v2755
  %v2820 = vsel %vm1438, %v2182, %v2756
  %v2821 = vsel %vm1438, %v2187, %v2757
  %v2822 = vsel %vm1438, %v2190, %v2758
  %v2823 = vsel %vm1438, %v2195, %v2759
  %v2824 = vsel %vm1438, %v2198, %v2760
  %v2825 = vsel %vm1438, %v2203, %v2761
  %v2826 = vsel %vm1438, %v2206, %v2762
  %v2827 = vsel %vm1438, %v2211, %v2763
  %v2828 = vsel %vm1438, %v2214, %v2764
  %v2829 = vsel %vm1438, %v2219, %v2765
  %v2830 = vsel %vm1438, %v2222, %v2766
  %v2831 = vsel %vm1438, %v2227, %v2767
  %v2832 = vsel %vm1438, %v2230, %v2768
  %v2833 = vsel %vm1438, %v2235, %v2769
  %v2834 = vsel %vm1438, %v2238, %v2770
  %v2835 = vsel %vm1438, %v2243, %v2771
  %v2836 = vsel %vm1438, %v2246, %v2772
  %v2837 = vsel %vm1438, %v2251, %v2773
  %v2838 = vsel %vm1438, %v2254, %v2774
  %v2839 = vsel %vm1438, %v2259, %v2775
  %v2840 = vsel %vm1438, %v2262, %v2776
  %v2841 = vsel %vm1438, %v2267, %v2777
  %v2842 = vsel %vm1438, %v2270, %v2778
  %v2843 = vsel %vm1438, %v2275, %v2779
  %v2844 = vsel %vm1438, %v2278, %v2780
  %v2845 = vsel %vm1438, %v2283, %v2781
  %v2846 = vsel %vm1438, %v2286, %v2782
  %v2847 = vsel %vm1438, %v2291, %v2783
  %v2848 = vsel %vm1438, %v2294, %v2784
  %v2849 = vsel %vm1503, %v2785, %v227
  %v2850 = vsel %vm1503, %v2786, %v228
  %v2851 = vsel %vm1503, %v2787, %v229
  %v2852 = vsel %vm1503, %v2788, %v230
  %v2853 = vsel %vm1503, %v2789, %v231
  %v2854 = vsel %vm1503, %v2790, %v232
  %v2855 = vsel %vm1503, %v2791, %v233
  %v2856 = vsel %vm1503, %v2792, %v234
  %v2857 = vsel %vm1503, %v2793, %v235
  %v2858 = vsel %vm1503, %v2794, %v236
  %v2859 = vsel %vm1503, %v2795, %v237
  %v2860 = vsel %vm1503, %v2796, %v238
  %v2861 = vsel %vm1503, %v2797, %v239
  %v2862 = vsel %vm1503, %v2798, %v240
  %v2863 = vsel %vm1503, %v2799, %v241
  %v2864 = vsel %vm1503, %v2800, %v242
  %v2865 = vsel %vm1503, %v2801, %v243
  %v2866 = vsel %vm1503, %v2802, %v244
  %v2867 = vsel %vm1503, %v2803, %v245
  %v2868 = vsel %vm1503, %v2804, %v246
  %v2869 = vsel %vm1503, %v2805, %v247
  %v2870 = vsel %vm1503, %v2806, %v248
  %v2871 = vsel %vm1503, %v2807, %v249
  %v2872 = vsel %vm1503, %v2808, %v250
  %v2873 = vsel %vm1503, %v2809, %v251
  %v2874 = vsel %vm1503, %v2810, %v252
  %v2875 = vsel %vm1503, %v2811, %v253
  %v2876 = vsel %vm1503, %v2812, %v254
  %v2877 = vsel %vm1503, %v2813, %v255
  %v2878 = vsel %vm1503, %v2814, %v256
  %v2879 = vsel %vm1503, %v2815, %v257
  %v2880 = vsel %vm1503, %v2816, %v258
  %v2881 = vsel %vm1503, %v2817, %v259
  %v2882 = vsel %vm1503, %v2818, %v260
  %v2883 = vsel %vm1503, %v2819, %v261
  %v2884 = vsel %vm1503, %v2820, %v262
  %v2885 = vsel %vm1503, %v2821, %v263
  %v2886 = vsel %vm1503, %v2822, %v264
  %v2887 = vsel %vm1503, %v2823, %v265
  %v2888 = vsel %vm1503, %v2824, %v266
  %v2889 = vsel %vm1503, %v2825, %v267
  %v2890 = vsel %vm1503, %v2826, %v268
  %v2891 = vsel %vm1503, %v2827, %v269
  %v2892 = vsel %vm1503, %v2828, %v270
  %v2893 = vsel %vm1503, %v2829, %v271
  %v2894 = vsel %vm1503, %v2830, %v272
  %v2895 = vsel %vm1503, %v2831, %v273
  %v2896 = vsel %vm1503, %v2832, %v274
  %v2897 = vsel %vm1503, %v2833, %v275
  %v2898 = vsel %vm1503, %v2834, %v276
  %v2899 = vsel %vm1503, %v2835, %v277
  %v2900 = vsel %vm1503, %v2836, %v278
  %v2901 = vsel %vm1503, %v2837, %v279
  %v2902 = vsel %vm1503, %v2838, %v280
  %v2903 = vsel %vm1503, %v2839, %v281
  %v2904 = vsel %vm1503, %v2840, %v282
  %v2905 = vsel %vm1503, %v2841, %v283
  %v2906 = vsel %vm1503, %v2842, %v284
  %v2907 = vsel %vm1503, %v2843, %v285
  %v2908 = vsel %vm1503, %v2844, %v286
  %v2909 = vsel %vm1503, %v2845, %v287
  %v2910 = vsel %vm1503, %v2846, %v288
  %v2911 = vsel %vm1503, %v2847, %v289
  %v2912 = vsel %vm1503, %v2848, %v290
  %v2913 = vsel %vm1565, %v2849, 0.0
  %v2914 = vsel %vm1565, %v2850, 0.0
  %v2915 = vadd.f32 %v2913, %v2914
  %v2916 = vsel %vm1565, %v2851, 0.0
  %v2917 = vadd.f32 %v2915, %v2916
  %v2918 = vsel %vm1565, %v2852, 0.0
  %v2919 = vadd.f32 %v2917, %v2918
  %v2920 = vsel %vm1565, %v2853, 0.0
  %v2921 = vadd.f32 %v2919, %v2920
  %v2922 = vsel %vm1565, %v2854, 0.0
  %v2923 = vadd.f32 %v2921, %v2922
  %v2924 = vsel %vm1565, %v2855, 0.0
  %v2925 = vadd.f32 %v2923, %v2924
  %v2926 = vsel %vm1565, %v2856, 0.0
  %v2927 = vadd.f32 %v2925, %v2926
  %v2928 = vsel %vm1565, %v2857, 0.0
  %v2929 = vadd.f32 %v2927, %v2928
  %v2930 = vsel %vm1565, %v2858, 0.0
  %v2931 = vadd.f32 %v2929, %v2930
  %v2932 = vsel %vm1565, %v2859, 0.0
  %v2933 = vadd.f32 %v2931, %v2932
  %v2934 = vsel %vm1565, %v2860, 0.0
  %v2935 = vadd.f32 %v2933, %v2934
  %v2936 = vsel %vm1565, %v2861, 0.0
  %v2937 = vadd.f32 %v2935, %v2936
  %v2938 = vsel %vm1565, %v2862, 0.0
  %v2939 = vadd.f32 %v2937, %v2938
  %v2940 = vsel %vm1565, %v2863, 0.0
  %v2941 = vadd.f32 %v2939, %v2940
  %v2942 = vsel %vm1565, %v2864, 0.0
  %v2943 = vadd.f32 %v2941, %v2942
  %v2944 = vsel %vm1565, %v2865, 0.0
  %v2945 = vadd.f32 %v2943, %v2944
  %v2946 = vsel %vm1565, %v2866, 0.0
  %v2947 = vadd.f32 %v2945, %v2946
  %v2948 = vsel %vm1565, %v2867, 0.0
  %v2949 = vadd.f32 %v2947, %v2948
  %v2950 = vsel %vm1565, %v2868, 0.0
  %v2951 = vadd.f32 %v2949, %v2950
  %v2952 = vsel %vm1565, %v2869, 0.0
  %v2953 = vadd.f32 %v2951, %v2952
  %v2954 = vsel %vm1565, %v2870, 0.0
  %v2955 = vadd.f32 %v2953, %v2954
  %v2956 = vsel %vm1565, %v2871, 0.0
  %v2957 = vadd.f32 %v2955, %v2956
  %v2958 = vsel %vm1565, %v2872, 0.0
  %v2959 = vadd.f32 %v2957, %v2958
  %v2960 = vsel %vm1565, %v2873, 0.0
  %v2961 = vadd.f32 %v2959, %v2960
  %v2962 = vsel %vm1565, %v2874, 0.0
  %v2963 = vadd.f32 %v2961, %v2962
  %v2964 = vsel %vm1565, %v2875, 0.0
  %v2965 = vadd.f32 %v2963, %v2964
  %v2966 = vsel %vm1565, %v2876, 0.0
  %v2967 = vadd.f32 %v2965, %v2966
  %v2968 = vsel %vm1565, %v2877, 0.0
  %v2969 = vadd.f32 %v2967, %v2968
  %v2970 = vsel %vm1565, %v2878, 0.0
  %v2971 = vadd.f32 %v2969, %v2970
  %v2972 = vsel %vm1565, %v2879, 0.0
  %v2973 = vadd.f32 %v2971, %v2972
  %v2974 = vsel %vm1565, %v2880, 0.0
  %v2975 = vadd.f32 %v2973, %v2974
  %v2976 = vsel %vm1565, %v2881, 0.0
  %v2977 = vadd.f32 %v2975, %v2976
  %v2978 = vsel %vm1565, %v2882, 0.0
  %v2979 = vadd.f32 %v2977, %v2978
  %v2980 = vsel %vm1565, %v2883, 0.0
  %v2981 = vadd.f32 %v2979, %v2980
  %v2982 = vsel %vm1565, %v2884, 0.0
  %v2983 = vadd.f32 %v2981, %v2982
  %v2984 = vsel %vm1565, %v2885, 0.0
  %v2985 = vadd.f32 %v2983, %v2984
  %v2986 = vsel %vm1565, %v2886, 0.0
  %v2987 = vadd.f32 %v2985, %v2986
  %v2988 = vsel %vm1565, %v2887, 0.0
  %v2989 = vadd.f32 %v2987, %v2988
  %v2990 = vsel %vm1565, %v2888, 0.0
  %v2991 = vadd.f32 %v2989, %v2990
  %v2992 = vsel %vm1565, %v2889, 0.0
  %v2993 = vadd.f32 %v2991, %v2992
  %v2994 = vsel %vm1565, %v2890, 0.0
  %v2995 = vadd.f32 %v2993, %v2994
  %v2996 = vsel %vm1565, %v2891, 0.0
  %v2997 = vadd.f32 %v2995, %v2996
  %v2998 = vsel %vm1565, %v2892, 0.0
  %v2999 = vadd.f32 %v2997, %v2998
  %v3000 = vsel %vm1565, %v2893, 0.0
  %v3001 = vadd.f32 %v2999, %v3000
  %v3002 = vsel %vm1565, %v2894, 0.0
  %v3003 = vadd.f32 %v3001, %v3002
  %v3004 = vsel %vm1565, %v2895, 0.0
  %v3005 = vadd.f32 %v3003, %v3004
  %v3006 = vsel %vm1565, %v2896, 0.0
  %v3007 = vadd.f32 %v3005, %v3006
  %v3008 = vsel %vm1565, %v2897, 0.0
  %v3009 = vadd.f32 %v3007, %v3008
  %v3010 = vsel %vm1565, %v2898, 0.0
  %v3011 = vadd.f32 %v3009, %v3010
  %v3012 = vsel %vm1565, %v2899, 0.0
  %v3013 = vadd.f32 %v3011, %v3012
  %v3014 = vsel %vm1565, %v2900, 0.0
  %v3015 = vadd.f32 %v3013, %v3014
  %v3016 = vsel %vm1565, %v2901, 0.0
  %v3017 = vadd.f32 %v3015, %v3016
  %v3018 = vsel %vm1565, %v2902, 0.0
  %v3019 = vadd.f32 %v3017, %v3018
  %v3020 = vsel %vm1565, %v2903, 0.0
  %v3021 = vadd.f32 %v3019, %v3020
  %v3022 = vsel %vm1565, %v2904, 0.0
  %v3023 = vadd.f32 %v3021, %v3022
  %v3024 = vsel %vm1565, %v2905, 0.0
  %v3025 = vadd.f32 %v3023, %v3024
  %v3026 = vsel %vm1565, %v2906, 0.0
  %v3027 = vadd.f32 %v3025, %v3026
  %v3028 = vsel %vm1565, %v2907, 0.0
  %v3029 = vadd.f32 %v3027, %v3028
  %v3030 = vsel %vm1565, %v2908, 0.0
  %v3031 = vadd.f32 %v3029, %v3030
  %v3032 = vsel %vm1565, %v2909, 0.0
  %v3033 = vadd.f32 %v3031, %v3032
  %v3034 = vsel %vm1565, %v2910, 0.0
  %v3035 = vadd.f32 %v3033, %v3034
  %v3036 = vsel %vm1565, %v2911, 0.0
  %v3037 = vadd.f32 %v3035, %v3036
  %v3038 = vsel %vm1565, %v2912, 0.0
  %v3039 = vadd.f32 %v3037, %v3038
  %v3040 = vrot.slane %v3039, 4
  %v3041 = vadd.f32 %v3039, %v3040
  %v3042 = vrot.slane %v3041, 2
  %v3043 = vadd.f32 %v3041, %v3042
  %v3044 = vrot.slane %v3043, 1
  %v3045 = vadd.f32 %v3043, %v3044
  %v3046 = vmul.f32 %v2849, %v2849
  %v3047 = vmul.f32 %v2850, %v2850
  %v3048 = vmul.f32 %v2851, %v2851
  %v3049 = vmul.f32 %v2852, %v2852
  %v3050 = vmul.f32 %v2853, %v2853
  %v3051 = vmul.f32 %v2854, %v2854
  %v3052 = vmul.f32 %v2855, %v2855
  %v3053 = vmul.f32 %v2856, %v2856
  %v3054 = vmul.f32 %v2857, %v2857
  %v3055 = vmul.f32 %v2858, %v2858
  %v3056 = vmul.f32 %v2859, %v2859
  %v3057 = vmul.f32 %v2860, %v2860
  %v3058 = vmul.f32 %v2861, %v2861
  %v3059 = vmul.f32 %v2862, %v2862
  %v3060 = vmul.f32 %v2863, %v2863
  %v3061 = vmul.f32 %v2864, %v2864
  %v3062 = vmul.f32 %v2865, %v2865
  %v3063 = vmul.f32 %v2866, %v2866
  %v3064 = vmul.f32 %v2867, %v2867
  %v3065 = vmul.f32 %v2868, %v2868
  %v3066 = vmul.f32 %v2869, %v2869
  %v3067 = vmul.f32 %v2870, %v2870
  %v3068 = vmul.f32 %v2871, %v2871
  %v3069 = vmul.f32 %v2872, %v2872
  %v3070 = vmul.f32 %v2873, %v2873
  %v3071 = vmul.f32 %v2874, %v2874
  %v3072 = vmul.f32 %v2875, %v2875
  %v3073 = vmul.f32 %v2876, %v2876
  %v3074 = vmul.f32 %v2877, %v2877
  %v3075 = vmul.f32 %v2878, %v2878
  %v3076 = vmul.f32 %v2879, %v2879
  %v3077 = vmul.f32 %v2880, %v2880
  %v3078 = vmul.f32 %v2881, %v2881
  %v3079 = vmul.f32 %v2882, %v2882
  %v3080 = vmul.f32 %v2883, %v2883
  %v3081 = vmul.f32 %v2884, %v2884
  %v3082 = vmul.f32 %v2885, %v2885
  %v3083 = vmul.f32 %v2886, %v2886
  %v3084 = vmul.f32 %v2887, %v2887
  %v3085 = vmul.f32 %v2888, %v2888
  %v3086 = vmul.f32 %v2889, %v2889
  %v3087 = vmul.f32 %v2890, %v2890
  %v3088 = vmul.f32 %v2891, %v2891
  %v3089 = vmul.f32 %v2892, %v2892
  %v3090 = vmul.f32 %v2893, %v2893
  %v3091 = vmul.f32 %v2894, %v2894
  %v3092 = vmul.f32 %v2895, %v2895
  %v3093 = vmul.f32 %v2896, %v2896
  %v3094 = vmul.f32 %v2897, %v2897
  %v3095 = vmul.f32 %v2898, %v2898
  %v3096 = vmul.f32 %v2899, %v2899
  %v3097 = vmul.f32 %v2900, %v2900
  %v3098 = vmul.f32 %v2901, %v2901
  %v3099 = vmul.f32 %v2902, %v2902
  %v3100 = vmul.f32 %v2903, %v2903
  %v3101 = vmul.f32 %v2904, %v2904
  %v3102 = vmul.f32 %v2905, %v2905
  %v3103 = vmul.f32 %v2906, %v2906
  %v3104 = vmul.f32 %v2907, %v2907
  %v3105 = vmul.f32 %v2908, %v2908
  %v3106 = vmul.f32 %v2909, %v2909
  %v3107 = vmul.f32 %v2910, %v2910
  %v3108 = vmul.f32 %v2911, %v2911
  %v3109 = vmul.f32 %v2912, %v2912
  %v3110 = vsel %vm1565, %v3046, 0.0
  %v3111 = vsel %vm1565, %v3047, 0.0
  %v3112 = vadd.f32 %v3110, %v3111
  %v3113 = vsel %vm1565, %v3048, 0.0
  %v3114 = vadd.f32 %v3112, %v3113
  %v3115 = vsel %vm1565, %v3049, 0.0
  %v3116 = vadd.f32 %v3114, %v3115
  %v3117 = vsel %vm1565, %v3050, 0.0
  %v3118 = vadd.f32 %v3116, %v3117
  %v3119 = vsel %vm1565, %v3051, 0.0
  %v3120 = vadd.f32 %v3118, %v3119
  %v3121 = vsel %vm1565, %v3052, 0.0
  %v3122 = vadd.f32 %v3120, %v3121
  %v3123 = vsel %vm1565, %v3053, 0.0
  %v3124 = vadd.f32 %v3122, %v3123
  %v3125 = vsel %vm1565, %v3054, 0.0
  %v3126 = vadd.f32 %v3124, %v3125
  %v3127 = vsel %vm1565, %v3055, 0.0
  %v3128 = vadd.f32 %v3126, %v3127
  %v3129 = vsel %vm1565, %v3056, 0.0
  %v3130 = vadd.f32 %v3128, %v3129
  %v3131 = vsel %vm1565, %v3057, 0.0
  %v3132 = vadd.f32 %v3130, %v3131
  %v3133 = vsel %vm1565, %v3058, 0.0
  %v3134 = vadd.f32 %v3132, %v3133
  %v3135 = vsel %vm1565, %v3059, 0.0
  %v3136 = vadd.f32 %v3134, %v3135
  %v3137 = vsel %vm1565, %v3060, 0.0
  %v3138 = vadd.f32 %v3136, %v3137
  %v3139 = vsel %vm1565, %v3061, 0.0
  %v3140 = vadd.f32 %v3138, %v3139
  %v3141 = vsel %vm1565, %v3062, 0.0
  %v3142 = vadd.f32 %v3140, %v3141
  %v3143 = vsel %vm1565, %v3063, 0.0
  %v3144 = vadd.f32 %v3142, %v3143
  %v3145 = vsel %vm1565, %v3064, 0.0
  %v3146 = vadd.f32 %v3144, %v3145
  %v3147 = vsel %vm1565, %v3065, 0.0
  %v3148 = vadd.f32 %v3146, %v3147
  %v3149 = vsel %vm1565, %v3066, 0.0
  %v3150 = vadd.f32 %v3148, %v3149
  %v3151 = vsel %vm1565, %v3067, 0.0
  %v3152 = vadd.f32 %v3150, %v3151
  %v3153 = vsel %vm1565, %v3068, 0.0
  %v3154 = vadd.f32 %v3152, %v3153
  %v3155 = vsel %vm1565, %v3069, 0.0
  %v3156 = vadd.f32 %v3154, %v3155
  %v3157 = vsel %vm1565, %v3070, 0.0
  %v3158 = vadd.f32 %v3156, %v3157
  %v3159 = vsel %vm1565, %v3071, 0.0
  %v3160 = vadd.f32 %v3158, %v3159
  %v3161 = vsel %vm1565, %v3072, 0.0
  %v3162 = vadd.f32 %v3160, %v3161
  %v3163 = vsel %vm1565, %v3073, 0.0
  %v3164 = vadd.f32 %v3162, %v3163
  %v3165 = vsel %vm1565, %v3074, 0.0
  %v3166 = vadd.f32 %v3164, %v3165
  %v3167 = vsel %vm1565, %v3075, 0.0
  %v3168 = vadd.f32 %v3166, %v3167
  %v3169 = vsel %vm1565, %v3076, 0.0
  %v3170 = vadd.f32 %v3168, %v3169
  %v3171 = vsel %vm1565, %v3077, 0.0
  %v3172 = vadd.f32 %v3170, %v3171
  %v3173 = vsel %vm1565, %v3078, 0.0
  %v3174 = vadd.f32 %v3172, %v3173
  %v3175 = vsel %vm1565, %v3079, 0.0
  %v3176 = vadd.f32 %v3174, %v3175
  %v3177 = vsel %vm1565, %v3080, 0.0
  %v3178 = vadd.f32 %v3176, %v3177
  %v3179 = vsel %vm1565, %v3081, 0.0
  %v3180 = vadd.f32 %v3178, %v3179
  %v3181 = vsel %vm1565, %v3082, 0.0
  %v3182 = vadd.f32 %v3180, %v3181
  %v3183 = vsel %vm1565, %v3083, 0.0
  %v3184 = vadd.f32 %v3182, %v3183
  %v3185 = vsel %vm1565, %v3084, 0.0
  %v3186 = vadd.f32 %v3184, %v3185
  %v3187 = vsel %vm1565, %v3085, 0.0
  %v3188 = vadd.f32 %v3186, %v3187
  %v3189 = vsel %vm1565, %v3086, 0.0
  %v3190 = vadd.f32 %v3188, %v3189
  %v3191 = vsel %vm1565, %v3087, 0.0
  %v3192 = vadd.f32 %v3190, %v3191
  %v3193 = vsel %vm1565, %v3088, 0.0
  %v3194 = vadd.f32 %v3192, %v3193
  %v3195 = vsel %vm1565, %v3089, 0.0
  %v3196 = vadd.f32 %v3194, %v3195
  %v3197 = vsel %vm1565, %v3090, 0.0
  %v3198 = vadd.f32 %v3196, %v3197
  %v3199 = vsel %vm1565, %v3091, 0.0
  %v3200 = vadd.f32 %v3198, %v3199
  %v3201 = vsel %vm1565, %v3092, 0.0
  %v3202 = vadd.f32 %v3200, %v3201
  %v3203 = vsel %vm1565, %v3093, 0.0
  %v3204 = vadd.f32 %v3202, %v3203
  %v3205 = vsel %vm1565, %v3094, 0.0
  %v3206 = vadd.f32 %v3204, %v3205
  %v3207 = vsel %vm1565, %v3095, 0.0
  %v3208 = vadd.f32 %v3206, %v3207
  %v3209 = vsel %vm1565, %v3096, 0.0
  %v3210 = vadd.f32 %v3208, %v3209
  %v3211 = vsel %vm1565, %v3097, 0.0
  %v3212 = vadd.f32 %v3210, %v3211
  %v3213 = vsel %vm1565, %v3098, 0.0
  %v3214 = vadd.f32 %v3212, %v3213
  %v3215 = vsel %vm1565, %v3099, 0.0
  %v3216 = vadd.f32 %v3214, %v3215
  %v3217 = vsel %vm1565, %v3100, 0.0
  %v3218 = vadd.f32 %v3216, %v3217
  %v3219 = vsel %vm1565, %v3101, 0.0
  %v3220 = vadd.f32 %v3218, %v3219
  %v3221 = vsel %vm1565, %v3102, 0.0
  %v3222 = vadd.f32 %v3220, %v3221
  %v3223 = vsel %vm1565, %v3103, 0.0
  %v3224 = vadd.f32 %v3222, %v3223
  %v3225 = vsel %vm1565, %v3104, 0.0
  %v3226 = vadd.f32 %v3224, %v3225
  %v3227 = vsel %vm1565, %v3105, 0.0
  %v3228 = vadd.f32 %v3226, %v3227
  %v3229 = vsel %vm1565, %v3106, 0.0
  %v3230 = vadd.f32 %v3228, %v3229
  %v3231 = vsel %vm1565, %v3107, 0.0
  %v3232 = vadd.f32 %v3230, %v3231
  %v3233 = vsel %vm1565, %v3108, 0.0
  %v3234 = vadd.f32 %v3232, %v3233
  %v3235 = vsel %vm1565, %v3109, 0.0
  %v3236 = vadd.f32 %v3234, %v3235
  %v3237 = vrot.slane %v3236, 4
  %v3238 = vadd.f32 %v3236, %v3237
  %v3239 = vrot.slane %v3238, 2
  %v3240 = vadd.f32 %v3238, %v3239
  %v3241 = vrot.slane %v3240, 1
  %v3242 = vadd.f32 %v3240, %v3241
  %vm3243 = vcmask 1040384
  %v3244 = vsel %vm3243, %v3045, %v3242
  %vm3245 = vcmask 91136
  %3246 = vst.msk [vmem:[%s4] sm:$0x3] %vm3245, %v3244
  // Predicated region
  $region18: #{multiscale_temporal_conv.4} parent=0 // pred_check
    _
  $region19: #{multiscale_temporal_conv.4} parent=0 // pred_check_branch
    %3248 = sbr.rel (0) target = $region21
  $region20: #{multiscale_temporal_conv.4} parent=0 // pred_region
    _
  $region21: #{multiscale_temporal_conv.4} parent=0 // pred_fallthru
    _
  // Predicated region
  $region22: #{multiscale_temporal_conv.4} parent=0 // pred_check
    _
  $region23: #{multiscale_temporal_conv.4} parent=0 // pred_check_branch
    %3250 = sbr.rel (0) target = $region25
  $region24: #{multiscale_temporal_conv.4} parent=0 // pred_region
    _
  $region25: #{multiscale_temporal_conv.4} parent=0 // pred_fallthru
    _

// kernel: multiscale_temporal_conv.5
$region0: #{multiscale_temporal_conv.5}
  #allocation0 [shape = 'u32[]', space=smem, size = 0x4, offset = 0x4, fixed_abs, tag = 'smem constant byte address 0x4 - core index']
  #allocation1 [shape = 'u32[144,128]{1,0:T(1,128)}', space=vmem, size = 0x12000, scoped, tag = 'internal scratch']
  %s0 = inlined_call_operand.vmem [shape: bf16[2,16,16,128], index: 0, kind: input, shape index: {}]
  %s1 = inlined_call_operand.vmem [shape: f32[1,128], index: 1, kind: input, shape index: {}]
  %s2 = inlined_call_operand.vmem [shape: f32[1,128], index: 2, kind: input, shape index: {}]
  %s3 = inlined_call_operand.vmem [shape: bf16[24,8], index: 3, kind: input, shape index: {}]
  %s4 = inlined_call_operand.vmem [shape: f32[1,12], index: 4, kind: input, shape index: {}]
  %s5 = inlined_call_operand.vmem [shape: f32[1,12], index: 5, kind: input, shape index: {}]
  %s6 = inlined_call_operand.vmem [shape: f32[2,12,256], index: 6, kind: output, shape index: {}]
  %s7 = sld [smem:[#allocation0]]
  $region34: #{multiscale_temporal_conv.5} parent=0
    _
  %s9 = ssub.s32 1, %s7
  %s10 = scalar_select 0, %s9, %s7
  // Predicated region
  $region2: #{multiscale_temporal_conv.5} parent=0 // pred_check
    _
  $region3: #{multiscale_temporal_conv.5} parent=0 // pred_check_branch
    %12 = sbr.rel (0) target = $region5
  $region4: #{multiscale_temporal_conv.5} parent=0 // pred_region
    _
  $region5: #{multiscale_temporal_conv.5} parent=0 // pred_fallthru
    _
  // Predicated region
  $region6: #{multiscale_temporal_conv.5} parent=0 // pred_check
    _
  $region7: #{multiscale_temporal_conv.5} parent=0 // pred_check_branch
    %14 = sbr.rel (0) target = $region9
  $region8: #{multiscale_temporal_conv.5} parent=0 // pred_region
    _
  $region9: #{multiscale_temporal_conv.5} parent=0 // pred_fallthru
    _
  // Predicated region
  $region10: #{multiscale_temporal_conv.5} parent=0 // pred_check
    _
  $region11: #{multiscale_temporal_conv.5} parent=0 // pred_check_branch
    %16 = sbr.rel (0) target = $region13
  $region12: #{multiscale_temporal_conv.5} parent=0 // pred_region
    _
  $region13: #{multiscale_temporal_conv.5} parent=0 // pred_fallthru
    _
  // Predicated region
  $region14: #{multiscale_temporal_conv.5} parent=0 // pred_check
    _
  $region15: #{multiscale_temporal_conv.5} parent=0 // pred_check_branch
    %18 = sbr.rel (0) target = $region17
  $region16: #{multiscale_temporal_conv.5} parent=0 // pred_region
    _
  $region17: #{multiscale_temporal_conv.5} parent=0 // pred_fallthru
    _
  // Predicated region
  $region18: #{multiscale_temporal_conv.5} parent=0 // pred_check
    _
  $region19: #{multiscale_temporal_conv.5} parent=0 // pred_check_branch
    %20 = sbr.rel (0) target = $region21
  $region20: #{multiscale_temporal_conv.5} parent=0 // pred_region
    _
  $region21: #{multiscale_temporal_conv.5} parent=0 // pred_fallthru
    _
  // Predicated region
  $region22: #{multiscale_temporal_conv.5} parent=0 // pred_check
    _
  $region23: #{multiscale_temporal_conv.5} parent=0 // pred_check_branch
    %22 = sbr.rel (0) target = $region25
  $region24: #{multiscale_temporal_conv.5} parent=0 // pred_region
    _
  $region25: #{multiscale_temporal_conv.5} parent=0 // pred_fallthru
    _
  %v24 = vld [vmem:[%s0] sm:$0xf]
  %v25 = vld [vmem:[%s0 + $0x4] sm:$0xf]
  %v26 = vld [vmem:[%s0 + $0x8] sm:$0xf]
  %v27 = vld [vmem:[%s0 + $0xc] sm:$0xf]
  %v28 = vld [vmem:[%s0 + $0x10] sm:$0xf]
  %v29 = vld [vmem:[%s0 + $0x14] sm:$0xf]
  %v30 = vld [vmem:[%s0 + $0x18] sm:$0xf]
  %v31 = vld [vmem:[%s0 + $0x1c] sm:$0xf]
  %v32 = vld [vmem:[%s0 + $0x20] sm:$0xf]
  %v33 = vld [vmem:[%s0 + $0x24] sm:$0xf]
  %v34 = vld [vmem:[%s0 + $0x28] sm:$0xf]
  %v35 = vld [vmem:[%s0 + $0x2c] sm:$0xf]
  %v36 = vld [vmem:[%s0 + $0x30] sm:$0xf]
  %v37 = vld [vmem:[%s0 + $0x34] sm:$0xf]
  %v38 = vld [vmem:[%s0 + $0x38] sm:$0xf]
  %v39 = vld [vmem:[%s0 + $0x3c] sm:$0xf]
  %v40 = vld [vmem:[%s0 + $0x40] sm:$0xf]
  %v41 = vld [vmem:[%s0 + $0x44] sm:$0xf]
  %v42 = vld [vmem:[%s0 + $0x48] sm:$0xf]
  %v43 = vld [vmem:[%s0 + $0x4c] sm:$0xf]
  %v44 = vld [vmem:[%s0 + $0x50] sm:$0xf]
  %v45 = vld [vmem:[%s0 + $0x54] sm:$0xf]
  %v46 = vld [vmem:[%s0 + $0x58] sm:$0xf]
  %v47 = vld [vmem:[%s0 + $0x5c] sm:$0xf]
  %v48 = vld [vmem:[%s0 + $0x60] sm:$0xf]
  %v49 = vld [vmem:[%s0 + $0x64] sm:$0xf]
  %v50 = vld [vmem:[%s0 + $0x68] sm:$0xf]
  %v51 = vld [vmem:[%s0 + $0x6c] sm:$0xf]
  %v52 = vld [vmem:[%s0 + $0x70] sm:$0xf]
  %v53 = vld [vmem:[%s0 + $0x74] sm:$0xf]
  %v54 = vld [vmem:[%s0 + $0x78] sm:$0xf]
  %v55 = vld [vmem:[%s0 + $0x7c] sm:$0xf]
  %v56 = vld [vmem:[%s0 + $0x80] sm:$0xf]
  %v57 = vld [vmem:[%s0 + $0x84] sm:$0xf]
  %v58 = vld [vmem:[%s0 + $0x88] sm:$0xf]
  %v59 = vld [vmem:[%s0 + $0x8c] sm:$0xf]
  %v60 = vld [vmem:[%s0 + $0x90] sm:$0xf]
  %v61 = vld [vmem:[%s0 + $0x94] sm:$0xf]
  %v62 = vld [vmem:[%s0 + $0x98] sm:$0xf]
  %v63 = vld [vmem:[%s0 + $0x9c] sm:$0xf]
  %v64 = vld [vmem:[%s0 + $0xa0] sm:$0xf]
  %v65 = vld [vmem:[%s0 + $0xa4] sm:$0xf]
  %v66 = vld [vmem:[%s0 + $0xa8] sm:$0xf]
  %v67 = vld [vmem:[%s0 + $0xac] sm:$0xf]
  %v68 = vld [vmem:[%s0 + $0xb0] sm:$0xf]
  %v69 = vld [vmem:[%s0 + $0xb4] sm:$0xf]
  %v70 = vld [vmem:[%s0 + $0xb8] sm:$0xf]
  %v71 = vld [vmem:[%s0 + $0xbc] sm:$0xf]
  %v72 = vld [vmem:[%s0 + $0xc0] sm:$0xf]
  %v73 = vld [vmem:[%s0 + $0xc4] sm:$0xf]
  %v74 = vld [vmem:[%s0 + $0xc8] sm:$0xf]
  %v75 = vld [vmem:[%s0 + $0xcc] sm:$0xf]
  %v76 = vld [vmem:[%s0 + $0xd0] sm:$0xf]
  %v77 = vld [vmem:[%s0 + $0xd4] sm:$0xf]
  %v78 = vld [vmem:[%s0 + $0xd8] sm:$0xf]
  %v79 = vld [vmem:[%s0 + $0xdc] sm:$0xf]
  %v80 = vld [vmem:[%s0 + $0xe0] sm:$0xf]
  %v81 = vld [vmem:[%s0 + $0xe4] sm:$0xf]
  %v82 = vld [vmem:[%s0 + $0xe8] sm:$0xf]
  %v83 = vld [vmem:[%s0 + $0xec] sm:$0xf]
  %v84 = vld [vmem:[%s0 + $0xf0] sm:$0xf]
  %v85 = vld [vmem:[%s0 + $0xf4] sm:$0xf]
  %v86 = vld [vmem:[%s0 + $0xf8] sm:$0xf]
  %v87 = vld [vmem:[%s0 + $0xfc] sm:$0xf]
  %v88 = vld [vmem:[%s1] sm:$0x1]
  %v89 = vld [vmem:[%s2] sm:$0x1]
  %v90 = vld [vmem:[%s3] sm:$0xf]
  %v91 = vld [vmem:[%s3 + $0x4] sm:$0xf]
  %v92 = vld [vmem:[%s3 + $0x8] sm:$0xf]
  %v93 = vunpack.c.l.bf16 %v24
  %v94 = vunpack.c.l.bf16 %v25
  %v95 = vunpack.c.l.bf16 %v26
  %v96 = vunpack.c.l.bf16 %v27
  %v97 = vunpack.c.l.bf16 %v28
  %v98 = vunpack.c.l.bf16 %v29
  %v99 = vunpack.c.l.bf16 %v30
  %v100 = vunpack.c.l.bf16 %v31
  %v101 = vunpack.c.l.bf16 %v32
  %v102 = vunpack.c.l.bf16 %v33
  %v103 = vunpack.c.l.bf16 %v34
  %v104 = vunpack.c.l.bf16 %v35
  %v105 = vunpack.c.l.bf16 %v36
  %v106 = vunpack.c.l.bf16 %v37
  %v107 = vunpack.c.l.bf16 %v38
  %v108 = vunpack.c.l.bf16 %v39
  %v109 = vunpack.c.l.bf16 %v40
  %v110 = vunpack.c.l.bf16 %v41
  %v111 = vunpack.c.l.bf16 %v42
  %v112 = vunpack.c.l.bf16 %v43
  %v113 = vunpack.c.l.bf16 %v44
  %v114 = vunpack.c.l.bf16 %v45
  %v115 = vunpack.c.l.bf16 %v46
  %v116 = vunpack.c.l.bf16 %v47
  %v117 = vunpack.c.l.bf16 %v48
  %v118 = vunpack.c.l.bf16 %v49
  %v119 = vunpack.c.l.bf16 %v50
  %v120 = vunpack.c.l.bf16 %v51
  %v121 = vunpack.c.l.bf16 %v52
  %v122 = vunpack.c.l.bf16 %v53
  %v123 = vunpack.c.l.bf16 %v54
  %v124 = vunpack.c.l.bf16 %v55
  %v125 = vunpack.c.l.bf16 %v56
  %v126 = vunpack.c.l.bf16 %v57
  %v127 = vunpack.c.l.bf16 %v58
  %v128 = vunpack.c.l.bf16 %v59
  %v129 = vunpack.c.l.bf16 %v60
  %v130 = vunpack.c.l.bf16 %v61
  %v131 = vunpack.c.l.bf16 %v62
  %v132 = vunpack.c.l.bf16 %v63
  %v133 = vunpack.c.l.bf16 %v64
  %v134 = vunpack.c.l.bf16 %v65
  %v135 = vunpack.c.l.bf16 %v66
  %v136 = vunpack.c.l.bf16 %v67
  %v137 = vunpack.c.l.bf16 %v68
  %v138 = vunpack.c.l.bf16 %v69
  %v139 = vunpack.c.l.bf16 %v70
  %v140 = vunpack.c.l.bf16 %v71
  %v141 = vunpack.c.l.bf16 %v72
  %v142 = vunpack.c.l.bf16 %v73
  %v143 = vunpack.c.l.bf16 %v74
  %v144 = vunpack.c.l.bf16 %v75
  %v145 = vunpack.c.l.bf16 %v76
  %v146 = vunpack.c.l.bf16 %v77
  %v147 = vunpack.c.l.bf16 %v78
  %v148 = vunpack.c.l.bf16 %v79
  %v149 = vunpack.c.l.bf16 %v80
  %v150 = vunpack.c.l.bf16 %v81
  %v151 = vunpack.c.l.bf16 %v82
  %v152 = vunpack.c.l.bf16 %v83
  %v153 = vunpack.c.l.bf16 %v84
  %v154 = vunpack.c.l.bf16 %v85
  %v155 = vunpack.c.l.bf16 %v86
  %v156 = vunpack.c.l.bf16 %v87
  %v158 = vlaneseq
  %v159 = vshrl.u32 %v158, 7
  %v160 = vsub.s32 0, %v159
  %v161 = vrot.slane %v88, %v160
  %v163 = vmul.f32 %v93, %v161
  %v164 = vmul.f32 %v94, %v161
  %v165 = vmul.f32 %v95, %v161
  %v166 = vmul.f32 %v96, %v161
  %v167 = vmul.f32 %v97, %v161
  %v168 = vmul.f32 %v98, %v161
  %v169 = vmul.f32 %v99, %v161
  %v170 = vmul.f32 %v100, %v161
  %v171 = vmul.f32 %v101, %v161
  %v172 = vmul.f32 %v102, %v161
  %v173 = vmul.f32 %v103, %v161
  %v174 = vmul.f32 %v104, %v161
  %v175 = vmul.f32 %v105, %v161
  %v176 = vmul.f32 %v106, %v161
  %v177 = vmul.f32 %v107, %v161
  %v178 = vmul.f32 %v108, %v161
  %v179 = vmul.f32 %v109, %v161
  %v180 = vmul.f32 %v110, %v161
  %v181 = vmul.f32 %v111, %v161
  %v182 = vmul.f32 %v112, %v161
  %v183 = vmul.f32 %v113, %v161
  %v184 = vmul.f32 %v114, %v161
  %v185 = vmul.f32 %v115, %v161
  %v186 = vmul.f32 %v116, %v161
  %v187 = vmul.f32 %v117, %v161
  %v188 = vmul.f32 %v118, %v161
  %v189 = vmul.f32 %v119, %v161
  %v190 = vmul.f32 %v120, %v161
  %v191 = vmul.f32 %v121, %v161
  %v192 = vmul.f32 %v122, %v161
  %v193 = vmul.f32 %v123, %v161
  %v194 = vmul.f32 %v124, %v161
  %v195 = vmul.f32 %v125, %v161
  %v196 = vmul.f32 %v126, %v161
  %v197 = vmul.f32 %v127, %v161
  %v198 = vmul.f32 %v128, %v161
  %v199 = vmul.f32 %v129, %v161
  %v200 = vmul.f32 %v130, %v161
  %v201 = vmul.f32 %v131, %v161
  %v202 = vmul.f32 %v132, %v161
  %v203 = vmul.f32 %v133, %v161
  %v204 = vmul.f32 %v134, %v161
  %v205 = vmul.f32 %v135, %v161
  %v206 = vmul.f32 %v136, %v161
  %v207 = vmul.f32 %v137, %v161
  %v208 = vmul.f32 %v138, %v161
  %v209 = vmul.f32 %v139, %v161
  %v210 = vmul.f32 %v140, %v161
  %v211 = vmul.f32 %v141, %v161
  %v212 = vmul.f32 %v142, %v161
  %v213 = vmul.f32 %v143, %v161
  %v214 = vmul.f32 %v144, %v161
  %v215 = vmul.f32 %v145, %v161
  %v216 = vmul.f32 %v146, %v161
  %v217 = vmul.f32 %v147, %v161
  %v218 = vmul.f32 %v148, %v161
  %v219 = vmul.f32 %v149, %v161
  %v220 = vmul.f32 %v150, %v161
  %v221 = vmul.f32 %v151, %v161
  %v222 = vmul.f32 %v152, %v161
  %v223 = vmul.f32 %v153, %v161
  %v224 = vmul.f32 %v154, %v161
  %v225 = vmul.f32 %v155, %v161
  %v226 = vmul.f32 %v156, %v161
  %v228 = vlaneseq
  %v229 = vshrl.u32 %v228, 7
  %v230 = vsub.s32 0, %v229
  %v231 = vrot.slane %v89, %v230
  %v233 = vadd.f32 %v163, %v231
  %v234 = vadd.f32 %v164, %v231
  %v235 = vadd.f32 %v165, %v231
  %v236 = vadd.f32 %v166, %v231
  %v237 = vadd.f32 %v167, %v231
  %v238 = vadd.f32 %v168, %v231
  %v239 = vadd.f32 %v169, %v231
  %v240 = vadd.f32 %v170, %v231
  %v241 = vadd.f32 %v171, %v231
  %v242 = vadd.f32 %v172, %v231
  %v243 = vadd.f32 %v173, %v231
  %v244 = vadd.f32 %v174, %v231
  %v245 = vadd.f32 %v175, %v231
  %v246 = vadd.f32 %v176, %v231
  %v247 = vadd.f32 %v177, %v231
  %v248 = vadd.f32 %v178, %v231
  %v249 = vadd.f32 %v179, %v231
  %v250 = vadd.f32 %v180, %v231
  %v251 = vadd.f32 %v181, %v231
  %v252 = vadd.f32 %v182, %v231
  %v253 = vadd.f32 %v183, %v231
  %v254 = vadd.f32 %v184, %v231
  %v255 = vadd.f32 %v185, %v231
  %v256 = vadd.f32 %v186, %v231
  %v257 = vadd.f32 %v187, %v231
  %v258 = vadd.f32 %v188, %v231
  %v259 = vadd.f32 %v189, %v231
  %v260 = vadd.f32 %v190, %v231
  %v261 = vadd.f32 %v191, %v231
  %v262 = vadd.f32 %v192, %v231
  %v263 = vadd.f32 %v193, %v231
  %v264 = vadd.f32 %v194, %v231
  %v265 = vadd.f32 %v195, %v231
  %v266 = vadd.f32 %v196, %v231
  %v267 = vadd.f32 %v197, %v231
  %v268 = vadd.f32 %v198, %v231
  %v269 = vadd.f32 %v199, %v231
  %v270 = vadd.f32 %v200, %v231
  %v271 = vadd.f32 %v201, %v231
  %v272 = vadd.f32 %v202, %v231
  %v273 = vadd.f32 %v203, %v231
  %v274 = vadd.f32 %v204, %v231
  %v275 = vadd.f32 %v205, %v231
  %v276 = vadd.f32 %v206, %v231
  %v277 = vadd.f32 %v207, %v231
  %v278 = vadd.f32 %v208, %v231
  %v279 = vadd.f32 %v209, %v231
  %v280 = vadd.f32 %v210, %v231
  %v281 = vadd.f32 %v211, %v231
  %v282 = vadd.f32 %v212, %v231
  %v283 = vadd.f32 %v213, %v231
  %v284 = vadd.f32 %v214, %v231
  %v285 = vadd.f32 %v215, %v231
  %v286 = vadd.f32 %v216, %v231
  %v287 = vadd.f32 %v217, %v231
  %v288 = vadd.f32 %v218, %v231
  %v289 = vadd.f32 %v219, %v231
  %v290 = vadd.f32 %v220, %v231
  %v291 = vadd.f32 %v221, %v231
  %v292 = vadd.f32 %v222, %v231
  %v293 = vadd.f32 %v223, %v231
  %v294 = vadd.f32 %v224, %v231
  %v295 = vadd.f32 %v225, %v231
  %v296 = vadd.f32 %v226, %v231
  %v297 = vmax.f32 %v233, 0.0
  %v298 = vmax.f32 %v234, 0.0
  %v299 = vmax.f32 %v235, 0.0
  %v300 = vmax.f32 %v236, 0.0
  %v301 = vmax.f32 %v237, 0.0
  %v302 = vmax.f32 %v238, 0.0
  %v303 = vmax.f32 %v239, 0.0
  %v304 = vmax.f32 %v240, 0.0
  %v305 = vmax.f32 %v241, 0.0
  %v306 = vmax.f32 %v242, 0.0
  %v307 = vmax.f32 %v243, 0.0
  %v308 = vmax.f32 %v244, 0.0
  %v309 = vmax.f32 %v245, 0.0
  %v310 = vmax.f32 %v246, 0.0
  %v311 = vmax.f32 %v247, 0.0
  %v312 = vmax.f32 %v248, 0.0
  %v313 = vmax.f32 %v249, 0.0
  %v314 = vmax.f32 %v250, 0.0
  %v315 = vmax.f32 %v251, 0.0
  %v316 = vmax.f32 %v252, 0.0
  %v317 = vmax.f32 %v253, 0.0
  %v318 = vmax.f32 %v254, 0.0
  %v319 = vmax.f32 %v255, 0.0
  %v320 = vmax.f32 %v256, 0.0
  %v321 = vmax.f32 %v257, 0.0
  %v322 = vmax.f32 %v258, 0.0
  %v323 = vmax.f32 %v259, 0.0
  %v324 = vmax.f32 %v260, 0.0
  %v325 = vmax.f32 %v261, 0.0
  %v326 = vmax.f32 %v262, 0.0
  %v327 = vmax.f32 %v263, 0.0
  %v328 = vmax.f32 %v264, 0.0
  %v329 = vmax.f32 %v265, 0.0
  %v330 = vmax.f32 %v266, 0.0
  %v331 = vmax.f32 %v267, 0.0
  %v332 = vmax.f32 %v268, 0.0
  %v333 = vmax.f32 %v269, 0.0
  %v334 = vmax.f32 %v270, 0.0
  %v335 = vmax.f32 %v271, 0.0
  %v336 = vmax.f32 %v272, 0.0
  %v337 = vmax.f32 %v273, 0.0
  %v338 = vmax.f32 %v274, 0.0
  %v339 = vmax.f32 %v275, 0.0
  %v340 = vmax.f32 %v276, 0.0
  %v341 = vmax.f32 %v277, 0.0
  %v342 = vmax.f32 %v278, 0.0
  %v343 = vmax.f32 %v279, 0.0
  %v344 = vmax.f32 %v280, 0.0
  %v345 = vmax.f32 %v281, 0.0
  %v346 = vmax.f32 %v282, 0.0
  %v347 = vmax.f32 %v283, 0.0
  %v348 = vmax.f32 %v284, 0.0
  %v349 = vmax.f32 %v285, 0.0
  %v350 = vmax.f32 %v286, 0.0
  %v351 = vmax.f32 %v287, 0.0
  %v352 = vmax.f32 %v288, 0.0
  %v353 = vmax.f32 %v289, 0.0
  %v354 = vmax.f32 %v290, 0.0
  %v355 = vmax.f32 %v291, 0.0
  %v356 = vmax.f32 %v292, 0.0
  %v357 = vmax.f32 %v293, 0.0
  %v358 = vmax.f32 %v294, 0.0
  %v359 = vmax.f32 %v295, 0.0
  %v360 = vmax.f32 %v296, 0.0
  %v361 = vpack.c.bf16 %v298, %v297
  %v362 = vpack.c.bf16 %v300, %v299
  %v363 = vpack.c.bf16 %v302, %v301
  %v364 = vpack.c.bf16 %v304, %v303
  %v365 = vpack.c.bf16 %v306, %v305
  %v366 = vpack.c.bf16 %v308, %v307
  %v367 = vpack.c.bf16 %v310, %v309
  %v368 = vpack.c.bf16 %v312, %v311
  %v369 = vpack.c.bf16 %v314, %v313
  %v370 = vpack.c.bf16 %v316, %v315
  %v371 = vpack.c.bf16 %v318, %v317
  %v372 = vpack.c.bf16 %v320, %v319
  %v373 = vpack.c.bf16 %v322, %v321
  %v374 = vpack.c.bf16 %v324, %v323
  %v375 = vpack.c.bf16 %v326, %v325
  %v376 = vpack.c.bf16 %v328, %v327
  %v377 = vpack.c.bf16 %v330, %v329
  %v378 = vpack.c.bf16 %v332, %v331
  %v379 = vpack.c.bf16 %v334, %v333
  %v380 = vpack.c.bf16 %v336, %v335
  %v381 = vpack.c.bf16 %v338, %v337
  %v382 = vpack.c.bf16 %v340, %v339
  %v383 = vpack.c.bf16 %v342, %v341
  %v384 = vpack.c.bf16 %v344, %v343
  %v385 = vpack.c.bf16 %v346, %v345
  %v386 = vpack.c.bf16 %v348, %v347
  %v387 = vpack.c.bf16 %v350, %v349
  %v388 = vpack.c.bf16 %v352, %v351
  %v389 = vpack.c.bf16 %v354, %v353
  %v390 = vpack.c.bf16 %v356, %v355
  %v391 = vpack.c.bf16 %v358, %v357
  %v392 = vpack.c.bf16 %v360, %v359
  %421 = vrot.lane.b32.xlu0 %v361, 126
  %v422 = vpop.permute.xlu0 %421
  %423 = vrot.lane.b32.xlu0 %v362, 126
  %v424 = vpop.permute.xlu0 %423
  %425 = vrot.lane.b32.xlu0 %v363, 126
  %v426 = vpop.permute.xlu0 %425
  %427 = vrot.lane.b32.xlu0 %v364, 126
  %v428 = vpop.permute.xlu0 %427
  %429 = vrot.lane.b32.xlu0 %v365, 126
  %v430 = vpop.permute.xlu0 %429
  %431 = vrot.lane.b32.xlu0 %v366, 126
  %v432 = vpop.permute.xlu0 %431
  %433 = vrot.lane.b32.xlu0 %v367, 126
  %v434 = vpop.permute.xlu0 %433
  %435 = vrot.lane.b32.xlu0 %v368, 126
  %v436 = vpop.permute.xlu0 %435
  %437 = vrot.lane.b32.xlu0 %v369, 126
  %v438 = vpop.permute.xlu0 %437
  %439 = vrot.lane.b32.xlu0 %v370, 126
  %v440 = vpop.permute.xlu0 %439
  %441 = vrot.lane.b32.xlu0 %v371, 126
  %v442 = vpop.permute.xlu0 %441
  %443 = vrot.lane.b32.xlu0 %v372, 126
  %v444 = vpop.permute.xlu0 %443
  %445 = vrot.lane.b32.xlu0 %v373, 126
  %v446 = vpop.permute.xlu0 %445
  %447 = vrot.lane.b32.xlu0 %v374, 126
  %v448 = vpop.permute.xlu0 %447
  %449 = vrot.lane.b32.xlu0 %v377, 126
  %v450 = vpop.permute.xlu0 %449
  %451 = vrot.lane.b32.xlu0 %v378, 126
  %v452 = vpop.permute.xlu0 %451
  %453 = vrot.lane.b32.xlu0 %v379, 126
  %v454 = vpop.permute.xlu0 %453
  %455 = vrot.lane.b32.xlu0 %v380, 126
  %v456 = vpop.permute.xlu0 %455
  %457 = vrot.lane.b32.xlu0 %v381, 126
  %v458 = vpop.permute.xlu0 %457
  %459 = vrot.lane.b32.xlu0 %v382, 126
  %v460 = vpop.permute.xlu0 %459
  %461 = vrot.lane.b32.xlu0 %v383, 126
  %v462 = vpop.permute.xlu0 %461
  %463 = vrot.lane.b32.xlu0 %v384, 126
  %v464 = vpop.permute.xlu0 %463
  %465 = vrot.lane.b32.xlu0 %v385, 126
  %v466 = vpop.permute.xlu0 %465
  %467 = vrot.lane.b32.xlu0 %v386, 126
  %v468 = vpop.permute.xlu0 %467
  %469 = vrot.lane.b32.xlu0 %v387, 126
  %v470 = vpop.permute.xlu0 %469
  %471 = vrot.lane.b32.xlu0 %v388, 126
  %v472 = vpop.permute.xlu0 %471
  %473 = vrot.lane.b32.xlu0 %v389, 126
  %v474 = vpop.permute.xlu0 %473
  %475 = vrot.lane.b32.xlu0 %v390, 126
  %v476 = vpop.permute.xlu0 %475
  %477 = vrot.lane.b32.xlu0 %v361, 124
  %v478 = vpop.permute.xlu0 %477
  %479 = vrot.lane.b32.xlu0 %v362, 124
  %v480 = vpop.permute.xlu0 %479
  %481 = vrot.lane.b32.xlu0 %v363, 124
  %v482 = vpop.permute.xlu0 %481
  %483 = vrot.lane.b32.xlu0 %v364, 124
  %v484 = vpop.permute.xlu0 %483
  %485 = vrot.lane.b32.xlu0 %v365, 124
  %v486 = vpop.permute.xlu0 %485
  %487 = vrot.lane.b32.xlu0 %v366, 124
  %v488 = vpop.permute.xlu0 %487
  %489 = vrot.lane.b32.xlu0 %v367, 124
  %v490 = vpop.permute.xlu0 %489
  %491 = vrot.lane.b32.xlu0 %v368, 124
  %v492 = vpop.permute.xlu0 %491
  %493 = vrot.lane.b32.xlu0 %v369, 124
  %v494 = vpop.permute.xlu0 %493
  %495 = vrot.lane.b32.xlu0 %v370, 124
  %v496 = vpop.permute.xlu0 %495
  %497 = vrot.lane.b32.xlu0 %v371, 124
  %v498 = vpop.permute.xlu0 %497
  %499 = vrot.lane.b32.xlu0 %v372, 124
  %v500 = vpop.permute.xlu0 %499
  %501 = vrot.lane.b32.xlu0 %v373, 124
  %v502 = vpop.permute.xlu0 %501
  %503 = vrot.lane.b32.xlu0 %v377, 124
  %v504 = vpop.permute.xlu0 %503
  %505 = vrot.lane.b32.xlu0 %v378, 124
  %v506 = vpop.permute.xlu0 %505
  %507 = vrot.lane.b32.xlu0 %v379, 124
  %v508 = vpop.permute.xlu0 %507
  %509 = vrot.lane.b32.xlu0 %v380, 124
  %v510 = vpop.permute.xlu0 %509
  %511 = vrot.lane.b32.xlu0 %v381, 124
  %v512 = vpop.permute.xlu0 %511
  %513 = vrot.lane.b32.xlu0 %v382, 124
  %v514 = vpop.permute.xlu0 %513
  %515 = vrot.lane.b32.xlu0 %v383, 124
  %v516 = vpop.permute.xlu0 %515
  %517 = vrot.lane.b32.xlu0 %v384, 124
  %v518 = vpop.permute.xlu0 %517
  %519 = vrot.lane.b32.xlu0 %v385, 124
  %v520 = vpop.permute.xlu0 %519
  %521 = vrot.lane.b32.xlu0 %v386, 124
  %v522 = vpop.permute.xlu0 %521
  %523 = vrot.lane.b32.xlu0 %v387, 124
  %v524 = vpop.permute.xlu0 %523
  %525 = vrot.lane.b32.xlu0 %v388, 124
  %v526 = vpop.permute.xlu0 %525
  %527 = vrot.lane.b32.xlu0 %v389, 124
  %v528 = vpop.permute.xlu0 %527
  %529 = vrot.lane.b32.xlu0 %v361, 122
  %v530 = vpop.permute.xlu0 %529
  %531 = vrot.lane.b32.xlu0 %v362, 122
  %v532 = vpop.permute.xlu0 %531
  %533 = vrot.lane.b32.xlu0 %v363, 122
  %v534 = vpop.permute.xlu0 %533
  %535 = vrot.lane.b32.xlu0 %v364, 122
  %v536 = vpop.permute.xlu0 %535
  %537 = vrot.lane.b32.xlu0 %v365, 122
  %v538 = vpop.permute.xlu0 %537
  %539 = vrot.lane.b32.xlu0 %v366, 122
  %v540 = vpop.permute.xlu0 %539
  %541 = vrot.lane.b32.xlu0 %v367, 122
  %v542 = vpop.permute.xlu0 %541
  %543 = vrot.lane.b32.xlu0 %v368, 122
  %v544 = vpop.permute.xlu0 %543
  %545 = vrot.lane.b32.xlu0 %v369, 122
  %v546 = vpop.permute.xlu0 %545
  %547 = vrot.lane.b32.xlu0 %v370, 122
  %v548 = vpop.permute.xlu0 %547
  %549 = vrot.lane.b32.xlu0 %v371, 122
  %v550 = vpop.permute.xlu0 %549
  %551 = vrot.lane.b32.xlu0 %v372, 122
  %v552 = vpop.permute.xlu0 %551
  %553 = vrot.lane.b32.xlu0 %v377, 122
  %v554 = vpop.permute.xlu0 %553
  %555 = vrot.lane.b32.xlu0 %v378, 122
  %v556 = vpop.permute.xlu0 %555
  %557 = vrot.lane.b32.xlu0 %v379, 122
  %v558 = vpop.permute.xlu0 %557
  %559 = vrot.lane.b32.xlu0 %v380, 122
  %v560 = vpop.permute.xlu0 %559
  %561 = vrot.lane.b32.xlu0 %v381, 122
  %v562 = vpop.permute.xlu0 %561
  %563 = vrot.lane.b32.xlu0 %v382, 122
  %v564 = vpop.permute.xlu0 %563
  %565 = vrot.lane.b32.xlu0 %v383, 122
  %v566 = vpop.permute.xlu0 %565
  %567 = vrot.lane.b32.xlu0 %v384, 122
  %v568 = vpop.permute.xlu0 %567
  %569 = vrot.lane.b32.xlu0 %v385, 122
  %v570 = vpop.permute.xlu0 %569
  %571 = vrot.lane.b32.xlu0 %v386, 122
  %v572 = vpop.permute.xlu0 %571
  %573 = vrot.lane.b32.xlu0 %v387, 122
  %v574 = vpop.permute.xlu0 %573
  %575 = vrot.lane.b32.xlu0 %v388, 122
  %v576 = vpop.permute.xlu0 %575
  %581 = vrot.lane.b32.xlu0 %v361, 2
  %v582 = vpop.permute.xlu0 %581
  %583 = vrot.lane.b32.xlu0 %v362, 2
  %v584 = vpop.permute.xlu0 %583
  %585 = vrot.lane.b32.xlu0 %v363, 2
  %v586 = vpop.permute.xlu0 %585
  %587 = vrot.lane.b32.xlu0 %v364, 2
  %v588 = vpop.permute.xlu0 %587
  %589 = vrot.lane.b32.xlu0 %v365, 2
  %v590 = vpop.permute.xlu0 %589
  %591 = vrot.lane.b32.xlu0 %v366, 2
  %v592 = vpop.permute.xlu0 %591
  %593 = vrot.lane.b32.xlu0 %v367, 2
  %v594 = vpop.permute.xlu0 %593
  %595 = vrot.lane.b32.xlu0 %v368, 2
  %v596 = vpop.permute.xlu0 %595
  %597 = vrot.lane.b32.xlu0 %v369, 2
  %v598 = vpop.permute.xlu0 %597
  %599 = vrot.lane.b32.xlu0 %v370, 2
  %v600 = vpop.permute.xlu0 %599
  %601 = vrot.lane.b32.xlu0 %v371, 2
  %v602 = vpop.permute.xlu0 %601
  %603 = vrot.lane.b32.xlu0 %v372, 2
  %v604 = vpop.permute.xlu0 %603
  %605 = vrot.lane.b32.xlu0 %v373, 2
  %v606 = vpop.permute.xlu0 %605
  %607 = vrot.lane.b32.xlu0 %v374, 2
  %v608 = vpop.permute.xlu0 %607
  %609 = vrot.lane.b32.xlu0 %v375, 2
  %v610 = vpop.permute.xlu0 %609
  %611 = vrot.lane.b32.xlu0 %v376, 2
  %v612 = vpop.permute.xlu0 %611
  %613 = vrot.lane.b32.xlu0 %v377, 2
  %v614 = vpop.permute.xlu0 %613
  %615 = vrot.lane.b32.xlu0 %v378, 2
  %v616 = vpop.permute.xlu0 %615
  %617 = vrot.lane.b32.xlu0 %v379, 2
  %v618 = vpop.permute.xlu0 %617
  %619 = vrot.lane.b32.xlu0 %v380, 2
  %v620 = vpop.permute.xlu0 %619
  %621 = vrot.lane.b32.xlu0 %v381, 2
  %v622 = vpop.permute.xlu0 %621
  %623 = vrot.lane.b32.xlu0 %v382, 2
  %v624 = vpop.permute.xlu0 %623
  %625 = vrot.lane.b32.xlu0 %v383, 2
  %v626 = vpop.permute.xlu0 %625
  %627 = vrot.lane.b32.xlu0 %v384, 2
  %v628 = vpop.permute.xlu0 %627
  %629 = vrot.lane.b32.xlu0 %v385, 2
  %v630 = vpop.permute.xlu0 %629
  %631 = vrot.lane.b32.xlu0 %v386, 2
  %v632 = vpop.permute.xlu0 %631
  %633 = vrot.lane.b32.xlu0 %v387, 2
  %v634 = vpop.permute.xlu0 %633
  %635 = vrot.lane.b32.xlu0 %v388, 2
  %v636 = vpop.permute.xlu0 %635
  %637 = vrot.lane.b32.xlu0 %v389, 2
  %v638 = vpop.permute.xlu0 %637
  %639 = vrot.lane.b32.xlu0 %v390, 2
  %v640 = vpop.permute.xlu0 %639
  %641 = vrot.lane.b32.xlu0 %v391, 2
  %v642 = vpop.permute.xlu0 %641
  %643 = vrot.lane.b32.xlu0 %v392, 2
  %v644 = vpop.permute.xlu0 %643
  %646 = vrot.lane.b32.xlu0 %v362, 4
  %v647 = vpop.permute.xlu0 %646
  %648 = vrot.lane.b32.xlu0 %v363, 4
  %v649 = vpop.permute.xlu0 %648
  %650 = vrot.lane.b32.xlu0 %v364, 4
  %v651 = vpop.permute.xlu0 %650
  %652 = vrot.lane.b32.xlu0 %v365, 4
  %v653 = vpop.permute.xlu0 %652
  %654 = vrot.lane.b32.xlu0 %v366, 4
  %v655 = vpop.permute.xlu0 %654
  %656 = vrot.lane.b32.xlu0 %v367, 4
  %v657 = vpop.permute.xlu0 %656
  %658 = vrot.lane.b32.xlu0 %v368, 4
  %v659 = vpop.permute.xlu0 %658
  %660 = vrot.lane.b32.xlu0 %v369, 4
  %v661 = vpop.permute.xlu0 %660
  %662 = vrot.lane.b32.xlu0 %v370, 4
  %v663 = vpop.permute.xlu0 %662
  %664 = vrot.lane.b32.xlu0 %v371, 4
  %v665 = vpop.permute.xlu0 %664
  %666 = vrot.lane.b32.xlu0 %v372, 4
  %v667 = vpop.permute.xlu0 %666
  %668 = vrot.lane.b32.xlu0 %v373, 4
  %v669 = vpop.permute.xlu0 %668
  %670 = vrot.lane.b32.xlu0 %v374, 4
  %v671 = vpop.permute.xlu0 %670
  %672 = vrot.lane.b32.xlu0 %v375, 4
  %v673 = vpop.permute.xlu0 %672
  %674 = vrot.lane.b32.xlu0 %v376, 4
  %v675 = vpop.permute.xlu0 %674
  %676 = vrot.lane.b32.xlu0 0, 4
  %v677 = vpop.permute.xlu0 %676
  %678 = vrot.lane.b32.xlu0 %v378, 4
  %v679 = vpop.permute.xlu0 %678
  %680 = vrot.lane.b32.xlu0 %v379, 4
  %v681 = vpop.permute.xlu0 %680
  %682 = vrot.lane.b32.xlu0 %v380, 4
  %v683 = vpop.permute.xlu0 %682
  %684 = vrot.lane.b32.xlu0 %v381, 4
  %v685 = vpop.permute.xlu0 %684
  %686 = vrot.lane.b32.xlu0 %v382, 4
  %v687 = vpop.permute.xlu0 %686
  %688 = vrot.lane.b32.xlu0 %v383, 4
  %v689 = vpop.permute.xlu0 %688
  %690 = vrot.lane.b32.xlu0 %v384, 4
  %v691 = vpop.permute.xlu0 %690
  %692 = vrot.lane.b32.xlu0 %v385, 4
  %v693 = vpop.permute.xlu0 %692
  %694 = vrot.lane.b32.xlu0 %v386, 4
  %v695 = vpop.permute.xlu0 %694
  %696 = vrot.lane.b32.xlu0 %v387, 4
  %v697 = vpop.permute.xlu0 %696
  %698 = vrot.lane.b32.xlu0 %v388, 4
  %v699 = vpop.permute.xlu0 %698
  %700 = vrot.lane.b32.xlu0 %v389, 4
  %v701 = vpop.permute.xlu0 %700
  %702 = vrot.lane.b32.xlu0 %v390, 4
  %v703 = vpop.permute.xlu0 %702
  %704 = vrot.lane.b32.xlu0 %v391, 4
  %v705 = vpop.permute.xlu0 %704
  %706 = vrot.lane.b32.xlu0 %v392, 4
  %v707 = vpop.permute.xlu0 %706
  %708 = vrot.lane.b32.xlu0 0, 6
  %v709 = vpop.permute.xlu0 %708
  %710 = vrot.lane.b32.xlu0 %v422, 6
  %v711 = vpop.permute.xlu0 %710
  %712 = vrot.lane.b32.xlu0 %v424, 6
  %v713 = vpop.permute.xlu0 %712
  %714 = vrot.lane.b32.xlu0 %v426, 6
  %v715 = vpop.permute.xlu0 %714
  %716 = vrot.lane.b32.xlu0 %v428, 6
  %v717 = vpop.permute.xlu0 %716
  %718 = vrot.lane.b32.xlu0 %v430, 6
  %v719 = vpop.permute.xlu0 %718
  %720 = vrot.lane.b32.xlu0 %v432, 6
  %v721 = vpop.permute.xlu0 %720
  %722 = vrot.lane.b32.xlu0 %v434, 6
  %v723 = vpop.permute.xlu0 %722
  %724 = vrot.lane.b32.xlu0 %v436, 6
  %v725 = vpop.permute.xlu0 %724
  %726 = vrot.lane.b32.xlu0 %v438, 6
  %v727 = vpop.permute.xlu0 %726
  %728 = vrot.lane.b32.xlu0 %v440, 6
  %v729 = vpop.permute.xlu0 %728
  %730 = vrot.lane.b32.xlu0 %v442, 6
  %v731 = vpop.permute.xlu0 %730
  %732 = vrot.lane.b32.xlu0 %v444, 6
  %v733 = vpop.permute.xlu0 %732
  %734 = vrot.lane.b32.xlu0 %v446, 6
  %v735 = vpop.permute.xlu0 %734
  %736 = vrot.lane.b32.xlu0 %v448, 6
  %v737 = vpop.permute.xlu0 %736
  %738 = vrot.lane.b32.xlu0 %v450, 6
  %v739 = vpop.permute.xlu0 %738
  %740 = vrot.lane.b32.xlu0 %v452, 6
  %v741 = vpop.permute.xlu0 %740
  %742 = vrot.lane.b32.xlu0 %v454, 6
  %v743 = vpop.permute.xlu0 %742
  %744 = vrot.lane.b32.xlu0 %v456, 6
  %v745 = vpop.permute.xlu0 %744
  %746 = vrot.lane.b32.xlu0 %v458, 6
  %v747 = vpop.permute.xlu0 %746
  %748 = vrot.lane.b32.xlu0 %v460, 6
  %v749 = vpop.permute.xlu0 %748
  %750 = vrot.lane.b32.xlu0 %v462, 6
  %v751 = vpop.permute.xlu0 %750
  %752 = vrot.lane.b32.xlu0 %v464, 6
  %v753 = vpop.permute.xlu0 %752
  %754 = vrot.lane.b32.xlu0 %v466, 6
  %v755 = vpop.permute.xlu0 %754
  %756 = vrot.lane.b32.xlu0 %v468, 6
  %v757 = vpop.permute.xlu0 %756
  %758 = vrot.lane.b32.xlu0 %v470, 6
  %v759 = vpop.permute.xlu0 %758
  %760 = vrot.lane.b32.xlu0 %v472, 6
  %v761 = vpop.permute.xlu0 %760
  %762 = vrot.lane.b32.xlu0 %v474, 6
  %v763 = vpop.permute.xlu0 %762
  %764 = vrot.lane.b32.xlu0 %v476, 6
  %v765 = vpop.permute.xlu0 %764
  %766 = vrot.lane.b32.xlu0 %v361, 6
  %v767 = vpop.permute.xlu0 %766
  %768 = vrot.lane.b32.xlu0 %v362, 6
  %v769 = vpop.permute.xlu0 %768
  %770 = vrot.lane.b32.xlu0 %v363, 6
  %v771 = vpop.permute.xlu0 %770
  %772 = vrot.lane.b32.xlu0 %v364, 6
  %v773 = vpop.permute.xlu0 %772
  %774 = vrot.lane.b32.xlu0 %v365, 6
  %v775 = vpop.permute.xlu0 %774
  %776 = vrot.lane.b32.xlu0 %v366, 6
  %v777 = vpop.permute.xlu0 %776
  %778 = vrot.lane.b32.xlu0 %v367, 6
  %v779 = vpop.permute.xlu0 %778
  %780 = vrot.lane.b32.xlu0 %v368, 6
  %v781 = vpop.permute.xlu0 %780
  %782 = vrot.lane.b32.xlu0 %v369, 6
  %v783 = vpop.permute.xlu0 %782
  %784 = vrot.lane.b32.xlu0 %v370, 6
  %v785 = vpop.permute.xlu0 %784
  %786 = vrot.lane.b32.xlu0 %v371, 6
  %v787 = vpop.permute.xlu0 %786
  %788 = vrot.lane.b32.xlu0 %v372, 6
  %v789 = vpop.permute.xlu0 %788
  %790 = vrot.lane.b32.xlu0 %v373, 6
  %v791 = vpop.permute.xlu0 %790
  %792 = vrot.lane.b32.xlu0 %v374, 6
  %v793 = vpop.permute.xlu0 %792
  %794 = vrot.lane.b32.xlu0 %v375, 6
  %v795 = vpop.permute.xlu0 %794
  %796 = vrot.lane.b32.xlu0 %v376, 6
  %v797 = vpop.permute.xlu0 %796
  %798 = vrot.lane.b32.xlu0 %v377, 6
  %v799 = vpop.permute.xlu0 %798
  %800 = vrot.lane.b32.xlu0 %v378, 6
  %v801 = vpop.permute.xlu0 %800
  %802 = vrot.lane.b32.xlu0 %v379, 6
  %v803 = vpop.permute.xlu0 %802
  %804 = vrot.lane.b32.xlu0 %v380, 6
  %v805 = vpop.permute.xlu0 %804
  %806 = vrot.lane.b32.xlu0 %v381, 6
  %v807 = vpop.permute.xlu0 %806
  %808 = vrot.lane.b32.xlu0 %v382, 6
  %v809 = vpop.permute.xlu0 %808
  %810 = vrot.lane.b32.xlu0 %v383, 6
  %v811 = vpop.permute.xlu0 %810
  %812 = vrot.lane.b32.xlu0 %v384, 6
  %v813 = vpop.permute.xlu0 %812
  %814 = vrot.lane.b32.xlu0 %v385, 6
  %v815 = vpop.permute.xlu0 %814
  %816 = vrot.lane.b32.xlu0 %v386, 6
  %v817 = vpop.permute.xlu0 %816
  %818 = vrot.lane.b32.xlu0 %v387, 6
  %v819 = vpop.permute.xlu0 %818
  %820 = vrot.lane.b32.xlu0 %v388, 6
  %v821 = vpop.permute.xlu0 %820
  %822 = vrot.lane.b32.xlu0 %v389, 6
  %v823 = vpop.permute.xlu0 %822
  %824 = vrot.lane.b32.xlu0 %v390, 6
  %v825 = vpop.permute.xlu0 %824
  %826 = vrot.lane.b32.xlu0 %v391, 6
  %v827 = vpop.permute.xlu0 %826
  %828 = vrot.lane.b32.xlu0 %v392, 6
  %v829 = vpop.permute.xlu0 %828
  %830 = vrot.lane.b32.xlu0 %v363, 8
  %v831 = vpop.permute.xlu0 %830
  %832 = vrot.lane.b32.xlu0 %v364, 8
  %v833 = vpop.permute.xlu0 %832
  %834 = vrot.lane.b32.xlu0 %v365, 8
  %v835 = vpop.permute.xlu0 %834
  %836 = vrot.lane.b32.xlu0 %v366, 8
  %v837 = vpop.permute.xlu0 %836
  %838 = vrot.lane.b32.xlu0 %v367, 8
  %v839 = vpop.permute.xlu0 %838
  %840 = vrot.lane.b32.xlu0 %v368, 8
  %v841 = vpop.permute.xlu0 %840
  %842 = vrot.lane.b32.xlu0 %v369, 8
  %v843 = vpop.permute.xlu0 %842
  %844 = vrot.lane.b32.xlu0 %v370, 8
  %v845 = vpop.permute.xlu0 %844
  %846 = vrot.lane.b32.xlu0 %v371, 8
  %v847 = vpop.permute.xlu0 %846
  %848 = vrot.lane.b32.xlu0 %v372, 8
  %v849 = vpop.permute.xlu0 %848
  %850 = vrot.lane.b32.xlu0 %v373, 8
  %v851 = vpop.permute.xlu0 %850
  %852 = vrot.lane.b32.xlu0 %v374, 8
  %v853 = vpop.permute.xlu0 %852
  %854 = vrot.lane.b32.xlu0 %v375, 8
  %v855 = vpop.permute.xlu0 %854
  %856 = vrot.lane.b32.xlu0 %v376, 8
  %v857 = vpop.permute.xlu0 %856
  %858 = vrot.lane.b32.xlu0 0, 8
  %v859 = vpop.permute.xlu0 %858
  %860 = vrot.lane.b32.xlu0 %v379, 8
  %v861 = vpop.permute.xlu0 %860
  %862 = vrot.lane.b32.xlu0 %v380, 8
  %v863 = vpop.permute.xlu0 %862
  %864 = vrot.lane.b32.xlu0 %v381, 8
  %v865 = vpop.permute.xlu0 %864
  %866 = vrot.lane.b32.xlu0 %v382, 8
  %v867 = vpop.permute.xlu0 %866
  %868 = vrot.lane.b32.xlu0 %v383, 8
  %v869 = vpop.permute.xlu0 %868
  %870 = vrot.lane.b32.xlu0 %v384, 8
  %v871 = vpop.permute.xlu0 %870
  %872 = vrot.lane.b32.xlu0 %v385, 8
  %v873 = vpop.permute.xlu0 %872
  %874 = vrot.lane.b32.xlu0 %v386, 8
  %v875 = vpop.permute.xlu0 %874
  %876 = vrot.lane.b32.xlu0 %v387, 8
  %v877 = vpop.permute.xlu0 %876
  %878 = vrot.lane.b32.xlu0 %v388, 8
  %v879 = vpop.permute.xlu0 %878
  %880 = vrot.lane.b32.xlu0 %v389, 8
  %v881 = vpop.permute.xlu0 %880
  %882 = vrot.lane.b32.xlu0 %v390, 8
  %v883 = vpop.permute.xlu0 %882
  %884 = vrot.lane.b32.xlu0 %v391, 8
  %v885 = vpop.permute.xlu0 %884
  %886 = vrot.lane.b32.xlu0 %v392, 8
  %v887 = vpop.permute.xlu0 %886
  %888 = vrot.lane.b32.xlu0 0, 12
  %v889 = vpop.permute.xlu0 %888
  %890 = vrot.lane.b32.xlu0 %v478, 12
  %v891 = vpop.permute.xlu0 %890
  %892 = vrot.lane.b32.xlu0 %v480, 12
  %v893 = vpop.permute.xlu0 %892
  %894 = vrot.lane.b32.xlu0 %v482, 12
  %v895 = vpop.permute.xlu0 %894
  %896 = vrot.lane.b32.xlu0 %v484, 12
  %v897 = vpop.permute.xlu0 %896
  %898 = vrot.lane.b32.xlu0 %v486, 12
  %v899 = vpop.permute.xlu0 %898
  %900 = vrot.lane.b32.xlu0 %v488, 12
  %v901 = vpop.permute.xlu0 %900
  %902 = vrot.lane.b32.xlu0 %v490, 12
  %v903 = vpop.permute.xlu0 %902
  %904 = vrot.lane.b32.xlu0 %v492, 12
  %v905 = vpop.permute.xlu0 %904
  %906 = vrot.lane.b32.xlu0 %v494, 12
  %v907 = vpop.permute.xlu0 %906
  %908 = vrot.lane.b32.xlu0 %v496, 12
  %v909 = vpop.permute.xlu0 %908
  %910 = vrot.lane.b32.xlu0 %v498, 12
  %v911 = vpop.permute.xlu0 %910
  %912 = vrot.lane.b32.xlu0 %v500, 12
  %v913 = vpop.permute.xlu0 %912
  %914 = vrot.lane.b32.xlu0 %v502, 12
  %v915 = vpop.permute.xlu0 %914
  %916 = vrot.lane.b32.xlu0 %v504, 12
  %v917 = vpop.permute.xlu0 %916
  %918 = vrot.lane.b32.xlu0 %v506, 12
  %v919 = vpop.permute.xlu0 %918
  %920 = vrot.lane.b32.xlu0 %v508, 12
  %v921 = vpop.permute.xlu0 %920
  %922 = vrot.lane.b32.xlu0 %v510, 12
  %v923 = vpop.permute.xlu0 %922
  %924 = vrot.lane.b32.xlu0 %v512, 12
  %v925 = vpop.permute.xlu0 %924
  %926 = vrot.lane.b32.xlu0 %v514, 12
  %v927 = vpop.permute.xlu0 %926
  %928 = vrot.lane.b32.xlu0 %v516, 12
  %v929 = vpop.permute.xlu0 %928
  %930 = vrot.lane.b32.xlu0 %v518, 12
  %v931 = vpop.permute.xlu0 %930
  %932 = vrot.lane.b32.xlu0 %v520, 12
  %v933 = vpop.permute.xlu0 %932
  %934 = vrot.lane.b32.xlu0 %v522, 12
  %v935 = vpop.permute.xlu0 %934
  %936 = vrot.lane.b32.xlu0 %v524, 12
  %v937 = vpop.permute.xlu0 %936
  %938 = vrot.lane.b32.xlu0 %v526, 12
  %v939 = vpop.permute.xlu0 %938
  %940 = vrot.lane.b32.xlu0 %v528, 12
  %v941 = vpop.permute.xlu0 %940
  %942 = vrot.lane.b32.xlu0 %v361, 10
  %v943 = vpop.permute.xlu0 %942
  %944 = vrot.lane.b32.xlu0 %v362, 10
  %v945 = vpop.permute.xlu0 %944
  %946 = vrot.lane.b32.xlu0 %v363, 10
  %v947 = vpop.permute.xlu0 %946
  %948 = vrot.lane.b32.xlu0 %v364, 10
  %v949 = vpop.permute.xlu0 %948
  %950 = vrot.lane.b32.xlu0 %v365, 10
  %v951 = vpop.permute.xlu0 %950
  %952 = vrot.lane.b32.xlu0 %v366, 10
  %v953 = vpop.permute.xlu0 %952
  %954 = vrot.lane.b32.xlu0 %v367, 10
  %v955 = vpop.permute.xlu0 %954
  %956 = vrot.lane.b32.xlu0 %v368, 10
  %v957 = vpop.permute.xlu0 %956
  %958 = vrot.lane.b32.xlu0 %v369, 10
  %v959 = vpop.permute.xlu0 %958
  %960 = vrot.lane.b32.xlu0 %v370, 10
  %v961 = vpop.permute.xlu0 %960
  %962 = vrot.lane.b32.xlu0 %v371, 10
  %v963 = vpop.permute.xlu0 %962
  %964 = vrot.lane.b32.xlu0 %v372, 10
  %v965 = vpop.permute.xlu0 %964
  %966 = vrot.lane.b32.xlu0 %v373, 10
  %v967 = vpop.permute.xlu0 %966
  %968 = vrot.lane.b32.xlu0 %v374, 10
  %v969 = vpop.permute.xlu0 %968
  %970 = vrot.lane.b32.xlu0 %v375, 10
  %v971 = vpop.permute.xlu0 %970
  %972 = vrot.lane.b32.xlu0 %v376, 10
  %v973 = vpop.permute.xlu0 %972
  %974 = vrot.lane.b32.xlu0 %v377, 10
  %v975 = vpop.permute.xlu0 %974
  %976 = vrot.lane.b32.xlu0 %v378, 10
  %v977 = vpop.permute.xlu0 %976
  %978 = vrot.lane.b32.xlu0 %v379, 10
  %v979 = vpop.permute.xlu0 %978
  %980 = vrot.lane.b32.xlu0 %v380, 10
  %v981 = vpop.permute.xlu0 %980
  %982 = vrot.lane.b32.xlu0 %v381, 10
  %v983 = vpop.permute.xlu0 %982
  %984 = vrot.lane.b32.xlu0 %v382, 10
  %v985 = vpop.permute.xlu0 %984
  %986 = vrot.lane.b32.xlu0 %v383, 10
  %v987 = vpop.permute.xlu0 %986
  %988 = vrot.lane.b32.xlu0 %v384, 10
  %v989 = vpop.permute.xlu0 %988
  %990 = vrot.lane.b32.xlu0 %v385, 10
  %v991 = vpop.permute.xlu0 %990
  %992 = vrot.lane.b32.xlu0 %v386, 10
  %v993 = vpop.permute.xlu0 %992
  %994 = vrot.lane.b32.xlu0 %v387, 10
  %v995 = vpop.permute.xlu0 %994
  %996 = vrot.lane.b32.xlu0 %v388, 10
  %v997 = vpop.permute.xlu0 %996
  %998 = vrot.lane.b32.xlu0 %v389, 10
  %v999 = vpop.permute.xlu0 %998
  %1000 = vrot.lane.b32.xlu0 %v390, 10
  %v1001 = vpop.permute.xlu0 %1000
  %1002 = vrot.lane.b32.xlu0 %v391, 10
  %v1003 = vpop.permute.xlu0 %1002
  %1004 = vrot.lane.b32.xlu0 %v392, 10
  %v1005 = vpop.permute.xlu0 %1004
  %1006 = vrot.lane.b32.xlu0 %v364, 12
  %v1007 = vpop.permute.xlu0 %1006
  %1008 = vrot.lane.b32.xlu0 %v365, 12
  %v1009 = vpop.permute.xlu0 %1008
  %1010 = vrot.lane.b32.xlu0 %v366, 12
  %v1011 = vpop.permute.xlu0 %1010
  %1012 = vrot.lane.b32.xlu0 %v367, 12
  %v1013 = vpop.permute.xlu0 %1012
  %1014 = vrot.lane.b32.xlu0 %v368, 12
  %v1015 = vpop.permute.xlu0 %1014
  %1016 = vrot.lane.b32.xlu0 %v369, 12
  %v1017 = vpop.permute.xlu0 %1016
  %1018 = vrot.lane.b32.xlu0 %v370, 12
  %v1019 = vpop.permute.xlu0 %1018
  %1020 = vrot.lane.b32.xlu0 %v371, 12
  %v1021 = vpop.permute.xlu0 %1020
  %1022 = vrot.lane.b32.xlu0 %v372, 12
  %v1023 = vpop.permute.xlu0 %1022
  %1024 = vrot.lane.b32.xlu0 %v373, 12
  %v1025 = vpop.permute.xlu0 %1024
  %1026 = vrot.lane.b32.xlu0 %v374, 12
  %v1027 = vpop.permute.xlu0 %1026
  %1028 = vrot.lane.b32.xlu0 %v375, 12
  %v1029 = vpop.permute.xlu0 %1028
  %1030 = vrot.lane.b32.xlu0 %v376, 12
  %v1031 = vpop.permute.xlu0 %1030
  %1032 = vrot.lane.b32.xlu0 %v380, 12
  %v1033 = vpop.permute.xlu0 %1032
  %1034 = vrot.lane.b32.xlu0 %v381, 12
  %v1035 = vpop.permute.xlu0 %1034
  %1036 = vrot.lane.b32.xlu0 %v382, 12
  %v1037 = vpop.permute.xlu0 %1036
  %1038 = vrot.lane.b32.xlu0 %v383, 12
  %v1039 = vpop.permute.xlu0 %1038
  %1040 = vrot.lane.b32.xlu0 %v384, 12
  %v1041 = vpop.permute.xlu0 %1040
  %1042 = vrot.lane.b32.xlu0 %v385, 12
  %v1043 = vpop.permute.xlu0 %1042
  %1044 = vrot.lane.b32.xlu0 %v386, 12
  %v1045 = vpop.permute.xlu0 %1044
  %1046 = vrot.lane.b32.xlu0 %v387, 12
  %v1047 = vpop.permute.xlu0 %1046
  %1048 = vrot.lane.b32.xlu0 %v388, 12
  %v1049 = vpop.permute.xlu0 %1048
  %1050 = vrot.lane.b32.xlu0 %v389, 12
  %v1051 = vpop.permute.xlu0 %1050
  %1052 = vrot.lane.b32.xlu0 %v390, 12
  %v1053 = vpop.permute.xlu0 %1052
  %1054 = vrot.lane.b32.xlu0 %v391, 12
  %v1055 = vpop.permute.xlu0 %1054
  %1056 = vrot.lane.b32.xlu0 %v392, 12
  %v1057 = vpop.permute.xlu0 %1056
  %1058 = vrot.lane.b32.xlu0 0, 18
  %v1059 = vpop.permute.xlu0 %1058
  %1060 = vrot.lane.b32.xlu0 %v530, 18
  %v1061 = vpop.permute.xlu0 %1060
  %1062 = vrot.lane.b32.xlu0 %v532, 18
  %v1063 = vpop.permute.xlu0 %1062
  %1064 = vrot.lane.b32.xlu0 %v534, 18
  %v1065 = vpop.permute.xlu0 %1064
  %1066 = vrot.lane.b32.xlu0 %v536, 18
  %v1067 = vpop.permute.xlu0 %1066
  %1068 = vrot.lane.b32.xlu0 %v538, 18
  %v1069 = vpop.permute.xlu0 %1068
  %1070 = vrot.lane.b32.xlu0 %v540, 18
  %v1071 = vpop.permute.xlu0 %1070
  %1072 = vrot.lane.b32.xlu0 %v542, 18
  %v1073 = vpop.permute.xlu0 %1072
  %1074 = vrot.lane.b32.xlu0 %v544, 18
  %v1075 = vpop.permute.xlu0 %1074
  %1076 = vrot.lane.b32.xlu0 %v546, 18
  %v1077 = vpop.permute.xlu0 %1076
  %1078 = vrot.lane.b32.xlu0 %v548, 18
  %v1079 = vpop.permute.xlu0 %1078
  %1080 = vrot.lane.b32.xlu0 %v550, 18
  %v1081 = vpop.permute.xlu0 %1080
  %1082 = vrot.lane.b32.xlu0 %v552, 18
  %v1083 = vpop.permute.xlu0 %1082
  %1084 = vrot.lane.b32.xlu0 %v554, 18
  %v1085 = vpop.permute.xlu0 %1084
  %1086 = vrot.lane.b32.xlu0 %v556, 18
  %v1087 = vpop.permute.xlu0 %1086
  %1088 = vrot.lane.b32.xlu0 %v558, 18
  %v1089 = vpop.permute.xlu0 %1088
  %1090 = vrot.lane.b32.xlu0 %v560, 18
  %v1091 = vpop.permute.xlu0 %1090
  %1092 = vrot.lane.b32.xlu0 %v562, 18
  %v1093 = vpop.permute.xlu0 %1092
  %1094 = vrot.lane.b32.xlu0 %v564, 18
  %v1095 = vpop.permute.xlu0 %1094
  %1096 = vrot.lane.b32.xlu0 %v566, 18
  %v1097 = vpop.permute.xlu0 %1096
  %1098 = vrot.lane.b32.xlu0 %v568, 18
  %v1099 = vpop.permute.xlu0 %1098
  %1100 = vrot.lane.b32.xlu0 %v570, 18
  %v1101 = vpop.permute.xlu0 %1100
  %1102 = vrot.lane.b32.xlu0 %v572, 18
  %v1103 = vpop.permute.xlu0 %1102
  %1104 = vrot.lane.b32.xlu0 %v574, 18
  %v1105 = vpop.permute.xlu0 %1104
  %1106 = vrot.lane.b32.xlu0 %v576, 18
  %v1107 = vpop.permute.xlu0 %1106
  %1108 = vrot.lane.b32.xlu0 %v361, 14
  %v1109 = vpop.permute.xlu0 %1108
  %1110 = vrot.lane.b32.xlu0 %v362, 14
  %v1111 = vpop.permute.xlu0 %1110
  %1112 = vrot.lane.b32.xlu0 %v363, 14
  %v1113 = vpop.permute.xlu0 %1112
  %1114 = vrot.lane.b32.xlu0 %v364, 14
  %v1115 = vpop.permute.xlu0 %1114
  %1116 = vrot.lane.b32.xlu0 %v365, 14
  %v1117 = vpop.permute.xlu0 %1116
  %1118 = vrot.lane.b32.xlu0 %v366, 14
  %v1119 = vpop.permute.xlu0 %1118
  %1120 = vrot.lane.b32.xlu0 %v367, 14
  %v1121 = vpop.permute.xlu0 %1120
  %1122 = vrot.lane.b32.xlu0 %v368, 14
  %v1123 = vpop.permute.xlu0 %1122
  %1124 = vrot.lane.b32.xlu0 %v369, 14
  %v1125 = vpop.permute.xlu0 %1124
  %1126 = vrot.lane.b32.xlu0 %v370, 14
  %v1127 = vpop.permute.xlu0 %1126
  %1128 = vrot.lane.b32.xlu0 %v371, 14
  %v1129 = vpop.permute.xlu0 %1128
  %1130 = vrot.lane.b32.xlu0 %v372, 14
  %v1131 = vpop.permute.xlu0 %1130
  %1132 = vrot.lane.b32.xlu0 %v373, 14
  %v1133 = vpop.permute.xlu0 %1132
  %1134 = vrot.lane.b32.xlu0 %v374, 14
  %v1135 = vpop.permute.xlu0 %1134
  %1136 = vrot.lane.b32.xlu0 %v375, 14
  %v1137 = vpop.permute.xlu0 %1136
  %1138 = vrot.lane.b32.xlu0 %v376, 14
  %v1139 = vpop.permute.xlu0 %1138
  %1140 = vrot.lane.b32.xlu0 %v377, 14
  %v1141 = vpop.permute.xlu0 %1140
  %1142 = vrot.lane.b32.xlu0 %v378, 14
  %v1143 = vpop.permute.xlu0 %1142
  %1144 = vrot.lane.b32.xlu0 %v379, 14
  %v1145 = vpop.permute.xlu0 %1144
  %1146 = vrot.lane.b32.xlu0 %v380, 14
  %v1147 = vpop.permute.xlu0 %1146
  %1148 = vrot.lane.b32.xlu0 %v381, 14
  %v1149 = vpop.permute.xlu0 %1148
  %1150 = vrot.lane.b32.xlu0 %v382, 14
  %v1151 = vpop.permute.xlu0 %1150
  %1152 = vrot.lane.b32.xlu0 %v383, 14
  %v1153 = vpop.permute.xlu0 %1152
  %1154 = vrot.lane.b32.xlu0 %v384, 14
  %v1155 = vpop.permute.xlu0 %1154
  %1156 = vrot.lane.b32.xlu0 %v385, 14
  %v1157 = vpop.permute.xlu0 %1156
  %1158 = vrot.lane.b32.xlu0 %v386, 14
  %v1159 = vpop.permute.xlu0 %1158
  %1160 = vrot.lane.b32.xlu0 %v387, 14
  %v1161 = vpop.permute.xlu0 %1160
  %1162 = vrot.lane.b32.xlu0 %v388, 14
  %v1163 = vpop.permute.xlu0 %1162
  %1164 = vrot.lane.b32.xlu0 %v389, 14
  %v1165 = vpop.permute.xlu0 %1164
  %1166 = vrot.lane.b32.xlu0 %v390, 14
  %v1167 = vpop.permute.xlu0 %1166
  %1168 = vrot.lane.b32.xlu0 %v391, 14
  %v1169 = vpop.permute.xlu0 %1168
  %1170 = vrot.lane.b32.xlu0 %v392, 14
  %v1171 = vpop.permute.xlu0 %1170
  %1172 = vrot.lane.b32.xlu0 %v365, 16
  %v1173 = vpop.permute.xlu0 %1172
  %1174 = vrot.lane.b32.xlu0 %v366, 16
  %v1175 = vpop.permute.xlu0 %1174
  %1176 = vrot.lane.b32.xlu0 %v367, 16
  %v1177 = vpop.permute.xlu0 %1176
  %1178 = vrot.lane.b32.xlu0 %v368, 16
  %v1179 = vpop.permute.xlu0 %1178
  %1180 = vrot.lane.b32.xlu0 %v369, 16
  %v1181 = vpop.permute.xlu0 %1180
  %1182 = vrot.lane.b32.xlu0 %v370, 16
  %v1183 = vpop.permute.xlu0 %1182
  %1184 = vrot.lane.b32.xlu0 %v371, 16
  %v1185 = vpop.permute.xlu0 %1184
  %1186 = vrot.lane.b32.xlu0 %v372, 16
  %v1187 = vpop.permute.xlu0 %1186
  %1188 = vrot.lane.b32.xlu0 %v373, 16
  %v1189 = vpop.permute.xlu0 %1188
  %1190 = vrot.lane.b32.xlu0 %v374, 16
  %v1191 = vpop.permute.xlu0 %1190
  %1192 = vrot.lane.b32.xlu0 %v375, 16
  %v1193 = vpop.permute.xlu0 %1192
  %1194 = vrot.lane.b32.xlu0 %v376, 16
  %v1195 = vpop.permute.xlu0 %1194
  %1196 = vrot.lane.b32.xlu0 0, 16
  %v1197 = vpop.permute.xlu0 %1196
  %1198 = vrot.lane.b32.xlu0 %v381, 16
  %v1199 = vpop.permute.xlu0 %1198
  %1200 = vrot.lane.b32.xlu0 %v382, 16
  %v1201 = vpop.permute.xlu0 %1200
  %1202 = vrot.lane.b32.xlu0 %v383, 16
  %v1203 = vpop.permute.xlu0 %1202
  %1204 = vrot.lane.b32.xlu0 %v384, 16
  %v1205 = vpop.permute.xlu0 %1204
  %1206 = vrot.lane.b32.xlu0 %v385, 16
  %v1207 = vpop.permute.xlu0 %1206
  %1208 = vrot.lane.b32.xlu0 %v386, 16
  %v1209 = vpop.permute.xlu0 %1208
  %1210 = vrot.lane.b32.xlu0 %v387, 16
  %v1211 = vpop.permute.xlu0 %1210
  %1212 = vrot.lane.b32.xlu0 %v388, 16
  %v1213 = vpop.permute.xlu0 %1212
  %1214 = vrot.lane.b32.xlu0 %v389, 16
  %v1215 = vpop.permute.xlu0 %1214
  %1216 = vrot.lane.b32.xlu0 %v390, 16
  %v1217 = vpop.permute.xlu0 %1216
  %1218 = vrot.lane.b32.xlu0 %v391, 16
  %v1219 = vpop.permute.xlu0 %1218
  %1220 = vrot.lane.b32.xlu0 %v392, 16
  %v1221 = vpop.permute.xlu0 %1220
  %vm1222 = vcmask 15360
  %v1225 = vsel %vm1222, 0, %v582
  %v1228 = vsel %vm1222, %v361, %v584
  %v1231 = vsel %vm1222, %v362, %v586
  %v1234 = vsel %vm1222, %v363, %v588
  %v1237 = vsel %vm1222, %v364, %v590
  %v1240 = vsel %vm1222, %v365, %v592
  %v1243 = vsel %vm1222, %v366, %v594
  %v1246 = vsel %vm1222, %v367, %v596
  %v1249 = vsel %vm1222, %v368, %v598
  %v1252 = vsel %vm1222, %v369, %v600
  %v1255 = vsel %vm1222, %v370, %v602
  %v1258 = vsel %vm1222, %v371, %v604
  %v1261 = vsel %vm1222, %v372, %v606
  %v1264 = vsel %vm1222, %v373, %v608
  %v1267 = vsel %vm1222, %v374, %v610
  %v1270 = vsel %vm1222, %v375, %v612
  %v1272 = vsel %vm1222, 0, %v614
  %v1275 = vsel %vm1222, %v377, %v616
  %v1278 = vsel %vm1222, %v378, %v618
  %v1281 = vsel %vm1222, %v379, %v620
  %v1284 = vsel %vm1222, %v380, %v622
  %v1287 = vsel %vm1222, %v381, %v624
  %v1290 = vsel %vm1222, %v382, %v626
  %v1293 = vsel %vm1222, %v383, %v628
  %v1296 = vsel %vm1222, %v384, %v630
  %v1299 = vsel %vm1222, %v385, %v632
  %v1302 = vsel %vm1222, %v386, %v634
  %v1305 = vsel %vm1222, %v387, %v636
  %v1308 = vsel %vm1222, %v388, %v638
  %v1311 = vsel %vm1222, %v389, %v640
  %v1314 = vsel %vm1222, %v390, %v642
  %v1317 = vsel %vm1222, %v391, %v644
  %vm1318 = vcmask 31744
  %v1320 = vsel %vm1318, %v1225, %v647
  %v1322 = vsel %vm1318, %v1228, %v649
  %v1324 = vsel %vm1318, %v1231, %v651
  %v1326 = vsel %vm1318, %v1234, %v653
  %v1328 = vsel %vm1318, %v1237, %v655
  %v1330 = vsel %vm1318, %v1240, %v657
  %v1332 = vsel %vm1318, %v1243, %v659
  %v1334 = vsel %vm1318, %v1246, %v661
  %v1336 = vsel %vm1318, %v1249, %v663
  %v1338 = vsel %vm1318, %v1252, %v665
  %v1340 = vsel %vm1318, %v1255, %v667
  %v1342 = vsel %vm1318, %v1258, %v669
  %v1344 = vsel %vm1318, %v1261, %v671
  %v1346 = vsel %vm1318, %v1264, %v673
  %v1348 = vsel %vm1318, %v1267, %v675
  %v1350 = vsel %vm1318, %v1270, %v677
  %v1352 = vsel %vm1318, %v1272, %v679
  %v1354 = vsel %vm1318, %v1275, %v681
  %v1356 = vsel %vm1318, %v1278, %v683
  %v1358 = vsel %vm1318, %v1281, %v685
  %v1360 = vsel %vm1318, %v1284, %v687
  %v1362 = vsel %vm1318, %v1287, %v689
  %v1364 = vsel %vm1318, %v1290, %v691
  %v1366 = vsel %vm1318, %v1293, %v693
  %v1368 = vsel %vm1318, %v1296, %v695
  %v1370 = vsel %vm1318, %v1299, %v697
  %v1372 = vsel %vm1318, %v1302, %v699
  %v1374 = vsel %vm1318, %v1305, %v701
  %v1376 = vsel %vm1318, %v1308, %v703
  %v1378 = vsel %vm1318, %v1311, %v705
  %v1380 = vsel %vm1318, %v1314, %v707
  %v1381 = vsel %vm1318, %v1317, %v677
  %vm1382 = vcmask 48128
  %v1384 = vsel %vm1382, %v1320, %v709
  %v1385 = vsel %vm1382, %v1322, %v709
  %v1387 = vsel %vm1382, %v1324, %v711
  %v1389 = vsel %vm1382, %v1326, %v713
  %v1391 = vsel %vm1382, %v1328, %v715
  %v1393 = vsel %vm1382, %v1330, %v717
  %v1395 = vsel %vm1382, %v1332, %v719
  %v1397 = vsel %vm1382, %v1334, %v721
  %v1399 = vsel %vm1382, %v1336, %v723
  %v1401 = vsel %vm1382, %v1338, %v725
  %v1403 = vsel %vm1382, %v1340, %v727
  %v1405 = vsel %vm1382, %v1342, %v729
  %v1407 = vsel %vm1382, %v1344, %v731
  %v1409 = vsel %vm1382, %v1346, %v733
  %v1411 = vsel %vm1382, %v1348, %v735
  %v1413 = vsel %vm1382, %v1350, %v737
  %v1414 = vsel %vm1382, %v1352, %v709
  %v1415 = vsel %vm1382, %v1354, %v709
  %v1417 = vsel %vm1382, %v1356, %v739
  %v1419 = vsel %vm1382, %v1358, %v741
  %v1421 = vsel %vm1382, %v1360, %v743
  %v1423 = vsel %vm1382, %v1362, %v745
  %v1425 = vsel %vm1382, %v1364, %v747
  %v1427 = vsel %vm1382, %v1366, %v749
  %v1429 = vsel %vm1382, %v1368, %v751
  %v1431 = vsel %vm1382, %v1370, %v753
  %v1433 = vsel %vm1382, %v1372, %v755
  %v1435 = vsel %vm1382, %v1374, %v757
  %v1437 = vsel %vm1382, %v1376, %v759
  %v1439 = vsel %vm1382, %v1378, %v761
  %v1441 = vsel %vm1382, %v1380, %v763
  %v1443 = vsel %vm1382, %v1381, %v765
  %vm1444 = vcmask 64512
  %v1446 = vsel %vm1444, %v1384, %v767
  %v1448 = vsel %vm1444, %v1385, %v769
  %v1450 = vsel %vm1444, %v1387, %v771
  %v1452 = vsel %vm1444, %v1389, %v773
  %v1454 = vsel %vm1444, %v1391, %v775
  %v1456 = vsel %vm1444, %v1393, %v777
  %v1458 = vsel %vm1444, %v1395, %v779
  %v1460 = vsel %vm1444, %v1397, %v781
  %v1462 = vsel %vm1444, %v1399, %v783
  %v1464 = vsel %vm1444, %v1401, %v785
  %v1466 = vsel %vm1444, %v1403, %v787
  %v1468 = vsel %vm1444, %v1405, %v789
  %v1470 = vsel %vm1444, %v1407, %v791
  %v1472 = vsel %vm1444, %v1409, %v793
  %v1474 = vsel %vm1444, %v1411, %v795
  %v1476 = vsel %vm1444, %v1413, %v797
  %v1478 = vsel %vm1444, %v1414, %v799
  %v1480 = vsel %vm1444, %v1415, %v801
  %v1482 = vsel %vm1444, %v1417, %v803
  %v1484 = vsel %vm1444, %v1419, %v805
  %v1486 = vsel %vm1444, %v1421, %v807
  %v1488 = vsel %vm1444, %v1423, %v809
  %v1490 = vsel %vm1444, %v1425, %v811
  %v1492 = vsel %vm1444, %v1427, %v813
  %v1494 = vsel %vm1444, %v1429, %v815
  %v1496 = vsel %vm1444, %v1431, %v817
  %v1498 = vsel %vm1444, %v1433, %v819
  %v1500 = vsel %vm1444, %v1435, %v821
  %v1502 = vsel %vm1444, %v1437, %v823
  %v1504 = vsel %vm1444, %v1439, %v825
  %v1506 = vsel %vm1444, %v1441, %v827
  %v1508 = vsel %vm1444, %v1443, %v829
  %vm1509 = vcmask 80896
  %v1511 = vsel %vm1509, %v1446, %v831
  %v1513 = vsel %vm1509, %v1448, %v833
  %v1515 = vsel %vm1509, %v1450, %v835
  %v1517 = vsel %vm1509, %v1452, %v837
  %v1519 = vsel %vm1509, %v1454, %v839
  %v1521 = vsel %vm1509, %v1456, %v841
  %v1523 = vsel %vm1509, %v1458, %v843
  %v1525 = vsel %vm1509, %v1460, %v845
  %v1527 = vsel %vm1509, %v1462, %v847
  %v1529 = vsel %vm1509, %v1464, %v849
  %v1531 = vsel %vm1509, %v1466, %v851
  %v1533 = vsel %vm1509, %v1468, %v853
  %v1535 = vsel %vm1509, %v1470, %v855
  %v1537 = vsel %vm1509, %v1472, %v857
  %v1539 = vsel %vm1509, %v1474, %v859
  %v1540 = vsel %vm1509, %v1476, %v859
  %v1542 = vsel %vm1509, %v1478, %v861
  %v1544 = vsel %vm1509, %v1480, %v863
  %v1546 = vsel %vm1509, %v1482, %v865
  %v1548 = vsel %vm1509, %v1484, %v867
  %v1550 = vsel %vm1509, %v1486, %v869
  %v1552 = vsel %vm1509, %v1488, %v871
  %v1554 = vsel %vm1509, %v1490, %v873
  %v1556 = vsel %vm1509, %v1492, %v875
  %v1558 = vsel %vm1509, %v1494, %v877
  %v1560 = vsel %vm1509, %v1496, %v879
  %v1562 = vsel %vm1509, %v1498, %v881
  %v1564 = vsel %vm1509, %v1500, %v883
  %v1566 = vsel %vm1509, %v1502, %v885
  %v1568 = vsel %vm1509, %v1504, %v887
  %v1569 = vsel %vm1509, %v1506, %v859
  %v1570 = vsel %vm1509, %v1508, %v859
  %vm1571 = vcmask 97280
  %v1573 = vsel %vm1571, %v1511, %v889
  %v1574 = vsel %vm1571, %v1513, %v889
  %v1575 = vsel %vm1571, %v1515, %v889
  %v1577 = vsel %vm1571, %v1517, %v891
  %v1579 = vsel %vm1571, %v1519, %v893
  %v1581 = vsel %vm1571, %v1521, %v895
  %v1583 = vsel %vm1571, %v1523, %v897
  %v1585 = vsel %vm1571, %v1525, %v899
  %v1587 = vsel %vm1571, %v1527, %v901
  %v1589 = vsel %vm1571, %v1529, %v903
  %v1591 = vsel %vm1571, %v1531, %v905
  %v1593 = vsel %vm1571, %v1533, %v907
  %v1595 = vsel %vm1571, %v1535, %v909
  %v1597 = vsel %vm1571, %v1537, %v911
  %v1599 = vsel %vm1571, %v1539, %v913
  %v1601 = vsel %vm1571, %v1540, %v915
  %v1602 = vsel %vm1571, %v1542, %v889
  %v1603 = vsel %vm1571, %v1544, %v889
  %v1604 = vsel %vm1571, %v1546, %v889
  %v1606 = vsel %vm1571, %v1548, %v917
  %v1608 = vsel %vm1571, %v1550, %v919
  %v1610 = vsel %vm1571, %v1552, %v921
  %v1612 = vsel %vm1571, %v1554, %v923
  %v1614 = vsel %vm1571, %v1556, %v925
  %v1616 = vsel %vm1571, %v1558, %v927
  %v1618 = vsel %vm1571, %v1560, %v929
  %v1620 = vsel %vm1571, %v1562, %v931
  %v1622 = vsel %vm1571, %v1564, %v933
  %v1624 = vsel %vm1571, %v1566, %v935
  %v1626 = vsel %vm1571, %v1568, %v937
  %v1628 = vsel %vm1571, %v1569, %v939
  %v1630 = vsel %vm1571, %v1570, %v941
  %vm1631 = vcmask 113664
  %v1633 = vsel %vm1631, %v1573, %v943
  %v1635 = vsel %vm1631, %v1574, %v945
  %v1637 = vsel %vm1631, %v1575, %v947
  %v1639 = vsel %vm1631, %v1577, %v949
  %v1641 = vsel %vm1631, %v1579, %v951
  %v1643 = vsel %vm1631, %v1581, %v953
  %v1645 = vsel %vm1631, %v1583, %v955
  %v1647 = vsel %vm1631, %v1585, %v957
  %v1649 = vsel %vm1631, %v1587, %v959
  %v1651 = vsel %vm1631, %v1589, %v961
  %v1653 = vsel %vm1631, %v1591, %v963
  %v1655 = vsel %vm1631, %v1593, %v965
  %v1657 = vsel %vm1631, %v1595, %v967
  %v1659 = vsel %vm1631, %v1597, %v969
  %v1661 = vsel %vm1631, %v1599, %v971
  %v1663 = vsel %vm1631, %v1601, %v973
  %v1665 = vsel %vm1631, %v1602, %v975
  %v1667 = vsel %vm1631, %v1603, %v977
  %v1669 = vsel %vm1631, %v1604, %v979
  %v1671 = vsel %vm1631, %v1606, %v981
  %v1673 = vsel %vm1631, %v1608, %v983
  %v1675 = vsel %vm1631, %v1610, %v985
  %v1677 = vsel %vm1631, %v1612, %v987
  %v1679 = vsel %vm1631, %v1614, %v989
  %v1681 = vsel %vm1631, %v1616, %v991
  %v1683 = vsel %vm1631, %v1618, %v993
  %v1685 = vsel %vm1631, %v1620, %v995
  %v1687 = vsel %vm1631, %v1622, %v997
  %v1689 = vsel %vm1631, %v1624, %v999
  %v1691 = vsel %vm1631, %v1626, %v1001
  %v1693 = vsel %vm1631, %v1628, %v1003
  %v1695 = vsel %vm1631, %v1630, %v1005
  %vm1696 = vcmask 130048
  %v1698 = vsel %vm1696, %v1633, %v1007
  %v1700 = vsel %vm1696, %v1635, %v1009
  %v1702 = vsel %vm1696, %v1637, %v1011
  %v1704 = vsel %vm1696, %v1639, %v1013
  %v1706 = vsel %vm1696, %v1641, %v1015
  %v1708 = vsel %vm1696, %v1643, %v1017
  %v1710 = vsel %vm1696, %v1645, %v1019
  %v1712 = vsel %vm1696, %v1647, %v1021
  %v1714 = vsel %vm1696, %v1649, %v1023
  %v1716 = vsel %vm1696, %v1651, %v1025
  %v1718 = vsel %vm1696, %v1653, %v1027
  %v1720 = vsel %vm1696, %v1655, %v1029
  %v1722 = vsel %vm1696, %v1657, %v1031
  %v1723 = vsel %vm1696, %v1659, %v889
  %v1724 = vsel %vm1696, %v1661, %v889
  %v1725 = vsel %vm1696, %v1663, %v889
  %v1727 = vsel %vm1696, %v1665, %v1033
  %v1729 = vsel %vm1696, %v1667, %v1035
  %v1731 = vsel %vm1696, %v1669, %v1037
  %v1733 = vsel %vm1696, %v1671, %v1039
  %v1735 = vsel %vm1696, %v1673, %v1041
  %v1737 = vsel %vm1696, %v1675, %v1043
  %v1739 = vsel %vm1696, %v1677, %v1045
  %v1741 = vsel %vm1696, %v1679, %v1047
  %v1743 = vsel %vm1696, %v1681, %v1049
  %v1745 = vsel %vm1696, %v1683, %v1051
  %v1747 = vsel %vm1696, %v1685, %v1053
  %v1749 = vsel %vm1696, %v1687, %v1055
  %v1751 = vsel %vm1696, %v1689, %v1057
  %v1752 = vsel %vm1696, %v1691, %v889
  %v1753 = vsel %vm1696, %v1693, %v889
  %v1754 = vsel %vm1696, %v1695, %v889
  %vm1755 = vcmask 146432
  %v1757 = vsel %vm1755, %v1698, %v1059
  %v1758 = vsel %vm1755, %v1700, %v1059
  %v1759 = vsel %vm1755, %v1702, %v1059
  %v1760 = vsel %vm1755, %v1704, %v1059
  %v1762 = vsel %vm1755, %v1706, %v1061
  %v1764 = vsel %vm1755, %v1708, %v1063
  %v1766 = vsel %vm1755, %v1710, %v1065
  %v1768 = vsel %vm1755, %v1712, %v1067
  %v1770 = vsel %vm1755, %v1714, %v1069
  %v1772 = vsel %vm1755, %v1716, %v1071
  %v1774 = vsel %vm1755, %v1718, %v1073
  %v1776 = vsel %vm1755, %v1720, %v1075
  %v1778 = vsel %vm1755, %v1722, %v1077
  %v1780 = vsel %vm1755, %v1723, %v1079
  %v1782 = vsel %vm1755, %v1724, %v1081
  %v1784 = vsel %vm1755, %v1725, %v1083
  %v1785 = vsel %vm1755, %v1727, %v1059
  %v1786 = vsel %vm1755, %v1729, %v1059
  %v1787 = vsel %vm1755, %v1731, %v1059
  %v1788 = vsel %vm1755, %v1733, %v1059
  %v1790 = vsel %vm1755, %v1735, %v1085
  %v1792 = vsel %vm1755, %v1737, %v1087
  %v1794 = vsel %vm1755, %v1739, %v1089
  %v1796 = vsel %vm1755, %v1741, %v1091
  %v1798 = vsel %vm1755, %v1743, %v1093
  %v1800 = vsel %vm1755, %v1745, %v1095
  %v1802 = vsel %vm1755, %v1747, %v1097
  %v1804 = vsel %vm1755, %v1749, %v1099
  %v1806 = vsel %vm1755, %v1751, %v1101
  %v1808 = vsel %vm1755, %v1752, %v1103
  %v1810 = vsel %vm1755, %v1753, %v1105
  %v1812 = vsel %vm1755, %v1754, %v1107
  %vm1813 = vcmask 162816
  %v1815 = vsel %vm1813, %v1757, %v1109
  %v1817 = vsel %vm1813, %v1758, %v1111
  %v1819 = vsel %vm1813, %v1759, %v1113
  %v1821 = vsel %vm1813, %v1760, %v1115
  %v1823 = vsel %vm1813, %v1762, %v1117
  %v1825 = vsel %vm1813, %v1764, %v1119
  %v1827 = vsel %vm1813, %v1766, %v1121
  %v1829 = vsel %vm1813, %v1768, %v1123
  %v1831 = vsel %vm1813, %v1770, %v1125
  %v1833 = vsel %vm1813, %v1772, %v1127
  %v1835 = vsel %vm1813, %v1774, %v1129
  %v1837 = vsel %vm1813, %v1776, %v1131
  %v1839 = vsel %vm1813, %v1778, %v1133
  %v1841 = vsel %vm1813, %v1780, %v1135
  %v1843 = vsel %vm1813, %v1782, %v1137
  %v1845 = vsel %vm1813, %v1784, %v1139
  %v1847 = vsel %vm1813, %v1785, %v1141
  %v1849 = vsel %vm1813, %v1786, %v1143
  %v1851 = vsel %vm1813, %v1787, %v1145
  %v1853 = vsel %vm1813, %v1788, %v1147
  %v1855 = vsel %vm1813, %v1790, %v1149
  %v1857 = vsel %vm1813, %v1792, %v1151
  %v1859 = vsel %vm1813, %v1794, %v1153
  %v1861 = vsel %vm1813, %v1796, %v1155
  %v1863 = vsel %vm1813, %v1798, %v1157
  %v1865 = vsel %vm1813, %v1800, %v1159
  %v1867 = vsel %vm1813, %v1802, %v1161
  %v1869 = vsel %vm1813, %v1804, %v1163
  %v1871 = vsel %vm1813, %v1806, %v1165
  %v1873 = vsel %vm1813, %v1808, %v1167
  %v1875 = vsel %vm1813, %v1810, %v1169
  %v1877 = vsel %vm1813, %v1812, %v1171
  %vm1878 = vcmask 179200
  %v1880 = vsel %vm1878, %v1815, %v1173
  %v1882 = vsel %vm1878, %v1817, %v1175
  %v1884 = vsel %vm1878, %v1819, %v1177
  %v1886 = vsel %vm1878, %v1821, %v1179
  %v1888 = vsel %vm1878, %v1823, %v1181
  %v1890 = vsel %vm1878, %v1825, %v1183
  %v1892 = vsel %vm1878, %v1827, %v1185
  %v1894 = vsel %vm1878, %v1829, %v1187
  %v1896 = vsel %vm1878, %v1831, %v1189
  %v1898 = vsel %vm1878, %v1833, %v1191
  %v1900 = vsel %vm1878, %v1835, %v1193
  %v1902 = vsel %vm1878, %v1837, %v1195
  %v1904 = vsel %vm1878, %v1839, %v1197
  %v1905 = vsel %vm1878, %v1841, %v1197
  %v1906 = vsel %vm1878, %v1843, %v1197
  %v1907 = vsel %vm1878, %v1845, %v1197
  %v1909 = vsel %vm1878, %v1847, %v1199
  %v1911 = vsel %vm1878, %v1849, %v1201
  %v1913 = vsel %vm1878, %v1851, %v1203
  %v1915 = vsel %vm1878, %v1853, %v1205
  %v1917 = vsel %vm1878, %v1855, %v1207
  %v1919 = vsel %vm1878, %v1857, %v1209
  %v1921 = vsel %vm1878, %v1859, %v1211
  %v1923 = vsel %vm1878, %v1861, %v1213
  %v1925 = vsel %vm1878, %v1863, %v1215
  %v1927 = vsel %vm1878, %v1865, %v1217
  %v1929 = vsel %vm1878, %v1867, %v1219
  %v1931 = vsel %vm1878, %v1869, %v1221
  %v1932 = vsel %vm1878, %v1871, %v1197
  %v1933 = vsel %vm1878, %v1873, %v1197
  %v1934 = vsel %vm1878, %v1875, %v1197
  %v1935 = vsel %vm1878, %v1877, %v1197
  %v1939 = vunpack.c.l.b16 %v90
  %v1940 = vunpack.c.l.b16 %v91
  %v1941 = vunpack.c.l.b16 %v92
  %v1942 = vpack.c.b16 %v1940, %v1939
  %v1943 = vpack.c.b16 %v1941, %v1941
  %vm1945 = vcmask 195584
  %v1946 = vsel %vm1945, %v1880, 0
  %v1948 = vsel %vm1945, %v1882, 0
  %v1950 = vsel %vm1945, %v1884, 0
  %v1952 = vsel %vm1945, %v1886, 0
  %v1954 = vsel %vm1945, %v1888, 0
  %v1956 = vsel %vm1945, %v1890, 0
  %v1958 = vsel %vm1945, %v1892, 0
  %v1960 = vsel %vm1945, %v1894, 0
  %v1962 = vsel %vm1945, %v1896, 0
  %v1964 = vsel %vm1945, %v1898, 0
  %v1966 = vsel %vm1945, %v1900, 0
  %v1968 = vsel %vm1945, %v1902, 0
  %v1970 = vsel %vm1945, %v1904, 0
  %v1972 = vsel %vm1945, %v1905, 0
  %v1974 = vsel %vm1945, %v1906, 0
  %v1976 = vsel %vm1945, %v1907, 0
  %v1978 = vsel %vm1945, %v1909, 0
  %v1980 = vsel %vm1945, %v1911, 0
  %v1982 = vsel %vm1945, %v1913, 0
  %v1984 = vsel %vm1945, %v1915, 0
  %v1986 = vsel %vm1945, %v1917, 0
  %v1988 = vsel %vm1945, %v1919, 0
  %v1990 = vsel %vm1945, %v1921, 0
  %v1992 = vsel %vm1945, %v1923, 0
  %v1994 = vsel %vm1945, %v1925, 0
  %v1996 = vsel %vm1945, %v1927, 0
  %v1998 = vsel %vm1945, %v1929, 0
  %v2000 = vsel %vm1945, %v1931, 0
  %v2002 = vsel %vm1945, %v1932, 0
  %v2004 = vsel %vm1945, %v1933, 0
  %v2006 = vsel %vm1945, %v1934, 0
  %v2008 = vsel %vm1945, %v1935, 0
  %vm2010 = vcmask 1043456
  %v2012 = vsel %vm2010, %v1943, 0
  %2014 = vmatprep.subr.bf16.mxu0 0
  %2015 = vmatpush1.bf16.msra.mxu0 %v1942
  %2016 = vmatprep.subr.bf16.mxu0 0
  %2017 = vmatpush1.bf16.msra.mxu0 %v2012
  %2018 = vmatprep.subr.bf16.mxu0 0
  %2019 = vmatpush1.bf16.msra.mxu0 0
  %2020 = vmatprep.subr.bf16.mxu0 0
  %2021 = vmatpush1.bf16.msra.mxu0 0
  %2022 = vmatprep.subr.bf16.mxu0 0
  %2023 = vmatpush1.bf16.msra.mxu0 0
  %2024 = vmatprep.subr.bf16.mxu0 0
  %2025 = vmatpush1.bf16.msra.mxu0 0
  %2026 = vmatprep.subr.bf16.mxu0 0
  %2027 = vmatpush1.bf16.msra.mxu0 0
  %2028 = vmatprep.subr.bf16.mxu0 0
  %2029 = vmatpush1.bf16.msra.mxu0 0
  %2030 = vmatprep.subr.bf16.mxu0 0
  %2031 = vmatpush1.bf16.msra.mxu0 0
  %2032 = vmatprep.subr.bf16.mxu0 0
  %2033 = vmatpush1.bf16.msra.mxu0 0
  %2034 = vmatprep.subr.bf16.mxu0 0
  %2035 = vmatpush1.bf16.msra.mxu0 0
  %2036 = vmatprep.subr.bf16.mxu0 0
  %2037 = vmatpush1.bf16.msra.mxu0 0
  %2038 = vmatprep.subr.bf16.mxu0 0
  %2039 = vmatpush1.bf16.msra.mxu0 0
  %2040 = vmatprep.subr.bf16.mxu0 0
  %2041 = vmatpush1.bf16.msra.mxu0 0
  %2042 = vmatprep.subr.bf16.mxu0 0
  %2043 = vmatpush1.bf16.msra.mxu0 0
  %2044 = vmatprep.subr.bf16.mxu0 0
  %2045 = vmatpush1.bf16.msra.mxu0 0
  %2046 = vmatprep.mubr.bf16.mxu0 0
  %2047 = vmatmul.mubr.bf16.gmra.mrb[0].mxu0 %v1946
  %v2048 = vpop.f32.mrb[0].mxu0
  %v2049 = vadd.f32 0.0, %v2048
  %v2050 = vpop.f32.mrb[0].mxu0
  %v2051 = vpop.f32.mrb[0].mxu0
  %v2052 = vadd.f32 0.0, %v2051
  %v2053 = vpop.f32.mrb[0].mxu0
  %2054 = vmatprep.mubr.bf16.mxu0 0
  %2055 = vmatmul.mubr.bf16.gmra.mrb[0].mxu0 %v1948
  %v2056 = vpop.f32.mrb[0].mxu0
  %v2057 = vadd.f32 0.0, %v2056
  %v2058 = vpop.f32.mrb[0].mxu0
  %v2059 = vpop.f32.mrb[0].mxu0
  %v2060 = vadd.f32 0.0, %v2059
  %v2061 = vpop.f32.mrb[0].mxu0
  %2062 = vmatprep.mubr.bf16.mxu0 0
  %2063 = vmatmul.mubr.bf16.gmra.mrb[0].mxu0 %v1950
  %v2064 = vpop.f32.mrb[0].mxu0
  %v2065 = vadd.f32 0.0, %v2064
  %v2066 = vpop.f32.mrb[0].mxu0
  %v2067 = vpop.f32.mrb[0].mxu0
  %v2068 = vadd.f32 0.0, %v2067
  %v2069 = vpop.f32.mrb[0].mxu0
  %2070 = vmatprep.mubr.bf16.mxu0 0
  %2071 = vmatmul.mubr.bf16.gmra.mrb[0].mxu0 %v1952
  %v2072 = vpop.f32.mrb[0].mxu0
  %v2073 = vadd.f32 0.0, %v2072
  %v2074 = vpop.f32.mrb[0].mxu0
  %v2075 = vpop.f32.mrb[0].mxu0
  %v2076 = vadd.f32 0.0, %v2075
  %v2077 = vpop.f32.mrb[0].mxu0
  %2078 = vmatprep.mubr.bf16.mxu0 0
  %2079 = vmatmul.mubr.bf16.gmra.mrb[0].mxu0 %v1954
  %v2080 = vpop.f32.mrb[0].mxu0
  %v2081 = vadd.f32 0.0, %v2080
  %v2082 = vpop.f32.mrb[0].mxu0
  %v2083 = vpop.f32.mrb[0].mxu0
  %v2084 = vadd.f32 0.0, %v2083
  %v2085 = vpop.f32.mrb[0].mxu0
  %2086 = vmatprep.mubr.bf16.mxu0 0
  %2087 = vmatmul.mubr.bf16.gmra.mrb[0].mxu0 %v1956
  %v2088 = vpop.f32.mrb[0].mxu0
  %v2089 = vadd.f32 0.0, %v2088
  %v2090 = vpop.f32.mrb[0].mxu0
  %v2091 = vpop.f32.mrb[0].mxu0
  %v2092 = vadd.f32 0.0, %v2091
  %v2093 = vpop.f32.mrb[0].mxu0
  %2094 = vmatprep.mubr.bf16.mxu0 0
  %2095 = vmatmul.mubr.bf16.gmra.mrb[0].mxu0 %v1958
  %v2096 = vpop.f32.mrb[0].mxu0
  %v2097 = vadd.f32 0.0, %v2096
  %v2098 = vpop.f32.mrb[0].mxu0
  %v2099 = vpop.f32.mrb[0].mxu0
  %v2100 = vadd.f32 0.0, %v2099
  %v2101 = vpop.f32.mrb[0].mxu0
  %2102 = vmatprep.mubr.bf16.mxu0 0
  %2103 = vmatmul.mubr.bf16.gmra.mrb[0].mxu0 %v1960
  %v2104 = vpop.f32.mrb[0].mxu0
  %v2105 = vadd.f32 0.0, %v2104
  %v2106 = vpop.f32.mrb[0].mxu0
  %v2107 = vpop.f32.mrb[0].mxu0
  %v2108 = vadd.f32 0.0, %v2107
  %v2109 = vpop.f32.mrb[0].mxu0
  %2110 = vmatprep.mubr.bf16.mxu0 0
  %2111 = vmatmul.mubr.bf16.gmra.mrb[0].mxu0 %v1962
  %v2112 = vpop.f32.mrb[0].mxu0
  %v2113 = vadd.f32 0.0, %v2112
  %v2114 = vpop.f32.mrb[0].mxu0
  %v2115 = vpop.f32.mrb[0].mxu0
  %v2116 = vadd.f32 0.0, %v2115
  %v2117 = vpop.f32.mrb[0].mxu0
  %2118 = vmatprep.mubr.bf16.mxu0 0
  %2119 = vmatmul.mubr.bf16.gmra.mrb[0].mxu0 %v1964
  %v2120 = vpop.f32.mrb[0].mxu0
  %v2121 = vadd.f32 0.0, %v2120
  %v2122 = vpop.f32.mrb[0].mxu0
  %v2123 = vpop.f32.mrb[0].mxu0
  %v2124 = vadd.f32 0.0, %v2123
  %v2125 = vpop.f32.mrb[0].mxu0
  %2126 = vmatprep.mubr.bf16.mxu0 0
  %2127 = vmatmul.mubr.bf16.gmra.mrb[0].mxu0 %v1966
  %v2128 = vpop.f32.mrb[0].mxu0
  %v2129 = vadd.f32 0.0, %v2128
  %v2130 = vpop.f32.mrb[0].mxu0
  %v2131 = vpop.f32.mrb[0].mxu0
  %v2132 = vadd.f32 0.0, %v2131
  %v2133 = vpop.f32.mrb[0].mxu0
  %2134 = vmatprep.mubr.bf16.mxu0 0
  %2135 = vmatmul.mubr.bf16.gmra.mrb[0].mxu0 %v1968
  %v2136 = vpop.f32.mrb[0].mxu0
  %v2137 = vadd.f32 0.0, %v2136
  %v2138 = vpop.f32.mrb[0].mxu0
  %v2139 = vpop.f32.mrb[0].mxu0
  %v2140 = vadd.f32 0.0, %v2139
  %v2141 = vpop.f32.mrb[0].mxu0
  %2142 = vmatprep.mubr.bf16.mxu0 0
  %2143 = vmatmul.mubr.bf16.gmra.mrb[0].mxu0 %v1970
  %v2144 = vpop.f32.mrb[0].mxu0
  %v2145 = vadd.f32 0.0, %v2144
  %v2146 = vpop.f32.mrb[0].mxu0
  %v2147 = vpop.f32.mrb[0].mxu0
  %v2148 = vadd.f32 0.0, %v2147
  %v2149 = vpop.f32.mrb[0].mxu0
  %2150 = vmatprep.mubr.bf16.mxu0 0
  %2151 = vmatmul.mubr.bf16.gmra.mrb[0].mxu0 %v1972
  %v2152 = vpop.f32.mrb[0].mxu0
  %v2153 = vadd.f32 0.0, %v2152
  %v2154 = vpop.f32.mrb[0].mxu0
  %v2155 = vpop.f32.mrb[0].mxu0
  %v2156 = vadd.f32 0.0, %v2155
  %v2157 = vpop.f32.mrb[0].mxu0
  %2158 = vmatprep.mubr.bf16.mxu0 0
  %2159 = vmatmul.mubr.bf16.gmra.mrb[0].mxu0 %v1974
  %v2160 = vpop.f32.mrb[0].mxu0
  %v2161 = vadd.f32 0.0, %v2160
  %v2162 = vpop.f32.mrb[0].mxu0
  %v2163 = vpop.f32.mrb[0].mxu0
  %v2164 = vadd.f32 0.0, %v2163
  %v2165 = vpop.f32.mrb[0].mxu0
  %2166 = vmatprep.mubr.bf16.mxu0 0
  %2167 = vmatmul.mubr.bf16.gmra.mrb[0].mxu0 %v1976
  %v2168 = vpop.f32.mrb[0].mxu0
  %v2169 = vadd.f32 0.0, %v2168
  %v2170 = vpop.f32.mrb[0].mxu0
  %v2171 = vpop.f32.mrb[0].mxu0
  %v2172 = vadd.f32 0.0, %v2171
  %v2173 = vpop.f32.mrb[0].mxu0
  %2174 = vmatprep.mubr.bf16.mxu0 0
  %2175 = vmatmul.mubr.bf16.gmra.mrb[0].mxu0 %v1978
  %v2176 = vpop.f32.mrb[0].mxu0
  %v2177 = vadd.f32 0.0, %v2176
  %v2178 = vpop.f32.mrb[0].mxu0
  %v2179 = vpop.f32.mrb[0].mxu0
  %v2180 = vadd.f32 0.0, %v2179
  %v2181 = vpop.f32.mrb[0].mxu0
  %2182 = vmatprep.mubr.bf16.mxu0 0
  %2183 = vmatmul.mubr.bf16.gmra.mrb[0].mxu0 %v1980
  %v2184 = vpop.f32.mrb[0].mxu0
  %v2185 = vadd.f32 0.0, %v2184
  %v2186 = vpop.f32.mrb[0].mxu0
  %v2187 = vpop.f32.mrb[0].mxu0
  %v2188 = vadd.f32 0.0, %v2187
  %v2189 = vpop.f32.mrb[0].mxu0
  %2190 = vmatprep.mubr.bf16.mxu0 0
  %2191 = vmatmul.mubr.bf16.gmra.mrb[0].mxu0 %v1982
  %v2192 = vpop.f32.mrb[0].mxu0
  %v2193 = vadd.f32 0.0, %v2192
  %v2194 = vpop.f32.mrb[0].mxu0
  %v2195 = vpop.f32.mrb[0].mxu0
  %v2196 = vadd.f32 0.0, %v2195
  %v2197 = vpop.f32.mrb[0].mxu0
  %2198 = vmatprep.mubr.bf16.mxu0 0
  %2199 = vmatmul.mubr.bf16.gmra.mrb[0].mxu0 %v1984
  %v2200 = vpop.f32.mrb[0].mxu0
  %v2201 = vadd.f32 0.0, %v2200
  %v2202 = vpop.f32.mrb[0].mxu0
  %v2203 = vpop.f32.mrb[0].mxu0
  %v2204 = vadd.f32 0.0, %v2203
  %v2205 = vpop.f32.mrb[0].mxu0
  %2206 = vmatprep.mubr.bf16.mxu0 0
  %2207 = vmatmul.mubr.bf16.gmra.mrb[0].mxu0 %v1986
  %v2208 = vpop.f32.mrb[0].mxu0
  %v2209 = vadd.f32 0.0, %v2208
  %v2210 = vpop.f32.mrb[0].mxu0
  %v2211 = vpop.f32.mrb[0].mxu0
  %v2212 = vadd.f32 0.0, %v2211
  %v2213 = vpop.f32.mrb[0].mxu0
  %2214 = vmatprep.mubr.bf16.mxu0 0
  %2215 = vmatmul.mubr.bf16.gmra.mrb[0].mxu0 %v1988
  %v2216 = vpop.f32.mrb[0].mxu0
  %v2217 = vadd.f32 0.0, %v2216
  %v2218 = vpop.f32.mrb[0].mxu0
  %v2219 = vpop.f32.mrb[0].mxu0
  %v2220 = vadd.f32 0.0, %v2219
  %v2221 = vpop.f32.mrb[0].mxu0
  %2222 = vmatprep.mubr.bf16.mxu0 0
  %2223 = vmatmul.mubr.bf16.gmra.mrb[0].mxu0 %v1990
  %v2224 = vpop.f32.mrb[0].mxu0
  %v2225 = vadd.f32 0.0, %v2224
  %v2226 = vpop.f32.mrb[0].mxu0
  %v2227 = vpop.f32.mrb[0].mxu0
  %v2228 = vadd.f32 0.0, %v2227
  %v2229 = vpop.f32.mrb[0].mxu0
  %2230 = vmatprep.mubr.bf16.mxu0 0
  %2231 = vmatmul.mubr.bf16.gmra.mrb[0].mxu0 %v1992
  %v2232 = vpop.f32.mrb[0].mxu0
  %v2233 = vadd.f32 0.0, %v2232
  %v2234 = vpop.f32.mrb[0].mxu0
  %v2235 = vpop.f32.mrb[0].mxu0
  %v2236 = vadd.f32 0.0, %v2235
  %v2237 = vpop.f32.mrb[0].mxu0
  %2238 = vmatprep.mubr.bf16.mxu0 0
  %2239 = vmatmul.mubr.bf16.gmra.mrb[0].mxu0 %v1994
  %v2240 = vpop.f32.mrb[0].mxu0
  %v2241 = vadd.f32 0.0, %v2240
  %v2242 = vpop.f32.mrb[0].mxu0
  %v2243 = vpop.f32.mrb[0].mxu0
  %v2244 = vadd.f32 0.0, %v2243
  %v2245 = vpop.f32.mrb[0].mxu0
  %2246 = vmatprep.mubr.bf16.mxu0 0
  %2247 = vmatmul.mubr.bf16.gmra.mrb[0].mxu0 %v1996
  %v2248 = vpop.f32.mrb[0].mxu0
  %v2249 = vadd.f32 0.0, %v2248
  %v2250 = vpop.f32.mrb[0].mxu0
  %v2251 = vpop.f32.mrb[0].mxu0
  %v2252 = vadd.f32 0.0, %v2251
  %v2253 = vpop.f32.mrb[0].mxu0
  %2254 = vmatprep.mubr.bf16.mxu0 0
  %2255 = vmatmul.mubr.bf16.gmra.mrb[0].mxu0 %v1998
  %v2256 = vpop.f32.mrb[0].mxu0
  %v2257 = vadd.f32 0.0, %v2256
  %v2258 = vpop.f32.mrb[0].mxu0
  %v2259 = vpop.f32.mrb[0].mxu0
  %v2260 = vadd.f32 0.0, %v2259
  %v2261 = vpop.f32.mrb[0].mxu0
  %2262 = vmatprep.mubr.bf16.mxu0 0
  %2263 = vmatmul.mubr.bf16.gmra.mrb[0].mxu0 %v2000
  %v2264 = vpop.f32.mrb[0].mxu0
  %v2265 = vadd.f32 0.0, %v2264
  %v2266 = vpop.f32.mrb[0].mxu0
  %v2267 = vpop.f32.mrb[0].mxu0
  %v2268 = vadd.f32 0.0, %v2267
  %v2269 = vpop.f32.mrb[0].mxu0
  %2270 = vmatprep.mubr.bf16.mxu0 0
  %2271 = vmatmul.mubr.bf16.gmra.mrb[0].mxu0 %v2002
  %v2272 = vpop.f32.mrb[0].mxu0
  %v2273 = vadd.f32 0.0, %v2272
  %v2274 = vpop.f32.mrb[0].mxu0
  %v2275 = vpop.f32.mrb[0].mxu0
  %v2276 = vadd.f32 0.0, %v2275
  %v2277 = vpop.f32.mrb[0].mxu0
  %2278 = vmatprep.mubr.bf16.mxu0 0
  %2279 = vmatmul.mubr.bf16.gmra.mrb[0].mxu0 %v2004
  %v2280 = vpop.f32.mrb[0].mxu0
  %v2281 = vadd.f32 0.0, %v2280
  %v2282 = vpop.f32.mrb[0].mxu0
  %v2283 = vpop.f32.mrb[0].mxu0
  %v2284 = vadd.f32 0.0, %v2283
  %v2285 = vpop.f32.mrb[0].mxu0
  %2286 = vmatprep.mubr.bf16.mxu0 0
  %2287 = vmatmul.mubr.bf16.gmra.mrb[0].mxu0 %v2006
  %v2288 = vpop.f32.mrb[0].mxu0
  %v2289 = vadd.f32 0.0, %v2288
  %v2290 = vpop.f32.mrb[0].mxu0
  %v2291 = vpop.f32.mrb[0].mxu0
  %v2292 = vadd.f32 0.0, %v2291
  %v2293 = vpop.f32.mrb[0].mxu0
  %2294 = vmatprep.mubr.bf16.mxu0 0
  %2295 = vmatmul.mubr.bf16.gmra.mrb[0].mxu0 %v2008
  %v2296 = vpop.f32.mrb[0].mxu0
  %v2297 = vadd.f32 0.0, %v2296
  %v2298 = vpop.f32.mrb[0].mxu0
  %v2299 = vpop.f32.mrb[0].mxu0
  %v2300 = vadd.f32 0.0, %v2299
  %v2301 = vpop.f32.mrb[0].mxu0
  %2302 = vdwg.mxu0
  %2363 = vrot.lane.b32.xlu0 %v297, 120
  %v2364 = vpop.permute.xlu0 %2363
  %2365 = vrot.lane.b32.xlu0 %v298, 120
  %v2366 = vpop.permute.xlu0 %2365
  %2367 = vrot.lane.b32.xlu0 %v299, 120
  %v2368 = vpop.permute.xlu0 %2367
  %2369 = vrot.lane.b32.xlu0 %v300, 120
  %v2370 = vpop.permute.xlu0 %2369
  %2371 = vrot.lane.b32.xlu0 %v301, 120
  %v2372 = vpop.permute.xlu0 %2371
  %2373 = vrot.lane.b32.xlu0 %v302, 120
  %v2374 = vpop.permute.xlu0 %2373
  %2375 = vrot.lane.b32.xlu0 %v303, 120
  %v2376 = vpop.permute.xlu0 %2375
  %2377 = vrot.lane.b32.xlu0 %v304, 120
  %v2378 = vpop.permute.xlu0 %2377
  %2379 = vrot.lane.b32.xlu0 %v305, 120
  %v2380 = vpop.permute.xlu0 %2379
  %2381 = vrot.lane.b32.xlu0 %v306, 120
  %v2382 = vpop.permute.xlu0 %2381
  %2383 = vrot.lane.b32.xlu0 %v307, 120
  %v2384 = vpop.permute.xlu0 %2383
  %2385 = vrot.lane.b32.xlu0 %v308, 120
  %v2386 = vpop.permute.xlu0 %2385
  %2387 = vrot.lane.b32.xlu0 %v309, 120
  %v2388 = vpop.permute.xlu0 %2387
  %2389 = vrot.lane.b32.xlu0 %v310, 120
  %v2390 = vpop.permute.xlu0 %2389
  %2391 = vrot.lane.b32.xlu0 %v311, 120
  %v2392 = vpop.permute.xlu0 %2391
  %2393 = vrot.lane.b32.xlu0 %v312, 120
  %v2394 = vpop.permute.xlu0 %2393
  %2395 = vrot.lane.b32.xlu0 %v313, 120
  %v2396 = vpop.permute.xlu0 %2395
  %2397 = vrot.lane.b32.xlu0 %v314, 120
  %v2398 = vpop.permute.xlu0 %2397
  %2399 = vrot.lane.b32.xlu0 %v315, 120
  %v2400 = vpop.permute.xlu0 %2399
  %2401 = vrot.lane.b32.xlu0 %v316, 120
  %v2402 = vpop.permute.xlu0 %2401
  %2403 = vrot.lane.b32.xlu0 %v317, 120
  %v2404 = vpop.permute.xlu0 %2403
  %2405 = vrot.lane.b32.xlu0 %v318, 120
  %v2406 = vpop.permute.xlu0 %2405
  %2407 = vrot.lane.b32.xlu0 %v319, 120
  %v2408 = vpop.permute.xlu0 %2407
  %2409 = vrot.lane.b32.xlu0 %v320, 120
  %v2410 = vpop.permute.xlu0 %2409
  %2411 = vrot.lane.b32.xlu0 %v321, 120
  %v2412 = vpop.permute.xlu0 %2411
  %2413 = vrot.lane.b32.xlu0 %v322, 120
  %v2414 = vpop.permute.xlu0 %2413
  %2415 = vrot.lane.b32.xlu0 %v323, 120
  %v2416 = vpop.permute.xlu0 %2415
  %2417 = vrot.lane.b32.xlu0 %v324, 120
  %v2418 = vpop.permute.xlu0 %2417
  %2419 = vrot.lane.b32.xlu0 %v325, 120
  %v2420 = vpop.permute.xlu0 %2419
  %2421 = vrot.lane.b32.xlu0 %v326, 120
  %v2422 = vpop.permute.xlu0 %2421
  %2423 = vrot.lane.b32.xlu0 %v329, 120
  %v2424 = vpop.permute.xlu0 %2423
  %2425 = vrot.lane.b32.xlu0 %v330, 120
  %v2426 = vpop.permute.xlu0 %2425
  %2427 = vrot.lane.b32.xlu0 %v331, 120
  %v2428 = vpop.permute.xlu0 %2427
  %2429 = vrot.lane.b32.xlu0 %v332, 120
  %v2430 = vpop.permute.xlu0 %2429
  %2431 = vrot.lane.b32.xlu0 %v333, 120
  %v2432 = vpop.permute.xlu0 %2431
  %2433 = vrot.lane.b32.xlu0 %v334, 120
  %v2434 = vpop.permute.xlu0 %2433
  %2435 = vrot.lane.b32.xlu0 %v335, 120
  %v2436 = vpop.permute.xlu0 %2435
  %2437 = vrot.lane.b32.xlu0 %v336, 120
  %v2438 = vpop.permute.xlu0 %2437
  %2439 = vrot.lane.b32.xlu0 %v337, 120
  %v2440 = vpop.permute.xlu0 %2439
  %2441 = vrot.lane.b32.xlu0 %v338, 120
  %v2442 = vpop.permute.xlu0 %2441
  %2443 = vrot.lane.b32.xlu0 %v339, 120
  %v2444 = vpop.permute.xlu0 %2443
  %2445 = vrot.lane.b32.xlu0 %v340, 120
  %v2446 = vpop.permute.xlu0 %2445
  %2447 = vrot.lane.b32.xlu0 %v341, 120
  %v2448 = vpop.permute.xlu0 %2447
  %2449 = vrot.lane.b32.xlu0 %v342, 120
  %v2450 = vpop.permute.xlu0 %2449
  %2451 = vrot.lane.b32.xlu0 %v343, 120
  %v2452 = vpop.permute.xlu0 %2451
  %2453 = vrot.lane.b32.xlu0 %v344, 120
  %v2454 = vpop.permute.xlu0 %2453
  %2455 = vrot.lane.b32.xlu0 %v345, 120
  %v2456 = vpop.permute.xlu0 %2455
  %2457 = vrot.lane.b32.xlu0 %v346, 120
  %v2458 = vpop.permute.xlu0 %2457
  %2459 = vrot.lane.b32.xlu0 %v347, 120
  %v2460 = vpop.permute.xlu0 %2459
  %2461 = vrot.lane.b32.xlu0 %v348, 120
  %v2462 = vpop.permute.xlu0 %2461
  %2463 = vrot.lane.b32.xlu0 %v349, 120
  %v2464 = vpop.permute.xlu0 %2463
  %2465 = vrot.lane.b32.xlu0 %v350, 120
  %v2466 = vpop.permute.xlu0 %2465
  %2467 = vrot.lane.b32.xlu0 %v351, 120
  %v2468 = vpop.permute.xlu0 %2467
  %2469 = vrot.lane.b32.xlu0 %v352, 120
  %v2470 = vpop.permute.xlu0 %2469
  %2471 = vrot.lane.b32.xlu0 %v353, 120
  %v2472 = vpop.permute.xlu0 %2471
  %2473 = vrot.lane.b32.xlu0 %v354, 120
  %v2474 = vpop.permute.xlu0 %2473
  %2475 = vrot.lane.b32.xlu0 %v355, 120
  %v2476 = vpop.permute.xlu0 %2475
  %2477 = vrot.lane.b32.xlu0 %v356, 120
  %v2478 = vpop.permute.xlu0 %2477
  %2479 = vrot.lane.b32.xlu0 %v357, 120
  %v2480 = vpop.permute.xlu0 %2479
  %2481 = vrot.lane.b32.xlu0 %v358, 120
  %v2482 = vpop.permute.xlu0 %2481
  %v2483 = vmax.f32 %v297, %v299
  %v2484 = vmax.f32 %v298, %v300
  %v2485 = vmax.f32 %v299, %v301
  %v2486 = vmax.f32 %v300, %v302
  %v2487 = vmax.f32 %v301, %v303
  %v2488 = vmax.f32 %v302, %v304
  %v2489 = vmax.f32 %v303, %v305
  %v2490 = vmax.f32 %v304, %v306
  %v2491 = vmax.f32 %v305, %v307
  %v2492 = vmax.f32 %v306, %v308
  %v2493 = vmax.f32 %v307, %v309
  %v2494 = vmax.f32 %v308, %v310
  %v2495 = vmax.f32 %v309, %v311
  %v2496 = vmax.f32 %v310, %v312
  %v2497 = vmax.f32 %v311, %v313
  %v2498 = vmax.f32 %v312, %v314
  %v2499 = vmax.f32 %v313, %v315
  %v2500 = vmax.f32 %v314, %v316
  %v2501 = vmax.f32 %v315, %v317
  %v2502 = vmax.f32 %v316, %v318
  %v2503 = vmax.f32 %v317, %v319
  %v2504 = vmax.f32 %v318, %v320
  %v2505 = vmax.f32 %v319, %v321
  %v2506 = vmax.f32 %v320, %v322
  %v2507 = vmax.f32 %v321, %v323
  %v2508 = vmax.f32 %v322, %v324
  %v2509 = vmax.f32 %v323, %v325
  %v2510 = vmax.f32 %v324, %v326
  %v2511 = vmax.f32 %v325, %v327
  %v2512 = vmax.f32 %v326, %v328
  %v2513 = vmax.f32 %v329, %v331
  %v2514 = vmax.f32 %v330, %v332
  %v2515 = vmax.f32 %v331, %v333
  %v2516 = vmax.f32 %v332, %v334
  %v2517 = vmax.f32 %v333, %v335
  %v2518 = vmax.f32 %v334, %v336
  %v2519 = vmax.f32 %v335, %v337
  %v2520 = vmax.f32 %v336, %v338
  %v2521 = vmax.f32 %v337, %v339
  %v2522 = vmax.f32 %v338, %v340
  %v2523 = vmax.f32 %v339, %v341
  %v2524 = vmax.f32 %v340, %v342
  %v2525 = vmax.f32 %v341, %v343
  %v2526 = vmax.f32 %v342, %v344
  %v2527 = vmax.f32 %v343, %v345
  %v2528 = vmax.f32 %v344, %v346
  %v2529 = vmax.f32 %v345, %v347
  %v2530 = vmax.f32 %v346, %v348
  %v2531 = vmax.f32 %v347, %v349
  %v2532 = vmax.f32 %v348, %v350
  %v2533 = vmax.f32 %v349, %v351
  %v2534 = vmax.f32 %v350, %v352
  %v2535 = vmax.f32 %v351, %v353
  %v2536 = vmax.f32 %v352, %v354
  %v2537 = vmax.f32 %v353, %v355
  %v2538 = vmax.f32 %v354, %v356
  %v2539 = vmax.f32 %v355, %v357
  %v2540 = vmax.f32 %v356, %v358
  %v2541 = vmax.f32 %v357, %v359
  %v2542 = vmax.f32 %v358, %v360
  %2544 = vrot.lane.b32.xlu0 -inf, 8
  %v2545 = vpop.permute.xlu0 %2544
  %2546 = vrot.lane.b32.xlu0 %v2364, 8
  %v2547 = vpop.permute.xlu0 %2546
  %2548 = vrot.lane.b32.xlu0 %v2366, 8
  %v2549 = vpop.permute.xlu0 %2548
  %2550 = vrot.lane.b32.xlu0 %v2368, 8
  %v2551 = vpop.permute.xlu0 %2550
  %2552 = vrot.lane.b32.xlu0 %v2370, 8
  %v2553 = vpop.permute.xlu0 %2552
  %2554 = vrot.lane.b32.xlu0 %v2372, 8
  %v2555 = vpop.permute.xlu0 %2554
  %2556 = vrot.lane.b32.xlu0 %v2374, 8
  %v2557 = vpop.permute.xlu0 %2556
  %2558 = vrot.lane.b32.xlu0 %v2376, 8
  %v2559 = vpop.permute.xlu0 %2558
  %2560 = vrot.lane.b32.xlu0 %v2378, 8
  %v2561 = vpop.permute.xlu0 %2560
  %2562 = vrot.lane.b32.xlu0 %v2380, 8
  %v2563 = vpop.permute.xlu0 %2562
  %2564 = vrot.lane.b32.xlu0 %v2382, 8
  %v2565 = vpop.permute.xlu0 %2564
  %2566 = vrot.lane.b32.xlu0 %v2384, 8
  %v2567 = vpop.permute.xlu0 %2566
  %2568 = vrot.lane.b32.xlu0 %v2386, 8
  %v2569 = vpop.permute.xlu0 %2568
  %2570 = vrot.lane.b32.xlu0 %v2388, 8
  %v2571 = vpop.permute.xlu0 %2570
  %2572 = vrot.lane.b32.xlu0 %v2390, 8
  %v2573 = vpop.permute.xlu0 %2572
  %2574 = vrot.lane.b32.xlu0 %v2392, 8
  %v2575 = vpop.permute.xlu0 %2574
  %2576 = vrot.lane.b32.xlu0 %v2394, 8
  %v2577 = vpop.permute.xlu0 %2576
  %2578 = vrot.lane.b32.xlu0 %v2396, 8
  %v2579 = vpop.permute.xlu0 %2578
  %2580 = vrot.lane.b32.xlu0 %v2398, 8
  %v2581 = vpop.permute.xlu0 %2580
  %2582 = vrot.lane.b32.xlu0 %v2400, 8
  %v2583 = vpop.permute.xlu0 %2582
  %2584 = vrot.lane.b32.xlu0 %v2402, 8
  %v2585 = vpop.permute.xlu0 %2584
  %2586 = vrot.lane.b32.xlu0 %v2404, 8
  %v2587 = vpop.permute.xlu0 %2586
  %2588 = vrot.lane.b32.xlu0 %v2406, 8
  %v2589 = vpop.permute.xlu0 %2588
  %2590 = vrot.lane.b32.xlu0 %v2408, 8
  %v2591 = vpop.permute.xlu0 %2590
  %2592 = vrot.lane.b32.xlu0 %v2410, 8
  %v2593 = vpop.permute.xlu0 %2592
  %2594 = vrot.lane.b32.xlu0 %v2412, 8
  %v2595 = vpop.permute.xlu0 %2594
  %2596 = vrot.lane.b32.xlu0 %v2414, 8
  %v2597 = vpop.permute.xlu0 %2596
  %2598 = vrot.lane.b32.xlu0 %v2416, 8
  %v2599 = vpop.permute.xlu0 %2598
  %2600 = vrot.lane.b32.xlu0 %v2418, 8
  %v2601 = vpop.permute.xlu0 %2600
  %2602 = vrot.lane.b32.xlu0 %v2420, 8
  %v2603 = vpop.permute.xlu0 %2602
  %2604 = vrot.lane.b32.xlu0 %v2422, 8
  %v2605 = vpop.permute.xlu0 %2604
  %2606 = vrot.lane.b32.xlu0 %v2424, 8
  %v2607 = vpop.permute.xlu0 %2606
  %2608 = vrot.lane.b32.xlu0 %v2426, 8
  %v2609 = vpop.permute.xlu0 %2608
  %2610 = vrot.lane.b32.xlu0 %v2428, 8
  %v2611 = vpop.permute.xlu0 %2610
  %2612 = vrot.lane.b32.xlu0 %v2430, 8
  %v2613 = vpop.permute.xlu0 %2612
  %2614 = vrot.lane.b32.xlu0 %v2432, 8
  %v2615 = vpop.permute.xlu0 %2614
  %2616 = vrot.lane.b32.xlu0 %v2434, 8
  %v2617 = vpop.permute.xlu0 %2616
  %2618 = vrot.lane.b32.xlu0 %v2436, 8
  %v2619 = vpop.permute.xlu0 %2618
  %2620 = vrot.lane.b32.xlu0 %v2438, 8
  %v2621 = vpop.permute.xlu0 %2620
  %2622 = vrot.lane.b32.xlu0 %v2440, 8
  %v2623 = vpop.permute.xlu0 %2622
  %2624 = vrot.lane.b32.xlu0 %v2442, 8
  %v2625 = vpop.permute.xlu0 %2624
  %2626 = vrot.lane.b32.xlu0 %v2444, 8
  %v2627 = vpop.permute.xlu0 %2626
  %2628 = vrot.lane.b32.xlu0 %v2446, 8
  %v2629 = vpop.permute.xlu0 %2628
  %2630 = vrot.lane.b32.xlu0 %v2448, 8
  %v2631 = vpop.permute.xlu0 %2630
  %2632 = vrot.lane.b32.xlu0 %v2450, 8
  %v2633 = vpop.permute.xlu0 %2632
  %2634 = vrot.lane.b32.xlu0 %v2452, 8
  %v2635 = vpop.permute.xlu0 %2634
  %2636 = vrot.lane.b32.xlu0 %v2454, 8
  %v2637 = vpop.permute.xlu0 %2636
  %2638 = vrot.lane.b32.xlu0 %v2456, 8
  %v2639 = vpop.permute.xlu0 %2638
  %2640 = vrot.lane.b32.xlu0 %v2458, 8
  %v2641 = vpop.permute.xlu0 %2640
  %2642 = vrot.lane.b32.xlu0 %v2460, 8
  %v2643 = vpop.permute.xlu0 %2642
  %2644 = vrot.lane.b32.xlu0 %v2462, 8
  %v2645 = vpop.permute.xlu0 %2644
  %2646 = vrot.lane.b32.xlu0 %v2464, 8
  %v2647 = vpop.permute.xlu0 %2646
  %2648 = vrot.lane.b32.xlu0 %v2466, 8
  %v2649 = vpop.permute.xlu0 %2648
  %2650 = vrot.lane.b32.xlu0 %v2468, 8
  %v2651 = vpop.permute.xlu0 %2650
  %2652 = vrot.lane.b32.xlu0 %v2470, 8
  %v2653 = vpop.permute.xlu0 %2652
  %2654 = vrot.lane.b32.xlu0 %v2472, 8
  %v2655 = vpop.permute.xlu0 %2654
  %2656 = vrot.lane.b32.xlu0 %v2474, 8
  %v2657 = vpop.permute.xlu0 %2656
  %2658 = vrot.lane.b32.xlu0 %v2476, 8
  %v2659 = vpop.permute.xlu0 %2658
  %2660 = vrot.lane.b32.xlu0 %v2478, 8
  %v2661 = vpop.permute.xlu0 %2660
  %2662 = vrot.lane.b32.xlu0 %v2480, 8
  %v2663 = vpop.permute.xlu0 %2662
  %2664 = vrot.lane.b32.xlu0 %v2482, 8
  %v2665 = vpop.permute.xlu0 %2664
  %v2727 = vmax.f32 %v2483, %v2545
  %v2728 = vmax.f32 %v2484, %v2545
  %v2729 = vmax.f32 %v2485, %v2547
  %v2730 = vmax.f32 %v2486, %v2549
  %v2731 = vmax.f32 %v2487, %v2551
  %v2732 = vmax.f32 %v2488, %v2553
  %v2733 = vmax.f32 %v2489, %v2555
  %v2734 = vmax.f32 %v2490, %v2557
  %v2735 = vmax.f32 %v2491, %v2559
  %v2736 = vmax.f32 %v2492, %v2561
  %v2737 = vmax.f32 %v2493, %v2563
  %v2738 = vmax.f32 %v2494, %v2565
  %v2739 = vmax.f32 %v2495, %v2567
  %v2740 = vmax.f32 %v2496, %v2569
  %v2741 = vmax.f32 %v2497, %v2571
  %v2742 = vmax.f32 %v2498, %v2573
  %v2743 = vmax.f32 %v2499, %v2575
  %v2744 = vmax.f32 %v2500, %v2577
  %v2745 = vmax.f32 %v2501, %v2579
  %v2746 = vmax.f32 %v2502, %v2581
  %v2747 = vmax.f32 %v2503, %v2583
  %v2748 = vmax.f32 %v2504, %v2585
  %v2749 = vmax.f32 %v2505, %v2587
  %v2750 = vmax.f32 %v2506, %v2589
  %v2751 = vmax.f32 %v2507, %v2591
  %v2752 = vmax.f32 %v2508, %v2593
  %v2753 = vmax.f32 %v2509, %v2595
  %v2754 = vmax.f32 %v2510, %v2597
  %v2755 = vmax.f32 %v2511, %v2599
  %v2756 = vmax.f32 %v2512, %v2601
  %v2757 = vmax.f32 %v327, %v2603
  %v2758 = vmax.f32 %v328, %v2605
  %v2759 = vmax.f32 %v2513, %v2545
  %v2760 = vmax.f32 %v2514, %v2545
  %v2761 = vmax.f32 %v2515, %v2607
  %v2762 = vmax.f32 %v2516, %v2609
  %v2763 = vmax.f32 %v2517, %v2611
  %v2764 = vmax.f32 %v2518, %v2613
  %v2765 = vmax.f32 %v2519, %v2615
  %v2766 = vmax.f32 %v2520, %v2617
  %v2767 = vmax.f32 %v2521, %v2619
  %v2768 = vmax.f32 %v2522, %v2621
  %v2769 = vmax.f32 %v2523, %v2623
  %v2770 = vmax.f32 %v2524, %v2625
  %v2771 = vmax.f32 %v2525, %v2627
  %v2772 = vmax.f32 %v2526, %v2629
  %v2773 = vmax.f32 %v2527, %v2631
  %v2774 = vmax.f32 %v2528, %v2633
  %v2775 = vmax.f32 %v2529, %v2635
  %v2776 = vmax.f32 %v2530, %v2637
  %v2777 = vmax.f32 %v2531, %v2639
  %v2778 = vmax.f32 %v2532, %v2641
  %v2779 = vmax.f32 %v2533, %v2643
  %v2780 = vmax.f32 %v2534, %v2645
  %v2781 = vmax.f32 %v2535, %v2647
  %v2782 = vmax.f32 %v2536, %v2649
  %v2783 = vmax.f32 %v2537, %v2651
  %v2784 = vmax.f32 %v2538, %v2653
  %v2785 = vmax.f32 %v2539, %v2655
  %v2786 = vmax.f32 %v2540, %v2657
  %v2787 = vmax.f32 %v2541, %v2659
  %v2788 = vmax.f32 %v2542, %v2661
  %v2789 = vmax.f32 %v359, %v2663
  %v2790 = vmax.f32 %v360, %v2665
  %v2791 = vsel %vm1444, %v2049, %v2727
  %v2792 = vsel %vm1444, %v2052, %v2728
  %v2793 = vsel %vm1444, %v2057, %v2729
  %v2794 = vsel %vm1444, %v2060, %v2730
  %v2795 = vsel %vm1444, %v2065, %v2731
  %v2796 = vsel %vm1444, %v2068, %v2732
  %v2797 = vsel %vm1444, %v2073, %v2733
  %v2798 = vsel %vm1444, %v2076, %v2734
  %v2799 = vsel %vm1444, %v2081, %v2735
  %v2800 = vsel %vm1444, %v2084, %v2736
  %v2801 = vsel %vm1444, %v2089, %v2737
  %v2802 = vsel %vm1444, %v2092, %v2738
  %v2803 = vsel %vm1444, %v2097, %v2739
  %v2804 = vsel %vm1444, %v2100, %v2740
  %v2805 = vsel %vm1444, %v2105, %v2741
  %v2806 = vsel %vm1444, %v2108, %v2742
  %v2807 = vsel %vm1444, %v2113, %v2743
  %v2808 = vsel %vm1444, %v2116, %v2744
  %v2809 = vsel %vm1444, %v2121, %v2745
  %v2810 = vsel %vm1444, %v2124, %v2746
  %v2811 = vsel %vm1444, %v2129, %v2747
  %v2812 = vsel %vm1444, %v2132, %v2748
  %v2813 = vsel %vm1444, %v2137, %v2749
  %v2814 = vsel %vm1444, %v2140, %v2750
  %v2815 = vsel %vm1444, %v2145, %v2751
  %v2816 = vsel %vm1444, %v2148, %v2752
  %v2817 = vsel %vm1444, %v2153, %v2753
  %v2818 = vsel %vm1444, %v2156, %v2754
  %v2819 = vsel %vm1444, %v2161, %v2755
  %v2820 = vsel %vm1444, %v2164, %v2756
  %v2821 = vsel %vm1444, %v2169, %v2757
  %v2822 = vsel %vm1444, %v2172, %v2758
  %v2823 = vsel %vm1444, %v2177, %v2759
  %v2824 = vsel %vm1444, %v2180, %v2760
  %v2825 = vsel %vm1444, %v2185, %v2761
  %v2826 = vsel %vm1444, %v2188, %v2762
  %v2827 = vsel %vm1444, %v2193, %v2763
  %v2828 = vsel %vm1444, %v2196, %v2764
  %v2829 = vsel %vm1444, %v2201, %v2765
  %v2830 = vsel %vm1444, %v2204, %v2766
  %v2831 = vsel %vm1444, %v2209, %v2767
  %v2832 = vsel %vm1444, %v2212, %v2768
  %v2833 = vsel %vm1444, %v2217, %v2769
  %v2834 = vsel %vm1444, %v2220, %v2770
  %v2835 = vsel %vm1444, %v2225, %v2771
  %v2836 = vsel %vm1444, %v2228, %v2772
  %v2837 = vsel %vm1444, %v2233, %v2773
  %v2838 = vsel %vm1444, %v2236, %v2774
  %v2839 = vsel %vm1444, %v2241, %v2775
  %v2840 = vsel %vm1444, %v2244, %v2776
  %v2841 = vsel %vm1444, %v2249, %v2777
  %v2842 = vsel %vm1444, %v2252, %v2778
  %v2843 = vsel %vm1444, %v2257, %v2779
  %v2844 = vsel %vm1444, %v2260, %v2780
  %v2845 = vsel %vm1444, %v2265, %v2781
  %v2846 = vsel %vm1444, %v2268, %v2782
  %v2847 = vsel %vm1444, %v2273, %v2783
  %v2848 = vsel %vm1444, %v2276, %v2784
  %v2849 = vsel %vm1444, %v2281, %v2785
  %v2850 = vsel %vm1444, %v2284, %v2786
  %v2851 = vsel %vm1444, %v2289, %v2787
  %v2852 = vsel %vm1444, %v2292, %v2788
  %v2853 = vsel %vm1444, %v2297, %v2789
  %v2854 = vsel %vm1444, %v2300, %v2790
  %v2855 = vsel %vm1509, %v2791, %v233
  %v2856 = vsel %vm1509, %v2792, %v234
  %v2857 = vsel %vm1509, %v2793, %v235
  %v2858 = vsel %vm1509, %v2794, %v236
  %v2859 = vsel %vm1509, %v2795, %v237
  %v2860 = vsel %vm1509, %v2796, %v238
  %v2861 = vsel %vm1509, %v2797, %v239
  %v2862 = vsel %vm1509, %v2798, %v240
  %v2863 = vsel %vm1509, %v2799, %v241
  %v2864 = vsel %vm1509, %v2800, %v242
  %v2865 = vsel %vm1509, %v2801, %v243
  %v2866 = vsel %vm1509, %v2802, %v244
  %v2867 = vsel %vm1509, %v2803, %v245
  %v2868 = vsel %vm1509, %v2804, %v246
  %v2869 = vsel %vm1509, %v2805, %v247
  %v2870 = vsel %vm1509, %v2806, %v248
  %v2871 = vsel %vm1509, %v2807, %v249
  %v2872 = vsel %vm1509, %v2808, %v250
  %v2873 = vsel %vm1509, %v2809, %v251
  %v2874 = vsel %vm1509, %v2810, %v252
  %v2875 = vsel %vm1509, %v2811, %v253
  %v2876 = vsel %vm1509, %v2812, %v254
  %v2877 = vsel %vm1509, %v2813, %v255
  %v2878 = vsel %vm1509, %v2814, %v256
  %v2879 = vsel %vm1509, %v2815, %v257
  %v2880 = vsel %vm1509, %v2816, %v258
  %v2881 = vsel %vm1509, %v2817, %v259
  %v2882 = vsel %vm1509, %v2818, %v260
  %v2883 = vsel %vm1509, %v2819, %v261
  %v2884 = vsel %vm1509, %v2820, %v262
  %v2885 = vsel %vm1509, %v2821, %v263
  %v2886 = vsel %vm1509, %v2822, %v264
  %v2887 = vsel %vm1509, %v2823, %v265
  %v2888 = vsel %vm1509, %v2824, %v266
  %v2889 = vsel %vm1509, %v2825, %v267
  %v2890 = vsel %vm1509, %v2826, %v268
  %v2891 = vsel %vm1509, %v2827, %v269
  %v2892 = vsel %vm1509, %v2828, %v270
  %v2893 = vsel %vm1509, %v2829, %v271
  %v2894 = vsel %vm1509, %v2830, %v272
  %v2895 = vsel %vm1509, %v2831, %v273
  %v2896 = vsel %vm1509, %v2832, %v274
  %v2897 = vsel %vm1509, %v2833, %v275
  %v2898 = vsel %vm1509, %v2834, %v276
  %v2899 = vsel %vm1509, %v2835, %v277
  %v2900 = vsel %vm1509, %v2836, %v278
  %v2901 = vsel %vm1509, %v2837, %v279
  %v2902 = vsel %vm1509, %v2838, %v280
  %v2903 = vsel %vm1509, %v2839, %v281
  %v2904 = vsel %vm1509, %v2840, %v282
  %v2905 = vsel %vm1509, %v2841, %v283
  %v2906 = vsel %vm1509, %v2842, %v284
  %v2907 = vsel %vm1509, %v2843, %v285
  %v2908 = vsel %vm1509, %v2844, %v286
  %v2909 = vsel %vm1509, %v2845, %v287
  %v2910 = vsel %vm1509, %v2846, %v288
  %v2911 = vsel %vm1509, %v2847, %v289
  %v2912 = vsel %vm1509, %v2848, %v290
  %v2913 = vsel %vm1509, %v2849, %v291
  %v2914 = vsel %vm1509, %v2850, %v292
  %v2915 = vsel %vm1509, %v2851, %v293
  %v2916 = vsel %vm1509, %v2852, %v294
  %v2917 = vsel %vm1509, %v2853, %v295
  %v2918 = vsel %vm1509, %v2854, %v296
  %v2919 = vld [vmem:[%s4] sm:$0x1]
  %v2921 = vlaneseq
  %v2922 = vshrl.u32 %v2921, 7
  %v2923 = vsub.s32 0, %v2922
  %v2924 = vrot.slane %v2919, %v2923
  %v2926 = vmul.f32 %v2855, %v2924
  %v2927 = vmul.f32 %v2856, %v2924
  %v2928 = vmul.f32 %v2857, %v2924
  %v2929 = vmul.f32 %v2858, %v2924
  %v2930 = vmul.f32 %v2859, %v2924
  %v2931 = vmul.f32 %v2860, %v2924
  %v2932 = vmul.f32 %v2861, %v2924
  %v2933 = vmul.f32 %v2862, %v2924
  %v2934 = vmul.f32 %v2863, %v2924
  %v2935 = vmul.f32 %v2864, %v2924
  %v2936 = vmul.f32 %v2865, %v2924
  %v2937 = vmul.f32 %v2866, %v2924
  %v2938 = vmul.f32 %v2867, %v2924
  %v2939 = vmul.f32 %v2868, %v2924
  %v2940 = vmul.f32 %v2869, %v2924
  %v2941 = vmul.f32 %v2870, %v2924
  %v2942 = vmul.f32 %v2871, %v2924
  %v2943 = vmul.f32 %v2872, %v2924
  %v2944 = vmul.f32 %v2873, %v2924
  %v2945 = vmul.f32 %v2874, %v2924
  %v2946 = vmul.f32 %v2875, %v2924
  %v2947 = vmul.f32 %v2876, %v2924
  %v2948 = vmul.f32 %v2877, %v2924
  %v2949 = vmul.f32 %v2878, %v2924
  %v2950 = vmul.f32 %v2879, %v2924
  %v2951 = vmul.f32 %v2880, %v2924
  %v2952 = vmul.f32 %v2881, %v2924
  %v2953 = vmul.f32 %v2882, %v2924
  %v2954 = vmul.f32 %v2883, %v2924
  %v2955 = vmul.f32 %v2884, %v2924
  %v2956 = vmul.f32 %v2885, %v2924
  %v2957 = vmul.f32 %v2886, %v2924
  %v2958 = vmul.f32 %v2887, %v2924
  %v2959 = vmul.f32 %v2888, %v2924
  %v2960 = vmul.f32 %v2889, %v2924
  %v2961 = vmul.f32 %v2890, %v2924
  %v2962 = vmul.f32 %v2891, %v2924
  %v2963 = vmul.f32 %v2892, %v2924
  %v2964 = vmul.f32 %v2893, %v2924
  %v2965 = vmul.f32 %v2894, %v2924
  %v2966 = vmul.f32 %v2895, %v2924
  %v2967 = vmul.f32 %v2896, %v2924
  %v2968 = vmul.f32 %v2897, %v2924
  %v2969 = vmul.f32 %v2898, %v2924
  %v2970 = vmul.f32 %v2899, %v2924
  %v2971 = vmul.f32 %v2900, %v2924
  %v2972 = vmul.f32 %v2901, %v2924
  %v2973 = vmul.f32 %v2902, %v2924
  %v2974 = vmul.f32 %v2903, %v2924
  %v2975 = vmul.f32 %v2904, %v2924
  %v2976 = vmul.f32 %v2905, %v2924
  %v2977 = vmul.f32 %v2906, %v2924
  %v2978 = vmul.f32 %v2907, %v2924
  %v2979 = vmul.f32 %v2908, %v2924
  %v2980 = vmul.f32 %v2909, %v2924
  %v2981 = vmul.f32 %v2910, %v2924
  %v2982 = vmul.f32 %v2911, %v2924
  %v2983 = vmul.f32 %v2912, %v2924
  %v2984 = vmul.f32 %v2913, %v2924
  %v2985 = vmul.f32 %v2914, %v2924
  %v2986 = vmul.f32 %v2915, %v2924
  %v2987 = vmul.f32 %v2916, %v2924
  %v2988 = vmul.f32 %v2917, %v2924
  %v2989 = vmul.f32 %v2918, %v2924
  %v2990 = vld [vmem:[%s5] sm:$0x1]
  %v2992 = vlaneseq
  %v2993 = vshrl.u32 %v2992, 7
  %v2994 = vsub.s32 0, %v2993
  %v2995 = vrot.slane %v2990, %v2994
  %v2997 = vadd.f32 %v2926, %v2995
  %v2998 = vadd.f32 %v2927, %v2995
  %v2999 = vadd.f32 %v2928, %v2995
  %v3000 = vadd.f32 %v2929, %v2995
  %v3001 = vadd.f32 %v2930, %v2995
  %v3002 = vadd.f32 %v2931, %v2995
  %v3003 = vadd.f32 %v2932, %v2995
  %v3004 = vadd.f32 %v2933, %v2995
  %v3005 = vadd.f32 %v2934, %v2995
  %v3006 = vadd.f32 %v2935, %v2995
  %v3007 = vadd.f32 %v2936, %v2995
  %v3008 = vadd.f32 %v2937, %v2995
  %v3009 = vadd.f32 %v2938, %v2995
  %v3010 = vadd.f32 %v2939, %v2995
  %v3011 = vadd.f32 %v2940, %v2995
  %v3012 = vadd.f32 %v2941, %v2995
  %v3013 = vadd.f32 %v2942, %v2995
  %v3014 = vadd.f32 %v2943, %v2995
  %v3015 = vadd.f32 %v2944, %v2995
  %v3016 = vadd.f32 %v2945, %v2995
  %v3017 = vadd.f32 %v2946, %v2995
  %v3018 = vadd.f32 %v2947, %v2995
  %v3019 = vadd.f32 %v2948, %v2995
  %v3020 = vadd.f32 %v2949, %v2995
  %v3021 = vadd.f32 %v2950, %v2995
  %v3022 = vadd.f32 %v2951, %v2995
  %v3023 = vadd.f32 %v2952, %v2995
  %v3024 = vadd.f32 %v2953, %v2995
  %v3025 = vadd.f32 %v2954, %v2995
  %v3026 = vadd.f32 %v2955, %v2995
  %v3027 = vadd.f32 %v2956, %v2995
  %v3028 = vadd.f32 %v2957, %v2995
  %v3029 = vadd.f32 %v2958, %v2995
  %v3030 = vadd.f32 %v2959, %v2995
  %v3031 = vadd.f32 %v2960, %v2995
  %v3032 = vadd.f32 %v2961, %v2995
  %v3033 = vadd.f32 %v2962, %v2995
  %v3034 = vadd.f32 %v2963, %v2995
  %v3035 = vadd.f32 %v2964, %v2995
  %v3036 = vadd.f32 %v2965, %v2995
  %v3037 = vadd.f32 %v2966, %v2995
  %v3038 = vadd.f32 %v2967, %v2995
  %v3039 = vadd.f32 %v2968, %v2995
  %v3040 = vadd.f32 %v2969, %v2995
  %v3041 = vadd.f32 %v2970, %v2995
  %v3042 = vadd.f32 %v2971, %v2995
  %v3043 = vadd.f32 %v2972, %v2995
  %v3044 = vadd.f32 %v2973, %v2995
  %v3045 = vadd.f32 %v2974, %v2995
  %v3046 = vadd.f32 %v2975, %v2995
  %v3047 = vadd.f32 %v2976, %v2995
  %v3048 = vadd.f32 %v2977, %v2995
  %v3049 = vadd.f32 %v2978, %v2995
  %v3050 = vadd.f32 %v2979, %v2995
  %v3051 = vadd.f32 %v2980, %v2995
  %v3052 = vadd.f32 %v2981, %v2995
  %v3053 = vadd.f32 %v2982, %v2995
  %v3054 = vadd.f32 %v2983, %v2995
  %v3055 = vadd.f32 %v2984, %v2995
  %v3056 = vadd.f32 %v2985, %v2995
  %v3057 = vadd.f32 %v2986, %v2995
  %v3058 = vadd.f32 %v2987, %v2995
  %v3059 = vadd.f32 %v2988, %v2995
  %v3060 = vadd.f32 %v2989, %v2995
  %v3061 = vsel %vm1571, %v2997, 0.0
  %v3062 = vsel %vm1571, %v2998, 0.0
  %v3063 = vsel %vm1571, %v2999, 0.0
  %v3064 = vsel %vm1571, %v3000, 0.0
  %v3065 = vsel %vm1571, %v3001, 0.0
  %v3066 = vsel %vm1571, %v3002, 0.0
  %v3067 = vsel %vm1571, %v3003, 0.0
  %v3068 = vsel %vm1571, %v3004, 0.0
  %v3069 = vsel %vm1571, %v3005, 0.0
  %v3070 = vsel %vm1571, %v3006, 0.0
  %v3071 = vsel %vm1571, %v3007, 0.0
  %v3072 = vsel %vm1571, %v3008, 0.0
  %v3073 = vsel %vm1571, %v3009, 0.0
  %v3074 = vsel %vm1571, %v3010, 0.0
  %v3075 = vsel %vm1571, %v3011, 0.0
  %v3076 = vsel %vm1571, %v3012, 0.0
  %v3077 = vsel %vm1571, %v3013, 0.0
  %v3078 = vsel %vm1571, %v3014, 0.0
  %v3079 = vsel %vm1571, %v3015, 0.0
  %v3080 = vsel %vm1571, %v3016, 0.0
  %v3081 = vsel %vm1571, %v3017, 0.0
  %v3082 = vsel %vm1571, %v3018, 0.0
  %v3083 = vsel %vm1571, %v3019, 0.0
  %v3084 = vsel %vm1571, %v3020, 0.0
  %v3085 = vsel %vm1571, %v3021, 0.0
  %v3086 = vsel %vm1571, %v3022, 0.0
  %v3087 = vsel %vm1571, %v3023, 0.0
  %v3088 = vsel %vm1571, %v3024, 0.0
  %v3089 = vsel %vm1571, %v3025, 0.0
  %v3090 = vsel %vm1571, %v3026, 0.0
  %v3091 = vsel %vm1571, %v3027, 0.0
  %v3092 = vsel %vm1571, %v3028, 0.0
  %v3093 = vsel %vm1571, %v3029, 0.0
  %v3094 = vsel %vm1571, %v3030, 0.0
  %v3095 = vsel %vm1571, %v3031, 0.0
  %v3096 = vsel %vm1571, %v3032, 0.0
  %v3097 = vsel %vm1571, %v3033, 0.0
  %v3098 = vsel %vm1571, %v3034, 0.0
  %v3099 = vsel %vm1571, %v3035, 0.0
  %v3100 = vsel %vm1571, %v3036, 0.0
  %v3101 = vsel %vm1571, %v3037, 0.0
  %v3102 = vsel %vm1571, %v3038, 0.0
  %v3103 = vsel %vm1571, %v3039, 0.0
  %v3104 = vsel %vm1571, %v3040, 0.0
  %v3105 = vsel %vm1571, %v3041, 0.0
  %v3106 = vsel %vm1571, %v3042, 0.0
  %v3107 = vsel %vm1571, %v3043, 0.0
  %v3108 = vsel %vm1571, %v3044, 0.0
  %v3109 = vsel %vm1571, %v3045, 0.0
  %v3110 = vsel %vm1571, %v3046, 0.0
  %v3111 = vsel %vm1571, %v3047, 0.0
  %v3112 = vsel %vm1571, %v3048, 0.0
  %v3113 = vsel %vm1571, %v3049, 0.0
  %v3114 = vsel %vm1571, %v3050, 0.0
  %v3115 = vsel %vm1571, %v3051, 0.0
  %v3116 = vsel %vm1571, %v3052, 0.0
  %v3117 = vsel %vm1571, %v3053, 0.0
  %v3118 = vsel %vm1571, %v3054, 0.0
  %v3119 = vsel %vm1571, %v3055, 0.0
  %v3120 = vsel %vm1571, %v3056, 0.0
  %v3121 = vsel %vm1571, %v3057, 0.0
  %v3122 = vsel %vm1571, %v3058, 0.0
  %v3123 = vsel %vm1571, %v3059, 0.0
  %v3124 = vsel %vm1571, %v3060, 0.0
  %3125 = vxpose.xlu0.b32.start [1/16] %v3061, 128
  %3126 = vxpose.xlu0.b32.cont [2/16] %v3062, 128
  %3127 = vxpose.xlu0.b32.cont [3/16] %v3063, 128
  %3128 = vxpose.xlu0.b32.cont [4/16] %v3064, 128
  %3129 = vxpose.xlu0.b32.cont [5/16] %v3065, 128
  %3130 = vxpose.xlu0.b32.cont [6/16] %v3066, 128
  %3131 = vxpose.xlu0.b32.cont [7/16] %v3067, 128
  %3132 = vxpose.xlu0.b32.cont [8/16] %v3068, 128
  %3133 = vxpose.xlu0.b32.cont [9/16] %v3069, 128
  %3134 = vxpose.xlu0.b32.cont [10/16] %v3070, 128
  %3135 = vxpose.xlu0.b32.cont [11/16] %v3071, 128
  %3136 = vxpose.xlu0.b32.cont [12/16] %v3072, 128
  %3137 = vxpose.xlu0.b32.cont [13/16] %v3073, 128
  %3138 = vxpose.xlu0.b32.cont [14/16] %v3074, 128
  %3139 = vxpose.xlu0.b32.cont [15/16] %v3075, 128
  %3140 = vxpose.xlu0.b32.end [16/16] %v3076, 128
  %v3141 = vpop.trf.xlu0
  %v3142 = vpop.trf.xlu0
  %v3143 = vpop.trf.xlu0
  %v3144 = vpop.trf.xlu0
  %v3145 = vpop.trf.xlu0
  %v3146 = vpop.trf.xlu0
  %v3147 = vpop.trf.xlu0
  %v3148 = vpop.trf.xlu0
  %v3149 = vpop.trf.xlu0
  %v3150 = vpop.trf.xlu0
  %v3151 = vpop.trf.xlu0
  %v3152 = vpop.trf.xlu0
  %v3153 = vpop.trf.xlu0
  %v3154 = vpop.trf.xlu0
  %v3155 = vpop.trf.xlu0
  %v3156 = vpop.trf.xlu0
  %3157 = vxpose.xlu0.b32.start [1/16] %v3077, 128
  %3158 = vxpose.xlu0.b32.cont [2/16] %v3078, 128
  %3159 = vxpose.xlu0.b32.cont [3/16] %v3079, 128
  %3160 = vxpose.xlu0.b32.cont [4/16] %v3080, 128
  %3161 = vxpose.xlu0.b32.cont [5/16] %v3081, 128
  %3162 = vxpose.xlu0.b32.cont [6/16] %v3082, 128
  %3163 = vxpose.xlu0.b32.cont [7/16] %v3083, 128
  %3164 = vxpose.xlu0.b32.cont [8/16] %v3084, 128
  %3165 = vxpose.xlu0.b32.cont [9/16] %v3085, 128
  %3166 = vxpose.xlu0.b32.cont [10/16] %v3086, 128
  %3167 = vxpose.xlu0.b32.cont [11/16] %v3087, 128
  %3168 = vxpose.xlu0.b32.cont [12/16] %v3088, 128
  %3169 = vxpose.xlu0.b32.cont [13/16] %v3089, 128
  %3170 = vxpose.xlu0.b32.cont [14/16] %v3090, 128
  %3171 = vxpose.xlu0.b32.cont [15/16] %v3091, 128
  %3172 = vxpose.xlu0.b32.end [16/16] %v3092, 128
  %v3173 = vpop.trf.xlu0
  %v3174 = vpop.trf.xlu0
  %v3175 = vpop.trf.xlu0
  %v3176 = vpop.trf.xlu0
  %v3177 = vpop.trf.xlu0
  %v3178 = vpop.trf.xlu0
  %v3179 = vpop.trf.xlu0
  %v3180 = vpop.trf.xlu0
  %v3181 = vpop.trf.xlu0
  %v3182 = vpop.trf.xlu0
  %v3183 = vpop.trf.xlu0
  %v3184 = vpop.trf.xlu0
  %v3185 = vpop.trf.xlu0
  %v3186 = vpop.trf.xlu0
  %v3187 = vpop.trf.xlu0
  %v3188 = vpop.trf.xlu0
  %3189 = vst [vmem:[%s6] sm:$0xff] %v3141
  %3190 = vst [vmem:[%s6 + $0x8] sm:$0xff] %v3173
  %3191 = vst [vmem:[%s6 + $0x10] sm:$0xf] %v3142
  %3192 = vst [vmem:[%s6 + $0x18] sm:$0xf] %v3174
  %3193 = vxpose.xlu0.b32.start [1/16] %v3093, 128
  %3194 = vxpose.xlu0.b32.cont [2/16] %v3094, 128
  %3195 = vxpose.xlu0.b32.cont [3/16] %v3095, 128
  %3196 = vxpose.xlu0.b32.cont [4/16] %v3096, 128
  %3197 = vxpose.xlu0.b32.cont [5/16] %v3097, 128
  %3198 = vxpose.xlu0.b32.cont [6/16] %v3098, 128
  %3199 = vxpose.xlu0.b32.cont [7/16] %v3099, 128
  %3200 = vxpose.xlu0.b32.cont [8/16] %v3100, 128
  %3201 = vxpose.xlu0.b32.cont [9/16] %v3101, 128
  %3202 = vxpose.xlu0.b32.cont [10/16] %v3102, 128
  %3203 = vxpose.xlu0.b32.cont [11/16] %v3103, 128
  %3204 = vxpose.xlu0.b32.cont [12/16] %v3104, 128
  %3205 = vxpose.xlu0.b32.cont [13/16] %v3105, 128
  %3206 = vxpose.xlu0.b32.cont [14/16] %v3106, 128
  %3207 = vxpose.xlu0.b32.cont [15/16] %v3107, 128
  %3208 = vxpose.xlu0.b32.end [16/16] %v3108, 128
  %v3209 = vpop.trf.xlu0
  %v3210 = vpop.trf.xlu0
  %v3211 = vpop.trf.xlu0
  %v3212 = vpop.trf.xlu0
  %v3213 = vpop.trf.xlu0
  %v3214 = vpop.trf.xlu0
  %v3215 = vpop.trf.xlu0
  %v3216 = vpop.trf.xlu0
  %v3217 = vpop.trf.xlu0
  %v3218 = vpop.trf.xlu0
  %v3219 = vpop.trf.xlu0
  %v3220 = vpop.trf.xlu0
  %v3221 = vpop.trf.xlu0
  %v3222 = vpop.trf.xlu0
  %v3223 = vpop.trf.xlu0
  %v3224 = vpop.trf.xlu0
  %3225 = vxpose.xlu0.b32.start [1/16] %v3109, 128
  %3226 = vxpose.xlu0.b32.cont [2/16] %v3110, 128
  %3227 = vxpose.xlu0.b32.cont [3/16] %v3111, 128
  %3228 = vxpose.xlu0.b32.cont [4/16] %v3112, 128
  %3229 = vxpose.xlu0.b32.cont [5/16] %v3113, 128
  %3230 = vxpose.xlu0.b32.cont [6/16] %v3114, 128
  %3231 = vxpose.xlu0.b32.cont [7/16] %v3115, 128
  %3232 = vxpose.xlu0.b32.cont [8/16] %v3116, 128
  %3233 = vxpose.xlu0.b32.cont [9/16] %v3117, 128
  %3234 = vxpose.xlu0.b32.cont [10/16] %v3118, 128
  %3235 = vxpose.xlu0.b32.cont [11/16] %v3119, 128
  %3236 = vxpose.xlu0.b32.cont [12/16] %v3120, 128
  %3237 = vxpose.xlu0.b32.cont [13/16] %v3121, 128
  %3238 = vxpose.xlu0.b32.cont [14/16] %v3122, 128
  %3239 = vxpose.xlu0.b32.cont [15/16] %v3123, 128
  %3240 = vxpose.xlu0.b32.end [16/16] %v3124, 128
  %v3241 = vpop.trf.xlu0
  %v3242 = vpop.trf.xlu0
  %v3243 = vpop.trf.xlu0
  %v3244 = vpop.trf.xlu0
  %v3245 = vpop.trf.xlu0
  %v3246 = vpop.trf.xlu0
  %v3247 = vpop.trf.xlu0
  %v3248 = vpop.trf.xlu0
  %v3249 = vpop.trf.xlu0
  %v3250 = vpop.trf.xlu0
  %v3251 = vpop.trf.xlu0
  %v3252 = vpop.trf.xlu0
  %v3253 = vpop.trf.xlu0
  %v3254 = vpop.trf.xlu0
  %v3255 = vpop.trf.xlu0
  %v3256 = vpop.trf.xlu0
  %s3257 = scalar_lea.vmem %s6, 32
  %3258 = vst [vmem:[%s3257] sm:$0xff] %v3209
  %3259 = vst [vmem:[%s3257 + $0x8] sm:$0xff] %v3241
  %3260 = vst [vmem:[%s3257 + $0x10] sm:$0xf] %v3210
  %3261 = vst [vmem:[%s3257 + $0x18] sm:$0xf] %v3242
  // Predicated region
  $region26: #{multiscale_temporal_conv.5} parent=0 // pred_check
    _
  $region27: #{multiscale_temporal_conv.5} parent=0 // pred_check_branch
    %3263 = sbr.rel (0) target = $region29
  $region28: #{multiscale_temporal_conv.5} parent=0 // pred_region
    _
  $region29: #{multiscale_temporal_conv.5} parent=0 // pred_fallthru
    _
  // Predicated region
  $region30: #{multiscale_temporal_conv.5} parent=0 // pred_check
    _
  $region31: #{multiscale_temporal_conv.5} parent=0 // pred_check_branch
    %3265 = sbr.rel (0) target = $region33
  $region32: #{multiscale_temporal_conv.5} parent=0 // pred_region
    _
  $region33: #{multiscale_temporal_conv.5} parent=0 // pred_fallthru
    _

</llo_original>
